<compile_context>
chip_gen: v5e
topology: v5e:2x2
jax: 0.10.0
libtpu: 0.0.40
codegen_flags: <defaults>
</compile_context>

<pallas_src>
import functools

import jax
import jax.numpy as jnp
from jax import lax
from jax.experimental import pallas as pl
from jax.experimental.pallas import tpu as pltpu

EMB = 40          # emb_size
DEPTH = 6         # transformer depth
N_CLASSES = 4
N_HEADS = 10
EEG_CH = 22       # spatial conv kernel height  (22, 1)
CONV_KW = 25      # temporal conv kernel width  (1, 25)
POOL_W, POOL_S = 75, 15
SEQ_LEN = 22      # required by ClassificationHead: Linear(emb_size * 22, 256)

BLOCK_PARAM_NAMES = ["ln1_g", "ln1_b", "wqkv", "bqkv", "wo", "bo",
                     "ln2_g", "ln2_b", "w1", "b1", "w2", "b2"]


# ----------------------------------------------------------------------------
# small math helpers (used inside kernels AND in the pure-JAX reference)
# ----------------------------------------------------------------------------
def _elu(x):
    return jnp.where(x > 0, x, jnp.exp(jnp.minimum(x, 0.0)) - 1.0)


def _gelu(x):
    # exact (erf-based) GELU, matching torch.nn.GELU() default
    return 0.5 * x * (1.0 + lax.erf(x * 0.7071067811865476))


def _layernorm(x, g, b, eps=1e-5):
    mu = jnp.mean(x, axis=-1, keepdims=True)
    var = jnp.mean((x - mu) ** 2, axis=-1, keepdims=True)
    return (x - mu) * lax.rsqrt(var + eps) * g + b


# ----------------------------------------------------------------------------
# Kernel A: fused PatchEmbedding (conv1 o conv2 o BN -> ELU -> AvgPool -> proj)
#   per-batch program; all work on the VMEM-resident (22, T) slab.
#   Layout: time on the lane axis, channels on the sublane axis.
# ----------------------------------------------------------------------------
def patch_embed_kernel(x_ref, w_ref, scale_ref, bias_ref, pmat_ref,
                       pw_ref, pb_ref, o_ref, *, kw, t_out):
    x = x_ref[0]                                    # (22, T)
    w = w_ref[...]                                  # (40, kw*22), col = k*22 + h

    # composed temporal+spatial conv as kw shifted small matmuls (in-VMEM
    # "im2col" without materializing a 25x slab in HBM)
    acc = jnp.zeros((w.shape[0], t_out), jnp.float32)      # (40, Tc)
    for k in range(kw):
        acc = acc + jnp.dot(w[:, k * EEG_CH:(k + 1) * EEG_CH],
                            x[:, k:k + t_out],
                            preferred_element_type=jnp.float32)

    # folded BatchNorm (scale/bias per output channel) + ELU
    y = _elu(acc * scale_ref[...] + bias_ref[...])          # (40, Tc)

    # AvgPool2d((1,75),(1,15)) as a matmul against the pooling matrix
    pooled = jnp.dot(y, pmat_ref[...], preferred_element_type=jnp.float32)  # (40, n_tok)

    # 1x1 projection conv: (n_tok, EMB) = pooled^T @ proj_w + proj_b
    z = lax.dot_general(pooled, pw_ref[...], (((0,), (0,)), ((), ())),
                        preferred_element_type=jnp.float32)                 # (n_tok, EMB)
    o_ref[0] = z + pb_ref[...]


def patch_embed(x, w_eff, scale, bias, pmat, proj_w, proj_b):
    B, H, T = x.shape
    Tc, n_tok = pmat.shape
    return pl.pallas_call(
        functools.partial(patch_embed_kernel, kw=CONV_KW, t_out=Tc),
        grid=(B,),
        in_specs=[pl.BlockSpec((1, H, T), lambda b: (b, 0, 0)),
                  pl.BlockSpec(w_eff.shape, lambda b: (0, 0)),
                  pl.BlockSpec(scale.shape, lambda b: (0, 0)),
                  pl.BlockSpec(bias.shape, lambda b: (0, 0)),
                  pl.BlockSpec(pmat.shape, lambda b: (0, 0)),
                  pl.BlockSpec(proj_w.shape, lambda b: (0, 0)),
                  pl.BlockSpec(proj_b.shape, lambda b: (0, 0))],
        out_specs=pl.BlockSpec((1, n_tok, EMB), lambda b: (b, 0, 0)),
        out_shape=jax.ShapeDtypeStruct((B, n_tok, EMB), jnp.float32),
        compiler_params=pltpu.CompilerParams(dimension_semantics=("parallel",)),
    )(x.astype(jnp.float32), w_eff, scale, bias, pmat, proj_w, proj_b)


# ----------------------------------------------------------------------------
# Kernel B: the ENTIRE TransformerEncoder in one pallas_call.
#   grid = (B, DEPTH); the output block (b, 0, 0) is revisited across the
#   depth axis, so z stays resident in VMEM between blocks (no HBM round
#   trips, no per-block launches).  Q/K/V are one fused matmul; attention
#   heads are batched einsums (one softmax for all heads).
# ----------------------------------------------------------------------------
def encoder_kernel(x_ref, ln1g, ln1b, wqkv, bqkv, wo, bo,
                   ln2g, ln2b, w1, b1, w2, b2, o_ref, *, num_heads):
    d_idx = pl.program_id(1)

    @pl.when(d_idx == 0)
    def _():                                    # load fresh tokens for this batch row
        o_ref[0] = x_ref[0]

    x = o_ref[0]                                # (N, E), resident across depth
    n_tok, emb = x.shape
    dh = emb // num_heads
    inv_scale = 1.0 / (float(emb) ** 0.5)       # / emb_size ** (1/2)

    # ---- attention sub-block (ResidualAdd around LN -> MHA) ----
    xn = _layernorm(x, ln1g[0], ln1b[0])
    qkv = jnp.dot(xn, wqkv[0], preferred_element_type=jnp.float32) + bqkv[0]  # (N, 3E)
    q = qkv[:, 0 * emb:1 * emb]
    k = qkv[:, 1 * emb:2 * emb]
    v = qkv[:, 2 * emb:3 * emb]

    # 'b n (h d) -> b h n d' (h-major split), batched over heads
    qh = jnp.stack([q[:, h * dh:(h + 1) * dh] for h in range(num_heads)], axis=0)
    kh = jnp.stack([k[:, h * dh:(h + 1) * dh] for h in range(num_heads)], axis=0)
    vh = jnp.stack([v[:, h * dh:(h + 1) * dh] for h in range(num_heads)], axis=0)

    energy = jnp.einsum('hnd,hmd->hnm', qh, kh,
                        preferred_element_type=jnp.float32)        # (H, N, N)
    e = energy * inv_scale
    e = e - jnp.max(e, axis=-1, keepdims=True)
    p = jnp.exp(e)
    att = p / jnp.sum(p, axis=-1, keepdims=True)                   # softmax(dim=-1)
    ctx = jnp.einsum('hnm,hmd->hnd', att, vh,
                     preferred_element_type=jnp.float32)           # (H, N, dh)

    att_out = jnp.concatenate([ctx[h] for h in range(num_heads)], axis=-1)  # (N, E)
    att_out = jnp.dot(att_out, wo[0], preferred_element_type=jnp.float32) + bo[0]
    x = x + att_out                                                 # ResidualAdd

    # ---- feed-forward sub-block (ResidualAdd around LN -> FFN) ----
    xn2 = _layernorm(x, ln2g[0], ln2b[0])
    hdn = jnp.dot(xn2, w1[0], preferred_element_type=jnp.float32) + b1[0]
    hdn = _gelu(hdn)
    hdn = jnp.dot(hdn, w2[0], preferred_element_type=jnp.float32) + b2[0]
    o_ref[0] = x + hdn                                              # ResidualAdd


def transformer_encoder(z, stacked):
    B, N, E = z.shape
    args = [stacked[n] for n in BLOCK_PARAM_NAMES]
    in_specs = [pl.BlockSpec((1, N, E), lambda b, d: (b, 0, 0))]
    in_specs += [pl.BlockSpec((1,) + a.shape[1:], lambda b, d: (d, 0, 0))
                 for a in args]
    return pl.pallas_call(
        functools.partial(encoder_kernel, num_heads=N_HEADS),
        grid=(B, DEPTH),
        in_specs=in_specs,
        out_specs=pl.BlockSpec((1, N, E), lambda b, d: (b, 0, 0)),
        out_shape=jax.ShapeDtypeStruct((B, N, E), jnp.float32),
        compiler_params=pltpu.CompilerParams(
            dimension_semantics=("parallel", "arbitrary")),
    )(z, *args)


# ----------------------------------------------------------------------------
# Kernel C: fused 3-layer ClassificationHead (fc1+ELU, fc2+ELU, fc3)
# ----------------------------------------------------------------------------
def head_kernel(x_ref, w1, b1, w2, b2, w3, b3, o_ref):
    h = _elu(jnp.dot(x_ref[...], w1[...], preferred_element_type=jnp.float32) + b1[...])
    h = _elu(jnp.dot(h, w2[...], preferred_element_type=jnp.float32) + b2[...])
    o_ref[...] = jnp.dot(h, w3[...], preferred_element_type=jnp.float32) + b3[...]


def class_head(feats, params):
    B = feats.shape[0]
    return pl.pallas_call(
        head_kernel,
        out_shape=jax.ShapeDtypeStruct((B, N_CLASSES), jnp.float32),
    )(feats,
      params["fc1_w"], params["fc1_b"].reshape(1, -1),
      params["fc2_w"], params["fc2_b"].reshape(1, -1),
      params["fc3_w"], params["fc3_b"].reshape(1, -1))


# ----------------------------------------------------------------------------
# parameter folding / stacking shared by the Pallas path and the reference
# ----------------------------------------------------------------------------
def stack_blocks(blocks):
    st = {}
    for n in ["ln1_g", "ln1_b", "wo", "bo", "ln2_g", "ln2_b", "w1", "b1", "w2", "b2"]:
        st[n] = jnp.stack([blk[n] for blk in blocks], axis=0)
    st["wqkv"] = jnp.stack([jnp.concatenate([blk["wq"], blk["wk"], blk["wv"]], axis=1)
                            for blk in blocks], axis=0)              # (D, E, 3E)
    st["bqkv"] = jnp.stack([jnp.concatenate([blk["bq"], blk["bk"], blk["bv"]], axis=1)
                            for blk in blocks], axis=0)              # (D, 1, 3E)
    return st


def _prepare(params, Tc, n_tok):
    # fold Conv2d(1,40,(1,25)) o Conv2d(40,40,(22,1)) o BatchNorm2d(40):
    # all linear, no nonlinearity between them in the reference shallownet.
    w2r = params["conv2_w"].reshape(40, EEG_CH, 40)                  # (ci, h, co)
    w_eff = jnp.einsum('kc,cho->okh', params["conv1_w"], w2r)        # (co, k, h)
    w_eff = w_eff.reshape(40, CONV_KW * EEG_CH)                      # col = k*22 + h
    b_eff = jnp.einsum('c,cho->o', params["conv1_b"], w2r) + params["conv2_b"]
    bn_scale = params["bn_g"] * lax.rsqrt(params["bn_var"] + 1e-5)
    scale = bn_scale.reshape(40, 1)
    bias = (b_eff * bn_scale + params["bn_b"]
            - params["bn_mean"] * bn_scale).reshape(40, 1)

    # pooling matrix for AvgPool2d((1,75),(1,15)): (Tc, n_tok)
    t = jnp.arange(Tc)[:, None]
    pp = jnp.arange(n_tok)[None, :]
    pmat = (((t >= POOL_S * pp) & (t < POOL_S * pp + POOL_W))
            .astype(jnp.float32) / float(POOL_W))

    return dict(w_eff=w_eff, scale=scale, bias=bias, pmat=pmat,
                stacked=stack_blocks(params["blocks"]))


# ----------------------------------------------------------------------------
# full forward pass (Pallas)
# ----------------------------------------------------------------------------
def conformer_forward(x, params):
    B, _, _, T = x.shape
    Tc = T - CONV_KW + 1
    n_tok = (Tc - POOL_W) // POOL_S + 1
    prep = _prepare(params, Tc, n_tok)

    # TODO(synk): the reference applies AdaptiveAvgPool2d(1)+rearrange('b e 1 1 -> b e'),
    # which collapses the token axis and makes MultiHeadAttention and
    # Linear(emb_size*22) shape-inconsistent; we keep the token axis
    # (standard EEG-Conformer 'b e h w -> b (h w) e') so the model is well-defined.
    z = patch_embed(x[:, 0], prep["w_eff"], prep["scale"], prep["bias"],
                    prep["pmat"], params["proj_w"],
                    params["proj_b"].reshape(1, EMB))                # (B, 22, 40)

    z = transformer_encoder(z, prep["stacked"])                      # (B, 22, 40)

    feats = z.reshape(B, n_tok * EMB)                                # torch .view(B, -1)
    logits = class_head(feats, params)                               # Dropouts identity
    return feats, logits


# ----------------------------------------------------------------------------
# pure-JAX reference forward (no Pallas) — same math, used for the check
# ----------------------------------------------------------------------------
def ref_forward(x, params):
    B, _, _, T = x.shape
    Tc = T - CONV_KW + 1
    n_tok = (Tc - POOL_W) // POOL_S + 1
    prep = _prepare(params, Tc, n_tok)
    xs = x[:, 0].astype(jnp.float32)                                 # (B, 22, T)

    acc = jnp.zeros((B, 40, Tc), jnp.float32)
    for k in range(CONV_KW):
        acc = acc + jnp.einsum('oc,bct->bot',
                               prep["w_eff"][:, k * EEG_CH:(k + 1) * EEG_CH],
                               xs[:, :, k:k + Tc])
    y = _elu(acc * prep["scale"][None] + prep["bias"][None])
    pooled = jnp.einsum('bot,tn->bon', y, prep["pmat"])
    z = jnp.einsum('bon,oe->bne', pooled, params["proj_w"]) + params["proj_b"]

    st = prep["stacked"]
    dh = EMB // N_HEADS
    inv_scale = 1.0 / (float(EMB) ** 0.5)
    for d in range(DEPTH):
        xn = _layernorm(z, st["ln1_g"][d], st["ln1_b"][d])
        qkv = jnp.einsum('bne,ef->bnf', xn, st["wqkv"][d]) + st["bqkv"][d]
        q, k_, v = qkv[..., :EMB], qkv[..., EMB:2 * EMB], qkv[..., 2 * EMB:]
        qh = q.reshape(B, n_tok, N_HEADS, dh)
        kh = k_.reshape(B, n_tok, N_HEADS, dh)
        vh = v.reshape(B, n_tok, N_HEADS, dh)
        energy = jnp.einsum('bnhd,bmhd->bhnm', qh, kh) * inv_scale
        att = jax.nn.softmax(energy, axis=-1)
        ctx = jnp.einsum('bhnm,bmhd->bnhd', att, vh).reshape(B, n_tok, EMB)
        z = z + (jnp.einsum('bne,ef->bnf', ctx, st["wo"][d]) + st["bo"][d])
        xn2 = _layernorm(z, st["ln2_g"][d], st["ln2_b"][d])
        h1 = _gelu(jnp.einsum('bne,ef->bnf', xn2, st["w1"][d]) + st["b1"][d])
        z = z + (jnp.einsum('bnf,fe->bne', h1, st["w2"][d]) + st["b2"][d])

    feats = z.reshape(B, n_tok * EMB)
    h = _elu(feats @ params["fc1_w"] + params["fc1_b"])
    h = _elu(h @ params["fc2_w"] + params["fc2_b"])
    logits = h @ params["fc3_w"] + params["fc3_b"]
    return feats, logits


# ----------------------------------------------------------------------------
# deterministic synthetic parameter init (shapes follow the PyTorch __init__)
# ----------------------------------------------------------------------------
def init_params(key):
    keys = iter(jax.random.split(key, 256))

    def w(shape, s=0.05):
        return jax.random.normal(next(keys), shape, jnp.float32) * s

    zeros = lambda s: jnp.zeros(s, jnp.float32)
    ones = lambda s: jnp.ones(s, jnp.float32)

    p = {
        # Conv2d(1, 40, (1, 25))  -> weight stored as (k=25, cout=40)
        "conv1_w": w((CONV_KW, 40)), "conv1_b": zeros((40,)),
        # Conv2d(40, 40, (22, 1)) -> weight stored as (ci*h=880, cout=40)
        "conv2_w": w((40 * EEG_CH, 40)), "conv2_b": zeros((40,)),
        # BatchNorm2d(40) running stats + affine
        "bn_g": ones((40,)), "bn_b": zeros((40,)),
        "bn_mean": zeros((40,)), "bn_var": ones((40,)),
        # projection Conv2d(40, emb, 1x1)
        "proj_w": w((40, EMB)), "proj_b": zeros((EMB,)),
        # classification head
        "fc1_w": w((EMB * SEQ_LEN, 256)), "fc1_b": zeros((256,)),
        "fc2_w": w((256, 32)), "fc2_b": zeros((32,)),
        "fc3_w": w((32, N_CLASSES)), "fc3_b": zeros((N_CLASSES,)),
        "blocks": [],
    }
    for _ in range(DEPTH):
        p["blocks"].append(dict(
            ln1_g=ones((1, EMB)), ln1_b=zeros((1, EMB)),
            wq=w((EMB, EMB)), bq=zeros((1, EMB)),
            wk=w((EMB, EMB)), bk=zeros((1, EMB)),
            wv=w((EMB, EMB)), bv=zeros((1, EMB)),
            wo=w((EMB, EMB)), bo=zeros((1, EMB)),
            ln2_g=ones((1, EMB)), ln2_b=zeros((1, EMB)),
            w1=w((EMB, 4 * EMB)), b1=zeros((1, 4 * EMB)),
            w2=w((4 * EMB, EMB)), b2=zeros((1, EMB)),
        ))
    return p


if __name__ == "__main__":
    # pick T so that the pooled token count is exactly 22
    # ((T - 25 + 1) - 75) // 15 + 1 == 22  ->  T = 414
    B, T = 2, 414
    assert ((T - CONV_KW + 1) - POOL_W) // POOL_S + 1 == SEQ_LEN

    key = jax.random.PRNGKey(0)
    kx, kp = jax.random.split(key)
    x = jax.random.normal(kx, (B, 1, EEG_CH, T), jnp.float32)   # NCHW, like torch
    params = init_params(kp)

    feats, logits = jax.jit(conformer_forward)(x, params)
    jax.block_until_ready((feats, logits))

    assert feats.shape == (B, EMB * SEQ_LEN)
    assert logits.shape == (B, N_CLASSES)
    assert bool(jnp.all(jnp.isfinite(feats))) and bool(jnp.all(jnp.isfinite(logits)))

    # correctness check vs pure-JAX reference (loose tolerance: XLA default
    # f32 matmul precision on TPU differs from Mosaic's in-kernel MXU passes)
    with jax.default_matmul_precision("float32"):
        feats_ref, logits_ref = jax.jit(ref_forward)(x, params)
    jax.block_until_ready((feats_ref, logits_ref))
    assert bool(jnp.allclose(feats, feats_ref, atol=1e-1, rtol=1e-1))
    assert bool(jnp.allclose(logits, logits_ref, atol=1e-1, rtol=1e-1))

    print("KERNEL_OK")
</pallas_src>

<mosaic_0001>
module attributes {stable_mosaic.version = 11 : i64} {
  func.func @patch_embed_kernel(%arg0: i32, %arg1: memref<1x22x414xf32, #tpu.memory_space<vmem>>, %arg2: memref<40x550xf32, #tpu.memory_space<vmem>>, %arg3: memref<40x1xf32, #tpu.memory_space<vmem>>, %arg4: memref<40x1xf32, #tpu.memory_space<vmem>>, %arg5: memref<390x22xf32, #tpu.memory_space<vmem>>, %arg6: memref<40x40xf32, #tpu.memory_space<vmem>>, %arg7: memref<1x40xf32, #tpu.memory_space<vmem>>, %arg8: memref<1x22x40xf32, #tpu.memory_space<vmem>>) attributes {dimension_semantics = [#tpu.dimension_semantics<parallel>], iteration_bounds = array<i64: 2>, scalar_prefetch = 0 : i64, scratch_operands = 0 : i64, tpu.core_type = #tpu.core_type<tc>, window_params = [{transform_indices = @transform_0, window_bounds = array<i64: 1, 22, 414>}, {pipeline_mode = #tpu.pipeline_mode<synchronous>, transform_indices = @transform_1, window_bounds = array<i64: 40, 550>}, {pipeline_mode = #tpu.pipeline_mode<synchronous>, transform_indices = @transform_2, window_bounds = array<i64: 40, 1>}, {pipeline_mode = #tpu.pipeline_mode<synchronous>, transform_indices = @transform_3, window_bounds = array<i64: 40, 1>}, {pipeline_mode = #tpu.pipeline_mode<synchronous>, transform_indices = @transform_4, window_bounds = array<i64: 390, 22>}, {pipeline_mode = #tpu.pipeline_mode<synchronous>, transform_indices = @transform_5, window_bounds = array<i64: 40, 40>}, {pipeline_mode = #tpu.pipeline_mode<synchronous>, transform_indices = @transform_6, window_bounds = array<i64: 1, 40>}, {transform_indices = @transform_7, window_bounds = array<i64: 1, 22, 40>}]} {
    %c0 = arith.constant 0 : index
    %c0_0 = arith.constant 0 : index
    %c0_1 = arith.constant 0 : index
    %0 = vector.load %arg1[%c0, %c0_0, %c0_1] : memref<1x22x414xf32, #tpu.memory_space<vmem>>, vector<1x22x414xf32>
    %1 = vector.shape_cast %0 : vector<1x22x414xf32> to vector<22x414xf32>
    %c0_2 = arith.constant 0 : index
    %c0_3 = arith.constant 0 : index
    %2 = vector.load %arg2[%c0_2, %c0_3] : memref<40x550xf32, #tpu.memory_space<vmem>>, vector<40x550xf32>
    %cst = arith.constant 0.000000e+00 : f32
    %3 = vector.broadcast %cst : f32 to vector<40x390xf32>
    %4 = vector.extract_strided_slice %2 {offsets = [0, 0], sizes = [40, 22], strides = [1, 1]} : vector<40x550xf32> to vector<40x22xf32>
    %5 = vector.extract_strided_slice %1 {offsets = [0, 0], sizes = [22, 390], strides = [1, 1]} : vector<22x414xf32> to vector<22x390xf32>
    %cst_4 = arith.constant dense<0.000000e+00> : vector<40x390xf32>
    %6 = tpu.matmul %4, %5, %cst_4 {dimension_numbers = #tpu.dot_dimension_numbers<[1], [0], [0], [1], [0, 0, 1, 1], [], []>} : vector<40x22xf32>, vector<22x390xf32>, vector<40x390xf32> -> vector<40x390xf32>
    %7 = arith.addf %3, %6 : vector<40x390xf32>
    %8 = vector.extract_strided_slice %2 {offsets = [0, 22], sizes = [40, 22], strides = [1, 1]} : vector<40x550xf32> to vector<40x22xf32>
    %9 = vector.extract_strided_slice %1 {offsets = [0, 1], sizes = [22, 390], strides = [1, 1]} : vector<22x414xf32> to vector<22x390xf32>
    %cst_5 = arith.constant dense<0.000000e+00> : vector<40x390xf32>
    %10 = tpu.matmul %8, %9, %cst_5 {dimension_numbers = #tpu.dot_dimension_numbers<[1], [0], [0], [1], [0, 0, 1, 1], [], []>} : vector<40x22xf32>, vector<22x390xf32>, vector<40x390xf32> -> vector<40x390xf32>
    %11 = arith.addf %7, %10 : vector<40x390xf32>
    %12 = vector.extract_strided_slice %2 {offsets = [0, 44], sizes = [40, 22], strides = [1, 1]} : vector<40x550xf32> to vector<40x22xf32>
    %13 = vector.extract_strided_slice %1 {offsets = [0, 2], sizes = [22, 390], strides = [1, 1]} : vector<22x414xf32> to vector<22x390xf32>
    %cst_6 = arith.constant dense<0.000000e+00> : vector<40x390xf32>
    %14 = tpu.matmul %12, %13, %cst_6 {dimension_numbers = #tpu.dot_dimension_numbers<[1], [0], [0], [1], [0, 0, 1, 1], [], []>} : vector<40x22xf32>, vector<22x390xf32>, vector<40x390xf32> -> vector<40x390xf32>
    %15 = arith.addf %11, %14 : vector<40x390xf32>
    %16 = vector.extract_strided_slice %2 {offsets = [0, 66], sizes = [40, 22], strides = [1, 1]} : vector<40x550xf32> to vector<40x22xf32>
    %17 = vector.extract_strided_slice %1 {offsets = [0, 3], sizes = [22, 390], strides = [1, 1]} : vector<22x414xf32> to vector<22x390xf32>
    %cst_7 = arith.constant dense<0.000000e+00> : vector<40x390xf32>
    %18 = tpu.matmul %16, %17, %cst_7 {dimension_numbers = #tpu.dot_dimension_numbers<[1], [0], [0], [1], [0, 0, 1, 1], [], []>} : vector<40x22xf32>, vector<22x390xf32>, vector<40x390xf32> -> vector<40x390xf32>
    %19 = arith.addf %15, %18 : vector<40x390xf32>
    %20 = vector.extract_strided_slice %2 {offsets = [0, 88], sizes = [40, 22], strides = [1, 1]} : vector<40x550xf32> to vector<40x22xf32>
    %21 = vector.extract_strided_slice %1 {offsets = [0, 4], sizes = [22, 390], strides = [1, 1]} : vector<22x414xf32> to vector<22x390xf32>
    %cst_8 = arith.constant dense<0.000000e+00> : vector<40x390xf32>
    %22 = tpu.matmul %20, %21, %cst_8 {dimension_numbers = #tpu.dot_dimension_numbers<[1], [0], [0], [1], [0, 0, 1, 1], [], []>} : vector<40x22xf32>, vector<22x390xf32>, vector<40x390xf32> -> vector<40x390xf32>
    %23 = arith.addf %19, %22 : vector<40x390xf32>
    %24 = vector.extract_strided_slice %2 {offsets = [0, 110], sizes = [40, 22], strides = [1, 1]} : vector<40x550xf32> to vector<40x22xf32>
    %25 = vector.extract_strided_slice %1 {offsets = [0, 5], sizes = [22, 390], strides = [1, 1]} : vector<22x414xf32> to vector<22x390xf32>
    %cst_9 = arith.constant dense<0.000000e+00> : vector<40x390xf32>
    %26 = tpu.matmul %24, %25, %cst_9 {dimension_numbers = #tpu.dot_dimension_numbers<[1], [0], [0], [1], [0, 0, 1, 1], [], []>} : vector<40x22xf32>, vector<22x390xf32>, vector<40x390xf32> -> vector<40x390xf32>
    %27 = arith.addf %23, %26 : vector<40x390xf32>
    %28 = vector.extract_strided_slice %2 {offsets = [0, 132], sizes = [40, 22], strides = [1, 1]} : vector<40x550xf32> to vector<40x22xf32>
    %29 = vector.extract_strided_slice %1 {offsets = [0, 6], sizes = [22, 390], strides = [1, 1]} : vector<22x414xf32> to vector<22x390xf32>
    %cst_10 = arith.constant dense<0.000000e+00> : vector<40x390xf32>
    %30 = tpu.matmul %28, %29, %cst_10 {dimension_numbers = #tpu.dot_dimension_numbers<[1], [0], [0], [1], [0, 0, 1, 1], [], []>} : vector<40x22xf32>, vector<22x390xf32>, vector<40x390xf32> -> vector<40x390xf32>
    %31 = arith.addf %27, %30 : vector<40x390xf32>
    %32 = vector.extract_strided_slice %2 {offsets = [0, 154], sizes = [40, 22], strides = [1, 1]} : vector<40x550xf32> to vector<40x22xf32>
    %33 = vector.extract_strided_slice %1 {offsets = [0, 7], sizes = [22, 390], strides = [1, 1]} : vector<22x414xf32> to vector<22x390xf32>
    %cst_11 = arith.constant dense<0.000000e+00> : vector<40x390xf32>
    %34 = tpu.matmul %32, %33, %cst_11 {dimension_numbers = #tpu.dot_dimension_numbers<[1], [0], [0], [1], [0, 0, 1, 1], [], []>} : vector<40x22xf32>, vector<22x390xf32>, vector<40x390xf32> -> vector<40x390xf32>
    %35 = arith.addf %31, %34 : vector<40x390xf32>
    %36 = vector.extract_strided_slice %2 {offsets = [0, 176], sizes = [40, 22], strides = [1, 1]} : vector<40x550xf32> to vector<40x22xf32>
    %37 = vector.extract_strided_slice %1 {offsets = [0, 8], sizes = [22, 390], strides = [1, 1]} : vector<22x414xf32> to vector<22x390xf32>
    %cst_12 = arith.constant dense<0.000000e+00> : vector<40x390xf32>
    %38 = tpu.matmul %36, %37, %cst_12 {dimension_numbers = #tpu.dot_dimension_numbers<[1], [0], [0], [1], [0, 0, 1, 1], [], []>} : vector<40x22xf32>, vector<22x390xf32>, vector<40x390xf32> -> vector<40x390xf32>
    %39 = arith.addf %35, %38 : vector<40x390xf32>
    %40 = vector.extract_strided_slice %2 {offsets = [0, 198], sizes = [40, 22], strides = [1, 1]} : vector<40x550xf32> to vector<40x22xf32>
    %41 = vector.extract_strided_slice %1 {offsets = [0, 9], sizes = [22, 390], strides = [1, 1]} : vector<22x414xf32> to vector<22x390xf32>
    %cst_13 = arith.constant dense<0.000000e+00> : vector<40x390xf32>
    %42 = tpu.matmul %40, %41, %cst_13 {dimension_numbers = #tpu.dot_dimension_numbers<[1], [0], [0], [1], [0, 0, 1, 1], [], []>} : vector<40x22xf32>, vector<22x390xf32>, vector<40x390xf32> -> vector<40x390xf32>
    %43 = arith.addf %39, %42 : vector<40x390xf32>
    %44 = vector.extract_strided_slice %2 {offsets = [0, 220], sizes = [40, 22], strides = [1, 1]} : vector<40x550xf32> to vector<40x22xf32>
    %45 = vector.extract_strided_slice %1 {offsets = [0, 10], sizes = [22, 390], strides = [1, 1]} : vector<22x414xf32> to vector<22x390xf32>
    %cst_14 = arith.constant dense<0.000000e+00> : vector<40x390xf32>
    %46 = tpu.matmul %44, %45, %cst_14 {dimension_numbers = #tpu.dot_dimension_numbers<[1], [0], [0], [1], [0, 0, 1, 1], [], []>} : vector<40x22xf32>, vector<22x390xf32>, vector<40x390xf32> -> vector<40x390xf32>
    %47 = arith.addf %43, %46 : vector<40x390xf32>
    %48 = vector.extract_strided_slice %2 {offsets = [0, 242], sizes = [40, 22], strides = [1, 1]} : vector<40x550xf32> to vector<40x22xf32>
    %49 = vector.extract_strided_slice %1 {offsets = [0, 11], sizes = [22, 390], strides = [1, 1]} : vector<22x414xf32> to vector<22x390xf32>
    %cst_15 = arith.constant dense<0.000000e+00> : vector<40x390xf32>
    %50 = tpu.matmul %48, %49, %cst_15 {dimension_numbers = #tpu.dot_dimension_numbers<[1], [0], [0], [1], [0, 0, 1, 1], [], []>} : vector<40x22xf32>, vector<22x390xf32>, vector<40x390xf32> -> vector<40x390xf32>
    %51 = arith.addf %47, %50 : vector<40x390xf32>
    %52 = vector.extract_strided_slice %2 {offsets = [0, 264], sizes = [40, 22], strides = [1, 1]} : vector<40x550xf32> to vector<40x22xf32>
    %53 = vector.extract_strided_slice %1 {offsets = [0, 12], sizes = [22, 390], strides = [1, 1]} : vector<22x414xf32> to vector<22x390xf32>
    %cst_16 = arith.constant dense<0.000000e+00> : vector<40x390xf32>
    %54 = tpu.matmul %52, %53, %cst_16 {dimension_numbers = #tpu.dot_dimension_numbers<[1], [0], [0], [1], [0, 0, 1, 1], [], []>} : vector<40x22xf32>, vector<22x390xf32>, vector<40x390xf32> -> vector<40x390xf32>
    %55 = arith.addf %51, %54 : vector<40x390xf32>
    %56 = vector.extract_strided_slice %2 {offsets = [0, 286], sizes = [40, 22], strides = [1, 1]} : vector<40x550xf32> to vector<40x22xf32>
    %57 = vector.extract_strided_slice %1 {offsets = [0, 13], sizes = [22, 390], strides = [1, 1]} : vector<22x414xf32> to vector<22x390xf32>
    %cst_17 = arith.constant dense<0.000000e+00> : vector<40x390xf32>
    %58 = tpu.matmul %56, %57, %cst_17 {dimension_numbers = #tpu.dot_dimension_numbers<[1], [0], [0], [1], [0, 0, 1, 1], [], []>} : vector<40x22xf32>, vector<22x390xf32>, vector<40x390xf32> -> vector<40x390xf32>
    %59 = arith.addf %55, %58 : vector<40x390xf32>
    %60 = vector.extract_strided_slice %2 {offsets = [0, 308], sizes = [40, 22], strides = [1, 1]} : vector<40x550xf32> to vector<40x22xf32>
    %61 = vector.extract_strided_slice %1 {offsets = [0, 14], sizes = [22, 390], strides = [1, 1]} : vector<22x414xf32> to vector<22x390xf32>
    %cst_18 = arith.constant dense<0.000000e+00> : vector<40x390xf32>
    %62 = tpu.matmul %60, %61, %cst_18 {dimension_numbers = #tpu.dot_dimension_numbers<[1], [0], [0], [1], [0, 0, 1, 1], [], []>} : vector<40x22xf32>, vector<22x390xf32>, vector<40x390xf32> -> vector<40x390xf32>
    %63 = arith.addf %59, %62 : vector<40x390xf32>
    %64 = vector.extract_strided_slice %2 {offsets = [0, 330], sizes = [40, 22], strides = [1, 1]} : vector<40x550xf32> to vector<40x22xf32>
    %65 = vector.extract_strided_slice %1 {offsets = [0, 15], sizes = [22, 390], strides = [1, 1]} : vector<22x414xf32> to vector<22x390xf32>
    %cst_19 = arith.constant dense<0.000000e+00> : vector<40x390xf32>
    %66 = tpu.matmul %64, %65, %cst_19 {dimension_numbers = #tpu.dot_dimension_numbers<[1], [0], [0], [1], [0, 0, 1, 1], [], []>} : vector<40x22xf32>, vector<22x390xf32>, vector<40x390xf32> -> vector<40x390xf32>
    %67 = arith.addf %63, %66 : vector<40x390xf32>
    %68 = vector.extract_strided_slice %2 {offsets = [0, 352], sizes = [40, 22], strides = [1, 1]} : vector<40x550xf32> to vector<40x22xf32>
    %69 = vector.extract_strided_slice %1 {offsets = [0, 16], sizes = [22, 390], strides = [1, 1]} : vector<22x414xf32> to vector<22x390xf32>
    %cst_20 = arith.constant dense<0.000000e+00> : vector<40x390xf32>
    %70 = tpu.matmul %68, %69, %cst_20 {dimension_numbers = #tpu.dot_dimension_numbers<[1], [0], [0], [1], [0, 0, 1, 1], [], []>} : vector<40x22xf32>, vector<22x390xf32>, vector<40x390xf32> -> vector<40x390xf32>
    %71 = arith.addf %67, %70 : vector<40x390xf32>
    %72 = vector.extract_strided_slice %2 {offsets = [0, 374], sizes = [40, 22], strides = [1, 1]} : vector<40x550xf32> to vector<40x22xf32>
    %73 = vector.extract_strided_slice %1 {offsets = [0, 17], sizes = [22, 390], strides = [1, 1]} : vector<22x414xf32> to vector<22x390xf32>
    %cst_21 = arith.constant dense<0.000000e+00> : vector<40x390xf32>
    %74 = tpu.matmul %72, %73, %cst_21 {dimension_numbers = #tpu.dot_dimension_numbers<[1], [0], [0], [1], [0, 0, 1, 1], [], []>} : vector<40x22xf32>, vector<22x390xf32>, vector<40x390xf32> -> vector<40x390xf32>
    %75 = arith.addf %71, %74 : vector<40x390xf32>
    %76 = vector.extract_strided_slice %2 {offsets = [0, 396], sizes = [40, 22], strides = [1, 1]} : vector<40x550xf32> to vector<40x22xf32>
    %77 = vector.extract_strided_slice %1 {offsets = [0, 18], sizes = [22, 390], strides = [1, 1]} : vector<22x414xf32> to vector<22x390xf32>
    %cst_22 = arith.constant dense<0.000000e+00> : vector<40x390xf32>
    %78 = tpu.matmul %76, %77, %cst_22 {dimension_numbers = #tpu.dot_dimension_numbers<[1], [0], [0], [1], [0, 0, 1, 1], [], []>} : vector<40x22xf32>, vector<22x390xf32>, vector<40x390xf32> -> vector<40x390xf32>
    %79 = arith.addf %75, %78 : vector<40x390xf32>
    %80 = vector.extract_strided_slice %2 {offsets = [0, 418], sizes = [40, 22], strides = [1, 1]} : vector<40x550xf32> to vector<40x22xf32>
    %81 = vector.extract_strided_slice %1 {offsets = [0, 19], sizes = [22, 390], strides = [1, 1]} : vector<22x414xf32> to vector<22x390xf32>
    %cst_23 = arith.constant dense<0.000000e+00> : vector<40x390xf32>
    %82 = tpu.matmul %80, %81, %cst_23 {dimension_numbers = #tpu.dot_dimension_numbers<[1], [0], [0], [1], [0, 0, 1, 1], [], []>} : vector<40x22xf32>, vector<22x390xf32>, vector<40x390xf32> -> vector<40x390xf32>
    %83 = arith.addf %79, %82 : vector<40x390xf32>
    %84 = vector.extract_strided_slice %2 {offsets = [0, 440], sizes = [40, 22], strides = [1, 1]} : vector<40x550xf32> to vector<40x22xf32>
    %85 = vector.extract_strided_slice %1 {offsets = [0, 20], sizes = [22, 390], strides = [1, 1]} : vector<22x414xf32> to vector<22x390xf32>
    %cst_24 = arith.constant dense<0.000000e+00> : vector<40x390xf32>
    %86 = tpu.matmul %84, %85, %cst_24 {dimension_numbers = #tpu.dot_dimension_numbers<[1], [0], [0], [1], [0, 0, 1, 1], [], []>} : vector<40x22xf32>, vector<22x390xf32>, vector<40x390xf32> -> vector<40x390xf32>
    %87 = arith.addf %83, %86 : vector<40x390xf32>
    %88 = vector.extract_strided_slice %2 {offsets = [0, 462], sizes = [40, 22], strides = [1, 1]} : vector<40x550xf32> to vector<40x22xf32>
    %89 = vector.extract_strided_slice %1 {offsets = [0, 21], sizes = [22, 390], strides = [1, 1]} : vector<22x414xf32> to vector<22x390xf32>
    %cst_25 = arith.constant dense<0.000000e+00> : vector<40x390xf32>
    %90 = tpu.matmul %88, %89, %cst_25 {dimension_numbers = #tpu.dot_dimension_numbers<[1], [0], [0], [1], [0, 0, 1, 1], [], []>} : vector<40x22xf32>, vector<22x390xf32>, vector<40x390xf32> -> vector<40x390xf32>
    %91 = arith.addf %87, %90 : vector<40x390xf32>
    %92 = vector.extract_strided_slice %2 {offsets = [0, 484], sizes = [40, 22], strides = [1, 1]} : vector<40x550xf32> to vector<40x22xf32>
    %93 = vector.extract_strided_slice %1 {offsets = [0, 22], sizes = [22, 390], strides = [1, 1]} : vector<22x414xf32> to vector<22x390xf32>
    %cst_26 = arith.constant dense<0.000000e+00> : vector<40x390xf32>
    %94 = tpu.matmul %92, %93, %cst_26 {dimension_numbers = #tpu.dot_dimension_numbers<[1], [0], [0], [1], [0, 0, 1, 1], [], []>} : vector<40x22xf32>, vector<22x390xf32>, vector<40x390xf32> -> vector<40x390xf32>
    %95 = arith.addf %91, %94 : vector<40x390xf32>
    %96 = vector.extract_strided_slice %2 {offsets = [0, 506], sizes = [40, 22], strides = [1, 1]} : vector<40x550xf32> to vector<40x22xf32>
    %97 = vector.extract_strided_slice %1 {offsets = [0, 23], sizes = [22, 390], strides = [1, 1]} : vector<22x414xf32> to vector<22x390xf32>
    %cst_27 = arith.constant dense<0.000000e+00> : vector<40x390xf32>
    %98 = tpu.matmul %96, %97, %cst_27 {dimension_numbers = #tpu.dot_dimension_numbers<[1], [0], [0], [1], [0, 0, 1, 1], [], []>} : vector<40x22xf32>, vector<22x390xf32>, vector<40x390xf32> -> vector<40x390xf32>
    %99 = arith.addf %95, %98 : vector<40x390xf32>
    %100 = vector.extract_strided_slice %2 {offsets = [0, 528], sizes = [40, 22], strides = [1, 1]} : vector<40x550xf32> to vector<40x22xf32>
    %101 = vector.extract_strided_slice %1 {offsets = [0, 24], sizes = [22, 390], strides = [1, 1]} : vector<22x414xf32> to vector<22x390xf32>
    %cst_28 = arith.constant dense<0.000000e+00> : vector<40x390xf32>
    %102 = tpu.matmul %100, %101, %cst_28 {dimension_numbers = #tpu.dot_dimension_numbers<[1], [0], [0], [1], [0, 0, 1, 1], [], []>} : vector<40x22xf32>, vector<22x390xf32>, vector<40x390xf32> -> vector<40x390xf32>
    %103 = arith.addf %99, %102 : vector<40x390xf32>
    %c0_29 = arith.constant 0 : index
    %c0_30 = arith.constant 0 : index
    %104 = vector.load %arg3[%c0_29, %c0_30] : memref<40x1xf32, #tpu.memory_space<vmem>>, vector<40x1xf32>
    %105 = vector.broadcast %104 : vector<40x1xf32> to vector<40x390xf32>
    %106 = arith.mulf %103, %105 : vector<40x390xf32>
    %c0_31 = arith.constant 0 : index
    %c0_32 = arith.constant 0 : index
    %107 = vector.load %arg4[%c0_31, %c0_32] : memref<40x1xf32, #tpu.memory_space<vmem>>, vector<40x1xf32>
    %108 = vector.broadcast %107 : vector<40x1xf32> to vector<40x390xf32>
    %109 = arith.addf %106, %108 : vector<40x390xf32>
    %cst_33 = arith.constant 0.000000e+00 : f32
    %110 = vector.broadcast %cst_33 : f32 to vector<40x390xf32>
    %111 = arith.cmpf ogt, %109, %110 : vector<40x390xf32>
    %cst_34 = arith.constant 0.000000e+00 : f32
    %112 = vector.broadcast %cst_34 : f32 to vector<40x390xf32>
    %113 = arith.minimumf %109, %112 : vector<40x390xf32>
    %114 = math.exp %113 : vector<40x390xf32>
    %cst_35 = arith.constant 1.000000e+00 : f32
    %115 = vector.broadcast %cst_35 : f32 to vector<40x390xf32>
    %116 = arith.subf %114, %115 : vector<40x390xf32>
    %117 = arith.select %111, %109, %116 : vector<40x390xi1>, vector<40x390xf32>
    %c0_36 = arith.constant 0 : index
    %c0_37 = arith.constant 0 : index
    %118 = vector.load %arg5[%c0_36, %c0_37] : memref<390x22xf32, #tpu.memory_space<vmem>>, vector<390x22xf32>
    %cst_38 = arith.constant dense<0.000000e+00> : vector<40x22xf32>
    %119 = tpu.matmul %117, %118, %cst_38 {dimension_numbers = #tpu.dot_dimension_numbers<[1], [0], [0], [1], [0, 0, 1, 1], [], []>} : vector<40x390xf32>, vector<390x22xf32>, vector<40x22xf32> -> vector<40x22xf32>
    %c0_39 = arith.constant 0 : index
    %c0_40 = arith.constant 0 : index
    %120 = vector.load %arg6[%c0_39, %c0_40] : memref<40x40xf32, #tpu.memory_space<vmem>>, vector<40x40xf32>
    %cst_41 = arith.constant dense<0.000000e+00> : vector<22x40xf32>
    %121 = tpu.matmul %119, %120, %cst_41 {dimension_numbers = #tpu.dot_dimension_numbers<[0], [0], [1], [1], [0, 1, 1, 1], [], []>} : vector<40x22xf32>, vector<40x40xf32>, vector<22x40xf32> -> vector<22x40xf32>
    %c0_42 = arith.constant 0 : index
    %c0_43 = arith.constant 0 : index
    %122 = vector.load %arg7[%c0_42, %c0_43] : memref<1x40xf32, #tpu.memory_space<vmem>>, vector<1x40xf32>
    %123 = vector.broadcast %122 : vector<1x40xf32> to vector<22x40xf32>
    %124 = arith.addf %121, %123 : vector<22x40xf32>
    %c0_44 = arith.constant 0 : index
    %c0_45 = arith.constant 0 : index
    %c0_46 = arith.constant 0 : index
    %125 = vector.load %arg8[%c0_44, %c0_45, %c0_46] : memref<1x22x40xf32, #tpu.memory_space<vmem>>, vector<1x22x40xf32>
    %126 = vector.shape_cast %125 : vector<1x22x40xf32> to vector<22x40xf32>
    %127 = vector.shape_cast %124 : vector<22x40xf32> to vector<1x22x40xf32>
    tpu.vector_store %arg8[%c0_44, %c0_45, %c0_46], %127 {strides = array<i32>} : memref<1x22x40xf32, #tpu.memory_space<vmem>>, vector<1x22x40xf32>,
    return
  }
  func.func @transform_0(%arg0: i32) -> (i32, i32, i32) {
    %c0_i32 = arith.constant 0 : i32
    %c0_i32_0 = arith.constant 0 : i32
    %c0_i32_1 = arith.constant 0 : i32
    return %arg0, %c0_i32, %c0_i32_0 : i32, i32, i32
  }
  func.func @transform_1(%arg0: i32) -> (i32, i32) {
    %c0_i32 = arith.constant 0 : i32
    %c0_i32_0 = arith.constant 0 : i32
    %c0_i32_1 = arith.constant 0 : i32
    return %c0_i32, %c0_i32_0 : i32, i32
  }
  func.func @transform_2(%arg0: i32) -> (i32, i32) {
    %c0_i32 = arith.constant 0 : i32
    %c0_i32_0 = arith.constant 0 : i32
    %c0_i32_1 = arith.constant 0 : i32
    return %c0_i32, %c0_i32_0 : i32, i32
  }
  func.func @transform_3(%arg0: i32) -> (i32, i32) {
    %c0_i32 = arith.constant 0 : i32
    %c0_i32_0 = arith.constant 0 : i32
    %c0_i32_1 = arith.constant 0 : i32
    return %c0_i32, %c0_i32_0 : i32, i32
  }
  func.func @transform_4(%arg0: i32) -> (i32, i32) {
    %c0_i32 = arith.constant 0 : i32
    %c0_i32_0 = arith.constant 0 : i32
    %c0_i32_1 = arith.constant 0 : i32
    return %c0_i32, %c0_i32_0 : i32, i32
  }
  func.func @transform_5(%arg0: i32) -> (i32, i32) {
    %c0_i32 = arith.constant 0 : i32
    %c0_i32_0 = arith.constant 0 : i32
    %c0_i32_1 = arith.constant 0 : i32
    return %c0_i32, %c0_i32_0 : i32, i32
  }
  func.func @transform_6(%arg0: i32) -> (i32, i32) {
    %c0_i32 = arith.constant 0 : i32
    %c0_i32_0 = arith.constant 0 : i32
    %c0_i32_1 = arith.constant 0 : i32
    return %c0_i32, %c0_i32_0 : i32, i32
  }
  func.func @transform_7(%arg0: i32) -> (i32, i32, i32) {
    %c0_i32 = arith.constant 0 : i32
    %c0_i32_0 = arith.constant 0 : i32
    %c0_i32_1 = arith.constant 0 : i32
    return %arg0, %c0_i32, %c0_i32_0 : i32, i32, i32
  }
}

module attributes {stable_mosaic.version = 11 : i64} {
  func.func @head_kernel(%arg0: memref<2x880xf32, #tpu.memory_space<vmem>>, %arg1: memref<880x256xf32, #tpu.memory_space<vmem>>, %arg2: memref<1x256xf32, #tpu.memory_space<vmem>>, %arg3: memref<256x32xf32, #tpu.memory_space<vmem>>, %arg4: memref<1x32xf32, #tpu.memory_space<vmem>>, %arg5: memref<32x4xf32, #tpu.memory_space<vmem>>, %arg6: memref<1x4xf32, #tpu.memory_space<vmem>>, %arg7: memref<2x4xf32, #tpu.memory_space<vmem>>) attributes {dimension_semantics = [], scalar_prefetch = 0 : i64, scratch_operands = 0 : i64, tpu.core_type = #tpu.core_type<tc>} {
    %c0 = arith.constant 0 : index
    %c0_0 = arith.constant 0 : index
    %0 = vector.load %arg0[%c0, %c0_0] : memref<2x880xf32, #tpu.memory_space<vmem>>, vector<2x880xf32>
    %c0_1 = arith.constant 0 : index
    %c0_2 = arith.constant 0 : index
    %1 = vector.load %arg1[%c0_1, %c0_2] : memref<880x256xf32, #tpu.memory_space<vmem>>, vector<880x256xf32>
    %cst = arith.constant dense<0.000000e+00> : vector<2x256xf32>
    %2 = tpu.matmul %0, %1, %cst {dimension_numbers = #tpu.dot_dimension_numbers<[1], [0], [0], [1], [0, 0, 1, 1], [], []>} : vector<2x880xf32>, vector<880x256xf32>, vector<2x256xf32> -> vector<2x256xf32>
    %c0_3 = arith.constant 0 : index
    %c0_4 = arith.constant 0 : index
    %3 = vector.load %arg2[%c0_3, %c0_4] : memref<1x256xf32, #tpu.memory_space<vmem>>, vector<1x256xf32>
    %4 = vector.broadcast %3 : vector<1x256xf32> to vector<2x256xf32>
    %5 = arith.addf %2, %4 : vector<2x256xf32>
    %cst_5 = arith.constant 0.000000e+00 : f32
    %6 = vector.broadcast %cst_5 : f32 to vector<2x256xf32>
    %7 = arith.cmpf ogt, %5, %6 : vector<2x256xf32>
    %cst_6 = arith.constant 0.000000e+00 : f32
    %8 = vector.broadcast %cst_6 : f32 to vector<2x256xf32>
    %9 = arith.minimumf %5, %8 : vector<2x256xf32>
    %10 = math.exp %9 : vector<2x256xf32>
    %cst_7 = arith.constant 1.000000e+00 : f32
    %11 = vector.broadcast %cst_7 : f32 to vector<2x256xf32>
    %12 = arith.subf %10, %11 : vector<2x256xf32>
    %13 = arith.select %7, %5, %12 : vector<2x256xi1>, vector<2x256xf32>
    %c0_8 = arith.constant 0 : index
    %c0_9 = arith.constant 0 : index
    %14 = vector.load %arg3[%c0_8, %c0_9] : memref<256x32xf32, #tpu.memory_space<vmem>>, vector<256x32xf32>
    %cst_10 = arith.constant dense<0.000000e+00> : vector<2x32xf32>
    %15 = tpu.matmul %13, %14, %cst_10 {dimension_numbers = #tpu.dot_dimension_numbers<[1], [0], [0], [1], [0, 0, 1, 1], [], []>} : vector<2x256xf32>, vector<256x32xf32>, vector<2x32xf32> -> vector<2x32xf32>
    %c0_11 = arith.constant 0 : index
    %c0_12 = arith.constant 0 : index
    %16 = vector.load %arg4[%c0_11, %c0_12] : memref<1x32xf32, #tpu.memory_space<vmem>>, vector<1x32xf32>
    %17 = vector.broadcast %16 : vector<1x32xf32> to vector<2x32xf32>
    %18 = arith.addf %15, %17 : vector<2x32xf32>
    %cst_13 = arith.constant 0.000000e+00 : f32
    %19 = vector.broadcast %cst_13 : f32 to vector<2x32xf32>
    %20 = arith.cmpf ogt, %18, %19 : vector<2x32xf32>
    %cst_14 = arith.constant 0.000000e+00 : f32
    %21 = vector.broadcast %cst_14 : f32 to vector<2x32xf32>
    %22 = arith.minimumf %18, %21 : vector<2x32xf32>
    %23 = math.exp %22 : vector<2x32xf32>
    %cst_15 = arith.constant 1.000000e+00 : f32
    %24 = vector.broadcast %cst_15 : f32 to vector<2x32xf32>
    %25 = arith.subf %23, %24 : vector<2x32xf32>
    %26 = arith.select %20, %18, %25 : vector<2x32xi1>, vector<2x32xf32>
    %c0_16 = arith.constant 0 : index
    %c0_17 = arith.constant 0 : index
    %27 = vector.load %arg5[%c0_16, %c0_17] : memref<32x4xf32, #tpu.memory_space<vmem>>, vector<32x4xf32>
    %cst_18 = arith.constant dense<0.000000e+00> : vector<2x4xf32>
    %28 = tpu.matmul %26, %27, %cst_18 {dimension_numbers = #tpu.dot_dimension_numbers<[1], [0], [0], [1], [0, 0, 1, 1], [], []>} : vector<2x32xf32>, vector<32x4xf32>, vector<2x4xf32> -> vector<2x4xf32>
    %c0_19 = arith.constant 0 : index
    %c0_20 = arith.constant 0 : index
    %29 = vector.load %arg6[%c0_19, %c0_20] : memref<1x4xf32, #tpu.memory_space<vmem>>, vector<1x4xf32>
    %30 = vector.broadcast %29 : vector<1x4xf32> to vector<2x4xf32>
    %31 = arith.addf %28, %30 : vector<2x4xf32>
    %c0_21 = arith.constant 0 : index
    %c0_22 = arith.constant 0 : index
    %32 = vector.load %arg7[%c0_21, %c0_22] : memref<2x4xf32, #tpu.memory_space<vmem>>, vector<2x4xf32>
    tpu.vector_store %arg7[%c0_21, %c0_22], %31 {strides = array<i32>} : memref<2x4xf32, #tpu.memory_space<vmem>>, vector<2x4xf32>,
    return
  }
}

module attributes {stable_mosaic.version = 11 : i64} {
  func.func @encoder_kernel(%arg0: i32, %arg1: i32, %arg2: memref<1x22x40xf32, #tpu.memory_space<vmem>>, %arg3: memref<1x1x40xf32, #tpu.memory_space<vmem>>, %arg4: memref<1x1x40xf32, #tpu.memory_space<vmem>>, %arg5: memref<1x40x120xf32, #tpu.memory_space<vmem>>, %arg6: memref<1x1x120xf32, #tpu.memory_space<vmem>>, %arg7: memref<1x40x40xf32, #tpu.memory_space<vmem>>, %arg8: memref<1x1x40xf32, #tpu.memory_space<vmem>>, %arg9: memref<1x1x40xf32, #tpu.memory_space<vmem>>, %arg10: memref<1x1x40xf32, #tpu.memory_space<vmem>>, %arg11: memref<1x40x160xf32, #tpu.memory_space<vmem>>, %arg12: memref<1x1x160xf32, #tpu.memory_space<vmem>>, %arg13: memref<1x160x40xf32, #tpu.memory_space<vmem>>, %arg14: memref<1x1x40xf32, #tpu.memory_space<vmem>>, %arg15: memref<1x22x40xf32, #tpu.memory_space<vmem>>) attributes {dimension_semantics = [#tpu.dimension_semantics<parallel>, #tpu.dimension_semantics<arbitrary>], iteration_bounds = array<i64: 2, 6>, scalar_prefetch = 0 : i64, scratch_operands = 0 : i64, tpu.core_type = #tpu.core_type<tc>, window_params = [{transform_indices = @transform_0, window_bounds = array<i64: 1, 22, 40>}, {transform_indices = @transform_1, window_bounds = array<i64: 1, 1, 40>}, {transform_indices = @transform_2, window_bounds = array<i64: 1, 1, 40>}, {transform_indices = @transform_3, window_bounds = array<i64: 1, 40, 120>}, {transform_indices = @transform_4, window_bounds = array<i64: 1, 1, 120>}, {transform_indices = @transform_5, window_bounds = array<i64: 1, 40, 40>}, {transform_indices = @transform_6, window_bounds = array<i64: 1, 1, 40>}, {transform_indices = @transform_7, window_bounds = array<i64: 1, 1, 40>}, {transform_indices = @transform_8, window_bounds = array<i64: 1, 1, 40>}, {transform_indices = @transform_9, window_bounds = array<i64: 1, 40, 160>}, {transform_indices = @transform_10, window_bounds = array<i64: 1, 1, 160>}, {transform_indices = @transform_11, window_bounds = array<i64: 1, 160, 40>}, {transform_indices = @transform_12, window_bounds = array<i64: 1, 1, 40>}, {transform_indices = @transform_13, window_bounds = array<i64: 1, 22, 40>}]} {
    %c0_i32 = arith.constant 0 : i32
    %0 = arith.cmpi eq, %arg1, %c0_i32 : i32
    %1 = arith.extui %0 : i1 to i32
    %c0_i32_0 = arith.constant 0 : i32
    %2 = arith.cmpi ne, %1, %c0_i32_0 : i32
    scf.if %2 {
      %c0_63 = arith.constant 0 : index
      %c0_64 = arith.constant 0 : index
      %c0_65 = arith.constant 0 : index
      %198 = vector.load %arg2[%c0_63, %c0_64, %c0_65] : memref<1x22x40xf32, #tpu.memory_space<vmem>>, vector<1x22x40xf32>
      %199 = vector.shape_cast %198 : vector<1x22x40xf32> to vector<22x40xf32>
      %c0_66 = arith.constant 0 : index
      %c0_67 = arith.constant 0 : index
      %c0_68 = arith.constant 0 : index
      %200 = vector.load %arg15[%c0_66, %c0_67, %c0_68] : memref<1x22x40xf32, #tpu.memory_space<vmem>>, vector<1x22x40xf32>
      %201 = vector.shape_cast %200 : vector<1x22x40xf32> to vector<22x40xf32>
      %202 = vector.shape_cast %199 : vector<22x40xf32> to vector<1x22x40xf32>
      tpu.vector_store %arg15[%c0_66, %c0_67, %c0_68], %202 {strides = array<i32>} : memref<1x22x40xf32, #tpu.memory_space<vmem>>, vector<1x22x40xf32>,
    } else {
    }
    %c0 = arith.constant 0 : index
    %c0_1 = arith.constant 0 : index
    %c0_2 = arith.constant 0 : index
    %3 = vector.load %arg15[%c0, %c0_1, %c0_2] : memref<1x22x40xf32, #tpu.memory_space<vmem>>, vector<1x22x40xf32>
    %4 = vector.shape_cast %3 : vector<1x22x40xf32> to vector<22x40xf32>
    %c0_3 = arith.constant 0 : index
    %c0_4 = arith.constant 0 : index
    %c0_5 = arith.constant 0 : index
    %5 = vector.load %arg3[%c0_3, %c0_4, %c0_5] : memref<1x1x40xf32, #tpu.memory_space<vmem>>, vector<1x1x40xf32>
    %6 = vector.shape_cast %5 : vector<1x1x40xf32> to vector<1x40xf32>
    %c0_6 = arith.constant 0 : index
    %c0_7 = arith.constant 0 : index
    %c0_8 = arith.constant 0 : index
    %7 = vector.load %arg4[%c0_6, %c0_7, %c0_8] : memref<1x1x40xf32, #tpu.memory_space<vmem>>, vector<1x1x40xf32>
    %8 = vector.shape_cast %7 : vector<1x1x40xf32> to vector<1x40xf32>
    %cst = arith.constant dense<0.000000e+00> : vector<22xf32>
    %9 = vector.multi_reduction <add>, %4, %cst [1] : vector<22x40xf32> to vector<22xf32>
    %10 = vector.shape_cast %9 : vector<22xf32> to vector<22x1xf32>
    %cst_9 = arith.constant 4.000000e+01 : f32
    %11 = vector.broadcast %cst_9 : f32 to vector<22x1xf32>
    %12 = arith.divf %10, %11 : vector<22x1xf32>
    %13 = vector.broadcast %12 : vector<22x1xf32> to vector<22x40xf32>
    %14 = arith.subf %4, %13 : vector<22x40xf32>
    %15 = arith.mulf %14, %14 : vector<22x40xf32>
    %cst_10 = arith.constant dense<0.000000e+00> : vector<22xf32>
    %16 = vector.multi_reduction <add>, %15, %cst_10 [1] : vector<22x40xf32> to vector<22xf32>
    %17 = vector.shape_cast %16 : vector<22xf32> to vector<22x1xf32>
    %cst_11 = arith.constant 4.000000e+01 : f32
    %18 = vector.broadcast %cst_11 : f32 to vector<22x1xf32>
    %19 = arith.divf %17, %18 : vector<22x1xf32>
    %20 = vector.broadcast %12 : vector<22x1xf32> to vector<22x40xf32>
    %21 = arith.subf %4, %20 : vector<22x40xf32>
    %cst_12 = arith.constant 9.99999974E-6 : f32
    %22 = vector.broadcast %cst_12 : f32 to vector<22x1xf32>
    %23 = arith.addf %19, %22 : vector<22x1xf32>
    %24 = math.rsqrt %23 : vector<22x1xf32>
    %25 = vector.broadcast %24 : vector<22x1xf32> to vector<22x40xf32>
    %26 = arith.mulf %21, %25 : vector<22x40xf32>
    %27 = vector.broadcast %6 : vector<1x40xf32> to vector<22x40xf32>
    %28 = arith.mulf %26, %27 : vector<22x40xf32>
    %29 = vector.broadcast %8 : vector<1x40xf32> to vector<22x40xf32>
    %30 = arith.addf %28, %29 : vector<22x40xf32>
    %c0_13 = arith.constant 0 : index
    %c0_14 = arith.constant 0 : index
    %c0_15 = arith.constant 0 : index
    %31 = vector.load %arg5[%c0_13, %c0_14, %c0_15] : memref<1x40x120xf32, #tpu.memory_space<vmem>>, vector<1x40x120xf32>
    %32 = vector.shape_cast %31 : vector<1x40x120xf32> to vector<40x120xf32>
    %cst_16 = arith.constant dense<0.000000e+00> : vector<22x120xf32>
    %33 = tpu.matmul %30, %32, %cst_16 {dimension_numbers = #tpu.dot_dimension_numbers<[1], [0], [0], [1], [0, 0, 1, 1], [], []>} : vector<22x40xf32>, vector<40x120xf32>, vector<22x120xf32> -> vector<22x120xf32>
    %c0_17 = arith.constant 0 : index
    %c0_18 = arith.constant 0 : index
    %c0_19 = arith.constant 0 : index
    %34 = vector.load %arg6[%c0_17, %c0_18, %c0_19] : memref<1x1x120xf32, #tpu.memory_space<vmem>>, vector<1x1x120xf32>
    %35 = vector.shape_cast %34 : vector<1x1x120xf32> to vector<1x120xf32>
    %36 = vector.broadcast %35 : vector<1x120xf32> to vector<22x120xf32>
    %37 = arith.addf %33, %36 : vector<22x120xf32>
    %38 = vector.extract_strided_slice %37 {offsets = [0, 0], sizes = [22, 40], strides = [1, 1]} : vector<22x120xf32> to vector<22x40xf32>
    %39 = vector.extract_strided_slice %37 {offsets = [0, 40], sizes = [22, 40], strides = [1, 1]} : vector<22x120xf32> to vector<22x40xf32>
    %40 = vector.extract_strided_slice %37 {offsets = [0, 80], sizes = [22, 40], strides = [1, 1]} : vector<22x120xf32> to vector<22x40xf32>
    %41 = vector.extract_strided_slice %38 {offsets = [0, 0], sizes = [22, 4], strides = [1, 1]} : vector<22x40xf32> to vector<22x4xf32>
    %42 = vector.extract_strided_slice %38 {offsets = [0, 4], sizes = [22, 4], strides = [1, 1]} : vector<22x40xf32> to vector<22x4xf32>
    %43 = vector.extract_strided_slice %38 {offsets = [0, 8], sizes = [22, 4], strides = [1, 1]} : vector<22x40xf32> to vector<22x4xf32>
    %44 = vector.extract_strided_slice %38 {offsets = [0, 12], sizes = [22, 4], strides = [1, 1]} : vector<22x40xf32> to vector<22x4xf32>
    %45 = vector.extract_strided_slice %38 {offsets = [0, 16], sizes = [22, 4], strides = [1, 1]} : vector<22x40xf32> to vector<22x4xf32>
    %46 = vector.extract_strided_slice %38 {offsets = [0, 20], sizes = [22, 4], strides = [1, 1]} : vector<22x40xf32> to vector<22x4xf32>
    %47 = vector.extract_strided_slice %38 {offsets = [0, 24], sizes = [22, 4], strides = [1, 1]} : vector<22x40xf32> to vector<22x4xf32>
    %48 = vector.extract_strided_slice %38 {offsets = [0, 28], sizes = [22, 4], strides = [1, 1]} : vector<22x40xf32> to vector<22x4xf32>
    %49 = vector.extract_strided_slice %38 {offsets = [0, 32], sizes = [22, 4], strides = [1, 1]} : vector<22x40xf32> to vector<22x4xf32>
    %50 = vector.extract_strided_slice %38 {offsets = [0, 36], sizes = [22, 4], strides = [1, 1]} : vector<22x40xf32> to vector<22x4xf32>
    %51 = vector.shape_cast %41 : vector<22x4xf32> to vector<1x22x4xf32>
    %52 = vector.shape_cast %42 : vector<22x4xf32> to vector<1x22x4xf32>
    %53 = vector.shape_cast %43 : vector<22x4xf32> to vector<1x22x4xf32>
    %54 = vector.shape_cast %44 : vector<22x4xf32> to vector<1x22x4xf32>
    %55 = vector.shape_cast %45 : vector<22x4xf32> to vector<1x22x4xf32>
    %56 = vector.shape_cast %46 : vector<22x4xf32> to vector<1x22x4xf32>
    %57 = vector.shape_cast %47 : vector<22x4xf32> to vector<1x22x4xf32>
    %58 = vector.shape_cast %48 : vector<22x4xf32> to vector<1x22x4xf32>
    %59 = vector.shape_cast %49 : vector<22x4xf32> to vector<1x22x4xf32>
    %60 = vector.shape_cast %50 : vector<22x4xf32> to vector<1x22x4xf32>
    %61 = tpu.concatenate %51, %52, %53, %54, %55, %56, %57, %58, %59, %60 in 0 : vector<1x22x4xf32>, vector<1x22x4xf32>, vector<1x22x4xf32>, vector<1x22x4xf32>, vector<1x22x4xf32>, vector<1x22x4xf32>, vector<1x22x4xf32>, vector<1x22x4xf32>, vector<1x22x4xf32>, vector<1x22x4xf32> -> vector<10x22x4xf32>
    %62 = vector.extract_strided_slice %39 {offsets = [0, 0], sizes = [22, 4], strides = [1, 1]} : vector<22x40xf32> to vector<22x4xf32>
    %63 = vector.extract_strided_slice %39 {offsets = [0, 4], sizes = [22, 4], strides = [1, 1]} : vector<22x40xf32> to vector<22x4xf32>
    %64 = vector.extract_strided_slice %39 {offsets = [0, 8], sizes = [22, 4], strides = [1, 1]} : vector<22x40xf32> to vector<22x4xf32>
    %65 = vector.extract_strided_slice %39 {offsets = [0, 12], sizes = [22, 4], strides = [1, 1]} : vector<22x40xf32> to vector<22x4xf32>
    %66 = vector.extract_strided_slice %39 {offsets = [0, 16], sizes = [22, 4], strides = [1, 1]} : vector<22x40xf32> to vector<22x4xf32>
    %67 = vector.extract_strided_slice %39 {offsets = [0, 20], sizes = [22, 4], strides = [1, 1]} : vector<22x40xf32> to vector<22x4xf32>
    %68 = vector.extract_strided_slice %39 {offsets = [0, 24], sizes = [22, 4], strides = [1, 1]} : vector<22x40xf32> to vector<22x4xf32>
    %69 = vector.extract_strided_slice %39 {offsets = [0, 28], sizes = [22, 4], strides = [1, 1]} : vector<22x40xf32> to vector<22x4xf32>
    %70 = vector.extract_strided_slice %39 {offsets = [0, 32], sizes = [22, 4], strides = [1, 1]} : vector<22x40xf32> to vector<22x4xf32>
    %71 = vector.extract_strided_slice %39 {offsets = [0, 36], sizes = [22, 4], strides = [1, 1]} : vector<22x40xf32> to vector<22x4xf32>
    %72 = vector.shape_cast %62 : vector<22x4xf32> to vector<1x22x4xf32>
    %73 = vector.shape_cast %63 : vector<22x4xf32> to vector<1x22x4xf32>
    %74 = vector.shape_cast %64 : vector<22x4xf32> to vector<1x22x4xf32>
    %75 = vector.shape_cast %65 : vector<22x4xf32> to vector<1x22x4xf32>
    %76 = vector.shape_cast %66 : vector<22x4xf32> to vector<1x22x4xf32>
    %77 = vector.shape_cast %67 : vector<22x4xf32> to vector<1x22x4xf32>
    %78 = vector.shape_cast %68 : vector<22x4xf32> to vector<1x22x4xf32>
    %79 = vector.shape_cast %69 : vector<22x4xf32> to vector<1x22x4xf32>
    %80 = vector.shape_cast %70 : vector<22x4xf32> to vector<1x22x4xf32>
    %81 = vector.shape_cast %71 : vector<22x4xf32> to vector<1x22x4xf32>
    %82 = tpu.concatenate %72, %73, %74, %75, %76, %77, %78, %79, %80, %81 in 0 : vector<1x22x4xf32>, vector<1x22x4xf32>, vector<1x22x4xf32>, vector<1x22x4xf32>, vector<1x22x4xf32>, vector<1x22x4xf32>, vector<1x22x4xf32>, vector<1x22x4xf32>, vector<1x22x4xf32>, vector<1x22x4xf32> -> vector<10x22x4xf32>
    %83 = vector.extract_strided_slice %40 {offsets = [0, 0], sizes = [22, 4], strides = [1, 1]} : vector<22x40xf32> to vector<22x4xf32>
    %84 = vector.extract_strided_slice %40 {offsets = [0, 4], sizes = [22, 4], strides = [1, 1]} : vector<22x40xf32> to vector<22x4xf32>
    %85 = vector.extract_strided_slice %40 {offsets = [0, 8], sizes = [22, 4], strides = [1, 1]} : vector<22x40xf32> to vector<22x4xf32>
    %86 = vector.extract_strided_slice %40 {offsets = [0, 12], sizes = [22, 4], strides = [1, 1]} : vector<22x40xf32> to vector<22x4xf32>
    %87 = vector.extract_strided_slice %40 {offsets = [0, 16], sizes = [22, 4], strides = [1, 1]} : vector<22x40xf32> to vector<22x4xf32>
    %88 = vector.extract_strided_slice %40 {offsets = [0, 20], sizes = [22, 4], strides = [1, 1]} : vector<22x40xf32> to vector<22x4xf32>
    %89 = vector.extract_strided_slice %40 {offsets = [0, 24], sizes = [22, 4], strides = [1, 1]} : vector<22x40xf32> to vector<22x4xf32>
    %90 = vector.extract_strided_slice %40 {offsets = [0, 28], sizes = [22, 4], strides = [1, 1]} : vector<22x40xf32> to vector<22x4xf32>
    %91 = vector.extract_strided_slice %40 {offsets = [0, 32], sizes = [22, 4], strides = [1, 1]} : vector<22x40xf32> to vector<22x4xf32>
    %92 = vector.extract_strided_slice %40 {offsets = [0, 36], sizes = [22, 4], strides = [1, 1]} : vector<22x40xf32> to vector<22x4xf32>
    %93 = vector.shape_cast %83 : vector<22x4xf32> to vector<1x22x4xf32>
    %94 = vector.shape_cast %84 : vector<22x4xf32> to vector<1x22x4xf32>
    %95 = vector.shape_cast %85 : vector<22x4xf32> to vector<1x22x4xf32>
    %96 = vector.shape_cast %86 : vector<22x4xf32> to vector<1x22x4xf32>
    %97 = vector.shape_cast %87 : vector<22x4xf32> to vector<1x22x4xf32>
    %98 = vector.shape_cast %88 : vector<22x4xf32> to vector<1x22x4xf32>
    %99 = vector.shape_cast %89 : vector<22x4xf32> to vector<1x22x4xf32>
    %100 = vector.shape_cast %90 : vector<22x4xf32> to vector<1x22x4xf32>
    %101 = vector.shape_cast %91 : vector<22x4xf32> to vector<1x22x4xf32>
    %102 = vector.shape_cast %92 : vector<22x4xf32> to vector<1x22x4xf32>
    %103 = tpu.concatenate %93, %94, %95, %96, %97, %98, %99, %100, %101, %102 in 0 : vector<1x22x4xf32>, vector<1x22x4xf32>, vector<1x22x4xf32>, vector<1x22x4xf32>, vector<1x22x4xf32>, vector<1x22x4xf32>, vector<1x22x4xf32>, vector<1x22x4xf32>, vector<1x22x4xf32>, vector<1x22x4xf32> -> vector<10x22x4xf32>
    "tpu.trace_start"() <{level = 10 : i32, message = "hnd,hmd->hnm"}> : () -> ()
    %cst_20 = arith.constant dense<0.000000e+00> : vector<10x22x22xf32>
    %104 = tpu.matmul %61, %82, %cst_20 {dimension_numbers = #tpu.dot_dimension_numbers<[2], [2], [1], [1], [0, 0, 0, 1, 1, 1], [0], [0]>} : vector<10x22x4xf32>, vector<10x22x4xf32>, vector<10x22x22xf32> -> vector<10x22x22xf32>
    "tpu.trace_stop"() : () -> ()
    %cst_21 = arith.constant 0.158113882 : f32
    %105 = vector.broadcast %cst_21 : f32 to vector<10x22x22xf32>
    %106 = arith.mulf %104, %105 : vector<10x22x22xf32>
    %cst_22 = arith.constant dense<0xFF800000> : vector<10x22xf32>
    %107 = vector.multi_reduction <maximumf>, %106, %cst_22 [2] : vector<10x22x22xf32> to vector<10x22xf32>
    %108 = vector.shape_cast %107 : vector<10x22xf32> to vector<10x22x1xf32>
    %109 = vector.broadcast %108 : vector<10x22x1xf32> to vector<10x22x22xf32>
    %110 = arith.subf %106, %109 : vector<10x22x22xf32>
    %111 = math.exp %110 : vector<10x22x22xf32>
    %cst_23 = arith.constant dense<0.000000e+00> : vector<10x22xf32>
    %112 = vector.multi_reduction <add>, %111, %cst_23 [2] : vector<10x22x22xf32> to vector<10x22xf32>
    %113 = vector.shape_cast %112 : vector<10x22xf32> to vector<10x22x1xf32>
    %114 = vector.broadcast %113 : vector<10x22x1xf32> to vector<10x22x22xf32>
    %115 = arith.divf %111, %114 : vector<10x22x22xf32>
    "tpu.trace_start"() <{level = 10 : i32, message = "hnm,hmd->hnd"}> : () -> ()
    %cst_24 = arith.constant dense<0.000000e+00> : vector<10x22x4xf32>
    %116 = tpu.matmul %115, %103, %cst_24 {dimension_numbers = #tpu.dot_dimension_numbers<[2], [1], [1], [2], [0, 0, 0, 1, 1, 2], [0], [0]>} : vector<10x22x22xf32>, vector<10x22x4xf32>, vector<10x22x4xf32> -> vector<10x22x4xf32>
    "tpu.trace_stop"() : () -> ()
    %117 = vector.extract_strided_slice %116 {offsets = [0, 0, 0], sizes = [1, 22, 4], strides = [1, 1, 1]} : vector<10x22x4xf32> to vector<1x22x4xf32>
    %118 = vector.shape_cast %117 : vector<1x22x4xf32> to vector<22x4xf32>
    %119 = vector.extract_strided_slice %116 {offsets = [1, 0, 0], sizes = [1, 22, 4], strides = [1, 1, 1]} : vector<10x22x4xf32> to vector<1x22x4xf32>
    %120 = vector.shape_cast %119 : vector<1x22x4xf32> to vector<22x4xf32>
    %121 = vector.extract_strided_slice %116 {offsets = [2, 0, 0], sizes = [1, 22, 4], strides = [1, 1, 1]} : vector<10x22x4xf32> to vector<1x22x4xf32>
    %122 = vector.shape_cast %121 : vector<1x22x4xf32> to vector<22x4xf32>
    %123 = vector.extract_strided_slice %116 {offsets = [3, 0, 0], sizes = [1, 22, 4], strides = [1, 1, 1]} : vector<10x22x4xf32> to vector<1x22x4xf32>
    %124 = vector.shape_cast %123 : vector<1x22x4xf32> to vector<22x4xf32>
    %125 = vector.extract_strided_slice %116 {offsets = [4, 0, 0], sizes = [1, 22, 4], strides = [1, 1, 1]} : vector<10x22x4xf32> to vector<1x22x4xf32>
    %126 = vector.shape_cast %125 : vector<1x22x4xf32> to vector<22x4xf32>
    %127 = vector.extract_strided_slice %116 {offsets = [5, 0, 0], sizes = [1, 22, 4], strides = [1, 1, 1]} : vector<10x22x4xf32> to vector<1x22x4xf32>
    %128 = vector.shape_cast %127 : vector<1x22x4xf32> to vector<22x4xf32>
    %129 = vector.extract_strided_slice %116 {offsets = [6, 0, 0], sizes = [1, 22, 4], strides = [1, 1, 1]} : vector<10x22x4xf32> to vector<1x22x4xf32>
    %130 = vector.shape_cast %129 : vector<1x22x4xf32> to vector<22x4xf32>
    %131 = vector.extract_strided_slice %116 {offsets = [7, 0, 0], sizes = [1, 22, 4], strides = [1, 1, 1]} : vector<10x22x4xf32> to vector<1x22x4xf32>
    %132 = vector.shape_cast %131 : vector<1x22x4xf32> to vector<22x4xf32>
    %133 = vector.extract_strided_slice %116 {offsets = [8, 0, 0], sizes = [1, 22, 4], strides = [1, 1, 1]} : vector<10x22x4xf32> to vector<1x22x4xf32>
    %134 = vector.shape_cast %133 : vector<1x22x4xf32> to vector<22x4xf32>
    %135 = vector.extract_strided_slice %116 {offsets = [9, 0, 0], sizes = [1, 22, 4], strides = [1, 1, 1]} : vector<10x22x4xf32> to vector<1x22x4xf32>
    %136 = vector.shape_cast %135 : vector<1x22x4xf32> to vector<22x4xf32>
    %137 = tpu.concatenate %118, %120, %122, %124, %126, %128, %130, %132, %134, %136 in 1 : vector<22x4xf32>, vector<22x4xf32>, vector<22x4xf32>, vector<22x4xf32>, vector<22x4xf32>, vector<22x4xf32>, vector<22x4xf32>, vector<22x4xf32>, vector<22x4xf32>, vector<22x4xf32> -> vector<22x40xf32>
    %c0_25 = arith.constant 0 : index
    %c0_26 = arith.constant 0 : index
    %c0_27 = arith.constant 0 : index
    %138 = vector.load %arg7[%c0_25, %c0_26, %c0_27] : memref<1x40x40xf32, #tpu.memory_space<vmem>>, vector<1x40x40xf32>
    %139 = vector.shape_cast %138 : vector<1x40x40xf32> to vector<40x40xf32>
    %cst_28 = arith.constant dense<0.000000e+00> : vector<22x40xf32>
    %140 = tpu.matmul %137, %139, %cst_28 {dimension_numbers = #tpu.dot_dimension_numbers<[1], [0], [0], [1], [0, 0, 1, 1], [], []>} : vector<22x40xf32>, vector<40x40xf32>, vector<22x40xf32> -> vector<22x40xf32>
    %c0_29 = arith.constant 0 : index
    %c0_30 = arith.constant 0 : index
    %c0_31 = arith.constant 0 : index
    %141 = vector.load %arg8[%c0_29, %c0_30, %c0_31] : memref<1x1x40xf32, #tpu.memory_space<vmem>>, vector<1x1x40xf32>
    %142 = vector.shape_cast %141 : vector<1x1x40xf32> to vector<1x40xf32>
    %143 = vector.broadcast %142 : vector<1x40xf32> to vector<22x40xf32>
    %144 = arith.addf %140, %143 : vector<22x40xf32>
    %145 = arith.addf %4, %144 : vector<22x40xf32>
    %c0_32 = arith.constant 0 : index
    %c0_33 = arith.constant 0 : index
    %c0_34 = arith.constant 0 : index
    %146 = vector.load %arg9[%c0_32, %c0_33, %c0_34] : memref<1x1x40xf32, #tpu.memory_space<vmem>>, vector<1x1x40xf32>
    %147 = vector.shape_cast %146 : vector<1x1x40xf32> to vector<1x40xf32>
    %c0_35 = arith.constant 0 : index
    %c0_36 = arith.constant 0 : index
    %c0_37 = arith.constant 0 : index
    %148 = vector.load %arg10[%c0_35, %c0_36, %c0_37] : memref<1x1x40xf32, #tpu.memory_space<vmem>>, vector<1x1x40xf32>
    %149 = vector.shape_cast %148 : vector<1x1x40xf32> to vector<1x40xf32>
    %cst_38 = arith.constant dense<0.000000e+00> : vector<22xf32>
    %150 = vector.multi_reduction <add>, %145, %cst_38 [1] : vector<22x40xf32> to vector<22xf32>
    %151 = vector.shape_cast %150 : vector<22xf32> to vector<22x1xf32>
    %cst_39 = arith.constant 4.000000e+01 : f32
    %152 = vector.broadcast %cst_39 : f32 to vector<22x1xf32>
    %153 = arith.divf %151, %152 : vector<22x1xf32>
    %154 = vector.broadcast %153 : vector<22x1xf32> to vector<22x40xf32>
    %155 = arith.subf %145, %154 : vector<22x40xf32>
    %156 = arith.mulf %155, %155 : vector<22x40xf32>
    %cst_40 = arith.constant dense<0.000000e+00> : vector<22xf32>
    %157 = vector.multi_reduction <add>, %156, %cst_40 [1] : vector<22x40xf32> to vector<22xf32>
    %158 = vector.shape_cast %157 : vector<22xf32> to vector<22x1xf32>
    %cst_41 = arith.constant 4.000000e+01 : f32
    %159 = vector.broadcast %cst_41 : f32 to vector<22x1xf32>
    %160 = arith.divf %158, %159 : vector<22x1xf32>
    %161 = vector.broadcast %153 : vector<22x1xf32> to vector<22x40xf32>
    %162 = arith.subf %145, %161 : vector<22x40xf32>
    %cst_42 = arith.constant 9.99999974E-6 : f32
    %163 = vector.broadcast %cst_42 : f32 to vector<22x1xf32>
    %164 = arith.addf %160, %163 : vector<22x1xf32>
    %165 = math.rsqrt %164 : vector<22x1xf32>
    %166 = vector.broadcast %165 : vector<22x1xf32> to vector<22x40xf32>
    %167 = arith.mulf %162, %166 : vector<22x40xf32>
    %168 = vector.broadcast %147 : vector<1x40xf32> to vector<22x40xf32>
    %169 = arith.mulf %167, %168 : vector<22x40xf32>
    %170 = vector.broadcast %149 : vector<1x40xf32> to vector<22x40xf32>
    %171 = arith.addf %169, %170 : vector<22x40xf32>
    %c0_43 = arith.constant 0 : index
    %c0_44 = arith.constant 0 : index
    %c0_45 = arith.constant 0 : index
    %172 = vector.load %arg11[%c0_43, %c0_44, %c0_45] : memref<1x40x160xf32, #tpu.memory_space<vmem>>, vector<1x40x160xf32>
    %173 = vector.shape_cast %172 : vector<1x40x160xf32> to vector<40x160xf32>
    %cst_46 = arith.constant dense<0.000000e+00> : vector<22x160xf32>
    %174 = tpu.matmul %171, %173, %cst_46 {dimension_numbers = #tpu.dot_dimension_numbers<[1], [0], [0], [1], [0, 0, 1, 1], [], []>} : vector<22x40xf32>, vector<40x160xf32>, vector<22x160xf32> -> vector<22x160xf32>
    %c0_47 = arith.constant 0 : index
    %c0_48 = arith.constant 0 : index
    %c0_49 = arith.constant 0 : index
    %175 = vector.load %arg12[%c0_47, %c0_48, %c0_49] : memref<1x1x160xf32, #tpu.memory_space<vmem>>, vector<1x1x160xf32>
    %176 = vector.shape_cast %175 : vector<1x1x160xf32> to vector<1x160xf32>
    %177 = vector.broadcast %176 : vector<1x160xf32> to vector<22x160xf32>
    %178 = arith.addf %174, %177 : vector<22x160xf32>
    %cst_50 = arith.constant 5.000000e-01 : f32
    %179 = vector.broadcast %cst_50 : f32 to vector<22x160xf32>
    %180 = arith.mulf %179, %178 : vector<22x160xf32>
    %cst_51 = arith.constant 0.707106769 : f32
    %181 = vector.broadcast %cst_51 : f32 to vector<22x160xf32>
    %182 = arith.mulf %178, %181 : vector<22x160xf32>
    %183 = math.erf %182 : vector<22x160xf32>
    %cst_52 = arith.constant 1.000000e+00 : f32
    %184 = vector.broadcast %cst_52 : f32 to vector<22x160xf32>
    %185 = arith.addf %184, %183 : vector<22x160xf32>
    %186 = arith.mulf %180, %185 : vector<22x160xf32>
    %c0_53 = arith.constant 0 : index
    %c0_54 = arith.constant 0 : index
    %c0_55 = arith.constant 0 : index
    %187 = vector.load %arg13[%c0_53, %c0_54, %c0_55] : memref<1x160x40xf32, #tpu.memory_space<vmem>>, vector<1x160x40xf32>
    %188 = vector.shape_cast %187 : vector<1x160x40xf32> to vector<160x40xf32>
    %cst_56 = arith.constant dense<0.000000e+00> : vector<22x40xf32>
    %189 = tpu.matmul %186, %188, %cst_56 {dimension_numbers = #tpu.dot_dimension_numbers<[1], [0], [0], [1], [0, 0, 1, 1], [], []>} : vector<22x160xf32>, vector<160x40xf32>, vector<22x40xf32> -> vector<22x40xf32>
    %c0_57 = arith.constant 0 : index
    %c0_58 = arith.constant 0 : index
    %c0_59 = arith.constant 0 : index
    %190 = vector.load %arg14[%c0_57, %c0_58, %c0_59] : memref<1x1x40xf32, #tpu.memory_space<vmem>>, vector<1x1x40xf32>
    %191 = vector.shape_cast %190 : vector<1x1x40xf32> to vector<1x40xf32>
    %192 = vector.broadcast %191 : vector<1x40xf32> to vector<22x40xf32>
    %193 = arith.addf %189, %192 : vector<22x40xf32>
    %194 = arith.addf %145, %193 : vector<22x40xf32>
    %c0_60 = arith.constant 0 : index
    %c0_61 = arith.constant 0 : index
    %c0_62 = arith.constant 0 : index
    %195 = vector.load %arg15[%c0_60, %c0_61, %c0_62] : memref<1x22x40xf32, #tpu.memory_space<vmem>>, vector<1x22x40xf32>
    %196 = vector.shape_cast %195 : vector<1x22x40xf32> to vector<22x40xf32>
    %197 = vector.shape_cast %194 : vector<22x40xf32> to vector<1x22x40xf32>
    tpu.vector_store %arg15[%c0_60, %c0_61, %c0_62], %197 {strides = array<i32>} : memref<1x22x40xf32, #tpu.memory_space<vmem>>, vector<1x22x40xf32>,
    return
  }
  func.func @transform_0(%arg0: i32, %arg1: i32) -> (i32, i32, i32) {
    %c0_i32 = arith.constant 0 : i32
    %c0_i32_0 = arith.constant 0 : i32
    %c0_i32_1 = arith.constant 0 : i32
    return %arg0, %c0_i32, %c0_i32_0 : i32, i32, i32
  }
  func.func @transform_1(%arg0: i32, %arg1: i32) -> (i32, i32, i32) {
    %c0_i32 = arith.constant 0 : i32
    %c0_i32_0 = arith.constant 0 : i32
    %c0_i32_1 = arith.constant 0 : i32
    return %arg1, %c0_i32, %c0_i32_0 : i32, i32, i32
  }
  func.func @transform_2(%arg0: i32, %arg1: i32) -> (i32, i32, i32) {
    %c0_i32 = arith.constant 0 : i32
    %c0_i32_0 = arith.constant 0 : i32
    %c0_i32_1 = arith.constant 0 : i32
    return %arg1, %c0_i32, %c0_i32_0 : i32, i32, i32
  }
  func.func @transform_3(%arg0: i32, %arg1: i32) -> (i32, i32, i32) {
    %c0_i32 = arith.constant 0 : i32
    %c0_i32_0 = arith.constant 0 : i32
    %c0_i32_1 = arith.constant 0 : i32
    return %arg1, %c0_i32, %c0_i32_0 : i32, i32, i32
  }
  func.func @transform_4(%arg0: i32, %arg1: i32) -> (i32, i32, i32) {
    %c0_i32 = arith.constant 0 : i32
    %c0_i32_0 = arith.constant 0 : i32
    %c0_i32_1 = arith.constant 0 : i32
    return %arg1, %c0_i32, %c0_i32_0 : i32, i32, i32
  }
  func.func @transform_5(%arg0: i32, %arg1: i32) -> (i32, i32, i32) {
    %c0_i32 = arith.constant 0 : i32
    %c0_i32_0 = arith.constant 0 : i32
    %c0_i32_1 = arith.constant 0 : i32
    return %arg1, %c0_i32, %c0_i32_0 : i32, i32, i32
  }
  func.func @transform_6(%arg0: i32, %arg1: i32) -> (i32, i32, i32) {
    %c0_i32 = arith.constant 0 : i32
    %c0_i32_0 = arith.constant 0 : i32
    %c0_i32_1 = arith.constant 0 : i32
    return %arg1, %c0_i32, %c0_i32_0 : i32, i32, i32
  }
  func.func @transform_7(%arg0: i32, %arg1: i32) -> (i32, i32, i32) {
    %c0_i32 = arith.constant 0 : i32
    %c0_i32_0 = arith.constant 0 : i32
    %c0_i32_1 = arith.constant 0 : i32
    return %arg1, %c0_i32, %c0_i32_0 : i32, i32, i32
  }
  func.func @transform_8(%arg0: i32, %arg1: i32) -> (i32, i32, i32) {
    %c0_i32 = arith.constant 0 : i32
    %c0_i32_0 = arith.constant 0 : i32
    %c0_i32_1 = arith.constant 0 : i32
    return %arg1, %c0_i32, %c0_i32_0 : i32, i32, i32
  }
  func.func @transform_9(%arg0: i32, %arg1: i32) -> (i32, i32, i32) {
    %c0_i32 = arith.constant 0 : i32
    %c0_i32_0 = arith.constant 0 : i32
    %c0_i32_1 = arith.constant 0 : i32
    return %arg1, %c0_i32, %c0_i32_0 : i32, i32, i32
  }
  func.func @transform_10(%arg0: i32, %arg1: i32) -> (i32, i32, i32) {
    %c0_i32 = arith.constant 0 : i32
    %c0_i32_0 = arith.constant 0 : i32
    %c0_i32_1 = arith.constant 0 : i32
    return %arg1, %c0_i32, %c0_i32_0 : i32, i32, i32
  }
  func.func @transform_11(%arg0: i32, %arg1: i32) -> (i32, i32, i32) {
    %c0_i32 = arith.constant 0 : i32
    %c0_i32_0 = arith.constant 0 : i32
    %c0_i32_1 = arith.constant 0 : i32
    return %arg1, %c0_i32, %c0_i32_0 : i32, i32, i32
  }
  func.func @transform_12(%arg0: i32, %arg1: i32) -> (i32, i32, i32) {
    %c0_i32 = arith.constant 0 : i32
    %c0_i32_0 = arith.constant 0 : i32
    %c0_i32_1 = arith.constant 0 : i32
    return %arg1, %c0_i32, %c0_i32_0 : i32, i32, i32
  }
  func.func @transform_13(%arg0: i32, %arg1: i32) -> (i32, i32, i32) {
    %c0_i32 = arith.constant 0 : i32
    %c0_i32_0 = arith.constant 0 : i32
    %c0_i32_1 = arith.constant 0 : i32
    return %arg0, %c0_i32, %c0_i32_0 : i32, i32, i32
  }
}

</mosaic_0001>

<llo_original>
// kernel: conformer_forward.3
$region0: #{conformer_forward.3}
  #allocation0 [shape = 'u32[]', space=smem, size = 0x4, offset = 0x4, fixed_abs, tag = 'smem constant byte address 0x4 - core index']
  #allocation1 [shape = 'u32[72,128]{1,0:T(1,128)}', space=vmem, size = 0x9000, scoped, tag = 'internal scratch']
  %s0 = inlined_call_operand.vmem [shape: f32[2,22,414], index: 0, kind: input, shape index: {}]
  %s1 = inlined_call_operand.vmem [shape: f32[40,550], index: 1, kind: input, shape index: {}]
  %s2 = inlined_call_operand.vmem [shape: f32[40,1], index: 2, kind: input, shape index: {}]
  %s3 = inlined_call_operand.vmem [shape: f32[40,1], index: 3, kind: input, shape index: {}]
  %s4 = inlined_call_operand.vmem [shape: f32[390,22], index: 4, kind: input, shape index: {}]
  %s5 = inlined_call_operand.vmem [shape: f32[40,40], index: 5, kind: input, shape index: {}]
  %s6 = inlined_call_operand.vmem [shape: f32[1,40], index: 6, kind: input, shape index: {}]
  %s7 = inlined_call_operand.vmem [shape: f32[2,22,40], index: 7, kind: output, shape index: {}]
  %s8 = sld [smem:[#allocation0]]
  $region61: #{conformer_forward.3} parent=0
    _
  %s10 = ssub.s32 1, %s8
  %s11 = scalar_select 0, %s10, %s8
  loop: start=0, step=1, limit=4
  $region2: #{conformer_forward.3} parent=0 // loop_pre_header
    _
  $region3: #{conformer_forward.3} parent=0 // loop_header
    %s13 = sphi 0, %s17
    %p14 = scmp.ge.s32.totalorder %s13, 4
    %s23 = sphi 0, %s25
    %s26 = sphi 0, %s23
    %s27 = sphi 0, %s26
    %s43 = sphi 0, %s27
    %s47 = sphi 0, %s47
    %s49 = sphi 0, %s47
    %s50 = sphi 0, %s49
    %s64 = sphi 0, %s50
    %s68 = sphi 0, %s68
    %s70 = sphi 0, %s68
    %s71 = sphi 0, %s70
    %s85 = sphi 0, %s71
    %s89 = sphi 0, %s89
    %s91 = sphi 0, %s89
    %s92 = sphi 0, %s91
    %s106 = sphi 0, %s92
    %s110 = sphi 0, %s110
    %s112 = sphi 0, %s110
    %s113 = sphi 0, %s112
    %s127 = sphi 0, %s113
    %s131 = sphi 0, %s131
    %s133 = sphi 0, %s131
    %s134 = sphi 0, %s133
    %s148 = sphi 0, %s134
    %s152 = sphi 0, %s152
    %s154 = sphi 0, %s152
    %s155 = sphi 0, %s154
    %s169 = sphi 0, %s155
    %s175 = sphi 0, %s177
    %s178 = sphi 0, %s175
    %s179 = sphi 0, %s178
    %s195 = sphi 0, %s179
  $region4: #{conformer_forward.3} parent=0 // loop_header_branch
    %16 = sbr.rel (%p14) target = $region8
  $region5: #{conformer_forward.3} parent=0 // loop_body
    %s18 = ssub.s32 %s13, 1
    %s19 = ssub.s32 %s13, 2
    %s20 = sadd.s32 %s13, 1
    %s21 = ssub.s32 %s13, %s20
    %p22 = scmp.eq.s32.totalorder %s21, 0
    %s24 = sadd.s32 %s23, 1
    %s25 = scalar_select %p22, %s23, %s24
    %p28 = pneg %p22
    %p29 = scmp.eq.s32.totalorder %s13, 1
    %p30 = por %p28, %p29
    %p31 = scmp.ne.s32.totalorder %s23, %s26
    %p32 = scmp.eq.s32.totalorder %s13, 0
    %p33 = por %p31, %p32
    %p34 = scmp.ne.s32.totalorder %s23, %s26
    %p35 = scmp.eq.s32.totalorder %s18, 1
    %p36 = por %p34, %p35
    %p37 = scmp.ne.s32.totalorder %s26, %s27
    %p38 = scmp.eq.s32.totalorder %s18, 0
    %p39 = por %p37, %p38
    %p40 = scmp.ne.s32.totalorder %s26, %s27
    %p41 = scmp.eq.s32.totalorder %s19, 1
    %p42 = por %p40, %p41
    %p44 = scmp.ne.s32.totalorder %s27, %s43
    %p45 = scmp.eq.s32.totalorder %s19, 0
    %p46 = por %p44, %p45
    %s48 = sadd.s32 %s47, 1
    %p51 = scmp.eq.s32.totalorder %s13, 1
    %p52 = scmp.ne.s32.totalorder %s47, %s49
    %p53 = scmp.eq.s32.totalorder %s13, 0
    %p54 = por %p52, %p53
    %p55 = scmp.ne.s32.totalorder %s47, %s49
    %p56 = scmp.eq.s32.totalorder %s18, 1
    %p57 = por %p55, %p56
    %p58 = scmp.ne.s32.totalorder %s49, %s50
    %p59 = scmp.eq.s32.totalorder %s18, 0
    %p60 = por %p58, %p59
    %p61 = scmp.ne.s32.totalorder %s49, %s50
    %p62 = scmp.eq.s32.totalorder %s19, 1
    %p63 = por %p61, %p62
    %p65 = scmp.ne.s32.totalorder %s50, %s64
    %p66 = scmp.eq.s32.totalorder %s19, 0
    %p67 = por %p65, %p66
    %s69 = sadd.s32 %s68, 1
    %p72 = scmp.eq.s32.totalorder %s13, 1
    %p73 = scmp.ne.s32.totalorder %s68, %s70
    %p74 = scmp.eq.s32.totalorder %s13, 0
    %p75 = por %p73, %p74
    %p76 = scmp.ne.s32.totalorder %s68, %s70
    %p77 = scmp.eq.s32.totalorder %s18, 1
    %p78 = por %p76, %p77
    %p79 = scmp.ne.s32.totalorder %s70, %s71
    %p80 = scmp.eq.s32.totalorder %s18, 0
    %p81 = por %p79, %p80
    %p82 = scmp.ne.s32.totalorder %s70, %s71
    %p83 = scmp.eq.s32.totalorder %s19, 1
    %p84 = por %p82, %p83
    %p86 = scmp.ne.s32.totalorder %s71, %s85
    %p87 = scmp.eq.s32.totalorder %s19, 0
    %p88 = por %p86, %p87
    %s90 = sadd.s32 %s89, 1
    %p93 = scmp.eq.s32.totalorder %s13, 1
    %p94 = scmp.ne.s32.totalorder %s89, %s91
    %p95 = scmp.eq.s32.totalorder %s13, 0
    %p96 = por %p94, %p95
    %p97 = scmp.ne.s32.totalorder %s89, %s91
    %p98 = scmp.eq.s32.totalorder %s18, 1
    %p99 = por %p97, %p98
    %p100 = scmp.ne.s32.totalorder %s91, %s92
    %p101 = scmp.eq.s32.totalorder %s18, 0
    %p102 = por %p100, %p101
    %p103 = scmp.ne.s32.totalorder %s91, %s92
    %p104 = scmp.eq.s32.totalorder %s19, 1
    %p105 = por %p103, %p104
    %p107 = scmp.ne.s32.totalorder %s92, %s106
    %p108 = scmp.eq.s32.totalorder %s19, 0
    %p109 = por %p107, %p108
    %s111 = sadd.s32 %s110, 1
    %p114 = scmp.eq.s32.totalorder %s13, 1
    %p115 = scmp.ne.s32.totalorder %s110, %s112
    %p116 = scmp.eq.s32.totalorder %s13, 0
    %p117 = por %p115, %p116
    %p118 = scmp.ne.s32.totalorder %s110, %s112
    %p119 = scmp.eq.s32.totalorder %s18, 1
    %p120 = por %p118, %p119
    %p121 = scmp.ne.s32.totalorder %s112, %s113
    %p122 = scmp.eq.s32.totalorder %s18, 0
    %p123 = por %p121, %p122
    %p124 = scmp.ne.s32.totalorder %s112, %s113
    %p125 = scmp.eq.s32.totalorder %s19, 1
    %p126 = por %p124, %p125
    %p128 = scmp.ne.s32.totalorder %s113, %s127
    %p129 = scmp.eq.s32.totalorder %s19, 0
    %p130 = por %p128, %p129
    %s132 = sadd.s32 %s131, 1
    %p135 = scmp.eq.s32.totalorder %s13, 1
    %p136 = scmp.ne.s32.totalorder %s131, %s133
    %p137 = scmp.eq.s32.totalorder %s13, 0
    %p138 = por %p136, %p137
    %p139 = scmp.ne.s32.totalorder %s131, %s133
    %p140 = scmp.eq.s32.totalorder %s18, 1
    %p141 = por %p139, %p140
    %p142 = scmp.ne.s32.totalorder %s133, %s134
    %p143 = scmp.eq.s32.totalorder %s18, 0
    %p144 = por %p142, %p143
    %p145 = scmp.ne.s32.totalorder %s133, %s134
    %p146 = scmp.eq.s32.totalorder %s19, 1
    %p147 = por %p145, %p146
    %p149 = scmp.ne.s32.totalorder %s134, %s148
    %p150 = scmp.eq.s32.totalorder %s19, 0
    %p151 = por %p149, %p150
    %s153 = sadd.s32 %s152, 1
    %p156 = scmp.eq.s32.totalorder %s13, 1
    %p157 = scmp.ne.s32.totalorder %s152, %s154
    %p158 = scmp.eq.s32.totalorder %s13, 0
    %p159 = por %p157, %p158
    %p160 = scmp.ne.s32.totalorder %s152, %s154
    %p161 = scmp.eq.s32.totalorder %s18, 1
    %p162 = por %p160, %p161
    %p163 = scmp.ne.s32.totalorder %s154, %s155
    %p164 = scmp.eq.s32.totalorder %s18, 0
    %p165 = por %p163, %p164
    %p166 = scmp.ne.s32.totalorder %s154, %s155
    %p167 = scmp.eq.s32.totalorder %s19, 1
    %p168 = por %p166, %p167
    %p170 = scmp.ne.s32.totalorder %s155, %s169
    %p171 = scmp.eq.s32.totalorder %s19, 0
    %p172 = por %p170, %p171
    %s173 = ssub.s32 %s13, %s20
    %p174 = scmp.eq.s32.totalorder %s173, 0
    %s176 = sadd.s32 %s175, 1
    %s177 = scalar_select %p174, %s175, %s176
    %p180 = pneg %p174
    %p181 = scmp.eq.s32.totalorder %s13, 1
    %p182 = por %p180, %p181
    %p183 = scmp.ne.s32.totalorder %s175, %s178
    %p184 = scmp.eq.s32.totalorder %s13, 0
    %p185 = por %p183, %p184
    %p186 = scmp.ne.s32.totalorder %s175, %s178
    %p187 = scmp.eq.s32.totalorder %s18, 1
    %p188 = por %p186, %p187
    %p189 = scmp.ne.s32.totalorder %s178, %s179
    %p190 = scmp.eq.s32.totalorder %s18, 0
    %p191 = por %p189, %p190
    %p192 = scmp.ne.s32.totalorder %s178, %s179
    %p193 = scmp.eq.s32.totalorder %s19, 1
    %p194 = por %p192, %p193
    %p196 = scmp.ne.s32.totalorder %s179, %s195
    %p197 = scmp.eq.s32.totalorder %s19, 0
    %p198 = por %p196, %p197
    %p199 = scmp.le.s32.totalorder 1, %s13
    %p200 = scmp.lt.s32.totalorder %s13, 3
    %p201 = pnand %p199, %p200
    %p202 = pneg %p201
    // Predicated region
    $region9: #{conformer_forward.3} parent=5 // pred_check
      _
    $region10: #{conformer_forward.3} parent=5 // pred_check_branch
      %204 = sbr.rel (%p201) target = $region12
    $region11: #{conformer_forward.3} parent=5 // pred_region
      %s205 = ssub.s32 %s13, 1
      // Predicated region
      $region13: #{conformer_forward.3} parent=11 // pred_check
        %p206 = pneg %p60
      $region14: #{conformer_forward.3} parent=11 // pred_check_branch
        %208 = sbr.rel (%p206) target = $region16
      $region15: #{conformer_forward.3} parent=11 // pred_region
        _
      $region16: #{conformer_forward.3} parent=11 // pred_fallthru
        _
      // Predicated region
      $region17: #{conformer_forward.3} parent=11 // pred_check
        %p209 = pneg %p81
      $region18: #{conformer_forward.3} parent=11 // pred_check_branch
        %211 = sbr.rel (%p209) target = $region20
      $region19: #{conformer_forward.3} parent=11 // pred_region
        _
      $region20: #{conformer_forward.3} parent=11 // pred_fallthru
        _
      // Predicated region
      $region21: #{conformer_forward.3} parent=11 // pred_check
        %p212 = pneg %p102
      $region22: #{conformer_forward.3} parent=11 // pred_check_branch
        %214 = sbr.rel (%p212) target = $region24
      $region23: #{conformer_forward.3} parent=11 // pred_region
        _
      $region24: #{conformer_forward.3} parent=11 // pred_fallthru
        _
      // Predicated region
      $region25: #{conformer_forward.3} parent=11 // pred_check
        %p215 = pneg %p123
      $region26: #{conformer_forward.3} parent=11 // pred_check_branch
        %217 = sbr.rel (%p215) target = $region28
      $region27: #{conformer_forward.3} parent=11 // pred_region
        _
      $region28: #{conformer_forward.3} parent=11 // pred_fallthru
        _
      // Predicated region
      $region29: #{conformer_forward.3} parent=11 // pred_check
        %p218 = pneg %p144
      $region30: #{conformer_forward.3} parent=11 // pred_check_branch
        %220 = sbr.rel (%p218) target = $region32
      $region31: #{conformer_forward.3} parent=11 // pred_region
        _
      $region32: #{conformer_forward.3} parent=11 // pred_fallthru
        _
      // Predicated region
      $region33: #{conformer_forward.3} parent=11 // pred_check
        %p221 = pneg %p165
      $region34: #{conformer_forward.3} parent=11 // pred_check_branch
        %223 = sbr.rel (%p221) target = $region36
      $region35: #{conformer_forward.3} parent=11 // pred_region
        _
      $region36: #{conformer_forward.3} parent=11 // pred_fallthru
        _
    $region12: #{conformer_forward.3} parent=5 // pred_fallthru
      _
    %p224 = scmp.lt.s32.totalorder %s13, 2
    // Predicated region
    $region37: #{conformer_forward.3} parent=5 // pred_check
      %p225 = pneg %p224
    $region38: #{conformer_forward.3} parent=5 // pred_check_branch
      %227 = sbr.rel (%p225) target = $region40
    $region39: #{conformer_forward.3} parent=5 // pred_region
      // Predicated region
      $region41: #{conformer_forward.3} parent=39 // pred_check
        %p228 = pneg %p33
      $region42: #{conformer_forward.3} parent=39 // pred_check_branch
        %230 = sbr.rel (%p228) target = $region44
      $region43: #{conformer_forward.3} parent=39 // pred_region
        %p231 = scmp.lt.s32.totalorder %s13, 1
        %s232 = scalar_select %p231, %s13, 1
        %s233 = smul.addr %s232, 12
        %s234 = smul.addr %s233, 8
        %s235 = scalar_lea.vmem %s0, %s234
      $region44: #{conformer_forward.3} parent=39 // pred_fallthru
        _
    $region40: #{conformer_forward.3} parent=5 // pred_fallthru
      _
    %p236 = scmp.le.s32.totalorder 1, %s13
    %p237 = scmp.lt.s32.totalorder %s13, 3
    %p238 = pnand %p236, %p237
    %p239 = pneg %p238
    // Predicated region
    $region45: #{conformer_forward.3} parent=5 // pred_check
      _
    $region46: #{conformer_forward.3} parent=5 // pred_check_branch
      %241 = sbr.rel (%p238) target = $region48
    $region47: #{conformer_forward.3} parent=5 // pred_region
      %s242 = ssub.s32 %s13, 1
      %p243 = scmp.lt.s32.totalorder %s18, 1
      %s244 = scalar_select %p243, %s18, 1
      %s245 = smul.addr %s244, 12
      %s246 = smul.addr %s245, 8
      %s247 = scalar_lea.vmem %s0, %s246
      %p248 = pneg %p39
      %p249 = pneg %p36
      %p250 = pneg %p60
      %p251 = pneg %p57
      %p252 = pneg %p81
      %p253 = pneg %p78
      %p254 = pneg %p102
      %p255 = pneg %p99
      %p256 = pneg %p123
      %p257 = pneg %p120
      %p258 = pneg %p144
      %p259 = pneg %p141
      %p260 = pneg %p165
      %p261 = pneg %p162
      %p262 = pneg %p191
      %p263 = pneg %p188
      %p264 = scmp.lt.s32.totalorder %s18, 1
      %s265 = scalar_select %p264, %s18, 1
      %s266 = smul.addr %s265, 3
      %s267 = smul.addr %s266, 8
      %s268 = scalar_lea.vmem %s7, %s267
      %p269 = scmp.lt.s32.totalorder %s18, 1
      %s270 = scalar_select %p269, %s18, 1
      %s271 = smul.addr %s270, 12
      %s272 = smul.addr %s271, 8
      %s273 = scalar_lea.vmem %s0, %s272
      %p274 = scmp.lt.s32.totalorder %s18, 1
      %s275 = scalar_select %p274, %s18, 1
      %s276 = smul.addr %s275, 3
      %s277 = smul.addr %s276, 8
      %s278 = scalar_lea.vmem %s7, %s277
      %v279 = vld [vmem:[%s273] sm:$0xff]
      %v280 = vld [vmem:[%s273 + $0x8] sm:$0xff]
      %v281 = vld [vmem:[%s273 + $0x10] sm:$0xff]
      %v282 = vld [vmem:[%s273 + $0x18] sm:$0xff]
      %v283 = vld [vmem:[%s273 + $0x20] sm:$0xff]
      %v284 = vld [vmem:[%s273 + $0x28] sm:$0xff]
      %v285 = vld [vmem:[%s273 + $0x30] sm:$0xff]
      %v286 = vld [vmem:[%s273 + $0x38] sm:$0xff]
      %v287 = vld [vmem:[%s273 + $0x40] sm:$0x3f]
      %v288 = vld [vmem:[%s273 + $0x48] sm:$0x3f]
      %v289 = vld [vmem:[%s273 + $0x50] sm:$0x3f]
      %v290 = vld [vmem:[%s273 + $0x58] sm:$0x3f]
      %v291 = vld [vmem:[%s1] sm:$0xff]
      %v292 = vld [vmem:[%s1 + $0x8] sm:$0xff]
      %v293 = vld [vmem:[%s1 + $0x10] sm:$0xff]
      %v294 = vld [vmem:[%s1 + $0x18] sm:$0xff]
      %v295 = vld [vmem:[%s1 + $0x20] sm:$0xff]
      %v296 = vld [vmem:[%s1 + $0x28] sm:$0xff]
      %v297 = vld [vmem:[%s1 + $0x30] sm:$0xff]
      %v298 = vld [vmem:[%s1 + $0x38] sm:$0xff]
      %v299 = vld [vmem:[%s1 + $0x40] sm:$0xff]
      %v300 = vld [vmem:[%s1 + $0x48] sm:$0xff]
      %v301 = vld [vmem:[%s1 + $0x50] sm:$0xff]
      %v302 = vld [vmem:[%s1 + $0x58] sm:$0xff]
      %v303 = vld [vmem:[%s1 + $0x60] sm:$0xff]
      %v304 = vld [vmem:[%s1 + $0x68] sm:$0xff]
      %v305 = vld [vmem:[%s1 + $0x70] sm:$0xff]
      %v306 = vld [vmem:[%s1 + $0x78] sm:$0xff]
      %v307 = vld [vmem:[%s1 + $0x80] sm:$0xff]
      %v308 = vld [vmem:[%s1 + $0x88] sm:$0xff]
      %v309 = vld [vmem:[%s1 + $0x90] sm:$0xff]
      %v310 = vld [vmem:[%s1 + $0x98] sm:$0xff]
      %v311 = vld [vmem:[%s1 + $0xa0] sm:$0xff]
      %v312 = vld [vmem:[%s1 + $0xa8] sm:$0xff]
      %v313 = vld [vmem:[%s1 + $0xb0] sm:$0xff]
      %v314 = vld [vmem:[%s1 + $0xb8] sm:$0xff]
      %v315 = vld [vmem:[%s1 + $0xc0] sm:$0xff]
      %321 = vrot.lane.b32.xlu0 %v291, 106
      %v322 = vpop.permute.xlu0 %321
      %323 = vrot.lane.b32.xlu0 %v296, 106
      %v324 = vpop.permute.xlu0 %323
      %325 = vrot.lane.b32.xlu0 %v301, 106
      %v326 = vpop.permute.xlu0 %325
      %327 = vrot.lane.b32.xlu0 %v306, 106
      %v328 = vpop.permute.xlu0 %327
      %329 = vrot.lane.b32.xlu0 %v311, 106
      %v330 = vpop.permute.xlu0 %329
      %343 = vrot.lane.b32.xlu0 %v279, 127
      %v344 = vpop.permute.xlu0 %343
      %345 = vrot.lane.b32.xlu0 %v280, 127
      %v346 = vpop.permute.xlu0 %345
      %347 = vrot.lane.b32.xlu0 %v281, 127
      %v348 = vpop.permute.xlu0 %347
      %349 = vrot.lane.b32.xlu0 %v282, 127
      %v350 = vpop.permute.xlu0 %349
      %351 = vrot.lane.b32.xlu0 %v283, 127
      %v352 = vpop.permute.xlu0 %351
      %353 = vrot.lane.b32.xlu0 %v284, 127
      %v354 = vpop.permute.xlu0 %353
      %355 = vrot.lane.b32.xlu0 %v285, 127
      %v356 = vpop.permute.xlu0 %355
      %357 = vrot.lane.b32.xlu0 %v286, 127
      %v358 = vpop.permute.xlu0 %357
      %359 = vrot.lane.b32.xlu0 %v287, 127
      %v360 = vpop.permute.xlu0 %359
      %361 = vrot.lane.b32.xlu0 %v288, 127
      %v362 = vpop.permute.xlu0 %361
      %363 = vrot.lane.b32.xlu0 %v289, 127
      %v364 = vpop.permute.xlu0 %363
      %365 = vrot.lane.b32.xlu0 %v290, 127
      %v366 = vpop.permute.xlu0 %365
      %vm367 = vcmask 1039360
      %v368 = vsel %vm367, %v344, %v346
      %v369 = vsel %vm367, %v346, %v348
      %v370 = vsel %vm367, %v348, %v350
      %v371 = vsel %vm367, %v352, %v354
      %v372 = vsel %vm367, %v354, %v356
      %v373 = vsel %vm367, %v356, %v358
      %v374 = vsel %vm367, %v360, %v362
      %v375 = vsel %vm367, %v362, %v364
      %v376 = vsel %vm367, %v364, %v366
      %vm385 = vcmask 179200
      %v386 = vsel %vm385, %v322, 0
      %v388 = vsel %vm385, %v324, 0
      %v390 = vsel %vm385, %v326, 0
      %v392 = vsel %vm385, %v328, 0
      %v394 = vsel %vm385, %v330, 0
      %vm396 = vcmask 1045504
      %v397 = vsel %vm396, %v374, 0
      %v399 = vsel %vm396, %v375, 0
      %v401 = vsel %vm396, %v376, 0
      %v403 = vsel %vm396, %v366, 0
      %405 = vmatpush.msra.mxu0 0.0
      %406 = vmatpush.msra.mxu0 0.0
      %407 = vmatpush.msra.mxu0 0.0
      %408 = vmatpush.msra.mxu0 0.0
      %409 = vmatpush.msra.mxu0 0.0
      %410 = vmatpush.msra.mxu0 0.0
      %411 = vmatpush.msra.mxu0 0.0
      %412 = vmatpush.msra.mxu0 0.0
      %413 = vmatpush.msra.mxu0 0.0
      %414 = vmatpush.msra.mxu0 0.0
      %415 = vmatpush.msra.mxu0 0.0
      %416 = vmatpush.msra.mxu0 0.0
      %417 = vmatpush.msra.mxu0 0.0
      %418 = vmatpush.msra.mxu0 %v397
      %419 = vmatpush.msra.mxu0 %v371
      %420 = vmatpush.msra.mxu0 %v368
      %421 = vmatmul.f32.gmra.mxu0 %v386
      %v422 = vpop.f32.mrf.mxu0
      %v423 = vadd.f32 0.0, %v422
      %424 = vmatmul.f32.gmra.mxu0 %v388
      %v425 = vpop.f32.mrf.mxu0
      %v426 = vadd.f32 0.0, %v425
      %427 = vmatmul.f32.gmra.mxu0 %v390
      %v428 = vpop.f32.mrf.mxu0
      %v429 = vadd.f32 0.0, %v428
      %430 = vmatmul.f32.gmra.mxu0 %v392
      %v431 = vpop.f32.mrf.mxu0
      %v432 = vadd.f32 0.0, %v431
      %433 = vmatmul.f32.gmra.mxu0 %v394
      %v434 = vpop.f32.mrf.mxu0
      %v435 = vadd.f32 0.0, %v434
      %436 = vdwg.mxu0
      %437 = vmatpush.msra.mxu0 0.0
      %438 = vmatpush.msra.mxu0 0.0
      %439 = vmatpush.msra.mxu0 0.0
      %440 = vmatpush.msra.mxu0 0.0
      %441 = vmatpush.msra.mxu0 0.0
      %442 = vmatpush.msra.mxu0 0.0
      %443 = vmatpush.msra.mxu0 0.0
      %444 = vmatpush.msra.mxu0 0.0
      %445 = vmatpush.msra.mxu0 0.0
      %446 = vmatpush.msra.mxu0 0.0
      %447 = vmatpush.msra.mxu0 0.0
      %448 = vmatpush.msra.mxu0 0.0
      %449 = vmatpush.msra.mxu0 0.0
      %450 = vmatpush.msra.mxu0 %v399
      %451 = vmatpush.msra.mxu0 %v372
      %452 = vmatpush.msra.mxu0 %v369
      %453 = vmatmul.f32.gmra.mxu0 %v386
      %v454 = vpop.f32.mrf.mxu0
      %v455 = vadd.f32 0.0, %v454
      %456 = vmatmul.f32.gmra.mxu0 %v388
      %v457 = vpop.f32.mrf.mxu0
      %v458 = vadd.f32 0.0, %v457
      %459 = vmatmul.f32.gmra.mxu0 %v390
      %v460 = vpop.f32.mrf.mxu0
      %v461 = vadd.f32 0.0, %v460
      %462 = vmatmul.f32.gmra.mxu0 %v392
      %v463 = vpop.f32.mrf.mxu0
      %v464 = vadd.f32 0.0, %v463
      %465 = vmatmul.f32.gmra.mxu0 %v394
      %v466 = vpop.f32.mrf.mxu0
      %v467 = vadd.f32 0.0, %v466
      %468 = vdwg.mxu0
      %469 = vmatpush.msra.mxu0 0.0
      %470 = vmatpush.msra.mxu0 0.0
      %471 = vmatpush.msra.mxu0 0.0
      %472 = vmatpush.msra.mxu0 0.0
      %473 = vmatpush.msra.mxu0 0.0
      %474 = vmatpush.msra.mxu0 0.0
      %475 = vmatpush.msra.mxu0 0.0
      %476 = vmatpush.msra.mxu0 0.0
      %477 = vmatpush.msra.mxu0 0.0
      %478 = vmatpush.msra.mxu0 0.0
      %479 = vmatpush.msra.mxu0 0.0
      %480 = vmatpush.msra.mxu0 0.0
      %481 = vmatpush.msra.mxu0 0.0
      %482 = vmatpush.msra.mxu0 %v401
      %483 = vmatpush.msra.mxu0 %v373
      %484 = vmatpush.msra.mxu0 %v370
      %485 = vmatmul.f32.gmra.mxu0 %v386
      %v486 = vpop.f32.mrf.mxu0
      %v487 = vadd.f32 0.0, %v486
      %488 = vmatmul.f32.gmra.mxu0 %v388
      %v489 = vpop.f32.mrf.mxu0
      %v490 = vadd.f32 0.0, %v489
      %491 = vmatmul.f32.gmra.mxu0 %v390
      %v492 = vpop.f32.mrf.mxu0
      %v493 = vadd.f32 0.0, %v492
      %494 = vmatmul.f32.gmra.mxu0 %v392
      %v495 = vpop.f32.mrf.mxu0
      %v496 = vadd.f32 0.0, %v495
      %497 = vmatmul.f32.gmra.mxu0 %v394
      %v498 = vpop.f32.mrf.mxu0
      %v499 = vadd.f32 0.0, %v498
      %500 = vdwg.mxu0
      %501 = vmatpush.msra.mxu0 0.0
      %502 = vmatpush.msra.mxu0 0.0
      %503 = vmatpush.msra.mxu0 0.0
      %504 = vmatpush.msra.mxu0 0.0
      %505 = vmatpush.msra.mxu0 0.0
      %506 = vmatpush.msra.mxu0 0.0
      %507 = vmatpush.msra.mxu0 0.0
      %508 = vmatpush.msra.mxu0 0.0
      %509 = vmatpush.msra.mxu0 0.0
      %510 = vmatpush.msra.mxu0 0.0
      %511 = vmatpush.msra.mxu0 0.0
      %512 = vmatpush.msra.mxu0 0.0
      %513 = vmatpush.msra.mxu0 0.0
      %514 = vmatpush.msra.mxu0 %v403
      %515 = vmatpush.msra.mxu0 %v358
      %516 = vmatpush.msra.mxu0 %v350
      %517 = vmatmul.f32.gmra.mxu0 %v386
      %v518 = vpop.f32.mrf.mxu0
      %v519 = vadd.f32 0.0, %v518
      %520 = vmatmul.f32.gmra.mxu0 %v388
      %v521 = vpop.f32.mrf.mxu0
      %v522 = vadd.f32 0.0, %v521
      %523 = vmatmul.f32.gmra.mxu0 %v390
      %v524 = vpop.f32.mrf.mxu0
      %v525 = vadd.f32 0.0, %v524
      %526 = vmatmul.f32.gmra.mxu0 %v392
      %v527 = vpop.f32.mrf.mxu0
      %v528 = vadd.f32 0.0, %v527
      %529 = vmatmul.f32.gmra.mxu0 %v394
      %v530 = vpop.f32.mrf.mxu0
      %v531 = vadd.f32 0.0, %v530
      %532 = vdwg.mxu0
      %v533 = vsel %vm385, %v291, 0
      %v535 = vsel %vm385, %v296, 0
      %v537 = vsel %vm385, %v301, 0
      %v539 = vsel %vm385, %v306, 0
      %v541 = vsel %vm385, %v311, 0
      %v543 = vsel %vm396, %v287, 0
      %v545 = vsel %vm396, %v288, 0
      %v547 = vsel %vm396, %v289, 0
      %v549 = vsel %vm396, %v290, 0
      %551 = vmatpush.msra.mxu0 0.0
      %552 = vmatpush.msra.mxu0 0.0
      %553 = vmatpush.msra.mxu0 0.0
      %554 = vmatpush.msra.mxu0 0.0
      %555 = vmatpush.msra.mxu0 0.0
      %556 = vmatpush.msra.mxu0 0.0
      %557 = vmatpush.msra.mxu0 0.0
      %558 = vmatpush.msra.mxu0 0.0
      %559 = vmatpush.msra.mxu0 0.0
      %560 = vmatpush.msra.mxu0 0.0
      %561 = vmatpush.msra.mxu0 0.0
      %562 = vmatpush.msra.mxu0 0.0
      %563 = vmatpush.msra.mxu0 0.0
      %564 = vmatpush.msra.mxu0 %v543
      %565 = vmatpush.msra.mxu0 %v283
      %566 = vmatpush.msra.mxu0 %v279
      %567 = vmatmul.f32.gmra.mxu0 %v533
      %v568 = vpop.f32.mrf.mxu0
      %v569 = vadd.f32 %v423, %v568
      %570 = vmatmul.f32.gmra.mxu0 %v535
      %v571 = vpop.f32.mrf.mxu0
      %v572 = vadd.f32 %v426, %v571
      %573 = vmatmul.f32.gmra.mxu0 %v537
      %v574 = vpop.f32.mrf.mxu0
      %v575 = vadd.f32 %v429, %v574
      %576 = vmatmul.f32.gmra.mxu0 %v539
      %v577 = vpop.f32.mrf.mxu0
      %v578 = vadd.f32 %v432, %v577
      %579 = vmatmul.f32.gmra.mxu0 %v541
      %v580 = vpop.f32.mrf.mxu0
      %v581 = vadd.f32 %v435, %v580
      %582 = vdwg.mxu0
      %583 = vmatpush.msra.mxu0 0.0
      %584 = vmatpush.msra.mxu0 0.0
      %585 = vmatpush.msra.mxu0 0.0
      %586 = vmatpush.msra.mxu0 0.0
      %587 = vmatpush.msra.mxu0 0.0
      %588 = vmatpush.msra.mxu0 0.0
      %589 = vmatpush.msra.mxu0 0.0
      %590 = vmatpush.msra.mxu0 0.0
      %591 = vmatpush.msra.mxu0 0.0
      %592 = vmatpush.msra.mxu0 0.0
      %593 = vmatpush.msra.mxu0 0.0
      %594 = vmatpush.msra.mxu0 0.0
      %595 = vmatpush.msra.mxu0 0.0
      %596 = vmatpush.msra.mxu0 %v545
      %597 = vmatpush.msra.mxu0 %v284
      %598 = vmatpush.msra.mxu0 %v280
      %599 = vmatmul.f32.gmra.mxu0 %v533
      %v600 = vpop.f32.mrf.mxu0
      %v601 = vadd.f32 %v455, %v600
      %602 = vmatmul.f32.gmra.mxu0 %v535
      %v603 = vpop.f32.mrf.mxu0
      %v604 = vadd.f32 %v458, %v603
      %605 = vmatmul.f32.gmra.mxu0 %v537
      %v606 = vpop.f32.mrf.mxu0
      %v607 = vadd.f32 %v461, %v606
      %608 = vmatmul.f32.gmra.mxu0 %v539
      %v609 = vpop.f32.mrf.mxu0
      %v610 = vadd.f32 %v464, %v609
      %611 = vmatmul.f32.gmra.mxu0 %v541
      %v612 = vpop.f32.mrf.mxu0
      %v613 = vadd.f32 %v467, %v612
      %614 = vdwg.mxu0
      %615 = vmatpush.msra.mxu0 0.0
      %616 = vmatpush.msra.mxu0 0.0
      %617 = vmatpush.msra.mxu0 0.0
      %618 = vmatpush.msra.mxu0 0.0
      %619 = vmatpush.msra.mxu0 0.0
      %620 = vmatpush.msra.mxu0 0.0
      %621 = vmatpush.msra.mxu0 0.0
      %622 = vmatpush.msra.mxu0 0.0
      %623 = vmatpush.msra.mxu0 0.0
      %624 = vmatpush.msra.mxu0 0.0
      %625 = vmatpush.msra.mxu0 0.0
      %626 = vmatpush.msra.mxu0 0.0
      %627 = vmatpush.msra.mxu0 0.0
      %628 = vmatpush.msra.mxu0 %v547
      %629 = vmatpush.msra.mxu0 %v285
      %630 = vmatpush.msra.mxu0 %v281
      %631 = vmatmul.f32.gmra.mxu0 %v533
      %v632 = vpop.f32.mrf.mxu0
      %v633 = vadd.f32 %v487, %v632
      %634 = vmatmul.f32.gmra.mxu0 %v535
      %v635 = vpop.f32.mrf.mxu0
      %v636 = vadd.f32 %v490, %v635
      %637 = vmatmul.f32.gmra.mxu0 %v537
      %v638 = vpop.f32.mrf.mxu0
      %v639 = vadd.f32 %v493, %v638
      %640 = vmatmul.f32.gmra.mxu0 %v539
      %v641 = vpop.f32.mrf.mxu0
      %v642 = vadd.f32 %v496, %v641
      %643 = vmatmul.f32.gmra.mxu0 %v541
      %v644 = vpop.f32.mrf.mxu0
      %v645 = vadd.f32 %v499, %v644
      %646 = vdwg.mxu0
      %647 = vmatpush.msra.mxu0 0.0
      %648 = vmatpush.msra.mxu0 0.0
      %649 = vmatpush.msra.mxu0 0.0
      %650 = vmatpush.msra.mxu0 0.0
      %651 = vmatpush.msra.mxu0 0.0
      %652 = vmatpush.msra.mxu0 0.0
      %653 = vmatpush.msra.mxu0 0.0
      %654 = vmatpush.msra.mxu0 0.0
      %655 = vmatpush.msra.mxu0 0.0
      %656 = vmatpush.msra.mxu0 0.0
      %657 = vmatpush.msra.mxu0 0.0
      %658 = vmatpush.msra.mxu0 0.0
      %659 = vmatpush.msra.mxu0 0.0
      %660 = vmatpush.msra.mxu0 %v549
      %661 = vmatpush.msra.mxu0 %v286
      %662 = vmatpush.msra.mxu0 %v282
      %663 = vmatmul.f32.gmra.mxu0 %v533
      %v664 = vpop.f32.mrf.mxu0
      %v665 = vadd.f32 %v519, %v664
      %666 = vmatmul.f32.gmra.mxu0 %v535
      %v667 = vpop.f32.mrf.mxu0
      %v668 = vadd.f32 %v522, %v667
      %669 = vmatmul.f32.gmra.mxu0 %v537
      %v670 = vpop.f32.mrf.mxu0
      %v671 = vadd.f32 %v525, %v670
      %672 = vmatmul.f32.gmra.mxu0 %v539
      %v673 = vpop.f32.mrf.mxu0
      %v674 = vadd.f32 %v528, %v673
      %675 = vmatmul.f32.gmra.mxu0 %v541
      %v676 = vpop.f32.mrf.mxu0
      %v677 = vadd.f32 %v531, %v676
      %678 = vdwg.mxu0
      %679 = vrot.lane.b32.xlu0 %v291, 84
      %v680 = vpop.permute.xlu0 %679
      %681 = vrot.lane.b32.xlu0 %v296, 84
      %v682 = vpop.permute.xlu0 %681
      %683 = vrot.lane.b32.xlu0 %v301, 84
      %v684 = vpop.permute.xlu0 %683
      %685 = vrot.lane.b32.xlu0 %v306, 84
      %v686 = vpop.permute.xlu0 %685
      %687 = vrot.lane.b32.xlu0 %v311, 84
      %v688 = vpop.permute.xlu0 %687
      %689 = vrot.lane.b32.xlu0 %v279, 126
      %v690 = vpop.permute.xlu0 %689
      %691 = vrot.lane.b32.xlu0 %v280, 126
      %v692 = vpop.permute.xlu0 %691
      %693 = vrot.lane.b32.xlu0 %v281, 126
      %v694 = vpop.permute.xlu0 %693
      %695 = vrot.lane.b32.xlu0 %v282, 126
      %v696 = vpop.permute.xlu0 %695
      %697 = vrot.lane.b32.xlu0 %v283, 126
      %v698 = vpop.permute.xlu0 %697
      %699 = vrot.lane.b32.xlu0 %v284, 126
      %v700 = vpop.permute.xlu0 %699
      %701 = vrot.lane.b32.xlu0 %v285, 126
      %v702 = vpop.permute.xlu0 %701
      %703 = vrot.lane.b32.xlu0 %v286, 126
      %v704 = vpop.permute.xlu0 %703
      %705 = vrot.lane.b32.xlu0 %v287, 126
      %v706 = vpop.permute.xlu0 %705
      %707 = vrot.lane.b32.xlu0 %v288, 126
      %v708 = vpop.permute.xlu0 %707
      %709 = vrot.lane.b32.xlu0 %v289, 126
      %v710 = vpop.permute.xlu0 %709
      %711 = vrot.lane.b32.xlu0 %v290, 126
      %v712 = vpop.permute.xlu0 %711
      %vm713 = vcmask 1031168
      %v714 = vsel %vm713, %v690, %v692
      %v715 = vsel %vm713, %v692, %v694
      %v716 = vsel %vm713, %v694, %v696
      %v717 = vsel %vm713, %v698, %v700
      %v718 = vsel %vm713, %v700, %v702
      %v719 = vsel %vm713, %v702, %v704
      %v720 = vsel %vm713, %v706, %v708
      %v721 = vsel %vm713, %v708, %v710
      %v722 = vsel %vm713, %v710, %v712
      %v731 = vsel %vm385, %v680, 0
      %v733 = vsel %vm385, %v682, 0
      %v735 = vsel %vm385, %v684, 0
      %v737 = vsel %vm385, %v686, 0
      %v739 = vsel %vm385, %v688, 0
      %v741 = vsel %vm396, %v720, 0
      %v743 = vsel %vm396, %v721, 0
      %v745 = vsel %vm396, %v722, 0
      %v747 = vsel %vm396, %v712, 0
      %749 = vmatpush.msra.mxu0 0.0
      %750 = vmatpush.msra.mxu0 0.0
      %751 = vmatpush.msra.mxu0 0.0
      %752 = vmatpush.msra.mxu0 0.0
      %753 = vmatpush.msra.mxu0 0.0
      %754 = vmatpush.msra.mxu0 0.0
      %755 = vmatpush.msra.mxu0 0.0
      %756 = vmatpush.msra.mxu0 0.0
      %757 = vmatpush.msra.mxu0 0.0
      %758 = vmatpush.msra.mxu0 0.0
      %759 = vmatpush.msra.mxu0 0.0
      %760 = vmatpush.msra.mxu0 0.0
      %761 = vmatpush.msra.mxu0 0.0
      %762 = vmatpush.msra.mxu0 %v741
      %763 = vmatpush.msra.mxu0 %v717
      %764 = vmatpush.msra.mxu0 %v714
      %765 = vmatmul.f32.gmra.mxu0 %v731
      %v766 = vpop.f32.mrf.mxu0
      %v767 = vadd.f32 0.0, %v766
      %768 = vmatmul.f32.gmra.mxu0 %v733
      %v769 = vpop.f32.mrf.mxu0
      %v770 = vadd.f32 0.0, %v769
      %771 = vmatmul.f32.gmra.mxu0 %v735
      %v772 = vpop.f32.mrf.mxu0
      %v773 = vadd.f32 0.0, %v772
      %774 = vmatmul.f32.gmra.mxu0 %v737
      %v775 = vpop.f32.mrf.mxu0
      %v776 = vadd.f32 0.0, %v775
      %777 = vmatmul.f32.gmra.mxu0 %v739
      %v778 = vpop.f32.mrf.mxu0
      %v779 = vadd.f32 0.0, %v778
      %780 = vdwg.mxu0
      %781 = vmatpush.msra.mxu0 0.0
      %782 = vmatpush.msra.mxu0 0.0
      %783 = vmatpush.msra.mxu0 0.0
      %784 = vmatpush.msra.mxu0 0.0
      %785 = vmatpush.msra.mxu0 0.0
      %786 = vmatpush.msra.mxu0 0.0
      %787 = vmatpush.msra.mxu0 0.0
      %788 = vmatpush.msra.mxu0 0.0
      %789 = vmatpush.msra.mxu0 0.0
      %790 = vmatpush.msra.mxu0 0.0
      %791 = vmatpush.msra.mxu0 0.0
      %792 = vmatpush.msra.mxu0 0.0
      %793 = vmatpush.msra.mxu0 0.0
      %794 = vmatpush.msra.mxu0 %v743
      %795 = vmatpush.msra.mxu0 %v718
      %796 = vmatpush.msra.mxu0 %v715
      %797 = vmatmul.f32.gmra.mxu0 %v731
      %v798 = vpop.f32.mrf.mxu0
      %v799 = vadd.f32 0.0, %v798
      %800 = vmatmul.f32.gmra.mxu0 %v733
      %v801 = vpop.f32.mrf.mxu0
      %v802 = vadd.f32 0.0, %v801
      %803 = vmatmul.f32.gmra.mxu0 %v735
      %v804 = vpop.f32.mrf.mxu0
      %v805 = vadd.f32 0.0, %v804
      %806 = vmatmul.f32.gmra.mxu0 %v737
      %v807 = vpop.f32.mrf.mxu0
      %v808 = vadd.f32 0.0, %v807
      %809 = vmatmul.f32.gmra.mxu0 %v739
      %v810 = vpop.f32.mrf.mxu0
      %v811 = vadd.f32 0.0, %v810
      %812 = vdwg.mxu0
      %813 = vmatpush.msra.mxu0 0.0
      %814 = vmatpush.msra.mxu0 0.0
      %815 = vmatpush.msra.mxu0 0.0
      %816 = vmatpush.msra.mxu0 0.0
      %817 = vmatpush.msra.mxu0 0.0
      %818 = vmatpush.msra.mxu0 0.0
      %819 = vmatpush.msra.mxu0 0.0
      %820 = vmatpush.msra.mxu0 0.0
      %821 = vmatpush.msra.mxu0 0.0
      %822 = vmatpush.msra.mxu0 0.0
      %823 = vmatpush.msra.mxu0 0.0
      %824 = vmatpush.msra.mxu0 0.0
      %825 = vmatpush.msra.mxu0 0.0
      %826 = vmatpush.msra.mxu0 %v745
      %827 = vmatpush.msra.mxu0 %v719
      %828 = vmatpush.msra.mxu0 %v716
      %829 = vmatmul.f32.gmra.mxu0 %v731
      %v830 = vpop.f32.mrf.mxu0
      %v831 = vadd.f32 0.0, %v830
      %832 = vmatmul.f32.gmra.mxu0 %v733
      %v833 = vpop.f32.mrf.mxu0
      %v834 = vadd.f32 0.0, %v833
      %835 = vmatmul.f32.gmra.mxu0 %v735
      %v836 = vpop.f32.mrf.mxu0
      %v837 = vadd.f32 0.0, %v836
      %838 = vmatmul.f32.gmra.mxu0 %v737
      %v839 = vpop.f32.mrf.mxu0
      %v840 = vadd.f32 0.0, %v839
      %841 = vmatmul.f32.gmra.mxu0 %v739
      %v842 = vpop.f32.mrf.mxu0
      %v843 = vadd.f32 0.0, %v842
      %844 = vdwg.mxu0
      %845 = vmatpush.msra.mxu0 0.0
      %846 = vmatpush.msra.mxu0 0.0
      %847 = vmatpush.msra.mxu0 0.0
      %848 = vmatpush.msra.mxu0 0.0
      %849 = vmatpush.msra.mxu0 0.0
      %850 = vmatpush.msra.mxu0 0.0
      %851 = vmatpush.msra.mxu0 0.0
      %852 = vmatpush.msra.mxu0 0.0
      %853 = vmatpush.msra.mxu0 0.0
      %854 = vmatpush.msra.mxu0 0.0
      %855 = vmatpush.msra.mxu0 0.0
      %856 = vmatpush.msra.mxu0 0.0
      %857 = vmatpush.msra.mxu0 0.0
      %858 = vmatpush.msra.mxu0 %v747
      %859 = vmatpush.msra.mxu0 %v704
      %860 = vmatpush.msra.mxu0 %v696
      %861 = vmatmul.f32.gmra.mxu0 %v731
      %v862 = vpop.f32.mrf.mxu0
      %v863 = vadd.f32 0.0, %v862
      %864 = vmatmul.f32.gmra.mxu0 %v733
      %v865 = vpop.f32.mrf.mxu0
      %v866 = vadd.f32 0.0, %v865
      %867 = vmatmul.f32.gmra.mxu0 %v735
      %v868 = vpop.f32.mrf.mxu0
      %v869 = vadd.f32 0.0, %v868
      %870 = vmatmul.f32.gmra.mxu0 %v737
      %v871 = vpop.f32.mrf.mxu0
      %v872 = vadd.f32 0.0, %v871
      %873 = vmatmul.f32.gmra.mxu0 %v739
      %v874 = vpop.f32.mrf.mxu0
      %v875 = vadd.f32 0.0, %v874
      %876 = vdwg.mxu0
      %v877 = vadd.f32 %v569, %v767
      %v878 = vadd.f32 %v601, %v799
      %v879 = vadd.f32 %v633, %v831
      %v880 = vadd.f32 %v665, %v863
      %v881 = vadd.f32 %v572, %v770
      %v882 = vadd.f32 %v604, %v802
      %v883 = vadd.f32 %v636, %v834
      %v884 = vadd.f32 %v668, %v866
      %v885 = vadd.f32 %v575, %v773
      %v886 = vadd.f32 %v607, %v805
      %v887 = vadd.f32 %v639, %v837
      %v888 = vadd.f32 %v671, %v869
      %v889 = vadd.f32 %v578, %v776
      %v890 = vadd.f32 %v610, %v808
      %v891 = vadd.f32 %v642, %v840
      %v892 = vadd.f32 %v674, %v872
      %v893 = vadd.f32 %v581, %v779
      %v894 = vadd.f32 %v613, %v811
      %v895 = vadd.f32 %v645, %v843
      %v896 = vadd.f32 %v677, %v875
      %897 = vrot.lane.b32.xlu0 %v291, 62
      %v898 = vpop.permute.xlu0 %897
      %899 = vrot.lane.b32.xlu0 %v296, 62
      %v900 = vpop.permute.xlu0 %899
      %901 = vrot.lane.b32.xlu0 %v301, 62
      %v902 = vpop.permute.xlu0 %901
      %903 = vrot.lane.b32.xlu0 %v306, 62
      %v904 = vpop.permute.xlu0 %903
      %905 = vrot.lane.b32.xlu0 %v311, 62
      %v906 = vpop.permute.xlu0 %905
      %907 = vrot.lane.b32.xlu0 %v279, 125
      %v908 = vpop.permute.xlu0 %907
      %909 = vrot.lane.b32.xlu0 %v280, 125
      %v910 = vpop.permute.xlu0 %909
      %911 = vrot.lane.b32.xlu0 %v281, 125
      %v912 = vpop.permute.xlu0 %911
      %913 = vrot.lane.b32.xlu0 %v282, 125
      %v914 = vpop.permute.xlu0 %913
      %915 = vrot.lane.b32.xlu0 %v283, 125
      %v916 = vpop.permute.xlu0 %915
      %917 = vrot.lane.b32.xlu0 %v284, 125
      %v918 = vpop.permute.xlu0 %917
      %919 = vrot.lane.b32.xlu0 %v285, 125
      %v920 = vpop.permute.xlu0 %919
      %921 = vrot.lane.b32.xlu0 %v286, 125
      %v922 = vpop.permute.xlu0 %921
      %923 = vrot.lane.b32.xlu0 %v287, 125
      %v924 = vpop.permute.xlu0 %923
      %925 = vrot.lane.b32.xlu0 %v288, 125
      %v926 = vpop.permute.xlu0 %925
      %927 = vrot.lane.b32.xlu0 %v289, 125
      %v928 = vpop.permute.xlu0 %927
      %929 = vrot.lane.b32.xlu0 %v290, 125
      %v930 = vpop.permute.xlu0 %929
      %vm931 = vcmask 1022976
      %v932 = vsel %vm931, %v908, %v910
      %v933 = vsel %vm931, %v910, %v912
      %v934 = vsel %vm931, %v912, %v914
      %v935 = vsel %vm931, %v916, %v918
      %v936 = vsel %vm931, %v918, %v920
      %v937 = vsel %vm931, %v920, %v922
      %v938 = vsel %vm931, %v924, %v926
      %v939 = vsel %vm931, %v926, %v928
      %v940 = vsel %vm931, %v928, %v930
      %v949 = vsel %vm385, %v898, 0
      %v951 = vsel %vm385, %v900, 0
      %v953 = vsel %vm385, %v902, 0
      %v955 = vsel %vm385, %v904, 0
      %v957 = vsel %vm385, %v906, 0
      %v959 = vsel %vm396, %v938, 0
      %v961 = vsel %vm396, %v939, 0
      %v963 = vsel %vm396, %v940, 0
      %v965 = vsel %vm396, %v930, 0
      %967 = vmatpush.msra.mxu0 0.0
      %968 = vmatpush.msra.mxu0 0.0
      %969 = vmatpush.msra.mxu0 0.0
      %970 = vmatpush.msra.mxu0 0.0
      %971 = vmatpush.msra.mxu0 0.0
      %972 = vmatpush.msra.mxu0 0.0
      %973 = vmatpush.msra.mxu0 0.0
      %974 = vmatpush.msra.mxu0 0.0
      %975 = vmatpush.msra.mxu0 0.0
      %976 = vmatpush.msra.mxu0 0.0
      %977 = vmatpush.msra.mxu0 0.0
      %978 = vmatpush.msra.mxu0 0.0
      %979 = vmatpush.msra.mxu0 0.0
      %980 = vmatpush.msra.mxu0 %v959
      %981 = vmatpush.msra.mxu0 %v935
      %982 = vmatpush.msra.mxu0 %v932
      %983 = vmatmul.f32.gmra.mxu0 %v949
      %v984 = vpop.f32.mrf.mxu0
      %v985 = vadd.f32 0.0, %v984
      %986 = vmatmul.f32.gmra.mxu0 %v951
      %v987 = vpop.f32.mrf.mxu0
      %v988 = vadd.f32 0.0, %v987
      %989 = vmatmul.f32.gmra.mxu0 %v953
      %v990 = vpop.f32.mrf.mxu0
      %v991 = vadd.f32 0.0, %v990
      %992 = vmatmul.f32.gmra.mxu0 %v955
      %v993 = vpop.f32.mrf.mxu0
      %v994 = vadd.f32 0.0, %v993
      %995 = vmatmul.f32.gmra.mxu0 %v957
      %v996 = vpop.f32.mrf.mxu0
      %v997 = vadd.f32 0.0, %v996
      %998 = vdwg.mxu0
      %999 = vmatpush.msra.mxu0 0.0
      %1000 = vmatpush.msra.mxu0 0.0
      %1001 = vmatpush.msra.mxu0 0.0
      %1002 = vmatpush.msra.mxu0 0.0
      %1003 = vmatpush.msra.mxu0 0.0
      %1004 = vmatpush.msra.mxu0 0.0
      %1005 = vmatpush.msra.mxu0 0.0
      %1006 = vmatpush.msra.mxu0 0.0
      %1007 = vmatpush.msra.mxu0 0.0
      %1008 = vmatpush.msra.mxu0 0.0
      %1009 = vmatpush.msra.mxu0 0.0
      %1010 = vmatpush.msra.mxu0 0.0
      %1011 = vmatpush.msra.mxu0 0.0
      %1012 = vmatpush.msra.mxu0 %v961
      %1013 = vmatpush.msra.mxu0 %v936
      %1014 = vmatpush.msra.mxu0 %v933
      %1015 = vmatmul.f32.gmra.mxu0 %v949
      %v1016 = vpop.f32.mrf.mxu0
      %v1017 = vadd.f32 0.0, %v1016
      %1018 = vmatmul.f32.gmra.mxu0 %v951
      %v1019 = vpop.f32.mrf.mxu0
      %v1020 = vadd.f32 0.0, %v1019
      %1021 = vmatmul.f32.gmra.mxu0 %v953
      %v1022 = vpop.f32.mrf.mxu0
      %v1023 = vadd.f32 0.0, %v1022
      %1024 = vmatmul.f32.gmra.mxu0 %v955
      %v1025 = vpop.f32.mrf.mxu0
      %v1026 = vadd.f32 0.0, %v1025
      %1027 = vmatmul.f32.gmra.mxu0 %v957
      %v1028 = vpop.f32.mrf.mxu0
      %v1029 = vadd.f32 0.0, %v1028
      %1030 = vdwg.mxu0
      %1031 = vmatpush.msra.mxu0 0.0
      %1032 = vmatpush.msra.mxu0 0.0
      %1033 = vmatpush.msra.mxu0 0.0
      %1034 = vmatpush.msra.mxu0 0.0
      %1035 = vmatpush.msra.mxu0 0.0
      %1036 = vmatpush.msra.mxu0 0.0
      %1037 = vmatpush.msra.mxu0 0.0
      %1038 = vmatpush.msra.mxu0 0.0
      %1039 = vmatpush.msra.mxu0 0.0
      %1040 = vmatpush.msra.mxu0 0.0
      %1041 = vmatpush.msra.mxu0 0.0
      %1042 = vmatpush.msra.mxu0 0.0
      %1043 = vmatpush.msra.mxu0 0.0
      %1044 = vmatpush.msra.mxu0 %v963
      %1045 = vmatpush.msra.mxu0 %v937
      %1046 = vmatpush.msra.mxu0 %v934
      %1047 = vmatmul.f32.gmra.mxu0 %v949
      %v1048 = vpop.f32.mrf.mxu0
      %v1049 = vadd.f32 0.0, %v1048
      %1050 = vmatmul.f32.gmra.mxu0 %v951
      %v1051 = vpop.f32.mrf.mxu0
      %v1052 = vadd.f32 0.0, %v1051
      %1053 = vmatmul.f32.gmra.mxu0 %v953
      %v1054 = vpop.f32.mrf.mxu0
      %v1055 = vadd.f32 0.0, %v1054
      %1056 = vmatmul.f32.gmra.mxu0 %v955
      %v1057 = vpop.f32.mrf.mxu0
      %v1058 = vadd.f32 0.0, %v1057
      %1059 = vmatmul.f32.gmra.mxu0 %v957
      %v1060 = vpop.f32.mrf.mxu0
      %v1061 = vadd.f32 0.0, %v1060
      %1062 = vdwg.mxu0
      %1063 = vmatpush.msra.mxu0 0.0
      %1064 = vmatpush.msra.mxu0 0.0
      %1065 = vmatpush.msra.mxu0 0.0
      %1066 = vmatpush.msra.mxu0 0.0
      %1067 = vmatpush.msra.mxu0 0.0
      %1068 = vmatpush.msra.mxu0 0.0
      %1069 = vmatpush.msra.mxu0 0.0
      %1070 = vmatpush.msra.mxu0 0.0
      %1071 = vmatpush.msra.mxu0 0.0
      %1072 = vmatpush.msra.mxu0 0.0
      %1073 = vmatpush.msra.mxu0 0.0
      %1074 = vmatpush.msra.mxu0 0.0
      %1075 = vmatpush.msra.mxu0 0.0
      %1076 = vmatpush.msra.mxu0 %v965
      %1077 = vmatpush.msra.mxu0 %v922
      %1078 = vmatpush.msra.mxu0 %v914
      %1079 = vmatmul.f32.gmra.mxu0 %v949
      %v1080 = vpop.f32.mrf.mxu0
      %v1081 = vadd.f32 0.0, %v1080
      %1082 = vmatmul.f32.gmra.mxu0 %v951
      %v1083 = vpop.f32.mrf.mxu0
      %v1084 = vadd.f32 0.0, %v1083
      %1085 = vmatmul.f32.gmra.mxu0 %v953
      %v1086 = vpop.f32.mrf.mxu0
      %v1087 = vadd.f32 0.0, %v1086
      %1088 = vmatmul.f32.gmra.mxu0 %v955
      %v1089 = vpop.f32.mrf.mxu0
      %v1090 = vadd.f32 0.0, %v1089
      %1091 = vmatmul.f32.gmra.mxu0 %v957
      %v1092 = vpop.f32.mrf.mxu0
      %v1093 = vadd.f32 0.0, %v1092
      %1094 = vdwg.mxu0
      %v1095 = vadd.f32 %v877, %v985
      %v1096 = vadd.f32 %v878, %v1017
      %v1097 = vadd.f32 %v879, %v1049
      %v1098 = vadd.f32 %v880, %v1081
      %v1099 = vadd.f32 %v881, %v988
      %v1100 = vadd.f32 %v882, %v1020
      %v1101 = vadd.f32 %v883, %v1052
      %v1102 = vadd.f32 %v884, %v1084
      %v1103 = vadd.f32 %v885, %v991
      %v1104 = vadd.f32 %v886, %v1023
      %v1105 = vadd.f32 %v887, %v1055
      %v1106 = vadd.f32 %v888, %v1087
      %v1107 = vadd.f32 %v889, %v994
      %v1108 = vadd.f32 %v890, %v1026
      %v1109 = vadd.f32 %v891, %v1058
      %v1110 = vadd.f32 %v892, %v1090
      %v1111 = vadd.f32 %v893, %v997
      %v1112 = vadd.f32 %v894, %v1029
      %v1113 = vadd.f32 %v895, %v1061
      %v1114 = vadd.f32 %v896, %v1093
      %1115 = vrot.lane.b32.xlu0 %v291, 40
      %v1116 = vpop.permute.xlu0 %1115
      %1117 = vrot.lane.b32.xlu0 %v296, 40
      %v1118 = vpop.permute.xlu0 %1117
      %1119 = vrot.lane.b32.xlu0 %v301, 40
      %v1120 = vpop.permute.xlu0 %1119
      %1121 = vrot.lane.b32.xlu0 %v306, 40
      %v1122 = vpop.permute.xlu0 %1121
      %1123 = vrot.lane.b32.xlu0 %v311, 40
      %v1124 = vpop.permute.xlu0 %1123
      %1125 = vrot.lane.b32.xlu0 %v279, 124
      %v1126 = vpop.permute.xlu0 %1125
      %1127 = vrot.lane.b32.xlu0 %v280, 124
      %v1128 = vpop.permute.xlu0 %1127
      %1129 = vrot.lane.b32.xlu0 %v281, 124
      %v1130 = vpop.permute.xlu0 %1129
      %1131 = vrot.lane.b32.xlu0 %v282, 124
      %v1132 = vpop.permute.xlu0 %1131
      %1133 = vrot.lane.b32.xlu0 %v283, 124
      %v1134 = vpop.permute.xlu0 %1133
      %1135 = vrot.lane.b32.xlu0 %v284, 124
      %v1136 = vpop.permute.xlu0 %1135
      %1137 = vrot.lane.b32.xlu0 %v285, 124
      %v1138 = vpop.permute.xlu0 %1137
      %1139 = vrot.lane.b32.xlu0 %v286, 124
      %v1140 = vpop.permute.xlu0 %1139
      %1141 = vrot.lane.b32.xlu0 %v287, 124
      %v1142 = vpop.permute.xlu0 %1141
      %1143 = vrot.lane.b32.xlu0 %v288, 124
      %v1144 = vpop.permute.xlu0 %1143
      %1145 = vrot.lane.b32.xlu0 %v289, 124
      %v1146 = vpop.permute.xlu0 %1145
      %1147 = vrot.lane.b32.xlu0 %v290, 124
      %v1148 = vpop.permute.xlu0 %1147
      %vm1149 = vcmask 1014784
      %v1150 = vsel %vm1149, %v1126, %v1128
      %v1151 = vsel %vm1149, %v1128, %v1130
      %v1152 = vsel %vm1149, %v1130, %v1132
      %v1153 = vsel %vm1149, %v1134, %v1136
      %v1154 = vsel %vm1149, %v1136, %v1138
      %v1155 = vsel %vm1149, %v1138, %v1140
      %v1156 = vsel %vm1149, %v1142, %v1144
      %v1157 = vsel %vm1149, %v1144, %v1146
      %v1158 = vsel %vm1149, %v1146, %v1148
      %v1167 = vsel %vm385, %v1116, 0
      %v1169 = vsel %vm385, %v1118, 0
      %v1171 = vsel %vm385, %v1120, 0
      %v1173 = vsel %vm385, %v1122, 0
      %v1175 = vsel %vm385, %v1124, 0
      %v1177 = vsel %vm396, %v1156, 0
      %v1179 = vsel %vm396, %v1157, 0
      %v1181 = vsel %vm396, %v1158, 0
      %v1183 = vsel %vm396, %v1148, 0
      %1185 = vmatpush.msra.mxu0 0.0
      %1186 = vmatpush.msra.mxu0 0.0
      %1187 = vmatpush.msra.mxu0 0.0
      %1188 = vmatpush.msra.mxu0 0.0
      %1189 = vmatpush.msra.mxu0 0.0
      %1190 = vmatpush.msra.mxu0 0.0
      %1191 = vmatpush.msra.mxu0 0.0
      %1192 = vmatpush.msra.mxu0 0.0
      %1193 = vmatpush.msra.mxu0 0.0
      %1194 = vmatpush.msra.mxu0 0.0
      %1195 = vmatpush.msra.mxu0 0.0
      %1196 = vmatpush.msra.mxu0 0.0
      %1197 = vmatpush.msra.mxu0 0.0
      %1198 = vmatpush.msra.mxu0 %v1177
      %1199 = vmatpush.msra.mxu0 %v1153
      %1200 = vmatpush.msra.mxu0 %v1150
      %1201 = vmatmul.f32.gmra.mxu0 %v1167
      %v1202 = vpop.f32.mrf.mxu0
      %v1203 = vadd.f32 0.0, %v1202
      %1204 = vmatmul.f32.gmra.mxu0 %v1169
      %v1205 = vpop.f32.mrf.mxu0
      %v1206 = vadd.f32 0.0, %v1205
      %1207 = vmatmul.f32.gmra.mxu0 %v1171
      %v1208 = vpop.f32.mrf.mxu0
      %v1209 = vadd.f32 0.0, %v1208
      %1210 = vmatmul.f32.gmra.mxu0 %v1173
      %v1211 = vpop.f32.mrf.mxu0
      %v1212 = vadd.f32 0.0, %v1211
      %1213 = vmatmul.f32.gmra.mxu0 %v1175
      %v1214 = vpop.f32.mrf.mxu0
      %v1215 = vadd.f32 0.0, %v1214
      %1216 = vdwg.mxu0
      %1217 = vmatpush.msra.mxu0 0.0
      %1218 = vmatpush.msra.mxu0 0.0
      %1219 = vmatpush.msra.mxu0 0.0
      %1220 = vmatpush.msra.mxu0 0.0
      %1221 = vmatpush.msra.mxu0 0.0
      %1222 = vmatpush.msra.mxu0 0.0
      %1223 = vmatpush.msra.mxu0 0.0
      %1224 = vmatpush.msra.mxu0 0.0
      %1225 = vmatpush.msra.mxu0 0.0
      %1226 = vmatpush.msra.mxu0 0.0
      %1227 = vmatpush.msra.mxu0 0.0
      %1228 = vmatpush.msra.mxu0 0.0
      %1229 = vmatpush.msra.mxu0 0.0
      %1230 = vmatpush.msra.mxu0 %v1179
      %1231 = vmatpush.msra.mxu0 %v1154
      %1232 = vmatpush.msra.mxu0 %v1151
      %1233 = vmatmul.f32.gmra.mxu0 %v1167
      %v1234 = vpop.f32.mrf.mxu0
      %v1235 = vadd.f32 0.0, %v1234
      %1236 = vmatmul.f32.gmra.mxu0 %v1169
      %v1237 = vpop.f32.mrf.mxu0
      %v1238 = vadd.f32 0.0, %v1237
      %1239 = vmatmul.f32.gmra.mxu0 %v1171
      %v1240 = vpop.f32.mrf.mxu0
      %v1241 = vadd.f32 0.0, %v1240
      %1242 = vmatmul.f32.gmra.mxu0 %v1173
      %v1243 = vpop.f32.mrf.mxu0
      %v1244 = vadd.f32 0.0, %v1243
      %1245 = vmatmul.f32.gmra.mxu0 %v1175
      %v1246 = vpop.f32.mrf.mxu0
      %v1247 = vadd.f32 0.0, %v1246
      %1248 = vdwg.mxu0
      %1249 = vmatpush.msra.mxu0 0.0
      %1250 = vmatpush.msra.mxu0 0.0
      %1251 = vmatpush.msra.mxu0 0.0
      %1252 = vmatpush.msra.mxu0 0.0
      %1253 = vmatpush.msra.mxu0 0.0
      %1254 = vmatpush.msra.mxu0 0.0
      %1255 = vmatpush.msra.mxu0 0.0
      %1256 = vmatpush.msra.mxu0 0.0
      %1257 = vmatpush.msra.mxu0 0.0
      %1258 = vmatpush.msra.mxu0 0.0
      %1259 = vmatpush.msra.mxu0 0.0
      %1260 = vmatpush.msra.mxu0 0.0
      %1261 = vmatpush.msra.mxu0 0.0
      %1262 = vmatpush.msra.mxu0 %v1181
      %1263 = vmatpush.msra.mxu0 %v1155
      %1264 = vmatpush.msra.mxu0 %v1152
      %1265 = vmatmul.f32.gmra.mxu0 %v1167
      %v1266 = vpop.f32.mrf.mxu0
      %v1267 = vadd.f32 0.0, %v1266
      %1268 = vmatmul.f32.gmra.mxu0 %v1169
      %v1269 = vpop.f32.mrf.mxu0
      %v1270 = vadd.f32 0.0, %v1269
      %1271 = vmatmul.f32.gmra.mxu0 %v1171
      %v1272 = vpop.f32.mrf.mxu0
      %v1273 = vadd.f32 0.0, %v1272
      %1274 = vmatmul.f32.gmra.mxu0 %v1173
      %v1275 = vpop.f32.mrf.mxu0
      %v1276 = vadd.f32 0.0, %v1275
      %1277 = vmatmul.f32.gmra.mxu0 %v1175
      %v1278 = vpop.f32.mrf.mxu0
      %v1279 = vadd.f32 0.0, %v1278
      %1280 = vdwg.mxu0
      %1281 = vmatpush.msra.mxu0 0.0
      %1282 = vmatpush.msra.mxu0 0.0
      %1283 = vmatpush.msra.mxu0 0.0
      %1284 = vmatpush.msra.mxu0 0.0
      %1285 = vmatpush.msra.mxu0 0.0
      %1286 = vmatpush.msra.mxu0 0.0
      %1287 = vmatpush.msra.mxu0 0.0
      %1288 = vmatpush.msra.mxu0 0.0
      %1289 = vmatpush.msra.mxu0 0.0
      %1290 = vmatpush.msra.mxu0 0.0
      %1291 = vmatpush.msra.mxu0 0.0
      %1292 = vmatpush.msra.mxu0 0.0
      %1293 = vmatpush.msra.mxu0 0.0
      %1294 = vmatpush.msra.mxu0 %v1183
      %1295 = vmatpush.msra.mxu0 %v1140
      %1296 = vmatpush.msra.mxu0 %v1132
      %1297 = vmatmul.f32.gmra.mxu0 %v1167
      %v1298 = vpop.f32.mrf.mxu0
      %v1299 = vadd.f32 0.0, %v1298
      %1300 = vmatmul.f32.gmra.mxu0 %v1169
      %v1301 = vpop.f32.mrf.mxu0
      %v1302 = vadd.f32 0.0, %v1301
      %1303 = vmatmul.f32.gmra.mxu0 %v1171
      %v1304 = vpop.f32.mrf.mxu0
      %v1305 = vadd.f32 0.0, %v1304
      %1306 = vmatmul.f32.gmra.mxu0 %v1173
      %v1307 = vpop.f32.mrf.mxu0
      %v1308 = vadd.f32 0.0, %v1307
      %1309 = vmatmul.f32.gmra.mxu0 %v1175
      %v1310 = vpop.f32.mrf.mxu0
      %v1311 = vadd.f32 0.0, %v1310
      %1312 = vdwg.mxu0
      %v1313 = vadd.f32 %v1095, %v1203
      %v1314 = vadd.f32 %v1096, %v1235
      %v1315 = vadd.f32 %v1097, %v1267
      %v1316 = vadd.f32 %v1098, %v1299
      %v1317 = vadd.f32 %v1099, %v1206
      %v1318 = vadd.f32 %v1100, %v1238
      %v1319 = vadd.f32 %v1101, %v1270
      %v1320 = vadd.f32 %v1102, %v1302
      %v1321 = vadd.f32 %v1103, %v1209
      %v1322 = vadd.f32 %v1104, %v1241
      %v1323 = vadd.f32 %v1105, %v1273
      %v1324 = vadd.f32 %v1106, %v1305
      %v1325 = vadd.f32 %v1107, %v1212
      %v1326 = vadd.f32 %v1108, %v1244
      %v1327 = vadd.f32 %v1109, %v1276
      %v1328 = vadd.f32 %v1110, %v1308
      %v1329 = vadd.f32 %v1111, %v1215
      %v1330 = vadd.f32 %v1112, %v1247
      %v1331 = vadd.f32 %v1113, %v1279
      %v1332 = vadd.f32 %v1114, %v1311
      %1338 = vrot.lane.b32.xlu0 %v291, 18
      %v1339 = vpop.permute.xlu0 %1338
      %1340 = vrot.lane.b32.xlu0 %v292, 18
      %v1341 = vpop.permute.xlu0 %1340
      %1342 = vrot.lane.b32.xlu0 %v296, 18
      %v1343 = vpop.permute.xlu0 %1342
      %1344 = vrot.lane.b32.xlu0 %v297, 18
      %v1345 = vpop.permute.xlu0 %1344
      %1346 = vrot.lane.b32.xlu0 %v301, 18
      %v1347 = vpop.permute.xlu0 %1346
      %1348 = vrot.lane.b32.xlu0 %v302, 18
      %v1349 = vpop.permute.xlu0 %1348
      %1350 = vrot.lane.b32.xlu0 %v306, 18
      %v1351 = vpop.permute.xlu0 %1350
      %1352 = vrot.lane.b32.xlu0 %v307, 18
      %v1353 = vpop.permute.xlu0 %1352
      %1354 = vrot.lane.b32.xlu0 %v311, 18
      %v1355 = vpop.permute.xlu0 %1354
      %1356 = vrot.lane.b32.xlu0 %v312, 18
      %v1357 = vpop.permute.xlu0 %1356
      %vm1358 = vcmask 146432
      %v1359 = vsel %vm1358, %v1339, %v1341
      %v1360 = vsel %vm1358, %v1343, %v1345
      %v1361 = vsel %vm1358, %v1347, %v1349
      %v1362 = vsel %vm1358, %v1351, %v1353
      %v1363 = vsel %vm1358, %v1355, %v1357
      %1364 = vrot.lane.b32.xlu0 %v279, 123
      %v1365 = vpop.permute.xlu0 %1364
      %1366 = vrot.lane.b32.xlu0 %v280, 123
      %v1367 = vpop.permute.xlu0 %1366
      %1368 = vrot.lane.b32.xlu0 %v281, 123
      %v1369 = vpop.permute.xlu0 %1368
      %1370 = vrot.lane.b32.xlu0 %v282, 123
      %v1371 = vpop.permute.xlu0 %1370
      %1372 = vrot.lane.b32.xlu0 %v283, 123
      %v1373 = vpop.permute.xlu0 %1372
      %1374 = vrot.lane.b32.xlu0 %v284, 123
      %v1375 = vpop.permute.xlu0 %1374
      %1376 = vrot.lane.b32.xlu0 %v285, 123
      %v1377 = vpop.permute.xlu0 %1376
      %1378 = vrot.lane.b32.xlu0 %v286, 123
      %v1379 = vpop.permute.xlu0 %1378
      %1380 = vrot.lane.b32.xlu0 %v287, 123
      %v1381 = vpop.permute.xlu0 %1380
      %1382 = vrot.lane.b32.xlu0 %v288, 123
      %v1383 = vpop.permute.xlu0 %1382
      %1384 = vrot.lane.b32.xlu0 %v289, 123
      %v1385 = vpop.permute.xlu0 %1384
      %1386 = vrot.lane.b32.xlu0 %v290, 123
      %v1387 = vpop.permute.xlu0 %1386
      %vm1388 = vcmask 1006592
      %v1389 = vsel %vm1388, %v1365, %v1367
      %v1390 = vsel %vm1388, %v1367, %v1369
      %v1391 = vsel %vm1388, %v1369, %v1371
      %v1392 = vsel %vm1388, %v1373, %v1375
      %v1393 = vsel %vm1388, %v1375, %v1377
      %v1394 = vsel %vm1388, %v1377, %v1379
      %v1395 = vsel %vm1388, %v1381, %v1383
      %v1396 = vsel %vm1388, %v1383, %v1385
      %v1397 = vsel %vm1388, %v1385, %v1387
      %v1406 = vsel %vm385, %v1359, 0
      %v1408 = vsel %vm385, %v1360, 0
      %v1410 = vsel %vm385, %v1361, 0
      %v1412 = vsel %vm385, %v1362, 0
      %v1414 = vsel %vm385, %v1363, 0
      %v1416 = vsel %vm396, %v1395, 0
      %v1418 = vsel %vm396, %v1396, 0
      %v1420 = vsel %vm396, %v1397, 0
      %v1422 = vsel %vm396, %v1387, 0
      %1424 = vmatpush.msra.mxu0 0.0
      %1425 = vmatpush.msra.mxu0 0.0
      %1426 = vmatpush.msra.mxu0 0.0
      %1427 = vmatpush.msra.mxu0 0.0
      %1428 = vmatpush.msra.mxu0 0.0
      %1429 = vmatpush.msra.mxu0 0.0
      %1430 = vmatpush.msra.mxu0 0.0
      %1431 = vmatpush.msra.mxu0 0.0
      %1432 = vmatpush.msra.mxu0 0.0
      %1433 = vmatpush.msra.mxu0 0.0
      %1434 = vmatpush.msra.mxu0 0.0
      %1435 = vmatpush.msra.mxu0 0.0
      %1436 = vmatpush.msra.mxu0 0.0
      %1437 = vmatpush.msra.mxu0 %v1416
      %1438 = vmatpush.msra.mxu0 %v1392
      %1439 = vmatpush.msra.mxu0 %v1389
      %1440 = vmatmul.f32.gmra.mxu0 %v1406
      %v1441 = vpop.f32.mrf.mxu0
      %v1442 = vadd.f32 0.0, %v1441
      %1443 = vmatmul.f32.gmra.mxu0 %v1408
      %v1444 = vpop.f32.mrf.mxu0
      %v1445 = vadd.f32 0.0, %v1444
      %1446 = vmatmul.f32.gmra.mxu0 %v1410
      %v1447 = vpop.f32.mrf.mxu0
      %v1448 = vadd.f32 0.0, %v1447
      %1449 = vmatmul.f32.gmra.mxu0 %v1412
      %v1450 = vpop.f32.mrf.mxu0
      %v1451 = vadd.f32 0.0, %v1450
      %1452 = vmatmul.f32.gmra.mxu0 %v1414
      %v1453 = vpop.f32.mrf.mxu0
      %v1454 = vadd.f32 0.0, %v1453
      %1455 = vdwg.mxu0
      %1456 = vmatpush.msra.mxu0 0.0
      %1457 = vmatpush.msra.mxu0 0.0
      %1458 = vmatpush.msra.mxu0 0.0
      %1459 = vmatpush.msra.mxu0 0.0
      %1460 = vmatpush.msra.mxu0 0.0
      %1461 = vmatpush.msra.mxu0 0.0
      %1462 = vmatpush.msra.mxu0 0.0
      %1463 = vmatpush.msra.mxu0 0.0
      %1464 = vmatpush.msra.mxu0 0.0
      %1465 = vmatpush.msra.mxu0 0.0
      %1466 = vmatpush.msra.mxu0 0.0
      %1467 = vmatpush.msra.mxu0 0.0
      %1468 = vmatpush.msra.mxu0 0.0
      %1469 = vmatpush.msra.mxu0 %v1418
      %1470 = vmatpush.msra.mxu0 %v1393
      %1471 = vmatpush.msra.mxu0 %v1390
      %1472 = vmatmul.f32.gmra.mxu0 %v1406
      %v1473 = vpop.f32.mrf.mxu0
      %v1474 = vadd.f32 0.0, %v1473
      %1475 = vmatmul.f32.gmra.mxu0 %v1408
      %v1476 = vpop.f32.mrf.mxu0
      %v1477 = vadd.f32 0.0, %v1476
      %1478 = vmatmul.f32.gmra.mxu0 %v1410
      %v1479 = vpop.f32.mrf.mxu0
      %v1480 = vadd.f32 0.0, %v1479
      %1481 = vmatmul.f32.gmra.mxu0 %v1412
      %v1482 = vpop.f32.mrf.mxu0
      %v1483 = vadd.f32 0.0, %v1482
      %1484 = vmatmul.f32.gmra.mxu0 %v1414
      %v1485 = vpop.f32.mrf.mxu0
      %v1486 = vadd.f32 0.0, %v1485
      %1487 = vdwg.mxu0
      %1488 = vmatpush.msra.mxu0 0.0
      %1489 = vmatpush.msra.mxu0 0.0
      %1490 = vmatpush.msra.mxu0 0.0
      %1491 = vmatpush.msra.mxu0 0.0
      %1492 = vmatpush.msra.mxu0 0.0
      %1493 = vmatpush.msra.mxu0 0.0
      %1494 = vmatpush.msra.mxu0 0.0
      %1495 = vmatpush.msra.mxu0 0.0
      %1496 = vmatpush.msra.mxu0 0.0
      %1497 = vmatpush.msra.mxu0 0.0
      %1498 = vmatpush.msra.mxu0 0.0
      %1499 = vmatpush.msra.mxu0 0.0
      %1500 = vmatpush.msra.mxu0 0.0
      %1501 = vmatpush.msra.mxu0 %v1420
      %1502 = vmatpush.msra.mxu0 %v1394
      %1503 = vmatpush.msra.mxu0 %v1391
      %1504 = vmatmul.f32.gmra.mxu0 %v1406
      %v1505 = vpop.f32.mrf.mxu0
      %v1506 = vadd.f32 0.0, %v1505
      %1507 = vmatmul.f32.gmra.mxu0 %v1408
      %v1508 = vpop.f32.mrf.mxu0
      %v1509 = vadd.f32 0.0, %v1508
      %1510 = vmatmul.f32.gmra.mxu0 %v1410
      %v1511 = vpop.f32.mrf.mxu0
      %v1512 = vadd.f32 0.0, %v1511
      %1513 = vmatmul.f32.gmra.mxu0 %v1412
      %v1514 = vpop.f32.mrf.mxu0
      %v1515 = vadd.f32 0.0, %v1514
      %1516 = vmatmul.f32.gmra.mxu0 %v1414
      %v1517 = vpop.f32.mrf.mxu0
      %v1518 = vadd.f32 0.0, %v1517
      %1519 = vdwg.mxu0
      %1520 = vmatpush.msra.mxu0 0.0
      %1521 = vmatpush.msra.mxu0 0.0
      %1522 = vmatpush.msra.mxu0 0.0
      %1523 = vmatpush.msra.mxu0 0.0
      %1524 = vmatpush.msra.mxu0 0.0
      %1525 = vmatpush.msra.mxu0 0.0
      %1526 = vmatpush.msra.mxu0 0.0
      %1527 = vmatpush.msra.mxu0 0.0
      %1528 = vmatpush.msra.mxu0 0.0
      %1529 = vmatpush.msra.mxu0 0.0
      %1530 = vmatpush.msra.mxu0 0.0
      %1531 = vmatpush.msra.mxu0 0.0
      %1532 = vmatpush.msra.mxu0 0.0
      %1533 = vmatpush.msra.mxu0 %v1422
      %1534 = vmatpush.msra.mxu0 %v1379
      %1535 = vmatpush.msra.mxu0 %v1371
      %1536 = vmatmul.f32.gmra.mxu0 %v1406
      %v1537 = vpop.f32.mrf.mxu0
      %v1538 = vadd.f32 0.0, %v1537
      %1539 = vmatmul.f32.gmra.mxu0 %v1408
      %v1540 = vpop.f32.mrf.mxu0
      %v1541 = vadd.f32 0.0, %v1540
      %1542 = vmatmul.f32.gmra.mxu0 %v1410
      %v1543 = vpop.f32.mrf.mxu0
      %v1544 = vadd.f32 0.0, %v1543
      %1545 = vmatmul.f32.gmra.mxu0 %v1412
      %v1546 = vpop.f32.mrf.mxu0
      %v1547 = vadd.f32 0.0, %v1546
      %1548 = vmatmul.f32.gmra.mxu0 %v1414
      %v1549 = vpop.f32.mrf.mxu0
      %v1550 = vadd.f32 0.0, %v1549
      %1551 = vdwg.mxu0
      %v1552 = vadd.f32 %v1313, %v1442
      %v1553 = vadd.f32 %v1314, %v1474
      %v1554 = vadd.f32 %v1315, %v1506
      %v1555 = vadd.f32 %v1316, %v1538
      %v1556 = vadd.f32 %v1317, %v1445
      %v1557 = vadd.f32 %v1318, %v1477
      %v1558 = vadd.f32 %v1319, %v1509
      %v1559 = vadd.f32 %v1320, %v1541
      %v1560 = vadd.f32 %v1321, %v1448
      %v1561 = vadd.f32 %v1322, %v1480
      %v1562 = vadd.f32 %v1323, %v1512
      %v1563 = vadd.f32 %v1324, %v1544
      %v1564 = vadd.f32 %v1325, %v1451
      %v1565 = vadd.f32 %v1326, %v1483
      %v1566 = vadd.f32 %v1327, %v1515
      %v1567 = vadd.f32 %v1328, %v1547
      %v1568 = vadd.f32 %v1329, %v1454
      %v1569 = vadd.f32 %v1330, %v1486
      %v1570 = vadd.f32 %v1331, %v1518
      %v1571 = vadd.f32 %v1332, %v1550
      %1572 = vrot.lane.b32.xlu0 %v292, 124
      %v1573 = vpop.permute.xlu0 %1572
      %1574 = vrot.lane.b32.xlu0 %v297, 124
      %v1575 = vpop.permute.xlu0 %1574
      %1576 = vrot.lane.b32.xlu0 %v302, 124
      %v1577 = vpop.permute.xlu0 %1576
      %1578 = vrot.lane.b32.xlu0 %v307, 124
      %v1579 = vpop.permute.xlu0 %1578
      %1580 = vrot.lane.b32.xlu0 %v312, 124
      %v1581 = vpop.permute.xlu0 %1580
      %1582 = vrot.lane.b32.xlu0 %v279, 122
      %v1583 = vpop.permute.xlu0 %1582
      %1584 = vrot.lane.b32.xlu0 %v280, 122
      %v1585 = vpop.permute.xlu0 %1584
      %1586 = vrot.lane.b32.xlu0 %v281, 122
      %v1587 = vpop.permute.xlu0 %1586
      %1588 = vrot.lane.b32.xlu0 %v282, 122
      %v1589 = vpop.permute.xlu0 %1588
      %1590 = vrot.lane.b32.xlu0 %v283, 122
      %v1591 = vpop.permute.xlu0 %1590
      %1592 = vrot.lane.b32.xlu0 %v284, 122
      %v1593 = vpop.permute.xlu0 %1592
      %1594 = vrot.lane.b32.xlu0 %v285, 122
      %v1595 = vpop.permute.xlu0 %1594
      %1596 = vrot.lane.b32.xlu0 %v286, 122
      %v1597 = vpop.permute.xlu0 %1596
      %1598 = vrot.lane.b32.xlu0 %v287, 122
      %v1599 = vpop.permute.xlu0 %1598
      %1600 = vrot.lane.b32.xlu0 %v288, 122
      %v1601 = vpop.permute.xlu0 %1600
      %1602 = vrot.lane.b32.xlu0 %v289, 122
      %v1603 = vpop.permute.xlu0 %1602
      %1604 = vrot.lane.b32.xlu0 %v290, 122
      %v1605 = vpop.permute.xlu0 %1604
      %vm1606 = vcmask 998400
      %v1607 = vsel %vm1606, %v1583, %v1585
      %v1608 = vsel %vm1606, %v1585, %v1587
      %v1609 = vsel %vm1606, %v1587, %v1589
      %v1610 = vsel %vm1606, %v1591, %v1593
      %v1611 = vsel %vm1606, %v1593, %v1595
      %v1612 = vsel %vm1606, %v1595, %v1597
      %v1613 = vsel %vm1606, %v1599, %v1601
      %v1614 = vsel %vm1606, %v1601, %v1603
      %v1615 = vsel %vm1606, %v1603, %v1605
      %v1624 = vsel %vm385, %v1573, 0
      %v1626 = vsel %vm385, %v1575, 0
      %v1628 = vsel %vm385, %v1577, 0
      %v1630 = vsel %vm385, %v1579, 0
      %v1632 = vsel %vm385, %v1581, 0
      %v1634 = vsel %vm396, %v1613, 0
      %v1636 = vsel %vm396, %v1614, 0
      %v1638 = vsel %vm396, %v1615, 0
      %v1640 = vsel %vm396, %v1605, 0
      %1642 = vmatpush.msra.mxu0 0.0
      %1643 = vmatpush.msra.mxu0 0.0
      %1644 = vmatpush.msra.mxu0 0.0
      %1645 = vmatpush.msra.mxu0 0.0
      %1646 = vmatpush.msra.mxu0 0.0
      %1647 = vmatpush.msra.mxu0 0.0
      %1648 = vmatpush.msra.mxu0 0.0
      %1649 = vmatpush.msra.mxu0 0.0
      %1650 = vmatpush.msra.mxu0 0.0
      %1651 = vmatpush.msra.mxu0 0.0
      %1652 = vmatpush.msra.mxu0 0.0
      %1653 = vmatpush.msra.mxu0 0.0
      %1654 = vmatpush.msra.mxu0 0.0
      %1655 = vmatpush.msra.mxu0 %v1634
      %1656 = vmatpush.msra.mxu0 %v1610
      %1657 = vmatpush.msra.mxu0 %v1607
      %1658 = vmatmul.f32.gmra.mxu0 %v1624
      %v1659 = vpop.f32.mrf.mxu0
      %v1660 = vadd.f32 0.0, %v1659
      %1661 = vmatmul.f32.gmra.mxu0 %v1626
      %v1662 = vpop.f32.mrf.mxu0
      %v1663 = vadd.f32 0.0, %v1662
      %1664 = vmatmul.f32.gmra.mxu0 %v1628
      %v1665 = vpop.f32.mrf.mxu0
      %v1666 = vadd.f32 0.0, %v1665
      %1667 = vmatmul.f32.gmra.mxu0 %v1630
      %v1668 = vpop.f32.mrf.mxu0
      %v1669 = vadd.f32 0.0, %v1668
      %1670 = vmatmul.f32.gmra.mxu0 %v1632
      %v1671 = vpop.f32.mrf.mxu0
      %v1672 = vadd.f32 0.0, %v1671
      %1673 = vdwg.mxu0
      %1674 = vmatpush.msra.mxu0 0.0
      %1675 = vmatpush.msra.mxu0 0.0
      %1676 = vmatpush.msra.mxu0 0.0
      %1677 = vmatpush.msra.mxu0 0.0
      %1678 = vmatpush.msra.mxu0 0.0
      %1679 = vmatpush.msra.mxu0 0.0
      %1680 = vmatpush.msra.mxu0 0.0
      %1681 = vmatpush.msra.mxu0 0.0
      %1682 = vmatpush.msra.mxu0 0.0
      %1683 = vmatpush.msra.mxu0 0.0
      %1684 = vmatpush.msra.mxu0 0.0
      %1685 = vmatpush.msra.mxu0 0.0
      %1686 = vmatpush.msra.mxu0 0.0
      %1687 = vmatpush.msra.mxu0 %v1636
      %1688 = vmatpush.msra.mxu0 %v1611
      %1689 = vmatpush.msra.mxu0 %v1608
      %1690 = vmatmul.f32.gmra.mxu0 %v1624
      %v1691 = vpop.f32.mrf.mxu0
      %v1692 = vadd.f32 0.0, %v1691
      %1693 = vmatmul.f32.gmra.mxu0 %v1626
      %v1694 = vpop.f32.mrf.mxu0
      %v1695 = vadd.f32 0.0, %v1694
      %1696 = vmatmul.f32.gmra.mxu0 %v1628
      %v1697 = vpop.f32.mrf.mxu0
      %v1698 = vadd.f32 0.0, %v1697
      %1699 = vmatmul.f32.gmra.mxu0 %v1630
      %v1700 = vpop.f32.mrf.mxu0
      %v1701 = vadd.f32 0.0, %v1700
      %1702 = vmatmul.f32.gmra.mxu0 %v1632
      %v1703 = vpop.f32.mrf.mxu0
      %v1704 = vadd.f32 0.0, %v1703
      %1705 = vdwg.mxu0
      %1706 = vmatpush.msra.mxu0 0.0
      %1707 = vmatpush.msra.mxu0 0.0
      %1708 = vmatpush.msra.mxu0 0.0
      %1709 = vmatpush.msra.mxu0 0.0
      %1710 = vmatpush.msra.mxu0 0.0
      %1711 = vmatpush.msra.mxu0 0.0
      %1712 = vmatpush.msra.mxu0 0.0
      %1713 = vmatpush.msra.mxu0 0.0
      %1714 = vmatpush.msra.mxu0 0.0
      %1715 = vmatpush.msra.mxu0 0.0
      %1716 = vmatpush.msra.mxu0 0.0
      %1717 = vmatpush.msra.mxu0 0.0
      %1718 = vmatpush.msra.mxu0 0.0
      %1719 = vmatpush.msra.mxu0 %v1638
      %1720 = vmatpush.msra.mxu0 %v1612
      %1721 = vmatpush.msra.mxu0 %v1609
      %1722 = vmatmul.f32.gmra.mxu0 %v1624
      %v1723 = vpop.f32.mrf.mxu0
      %v1724 = vadd.f32 0.0, %v1723
      %1725 = vmatmul.f32.gmra.mxu0 %v1626
      %v1726 = vpop.f32.mrf.mxu0
      %v1727 = vadd.f32 0.0, %v1726
      %1728 = vmatmul.f32.gmra.mxu0 %v1628
      %v1729 = vpop.f32.mrf.mxu0
      %v1730 = vadd.f32 0.0, %v1729
      %1731 = vmatmul.f32.gmra.mxu0 %v1630
      %v1732 = vpop.f32.mrf.mxu0
      %v1733 = vadd.f32 0.0, %v1732
      %1734 = vmatmul.f32.gmra.mxu0 %v1632
      %v1735 = vpop.f32.mrf.mxu0
      %v1736 = vadd.f32 0.0, %v1735
      %1737 = vdwg.mxu0
      %1738 = vmatpush.msra.mxu0 0.0
      %1739 = vmatpush.msra.mxu0 0.0
      %1740 = vmatpush.msra.mxu0 0.0
      %1741 = vmatpush.msra.mxu0 0.0
      %1742 = vmatpush.msra.mxu0 0.0
      %1743 = vmatpush.msra.mxu0 0.0
      %1744 = vmatpush.msra.mxu0 0.0
      %1745 = vmatpush.msra.mxu0 0.0
      %1746 = vmatpush.msra.mxu0 0.0
      %1747 = vmatpush.msra.mxu0 0.0
      %1748 = vmatpush.msra.mxu0 0.0
      %1749 = vmatpush.msra.mxu0 0.0
      %1750 = vmatpush.msra.mxu0 0.0
      %1751 = vmatpush.msra.mxu0 %v1640
      %1752 = vmatpush.msra.mxu0 %v1597
      %1753 = vmatpush.msra.mxu0 %v1589
      %1754 = vmatmul.f32.gmra.mxu0 %v1624
      %v1755 = vpop.f32.mrf.mxu0
      %v1756 = vadd.f32 0.0, %v1755
      %1757 = vmatmul.f32.gmra.mxu0 %v1626
      %v1758 = vpop.f32.mrf.mxu0
      %v1759 = vadd.f32 0.0, %v1758
      %1760 = vmatmul.f32.gmra.mxu0 %v1628
      %v1761 = vpop.f32.mrf.mxu0
      %v1762 = vadd.f32 0.0, %v1761
      %1763 = vmatmul.f32.gmra.mxu0 %v1630
      %v1764 = vpop.f32.mrf.mxu0
      %v1765 = vadd.f32 0.0, %v1764
      %1766 = vmatmul.f32.gmra.mxu0 %v1632
      %v1767 = vpop.f32.mrf.mxu0
      %v1768 = vadd.f32 0.0, %v1767
      %1769 = vdwg.mxu0
      %v1770 = vadd.f32 %v1552, %v1660
      %v1771 = vadd.f32 %v1553, %v1692
      %v1772 = vadd.f32 %v1554, %v1724
      %v1773 = vadd.f32 %v1555, %v1756
      %v1774 = vadd.f32 %v1556, %v1663
      %v1775 = vadd.f32 %v1557, %v1695
      %v1776 = vadd.f32 %v1558, %v1727
      %v1777 = vadd.f32 %v1559, %v1759
      %v1778 = vadd.f32 %v1560, %v1666
      %v1779 = vadd.f32 %v1561, %v1698
      %v1780 = vadd.f32 %v1562, %v1730
      %v1781 = vadd.f32 %v1563, %v1762
      %v1782 = vadd.f32 %v1564, %v1669
      %v1783 = vadd.f32 %v1565, %v1701
      %v1784 = vadd.f32 %v1566, %v1733
      %v1785 = vadd.f32 %v1567, %v1765
      %v1786 = vadd.f32 %v1568, %v1672
      %v1787 = vadd.f32 %v1569, %v1704
      %v1788 = vadd.f32 %v1570, %v1736
      %v1789 = vadd.f32 %v1571, %v1768
      %1790 = vrot.lane.b32.xlu0 %v292, 102
      %v1791 = vpop.permute.xlu0 %1790
      %1792 = vrot.lane.b32.xlu0 %v297, 102
      %v1793 = vpop.permute.xlu0 %1792
      %1794 = vrot.lane.b32.xlu0 %v302, 102
      %v1795 = vpop.permute.xlu0 %1794
      %1796 = vrot.lane.b32.xlu0 %v307, 102
      %v1797 = vpop.permute.xlu0 %1796
      %1798 = vrot.lane.b32.xlu0 %v312, 102
      %v1799 = vpop.permute.xlu0 %1798
      %1800 = vrot.lane.b32.xlu0 %v279, 121
      %v1801 = vpop.permute.xlu0 %1800
      %1802 = vrot.lane.b32.xlu0 %v280, 121
      %v1803 = vpop.permute.xlu0 %1802
      %1804 = vrot.lane.b32.xlu0 %v281, 121
      %v1805 = vpop.permute.xlu0 %1804
      %1806 = vrot.lane.b32.xlu0 %v282, 121
      %v1807 = vpop.permute.xlu0 %1806
      %1808 = vrot.lane.b32.xlu0 %v283, 121
      %v1809 = vpop.permute.xlu0 %1808
      %1810 = vrot.lane.b32.xlu0 %v284, 121
      %v1811 = vpop.permute.xlu0 %1810
      %1812 = vrot.lane.b32.xlu0 %v285, 121
      %v1813 = vpop.permute.xlu0 %1812
      %1814 = vrot.lane.b32.xlu0 %v286, 121
      %v1815 = vpop.permute.xlu0 %1814
      %1816 = vrot.lane.b32.xlu0 %v287, 121
      %v1817 = vpop.permute.xlu0 %1816
      %1818 = vrot.lane.b32.xlu0 %v288, 121
      %v1819 = vpop.permute.xlu0 %1818
      %1820 = vrot.lane.b32.xlu0 %v289, 121
      %v1821 = vpop.permute.xlu0 %1820
      %1822 = vrot.lane.b32.xlu0 %v290, 121
      %v1823 = vpop.permute.xlu0 %1822
      %vm1824 = vcmask 990208
      %v1825 = vsel %vm1824, %v1801, %v1803
      %v1826 = vsel %vm1824, %v1803, %v1805
      %v1827 = vsel %vm1824, %v1805, %v1807
      %v1828 = vsel %vm1824, %v1809, %v1811
      %v1829 = vsel %vm1824, %v1811, %v1813
      %v1830 = vsel %vm1824, %v1813, %v1815
      %v1831 = vsel %vm1824, %v1817, %v1819
      %v1832 = vsel %vm1824, %v1819, %v1821
      %v1833 = vsel %vm1824, %v1821, %v1823
      %v1842 = vsel %vm385, %v1791, 0
      %v1844 = vsel %vm385, %v1793, 0
      %v1846 = vsel %vm385, %v1795, 0
      %v1848 = vsel %vm385, %v1797, 0
      %v1850 = vsel %vm385, %v1799, 0
      %v1852 = vsel %vm396, %v1831, 0
      %v1854 = vsel %vm396, %v1832, 0
      %v1856 = vsel %vm396, %v1833, 0
      %v1858 = vsel %vm396, %v1823, 0
      %1860 = vmatpush.msra.mxu0 0.0
      %1861 = vmatpush.msra.mxu0 0.0
      %1862 = vmatpush.msra.mxu0 0.0
      %1863 = vmatpush.msra.mxu0 0.0
      %1864 = vmatpush.msra.mxu0 0.0
      %1865 = vmatpush.msra.mxu0 0.0
      %1866 = vmatpush.msra.mxu0 0.0
      %1867 = vmatpush.msra.mxu0 0.0
      %1868 = vmatpush.msra.mxu0 0.0
      %1869 = vmatpush.msra.mxu0 0.0
      %1870 = vmatpush.msra.mxu0 0.0
      %1871 = vmatpush.msra.mxu0 0.0
      %1872 = vmatpush.msra.mxu0 0.0
      %1873 = vmatpush.msra.mxu0 %v1852
      %1874 = vmatpush.msra.mxu0 %v1828
      %1875 = vmatpush.msra.mxu0 %v1825
      %1876 = vmatmul.f32.gmra.mxu0 %v1842
      %v1877 = vpop.f32.mrf.mxu0
      %v1878 = vadd.f32 0.0, %v1877
      %1879 = vmatmul.f32.gmra.mxu0 %v1844
      %v1880 = vpop.f32.mrf.mxu0
      %v1881 = vadd.f32 0.0, %v1880
      %1882 = vmatmul.f32.gmra.mxu0 %v1846
      %v1883 = vpop.f32.mrf.mxu0
      %v1884 = vadd.f32 0.0, %v1883
      %1885 = vmatmul.f32.gmra.mxu0 %v1848
      %v1886 = vpop.f32.mrf.mxu0
      %v1887 = vadd.f32 0.0, %v1886
      %1888 = vmatmul.f32.gmra.mxu0 %v1850
      %v1889 = vpop.f32.mrf.mxu0
      %v1890 = vadd.f32 0.0, %v1889
      %1891 = vdwg.mxu0
      %1892 = vmatpush.msra.mxu0 0.0
      %1893 = vmatpush.msra.mxu0 0.0
      %1894 = vmatpush.msra.mxu0 0.0
      %1895 = vmatpush.msra.mxu0 0.0
      %1896 = vmatpush.msra.mxu0 0.0
      %1897 = vmatpush.msra.mxu0 0.0
      %1898 = vmatpush.msra.mxu0 0.0
      %1899 = vmatpush.msra.mxu0 0.0
      %1900 = vmatpush.msra.mxu0 0.0
      %1901 = vmatpush.msra.mxu0 0.0
      %1902 = vmatpush.msra.mxu0 0.0
      %1903 = vmatpush.msra.mxu0 0.0
      %1904 = vmatpush.msra.mxu0 0.0
      %1905 = vmatpush.msra.mxu0 %v1854
      %1906 = vmatpush.msra.mxu0 %v1829
      %1907 = vmatpush.msra.mxu0 %v1826
      %1908 = vmatmul.f32.gmra.mxu0 %v1842
      %v1909 = vpop.f32.mrf.mxu0
      %v1910 = vadd.f32 0.0, %v1909
      %1911 = vmatmul.f32.gmra.mxu0 %v1844
      %v1912 = vpop.f32.mrf.mxu0
      %v1913 = vadd.f32 0.0, %v1912
      %1914 = vmatmul.f32.gmra.mxu0 %v1846
      %v1915 = vpop.f32.mrf.mxu0
      %v1916 = vadd.f32 0.0, %v1915
      %1917 = vmatmul.f32.gmra.mxu0 %v1848
      %v1918 = vpop.f32.mrf.mxu0
      %v1919 = vadd.f32 0.0, %v1918
      %1920 = vmatmul.f32.gmra.mxu0 %v1850
      %v1921 = vpop.f32.mrf.mxu0
      %v1922 = vadd.f32 0.0, %v1921
      %1923 = vdwg.mxu0
      %1924 = vmatpush.msra.mxu0 0.0
      %1925 = vmatpush.msra.mxu0 0.0
      %1926 = vmatpush.msra.mxu0 0.0
      %1927 = vmatpush.msra.mxu0 0.0
      %1928 = vmatpush.msra.mxu0 0.0
      %1929 = vmatpush.msra.mxu0 0.0
      %1930 = vmatpush.msra.mxu0 0.0
      %1931 = vmatpush.msra.mxu0 0.0
      %1932 = vmatpush.msra.mxu0 0.0
      %1933 = vmatpush.msra.mxu0 0.0
      %1934 = vmatpush.msra.mxu0 0.0
      %1935 = vmatpush.msra.mxu0 0.0
      %1936 = vmatpush.msra.mxu0 0.0
      %1937 = vmatpush.msra.mxu0 %v1856
      %1938 = vmatpush.msra.mxu0 %v1830
      %1939 = vmatpush.msra.mxu0 %v1827
      %1940 = vmatmul.f32.gmra.mxu0 %v1842
      %v1941 = vpop.f32.mrf.mxu0
      %v1942 = vadd.f32 0.0, %v1941
      %1943 = vmatmul.f32.gmra.mxu0 %v1844
      %v1944 = vpop.f32.mrf.mxu0
      %v1945 = vadd.f32 0.0, %v1944
      %1946 = vmatmul.f32.gmra.mxu0 %v1846
      %v1947 = vpop.f32.mrf.mxu0
      %v1948 = vadd.f32 0.0, %v1947
      %1949 = vmatmul.f32.gmra.mxu0 %v1848
      %v1950 = vpop.f32.mrf.mxu0
      %v1951 = vadd.f32 0.0, %v1950
      %1952 = vmatmul.f32.gmra.mxu0 %v1850
      %v1953 = vpop.f32.mrf.mxu0
      %v1954 = vadd.f32 0.0, %v1953
      %1955 = vdwg.mxu0
      %1956 = vmatpush.msra.mxu0 0.0
      %1957 = vmatpush.msra.mxu0 0.0
      %1958 = vmatpush.msra.mxu0 0.0
      %1959 = vmatpush.msra.mxu0 0.0
      %1960 = vmatpush.msra.mxu0 0.0
      %1961 = vmatpush.msra.mxu0 0.0
      %1962 = vmatpush.msra.mxu0 0.0
      %1963 = vmatpush.msra.mxu0 0.0
      %1964 = vmatpush.msra.mxu0 0.0
      %1965 = vmatpush.msra.mxu0 0.0
      %1966 = vmatpush.msra.mxu0 0.0
      %1967 = vmatpush.msra.mxu0 0.0
      %1968 = vmatpush.msra.mxu0 0.0
      %1969 = vmatpush.msra.mxu0 %v1858
      %1970 = vmatpush.msra.mxu0 %v1815
      %1971 = vmatpush.msra.mxu0 %v1807
      %1972 = vmatmul.f32.gmra.mxu0 %v1842
      %v1973 = vpop.f32.mrf.mxu0
      %v1974 = vadd.f32 0.0, %v1973
      %1975 = vmatmul.f32.gmra.mxu0 %v1844
      %v1976 = vpop.f32.mrf.mxu0
      %v1977 = vadd.f32 0.0, %v1976
      %1978 = vmatmul.f32.gmra.mxu0 %v1846
      %v1979 = vpop.f32.mrf.mxu0
      %v1980 = vadd.f32 0.0, %v1979
      %1981 = vmatmul.f32.gmra.mxu0 %v1848
      %v1982 = vpop.f32.mrf.mxu0
      %v1983 = vadd.f32 0.0, %v1982
      %1984 = vmatmul.f32.gmra.mxu0 %v1850
      %v1985 = vpop.f32.mrf.mxu0
      %v1986 = vadd.f32 0.0, %v1985
      %1987 = vdwg.mxu0
      %v1988 = vadd.f32 %v1770, %v1878
      %v1989 = vadd.f32 %v1771, %v1910
      %v1990 = vadd.f32 %v1772, %v1942
      %v1991 = vadd.f32 %v1773, %v1974
      %v1992 = vadd.f32 %v1774, %v1881
      %v1993 = vadd.f32 %v1775, %v1913
      %v1994 = vadd.f32 %v1776, %v1945
      %v1995 = vadd.f32 %v1777, %v1977
      %v1996 = vadd.f32 %v1778, %v1884
      %v1997 = vadd.f32 %v1779, %v1916
      %v1998 = vadd.f32 %v1780, %v1948
      %v1999 = vadd.f32 %v1781, %v1980
      %v2000 = vadd.f32 %v1782, %v1887
      %v2001 = vadd.f32 %v1783, %v1919
      %v2002 = vadd.f32 %v1784, %v1951
      %v2003 = vadd.f32 %v1785, %v1983
      %v2004 = vadd.f32 %v1786, %v1890
      %v2005 = vadd.f32 %v1787, %v1922
      %v2006 = vadd.f32 %v1788, %v1954
      %v2007 = vadd.f32 %v1789, %v1986
      %2008 = vrot.lane.b32.xlu0 %v292, 80
      %v2009 = vpop.permute.xlu0 %2008
      %2010 = vrot.lane.b32.xlu0 %v297, 80
      %v2011 = vpop.permute.xlu0 %2010
      %2012 = vrot.lane.b32.xlu0 %v302, 80
      %v2013 = vpop.permute.xlu0 %2012
      %2014 = vrot.lane.b32.xlu0 %v307, 80
      %v2015 = vpop.permute.xlu0 %2014
      %2016 = vrot.lane.b32.xlu0 %v312, 80
      %v2017 = vpop.permute.xlu0 %2016
      %2018 = vrot.lane.b32.xlu0 %v279, 120
      %v2019 = vpop.permute.xlu0 %2018
      %2020 = vrot.lane.b32.xlu0 %v280, 120
      %v2021 = vpop.permute.xlu0 %2020
      %2022 = vrot.lane.b32.xlu0 %v281, 120
      %v2023 = vpop.permute.xlu0 %2022
      %2024 = vrot.lane.b32.xlu0 %v282, 120
      %v2025 = vpop.permute.xlu0 %2024
      %2026 = vrot.lane.b32.xlu0 %v283, 120
      %v2027 = vpop.permute.xlu0 %2026
      %2028 = vrot.lane.b32.xlu0 %v284, 120
      %v2029 = vpop.permute.xlu0 %2028
      %2030 = vrot.lane.b32.xlu0 %v285, 120
      %v2031 = vpop.permute.xlu0 %2030
      %2032 = vrot.lane.b32.xlu0 %v286, 120
      %v2033 = vpop.permute.xlu0 %2032
      %2034 = vrot.lane.b32.xlu0 %v287, 120
      %v2035 = vpop.permute.xlu0 %2034
      %2036 = vrot.lane.b32.xlu0 %v288, 120
      %v2037 = vpop.permute.xlu0 %2036
      %2038 = vrot.lane.b32.xlu0 %v289, 120
      %v2039 = vpop.permute.xlu0 %2038
      %2040 = vrot.lane.b32.xlu0 %v290, 120
      %v2041 = vpop.permute.xlu0 %2040
      %vm2042 = vcmask 982016
      %v2043 = vsel %vm2042, %v2019, %v2021
      %v2044 = vsel %vm2042, %v2021, %v2023
      %v2045 = vsel %vm2042, %v2023, %v2025
      %v2046 = vsel %vm2042, %v2027, %v2029
      %v2047 = vsel %vm2042, %v2029, %v2031
      %v2048 = vsel %vm2042, %v2031, %v2033
      %v2049 = vsel %vm2042, %v2035, %v2037
      %v2050 = vsel %vm2042, %v2037, %v2039
      %v2051 = vsel %vm2042, %v2039, %v2041
      %v2060 = vsel %vm385, %v2009, 0
      %v2062 = vsel %vm385, %v2011, 0
      %v2064 = vsel %vm385, %v2013, 0
      %v2066 = vsel %vm385, %v2015, 0
      %v2068 = vsel %vm385, %v2017, 0
      %v2070 = vsel %vm396, %v2049, 0
      %v2072 = vsel %vm396, %v2050, 0
      %v2074 = vsel %vm396, %v2051, 0
      %v2076 = vsel %vm396, %v2041, 0
      %2078 = vmatpush.msra.mxu0 0.0
      %2079 = vmatpush.msra.mxu0 0.0
      %2080 = vmatpush.msra.mxu0 0.0
      %2081 = vmatpush.msra.mxu0 0.0
      %2082 = vmatpush.msra.mxu0 0.0
      %2083 = vmatpush.msra.mxu0 0.0
      %2084 = vmatpush.msra.mxu0 0.0
      %2085 = vmatpush.msra.mxu0 0.0
      %2086 = vmatpush.msra.mxu0 0.0
      %2087 = vmatpush.msra.mxu0 0.0
      %2088 = vmatpush.msra.mxu0 0.0
      %2089 = vmatpush.msra.mxu0 0.0
      %2090 = vmatpush.msra.mxu0 0.0
      %2091 = vmatpush.msra.mxu0 %v2070
      %2092 = vmatpush.msra.mxu0 %v2046
      %2093 = vmatpush.msra.mxu0 %v2043
      %2094 = vmatmul.f32.gmra.mxu0 %v2060
      %v2095 = vpop.f32.mrf.mxu0
      %v2096 = vadd.f32 0.0, %v2095
      %2097 = vmatmul.f32.gmra.mxu0 %v2062
      %v2098 = vpop.f32.mrf.mxu0
      %v2099 = vadd.f32 0.0, %v2098
      %2100 = vmatmul.f32.gmra.mxu0 %v2064
      %v2101 = vpop.f32.mrf.mxu0
      %v2102 = vadd.f32 0.0, %v2101
      %2103 = vmatmul.f32.gmra.mxu0 %v2066
      %v2104 = vpop.f32.mrf.mxu0
      %v2105 = vadd.f32 0.0, %v2104
      %2106 = vmatmul.f32.gmra.mxu0 %v2068
      %v2107 = vpop.f32.mrf.mxu0
      %v2108 = vadd.f32 0.0, %v2107
      %2109 = vdwg.mxu0
      %2110 = vmatpush.msra.mxu0 0.0
      %2111 = vmatpush.msra.mxu0 0.0
      %2112 = vmatpush.msra.mxu0 0.0
      %2113 = vmatpush.msra.mxu0 0.0
      %2114 = vmatpush.msra.mxu0 0.0
      %2115 = vmatpush.msra.mxu0 0.0
      %2116 = vmatpush.msra.mxu0 0.0
      %2117 = vmatpush.msra.mxu0 0.0
      %2118 = vmatpush.msra.mxu0 0.0
      %2119 = vmatpush.msra.mxu0 0.0
      %2120 = vmatpush.msra.mxu0 0.0
      %2121 = vmatpush.msra.mxu0 0.0
      %2122 = vmatpush.msra.mxu0 0.0
      %2123 = vmatpush.msra.mxu0 %v2072
      %2124 = vmatpush.msra.mxu0 %v2047
      %2125 = vmatpush.msra.mxu0 %v2044
      %2126 = vmatmul.f32.gmra.mxu0 %v2060
      %v2127 = vpop.f32.mrf.mxu0
      %v2128 = vadd.f32 0.0, %v2127
      %2129 = vmatmul.f32.gmra.mxu0 %v2062
      %v2130 = vpop.f32.mrf.mxu0
      %v2131 = vadd.f32 0.0, %v2130
      %2132 = vmatmul.f32.gmra.mxu0 %v2064
      %v2133 = vpop.f32.mrf.mxu0
      %v2134 = vadd.f32 0.0, %v2133
      %2135 = vmatmul.f32.gmra.mxu0 %v2066
      %v2136 = vpop.f32.mrf.mxu0
      %v2137 = vadd.f32 0.0, %v2136
      %2138 = vmatmul.f32.gmra.mxu0 %v2068
      %v2139 = vpop.f32.mrf.mxu0
      %v2140 = vadd.f32 0.0, %v2139
      %2141 = vdwg.mxu0
      %2142 = vmatpush.msra.mxu0 0.0
      %2143 = vmatpush.msra.mxu0 0.0
      %2144 = vmatpush.msra.mxu0 0.0
      %2145 = vmatpush.msra.mxu0 0.0
      %2146 = vmatpush.msra.mxu0 0.0
      %2147 = vmatpush.msra.mxu0 0.0
      %2148 = vmatpush.msra.mxu0 0.0
      %2149 = vmatpush.msra.mxu0 0.0
      %2150 = vmatpush.msra.mxu0 0.0
      %2151 = vmatpush.msra.mxu0 0.0
      %2152 = vmatpush.msra.mxu0 0.0
      %2153 = vmatpush.msra.mxu0 0.0
      %2154 = vmatpush.msra.mxu0 0.0
      %2155 = vmatpush.msra.mxu0 %v2074
      %2156 = vmatpush.msra.mxu0 %v2048
      %2157 = vmatpush.msra.mxu0 %v2045
      %2158 = vmatmul.f32.gmra.mxu0 %v2060
      %v2159 = vpop.f32.mrf.mxu0
      %v2160 = vadd.f32 0.0, %v2159
      %2161 = vmatmul.f32.gmra.mxu0 %v2062
      %v2162 = vpop.f32.mrf.mxu0
      %v2163 = vadd.f32 0.0, %v2162
      %2164 = vmatmul.f32.gmra.mxu0 %v2064
      %v2165 = vpop.f32.mrf.mxu0
      %v2166 = vadd.f32 0.0, %v2165
      %2167 = vmatmul.f32.gmra.mxu0 %v2066
      %v2168 = vpop.f32.mrf.mxu0
      %v2169 = vadd.f32 0.0, %v2168
      %2170 = vmatmul.f32.gmra.mxu0 %v2068
      %v2171 = vpop.f32.mrf.mxu0
      %v2172 = vadd.f32 0.0, %v2171
      %2173 = vdwg.mxu0
      %2174 = vmatpush.msra.mxu0 0.0
      %2175 = vmatpush.msra.mxu0 0.0
      %2176 = vmatpush.msra.mxu0 0.0
      %2177 = vmatpush.msra.mxu0 0.0
      %2178 = vmatpush.msra.mxu0 0.0
      %2179 = vmatpush.msra.mxu0 0.0
      %2180 = vmatpush.msra.mxu0 0.0
      %2181 = vmatpush.msra.mxu0 0.0
      %2182 = vmatpush.msra.mxu0 0.0
      %2183 = vmatpush.msra.mxu0 0.0
      %2184 = vmatpush.msra.mxu0 0.0
      %2185 = vmatpush.msra.mxu0 0.0
      %2186 = vmatpush.msra.mxu0 0.0
      %2187 = vmatpush.msra.mxu0 %v2076
      %2188 = vmatpush.msra.mxu0 %v2033
      %2189 = vmatpush.msra.mxu0 %v2025
      %2190 = vmatmul.f32.gmra.mxu0 %v2060
      %v2191 = vpop.f32.mrf.mxu0
      %v2192 = vadd.f32 0.0, %v2191
      %2193 = vmatmul.f32.gmra.mxu0 %v2062
      %v2194 = vpop.f32.mrf.mxu0
      %v2195 = vadd.f32 0.0, %v2194
      %2196 = vmatmul.f32.gmra.mxu0 %v2064
      %v2197 = vpop.f32.mrf.mxu0
      %v2198 = vadd.f32 0.0, %v2197
      %2199 = vmatmul.f32.gmra.mxu0 %v2066
      %v2200 = vpop.f32.mrf.mxu0
      %v2201 = vadd.f32 0.0, %v2200
      %2202 = vmatmul.f32.gmra.mxu0 %v2068
      %v2203 = vpop.f32.mrf.mxu0
      %v2204 = vadd.f32 0.0, %v2203
      %2205 = vdwg.mxu0
      %v2206 = vadd.f32 %v1988, %v2096
      %v2207 = vadd.f32 %v1989, %v2128
      %v2208 = vadd.f32 %v1990, %v2160
      %v2209 = vadd.f32 %v1991, %v2192
      %v2210 = vadd.f32 %v1992, %v2099
      %v2211 = vadd.f32 %v1993, %v2131
      %v2212 = vadd.f32 %v1994, %v2163
      %v2213 = vadd.f32 %v1995, %v2195
      %v2214 = vadd.f32 %v1996, %v2102
      %v2215 = vadd.f32 %v1997, %v2134
      %v2216 = vadd.f32 %v1998, %v2166
      %v2217 = vadd.f32 %v1999, %v2198
      %v2218 = vadd.f32 %v2000, %v2105
      %v2219 = vadd.f32 %v2001, %v2137
      %v2220 = vadd.f32 %v2002, %v2169
      %v2221 = vadd.f32 %v2003, %v2201
      %v2222 = vadd.f32 %v2004, %v2108
      %v2223 = vadd.f32 %v2005, %v2140
      %v2224 = vadd.f32 %v2006, %v2172
      %v2225 = vadd.f32 %v2007, %v2204
      %2226 = vrot.lane.b32.xlu0 %v292, 58
      %v2227 = vpop.permute.xlu0 %2226
      %2228 = vrot.lane.b32.xlu0 %v297, 58
      %v2229 = vpop.permute.xlu0 %2228
      %2230 = vrot.lane.b32.xlu0 %v302, 58
      %v2231 = vpop.permute.xlu0 %2230
      %2232 = vrot.lane.b32.xlu0 %v307, 58
      %v2233 = vpop.permute.xlu0 %2232
      %2234 = vrot.lane.b32.xlu0 %v312, 58
      %v2235 = vpop.permute.xlu0 %2234
      %2236 = vrot.lane.b32.xlu0 %v279, 119
      %v2237 = vpop.permute.xlu0 %2236
      %2238 = vrot.lane.b32.xlu0 %v280, 119
      %v2239 = vpop.permute.xlu0 %2238
      %2240 = vrot.lane.b32.xlu0 %v281, 119
      %v2241 = vpop.permute.xlu0 %2240
      %2242 = vrot.lane.b32.xlu0 %v282, 119
      %v2243 = vpop.permute.xlu0 %2242
      %2244 = vrot.lane.b32.xlu0 %v283, 119
      %v2245 = vpop.permute.xlu0 %2244
      %2246 = vrot.lane.b32.xlu0 %v284, 119
      %v2247 = vpop.permute.xlu0 %2246
      %2248 = vrot.lane.b32.xlu0 %v285, 119
      %v2249 = vpop.permute.xlu0 %2248
      %2250 = vrot.lane.b32.xlu0 %v286, 119
      %v2251 = vpop.permute.xlu0 %2250
      %2252 = vrot.lane.b32.xlu0 %v287, 119
      %v2253 = vpop.permute.xlu0 %2252
      %2254 = vrot.lane.b32.xlu0 %v288, 119
      %v2255 = vpop.permute.xlu0 %2254
      %2256 = vrot.lane.b32.xlu0 %v289, 119
      %v2257 = vpop.permute.xlu0 %2256
      %2258 = vrot.lane.b32.xlu0 %v290, 119
      %v2259 = vpop.permute.xlu0 %2258
      %vm2260 = vcmask 973824
      %v2261 = vsel %vm2260, %v2237, %v2239
      %v2262 = vsel %vm2260, %v2239, %v2241
      %v2263 = vsel %vm2260, %v2241, %v2243
      %v2264 = vsel %vm2260, %v2245, %v2247
      %v2265 = vsel %vm2260, %v2247, %v2249
      %v2266 = vsel %vm2260, %v2249, %v2251
      %v2267 = vsel %vm2260, %v2253, %v2255
      %v2268 = vsel %vm2260, %v2255, %v2257
      %v2269 = vsel %vm2260, %v2257, %v2259
      %v2278 = vsel %vm385, %v2227, 0
      %v2280 = vsel %vm385, %v2229, 0
      %v2282 = vsel %vm385, %v2231, 0
      %v2284 = vsel %vm385, %v2233, 0
      %v2286 = vsel %vm385, %v2235, 0
      %v2288 = vsel %vm396, %v2267, 0
      %v2290 = vsel %vm396, %v2268, 0
      %v2292 = vsel %vm396, %v2269, 0
      %v2294 = vsel %vm396, %v2259, 0
      %2296 = vmatpush.msra.mxu0 0.0
      %2297 = vmatpush.msra.mxu0 0.0
      %2298 = vmatpush.msra.mxu0 0.0
      %2299 = vmatpush.msra.mxu0 0.0
      %2300 = vmatpush.msra.mxu0 0.0
      %2301 = vmatpush.msra.mxu0 0.0
      %2302 = vmatpush.msra.mxu0 0.0
      %2303 = vmatpush.msra.mxu0 0.0
      %2304 = vmatpush.msra.mxu0 0.0
      %2305 = vmatpush.msra.mxu0 0.0
      %2306 = vmatpush.msra.mxu0 0.0
      %2307 = vmatpush.msra.mxu0 0.0
      %2308 = vmatpush.msra.mxu0 0.0
      %2309 = vmatpush.msra.mxu0 %v2288
      %2310 = vmatpush.msra.mxu0 %v2264
      %2311 = vmatpush.msra.mxu0 %v2261
      %2312 = vmatmul.f32.gmra.mxu0 %v2278
      %v2313 = vpop.f32.mrf.mxu0
      %v2314 = vadd.f32 0.0, %v2313
      %2315 = vmatmul.f32.gmra.mxu0 %v2280
      %v2316 = vpop.f32.mrf.mxu0
      %v2317 = vadd.f32 0.0, %v2316
      %2318 = vmatmul.f32.gmra.mxu0 %v2282
      %v2319 = vpop.f32.mrf.mxu0
      %v2320 = vadd.f32 0.0, %v2319
      %2321 = vmatmul.f32.gmra.mxu0 %v2284
      %v2322 = vpop.f32.mrf.mxu0
      %v2323 = vadd.f32 0.0, %v2322
      %2324 = vmatmul.f32.gmra.mxu0 %v2286
      %v2325 = vpop.f32.mrf.mxu0
      %v2326 = vadd.f32 0.0, %v2325
      %2327 = vdwg.mxu0
      %2328 = vmatpush.msra.mxu0 0.0
      %2329 = vmatpush.msra.mxu0 0.0
      %2330 = vmatpush.msra.mxu0 0.0
      %2331 = vmatpush.msra.mxu0 0.0
      %2332 = vmatpush.msra.mxu0 0.0
      %2333 = vmatpush.msra.mxu0 0.0
      %2334 = vmatpush.msra.mxu0 0.0
      %2335 = vmatpush.msra.mxu0 0.0
      %2336 = vmatpush.msra.mxu0 0.0
      %2337 = vmatpush.msra.mxu0 0.0
      %2338 = vmatpush.msra.mxu0 0.0
      %2339 = vmatpush.msra.mxu0 0.0
      %2340 = vmatpush.msra.mxu0 0.0
      %2341 = vmatpush.msra.mxu0 %v2290
      %2342 = vmatpush.msra.mxu0 %v2265
      %2343 = vmatpush.msra.mxu0 %v2262
      %2344 = vmatmul.f32.gmra.mxu0 %v2278
      %v2345 = vpop.f32.mrf.mxu0
      %v2346 = vadd.f32 0.0, %v2345
      %2347 = vmatmul.f32.gmra.mxu0 %v2280
      %v2348 = vpop.f32.mrf.mxu0
      %v2349 = vadd.f32 0.0, %v2348
      %2350 = vmatmul.f32.gmra.mxu0 %v2282
      %v2351 = vpop.f32.mrf.mxu0
      %v2352 = vadd.f32 0.0, %v2351
      %2353 = vmatmul.f32.gmra.mxu0 %v2284
      %v2354 = vpop.f32.mrf.mxu0
      %v2355 = vadd.f32 0.0, %v2354
      %2356 = vmatmul.f32.gmra.mxu0 %v2286
      %v2357 = vpop.f32.mrf.mxu0
      %v2358 = vadd.f32 0.0, %v2357
      %2359 = vdwg.mxu0
      %2360 = vmatpush.msra.mxu0 0.0
      %2361 = vmatpush.msra.mxu0 0.0
      %2362 = vmatpush.msra.mxu0 0.0
      %2363 = vmatpush.msra.mxu0 0.0
      %2364 = vmatpush.msra.mxu0 0.0
      %2365 = vmatpush.msra.mxu0 0.0
      %2366 = vmatpush.msra.mxu0 0.0
      %2367 = vmatpush.msra.mxu0 0.0
      %2368 = vmatpush.msra.mxu0 0.0
      %2369 = vmatpush.msra.mxu0 0.0
      %2370 = vmatpush.msra.mxu0 0.0
      %2371 = vmatpush.msra.mxu0 0.0
      %2372 = vmatpush.msra.mxu0 0.0
      %2373 = vmatpush.msra.mxu0 %v2292
      %2374 = vmatpush.msra.mxu0 %v2266
      %2375 = vmatpush.msra.mxu0 %v2263
      %2376 = vmatmul.f32.gmra.mxu0 %v2278
      %v2377 = vpop.f32.mrf.mxu0
      %v2378 = vadd.f32 0.0, %v2377
      %2379 = vmatmul.f32.gmra.mxu0 %v2280
      %v2380 = vpop.f32.mrf.mxu0
      %v2381 = vadd.f32 0.0, %v2380
      %2382 = vmatmul.f32.gmra.mxu0 %v2282
      %v2383 = vpop.f32.mrf.mxu0
      %v2384 = vadd.f32 0.0, %v2383
      %2385 = vmatmul.f32.gmra.mxu0 %v2284
      %v2386 = vpop.f32.mrf.mxu0
      %v2387 = vadd.f32 0.0, %v2386
      %2388 = vmatmul.f32.gmra.mxu0 %v2286
      %v2389 = vpop.f32.mrf.mxu0
      %v2390 = vadd.f32 0.0, %v2389
      %2391 = vdwg.mxu0
      %2392 = vmatpush.msra.mxu0 0.0
      %2393 = vmatpush.msra.mxu0 0.0
      %2394 = vmatpush.msra.mxu0 0.0
      %2395 = vmatpush.msra.mxu0 0.0
      %2396 = vmatpush.msra.mxu0 0.0
      %2397 = vmatpush.msra.mxu0 0.0
      %2398 = vmatpush.msra.mxu0 0.0
      %2399 = vmatpush.msra.mxu0 0.0
      %2400 = vmatpush.msra.mxu0 0.0
      %2401 = vmatpush.msra.mxu0 0.0
      %2402 = vmatpush.msra.mxu0 0.0
      %2403 = vmatpush.msra.mxu0 0.0
      %2404 = vmatpush.msra.mxu0 0.0
      %2405 = vmatpush.msra.mxu0 %v2294
      %2406 = vmatpush.msra.mxu0 %v2251
      %2407 = vmatpush.msra.mxu0 %v2243
      %2408 = vmatmul.f32.gmra.mxu0 %v2278
      %v2409 = vpop.f32.mrf.mxu0
      %v2410 = vadd.f32 0.0, %v2409
      %2411 = vmatmul.f32.gmra.mxu0 %v2280
      %v2412 = vpop.f32.mrf.mxu0
      %v2413 = vadd.f32 0.0, %v2412
      %2414 = vmatmul.f32.gmra.mxu0 %v2282
      %v2415 = vpop.f32.mrf.mxu0
      %v2416 = vadd.f32 0.0, %v2415
      %2417 = vmatmul.f32.gmra.mxu0 %v2284
      %v2418 = vpop.f32.mrf.mxu0
      %v2419 = vadd.f32 0.0, %v2418
      %2420 = vmatmul.f32.gmra.mxu0 %v2286
      %v2421 = vpop.f32.mrf.mxu0
      %v2422 = vadd.f32 0.0, %v2421
      %2423 = vdwg.mxu0
      %v2424 = vadd.f32 %v2206, %v2314
      %v2425 = vadd.f32 %v2207, %v2346
      %v2426 = vadd.f32 %v2208, %v2378
      %v2427 = vadd.f32 %v2209, %v2410
      %v2428 = vadd.f32 %v2210, %v2317
      %v2429 = vadd.f32 %v2211, %v2349
      %v2430 = vadd.f32 %v2212, %v2381
      %v2431 = vadd.f32 %v2213, %v2413
      %v2432 = vadd.f32 %v2214, %v2320
      %v2433 = vadd.f32 %v2215, %v2352
      %v2434 = vadd.f32 %v2216, %v2384
      %v2435 = vadd.f32 %v2217, %v2416
      %v2436 = vadd.f32 %v2218, %v2323
      %v2437 = vadd.f32 %v2219, %v2355
      %v2438 = vadd.f32 %v2220, %v2387
      %v2439 = vadd.f32 %v2221, %v2419
      %v2440 = vadd.f32 %v2222, %v2326
      %v2441 = vadd.f32 %v2223, %v2358
      %v2442 = vadd.f32 %v2224, %v2390
      %v2443 = vadd.f32 %v2225, %v2422
      %2444 = vrot.lane.b32.xlu0 %v292, 36
      %v2445 = vpop.permute.xlu0 %2444
      %2446 = vrot.lane.b32.xlu0 %v297, 36
      %v2447 = vpop.permute.xlu0 %2446
      %2448 = vrot.lane.b32.xlu0 %v302, 36
      %v2449 = vpop.permute.xlu0 %2448
      %2450 = vrot.lane.b32.xlu0 %v307, 36
      %v2451 = vpop.permute.xlu0 %2450
      %2452 = vrot.lane.b32.xlu0 %v312, 36
      %v2453 = vpop.permute.xlu0 %2452
      %2454 = vrot.lane.b32.xlu0 %v279, 118
      %v2455 = vpop.permute.xlu0 %2454
      %2456 = vrot.lane.b32.xlu0 %v280, 118
      %v2457 = vpop.permute.xlu0 %2456
      %2458 = vrot.lane.b32.xlu0 %v281, 118
      %v2459 = vpop.permute.xlu0 %2458
      %2460 = vrot.lane.b32.xlu0 %v282, 118
      %v2461 = vpop.permute.xlu0 %2460
      %2462 = vrot.lane.b32.xlu0 %v283, 118
      %v2463 = vpop.permute.xlu0 %2462
      %2464 = vrot.lane.b32.xlu0 %v284, 118
      %v2465 = vpop.permute.xlu0 %2464
      %2466 = vrot.lane.b32.xlu0 %v285, 118
      %v2467 = vpop.permute.xlu0 %2466
      %2468 = vrot.lane.b32.xlu0 %v286, 118
      %v2469 = vpop.permute.xlu0 %2468
      %2470 = vrot.lane.b32.xlu0 %v287, 118
      %v2471 = vpop.permute.xlu0 %2470
      %2472 = vrot.lane.b32.xlu0 %v288, 118
      %v2473 = vpop.permute.xlu0 %2472
      %2474 = vrot.lane.b32.xlu0 %v289, 118
      %v2475 = vpop.permute.xlu0 %2474
      %2476 = vrot.lane.b32.xlu0 %v290, 118
      %v2477 = vpop.permute.xlu0 %2476
      %vm2478 = vcmask 965632
      %v2479 = vsel %vm2478, %v2455, %v2457
      %v2480 = vsel %vm2478, %v2457, %v2459
      %v2481 = vsel %vm2478, %v2459, %v2461
      %v2482 = vsel %vm2478, %v2463, %v2465
      %v2483 = vsel %vm2478, %v2465, %v2467
      %v2484 = vsel %vm2478, %v2467, %v2469
      %v2485 = vsel %vm2478, %v2471, %v2473
      %v2486 = vsel %vm2478, %v2473, %v2475
      %v2487 = vsel %vm2478, %v2475, %v2477
      %v2496 = vsel %vm385, %v2445, 0
      %v2498 = vsel %vm385, %v2447, 0
      %v2500 = vsel %vm385, %v2449, 0
      %v2502 = vsel %vm385, %v2451, 0
      %v2504 = vsel %vm385, %v2453, 0
      %v2506 = vsel %vm396, %v2485, 0
      %v2508 = vsel %vm396, %v2486, 0
      %v2510 = vsel %vm396, %v2487, 0
      %v2512 = vsel %vm396, %v2477, 0
      %2514 = vmatpush.msra.mxu0 0.0
      %2515 = vmatpush.msra.mxu0 0.0
      %2516 = vmatpush.msra.mxu0 0.0
      %2517 = vmatpush.msra.mxu0 0.0
      %2518 = vmatpush.msra.mxu0 0.0
      %2519 = vmatpush.msra.mxu0 0.0
      %2520 = vmatpush.msra.mxu0 0.0
      %2521 = vmatpush.msra.mxu0 0.0
      %2522 = vmatpush.msra.mxu0 0.0
      %2523 = vmatpush.msra.mxu0 0.0
      %2524 = vmatpush.msra.mxu0 0.0
      %2525 = vmatpush.msra.mxu0 0.0
      %2526 = vmatpush.msra.mxu0 0.0
      %2527 = vmatpush.msra.mxu0 %v2506
      %2528 = vmatpush.msra.mxu0 %v2482
      %2529 = vmatpush.msra.mxu0 %v2479
      %2530 = vmatmul.f32.gmra.mxu0 %v2496
      %v2531 = vpop.f32.mrf.mxu0
      %v2532 = vadd.f32 0.0, %v2531
      %2533 = vmatmul.f32.gmra.mxu0 %v2498
      %v2534 = vpop.f32.mrf.mxu0
      %v2535 = vadd.f32 0.0, %v2534
      %2536 = vmatmul.f32.gmra.mxu0 %v2500
      %v2537 = vpop.f32.mrf.mxu0
      %v2538 = vadd.f32 0.0, %v2537
      %2539 = vmatmul.f32.gmra.mxu0 %v2502
      %v2540 = vpop.f32.mrf.mxu0
      %v2541 = vadd.f32 0.0, %v2540
      %2542 = vmatmul.f32.gmra.mxu0 %v2504
      %v2543 = vpop.f32.mrf.mxu0
      %v2544 = vadd.f32 0.0, %v2543
      %2545 = vdwg.mxu0
      %2546 = vmatpush.msra.mxu0 0.0
      %2547 = vmatpush.msra.mxu0 0.0
      %2548 = vmatpush.msra.mxu0 0.0
      %2549 = vmatpush.msra.mxu0 0.0
      %2550 = vmatpush.msra.mxu0 0.0
      %2551 = vmatpush.msra.mxu0 0.0
      %2552 = vmatpush.msra.mxu0 0.0
      %2553 = vmatpush.msra.mxu0 0.0
      %2554 = vmatpush.msra.mxu0 0.0
      %2555 = vmatpush.msra.mxu0 0.0
      %2556 = vmatpush.msra.mxu0 0.0
      %2557 = vmatpush.msra.mxu0 0.0
      %2558 = vmatpush.msra.mxu0 0.0
      %2559 = vmatpush.msra.mxu0 %v2508
      %2560 = vmatpush.msra.mxu0 %v2483
      %2561 = vmatpush.msra.mxu0 %v2480
      %2562 = vmatmul.f32.gmra.mxu0 %v2496
      %v2563 = vpop.f32.mrf.mxu0
      %v2564 = vadd.f32 0.0, %v2563
      %2565 = vmatmul.f32.gmra.mxu0 %v2498
      %v2566 = vpop.f32.mrf.mxu0
      %v2567 = vadd.f32 0.0, %v2566
      %2568 = vmatmul.f32.gmra.mxu0 %v2500
      %v2569 = vpop.f32.mrf.mxu0
      %v2570 = vadd.f32 0.0, %v2569
      %2571 = vmatmul.f32.gmra.mxu0 %v2502
      %v2572 = vpop.f32.mrf.mxu0
      %v2573 = vadd.f32 0.0, %v2572
      %2574 = vmatmul.f32.gmra.mxu0 %v2504
      %v2575 = vpop.f32.mrf.mxu0
      %v2576 = vadd.f32 0.0, %v2575
      %2577 = vdwg.mxu0
      %2578 = vmatpush.msra.mxu0 0.0
      %2579 = vmatpush.msra.mxu0 0.0
      %2580 = vmatpush.msra.mxu0 0.0
      %2581 = vmatpush.msra.mxu0 0.0
      %2582 = vmatpush.msra.mxu0 0.0
      %2583 = vmatpush.msra.mxu0 0.0
      %2584 = vmatpush.msra.mxu0 0.0
      %2585 = vmatpush.msra.mxu0 0.0
      %2586 = vmatpush.msra.mxu0 0.0
      %2587 = vmatpush.msra.mxu0 0.0
      %2588 = vmatpush.msra.mxu0 0.0
      %2589 = vmatpush.msra.mxu0 0.0
      %2590 = vmatpush.msra.mxu0 0.0
      %2591 = vmatpush.msra.mxu0 %v2510
      %2592 = vmatpush.msra.mxu0 %v2484
      %2593 = vmatpush.msra.mxu0 %v2481
      %2594 = vmatmul.f32.gmra.mxu0 %v2496
      %v2595 = vpop.f32.mrf.mxu0
      %v2596 = vadd.f32 0.0, %v2595
      %2597 = vmatmul.f32.gmra.mxu0 %v2498
      %v2598 = vpop.f32.mrf.mxu0
      %v2599 = vadd.f32 0.0, %v2598
      %2600 = vmatmul.f32.gmra.mxu0 %v2500
      %v2601 = vpop.f32.mrf.mxu0
      %v2602 = vadd.f32 0.0, %v2601
      %2603 = vmatmul.f32.gmra.mxu0 %v2502
      %v2604 = vpop.f32.mrf.mxu0
      %v2605 = vadd.f32 0.0, %v2604
      %2606 = vmatmul.f32.gmra.mxu0 %v2504
      %v2607 = vpop.f32.mrf.mxu0
      %v2608 = vadd.f32 0.0, %v2607
      %2609 = vdwg.mxu0
      %2610 = vmatpush.msra.mxu0 0.0
      %2611 = vmatpush.msra.mxu0 0.0
      %2612 = vmatpush.msra.mxu0 0.0
      %2613 = vmatpush.msra.mxu0 0.0
      %2614 = vmatpush.msra.mxu0 0.0
      %2615 = vmatpush.msra.mxu0 0.0
      %2616 = vmatpush.msra.mxu0 0.0
      %2617 = vmatpush.msra.mxu0 0.0
      %2618 = vmatpush.msra.mxu0 0.0
      %2619 = vmatpush.msra.mxu0 0.0
      %2620 = vmatpush.msra.mxu0 0.0
      %2621 = vmatpush.msra.mxu0 0.0
      %2622 = vmatpush.msra.mxu0 0.0
      %2623 = vmatpush.msra.mxu0 %v2512
      %2624 = vmatpush.msra.mxu0 %v2469
      %2625 = vmatpush.msra.mxu0 %v2461
      %2626 = vmatmul.f32.gmra.mxu0 %v2496
      %v2627 = vpop.f32.mrf.mxu0
      %v2628 = vadd.f32 0.0, %v2627
      %2629 = vmatmul.f32.gmra.mxu0 %v2498
      %v2630 = vpop.f32.mrf.mxu0
      %v2631 = vadd.f32 0.0, %v2630
      %2632 = vmatmul.f32.gmra.mxu0 %v2500
      %v2633 = vpop.f32.mrf.mxu0
      %v2634 = vadd.f32 0.0, %v2633
      %2635 = vmatmul.f32.gmra.mxu0 %v2502
      %v2636 = vpop.f32.mrf.mxu0
      %v2637 = vadd.f32 0.0, %v2636
      %2638 = vmatmul.f32.gmra.mxu0 %v2504
      %v2639 = vpop.f32.mrf.mxu0
      %v2640 = vadd.f32 0.0, %v2639
      %2641 = vdwg.mxu0
      %v2642 = vadd.f32 %v2424, %v2532
      %v2643 = vadd.f32 %v2425, %v2564
      %v2644 = vadd.f32 %v2426, %v2596
      %v2645 = vadd.f32 %v2427, %v2628
      %v2646 = vadd.f32 %v2428, %v2535
      %v2647 = vadd.f32 %v2429, %v2567
      %v2648 = vadd.f32 %v2430, %v2599
      %v2649 = vadd.f32 %v2431, %v2631
      %v2650 = vadd.f32 %v2432, %v2538
      %v2651 = vadd.f32 %v2433, %v2570
      %v2652 = vadd.f32 %v2434, %v2602
      %v2653 = vadd.f32 %v2435, %v2634
      %v2654 = vadd.f32 %v2436, %v2541
      %v2655 = vadd.f32 %v2437, %v2573
      %v2656 = vadd.f32 %v2438, %v2605
      %v2657 = vadd.f32 %v2439, %v2637
      %v2658 = vadd.f32 %v2440, %v2544
      %v2659 = vadd.f32 %v2441, %v2576
      %v2660 = vadd.f32 %v2442, %v2608
      %v2661 = vadd.f32 %v2443, %v2640
      %2667 = vrot.lane.b32.xlu0 %v292, 14
      %v2668 = vpop.permute.xlu0 %2667
      %2669 = vrot.lane.b32.xlu0 %v293, 14
      %v2670 = vpop.permute.xlu0 %2669
      %2671 = vrot.lane.b32.xlu0 %v297, 14
      %v2672 = vpop.permute.xlu0 %2671
      %2673 = vrot.lane.b32.xlu0 %v298, 14
      %v2674 = vpop.permute.xlu0 %2673
      %2675 = vrot.lane.b32.xlu0 %v302, 14
      %v2676 = vpop.permute.xlu0 %2675
      %2677 = vrot.lane.b32.xlu0 %v303, 14
      %v2678 = vpop.permute.xlu0 %2677
      %2679 = vrot.lane.b32.xlu0 %v307, 14
      %v2680 = vpop.permute.xlu0 %2679
      %2681 = vrot.lane.b32.xlu0 %v308, 14
      %v2682 = vpop.permute.xlu0 %2681
      %2683 = vrot.lane.b32.xlu0 %v312, 14
      %v2684 = vpop.permute.xlu0 %2683
      %2685 = vrot.lane.b32.xlu0 %v313, 14
      %v2686 = vpop.permute.xlu0 %2685
      %vm2687 = vcmask 113664
      %v2688 = vsel %vm2687, %v2668, %v2670
      %v2689 = vsel %vm2687, %v2672, %v2674
      %v2690 = vsel %vm2687, %v2676, %v2678
      %v2691 = vsel %vm2687, %v2680, %v2682
      %v2692 = vsel %vm2687, %v2684, %v2686
      %2693 = vrot.lane.b32.xlu0 %v279, 117
      %v2694 = vpop.permute.xlu0 %2693
      %2695 = vrot.lane.b32.xlu0 %v280, 117
      %v2696 = vpop.permute.xlu0 %2695
      %2697 = vrot.lane.b32.xlu0 %v281, 117
      %v2698 = vpop.permute.xlu0 %2697
      %2699 = vrot.lane.b32.xlu0 %v282, 117
      %v2700 = vpop.permute.xlu0 %2699
      %2701 = vrot.lane.b32.xlu0 %v283, 117
      %v2702 = vpop.permute.xlu0 %2701
      %2703 = vrot.lane.b32.xlu0 %v284, 117
      %v2704 = vpop.permute.xlu0 %2703
      %2705 = vrot.lane.b32.xlu0 %v285, 117
      %v2706 = vpop.permute.xlu0 %2705
      %2707 = vrot.lane.b32.xlu0 %v286, 117
      %v2708 = vpop.permute.xlu0 %2707
      %2709 = vrot.lane.b32.xlu0 %v287, 117
      %v2710 = vpop.permute.xlu0 %2709
      %2711 = vrot.lane.b32.xlu0 %v288, 117
      %v2712 = vpop.permute.xlu0 %2711
      %2713 = vrot.lane.b32.xlu0 %v289, 117
      %v2714 = vpop.permute.xlu0 %2713
      %2715 = vrot.lane.b32.xlu0 %v290, 117
      %v2716 = vpop.permute.xlu0 %2715
      %vm2717 = vcmask 957440
      %v2718 = vsel %vm2717, %v2694, %v2696
      %v2719 = vsel %vm2717, %v2696, %v2698
      %v2720 = vsel %vm2717, %v2698, %v2700
      %v2721 = vsel %vm2717, %v2702, %v2704
      %v2722 = vsel %vm2717, %v2704, %v2706
      %v2723 = vsel %vm2717, %v2706, %v2708
      %v2724 = vsel %vm2717, %v2710, %v2712
      %v2725 = vsel %vm2717, %v2712, %v2714
      %v2726 = vsel %vm2717, %v2714, %v2716
      %v2735 = vsel %vm385, %v2688, 0
      %v2737 = vsel %vm385, %v2689, 0
      %v2739 = vsel %vm385, %v2690, 0
      %v2741 = vsel %vm385, %v2691, 0
      %v2743 = vsel %vm385, %v2692, 0
      %v2745 = vsel %vm396, %v2724, 0
      %v2747 = vsel %vm396, %v2725, 0
      %v2749 = vsel %vm396, %v2726, 0
      %v2751 = vsel %vm396, %v2716, 0
      %2753 = vmatpush.msra.mxu0 0.0
      %2754 = vmatpush.msra.mxu0 0.0
      %2755 = vmatpush.msra.mxu0 0.0
      %2756 = vmatpush.msra.mxu0 0.0
      %2757 = vmatpush.msra.mxu0 0.0
      %2758 = vmatpush.msra.mxu0 0.0
      %2759 = vmatpush.msra.mxu0 0.0
      %2760 = vmatpush.msra.mxu0 0.0
      %2761 = vmatpush.msra.mxu0 0.0
      %2762 = vmatpush.msra.mxu0 0.0
      %2763 = vmatpush.msra.mxu0 0.0
      %2764 = vmatpush.msra.mxu0 0.0
      %2765 = vmatpush.msra.mxu0 0.0
      %2766 = vmatpush.msra.mxu0 %v2745
      %2767 = vmatpush.msra.mxu0 %v2721
      %2768 = vmatpush.msra.mxu0 %v2718
      %2769 = vmatmul.f32.gmra.mxu0 %v2735
      %v2770 = vpop.f32.mrf.mxu0
      %v2771 = vadd.f32 0.0, %v2770
      %2772 = vmatmul.f32.gmra.mxu0 %v2737
      %v2773 = vpop.f32.mrf.mxu0
      %v2774 = vadd.f32 0.0, %v2773
      %2775 = vmatmul.f32.gmra.mxu0 %v2739
      %v2776 = vpop.f32.mrf.mxu0
      %v2777 = vadd.f32 0.0, %v2776
      %2778 = vmatmul.f32.gmra.mxu0 %v2741
      %v2779 = vpop.f32.mrf.mxu0
      %v2780 = vadd.f32 0.0, %v2779
      %2781 = vmatmul.f32.gmra.mxu0 %v2743
      %v2782 = vpop.f32.mrf.mxu0
      %v2783 = vadd.f32 0.0, %v2782
      %2784 = vdwg.mxu0
      %2785 = vmatpush.msra.mxu0 0.0
      %2786 = vmatpush.msra.mxu0 0.0
      %2787 = vmatpush.msra.mxu0 0.0
      %2788 = vmatpush.msra.mxu0 0.0
      %2789 = vmatpush.msra.mxu0 0.0
      %2790 = vmatpush.msra.mxu0 0.0
      %2791 = vmatpush.msra.mxu0 0.0
      %2792 = vmatpush.msra.mxu0 0.0
      %2793 = vmatpush.msra.mxu0 0.0
      %2794 = vmatpush.msra.mxu0 0.0
      %2795 = vmatpush.msra.mxu0 0.0
      %2796 = vmatpush.msra.mxu0 0.0
      %2797 = vmatpush.msra.mxu0 0.0
      %2798 = vmatpush.msra.mxu0 %v2747
      %2799 = vmatpush.msra.mxu0 %v2722
      %2800 = vmatpush.msra.mxu0 %v2719
      %2801 = vmatmul.f32.gmra.mxu0 %v2735
      %v2802 = vpop.f32.mrf.mxu0
      %v2803 = vadd.f32 0.0, %v2802
      %2804 = vmatmul.f32.gmra.mxu0 %v2737
      %v2805 = vpop.f32.mrf.mxu0
      %v2806 = vadd.f32 0.0, %v2805
      %2807 = vmatmul.f32.gmra.mxu0 %v2739
      %v2808 = vpop.f32.mrf.mxu0
      %v2809 = vadd.f32 0.0, %v2808
      %2810 = vmatmul.f32.gmra.mxu0 %v2741
      %v2811 = vpop.f32.mrf.mxu0
      %v2812 = vadd.f32 0.0, %v2811
      %2813 = vmatmul.f32.gmra.mxu0 %v2743
      %v2814 = vpop.f32.mrf.mxu0
      %v2815 = vadd.f32 0.0, %v2814
      %2816 = vdwg.mxu0
      %2817 = vmatpush.msra.mxu0 0.0
      %2818 = vmatpush.msra.mxu0 0.0
      %2819 = vmatpush.msra.mxu0 0.0
      %2820 = vmatpush.msra.mxu0 0.0
      %2821 = vmatpush.msra.mxu0 0.0
      %2822 = vmatpush.msra.mxu0 0.0
      %2823 = vmatpush.msra.mxu0 0.0
      %2824 = vmatpush.msra.mxu0 0.0
      %2825 = vmatpush.msra.mxu0 0.0
      %2826 = vmatpush.msra.mxu0 0.0
      %2827 = vmatpush.msra.mxu0 0.0
      %2828 = vmatpush.msra.mxu0 0.0
      %2829 = vmatpush.msra.mxu0 0.0
      %2830 = vmatpush.msra.mxu0 %v2749
      %2831 = vmatpush.msra.mxu0 %v2723
      %2832 = vmatpush.msra.mxu0 %v2720
      %2833 = vmatmul.f32.gmra.mxu0 %v2735
      %v2834 = vpop.f32.mrf.mxu0
      %v2835 = vadd.f32 0.0, %v2834
      %2836 = vmatmul.f32.gmra.mxu0 %v2737
      %v2837 = vpop.f32.mrf.mxu0
      %v2838 = vadd.f32 0.0, %v2837
      %2839 = vmatmul.f32.gmra.mxu0 %v2739
      %v2840 = vpop.f32.mrf.mxu0
      %v2841 = vadd.f32 0.0, %v2840
      %2842 = vmatmul.f32.gmra.mxu0 %v2741
      %v2843 = vpop.f32.mrf.mxu0
      %v2844 = vadd.f32 0.0, %v2843
      %2845 = vmatmul.f32.gmra.mxu0 %v2743
      %v2846 = vpop.f32.mrf.mxu0
      %v2847 = vadd.f32 0.0, %v2846
      %2848 = vdwg.mxu0
      %2849 = vmatpush.msra.mxu0 0.0
      %2850 = vmatpush.msra.mxu0 0.0
      %2851 = vmatpush.msra.mxu0 0.0
      %2852 = vmatpush.msra.mxu0 0.0
      %2853 = vmatpush.msra.mxu0 0.0
      %2854 = vmatpush.msra.mxu0 0.0
      %2855 = vmatpush.msra.mxu0 0.0
      %2856 = vmatpush.msra.mxu0 0.0
      %2857 = vmatpush.msra.mxu0 0.0
      %2858 = vmatpush.msra.mxu0 0.0
      %2859 = vmatpush.msra.mxu0 0.0
      %2860 = vmatpush.msra.mxu0 0.0
      %2861 = vmatpush.msra.mxu0 0.0
      %2862 = vmatpush.msra.mxu0 %v2751
      %2863 = vmatpush.msra.mxu0 %v2708
      %2864 = vmatpush.msra.mxu0 %v2700
      %2865 = vmatmul.f32.gmra.mxu0 %v2735
      %v2866 = vpop.f32.mrf.mxu0
      %v2867 = vadd.f32 0.0, %v2866
      %2868 = vmatmul.f32.gmra.mxu0 %v2737
      %v2869 = vpop.f32.mrf.mxu0
      %v2870 = vadd.f32 0.0, %v2869
      %2871 = vmatmul.f32.gmra.mxu0 %v2739
      %v2872 = vpop.f32.mrf.mxu0
      %v2873 = vadd.f32 0.0, %v2872
      %2874 = vmatmul.f32.gmra.mxu0 %v2741
      %v2875 = vpop.f32.mrf.mxu0
      %v2876 = vadd.f32 0.0, %v2875
      %2877 = vmatmul.f32.gmra.mxu0 %v2743
      %v2878 = vpop.f32.mrf.mxu0
      %v2879 = vadd.f32 0.0, %v2878
      %2880 = vdwg.mxu0
      %v2881 = vadd.f32 %v2642, %v2771
      %v2882 = vadd.f32 %v2643, %v2803
      %v2883 = vadd.f32 %v2644, %v2835
      %v2884 = vadd.f32 %v2645, %v2867
      %v2885 = vadd.f32 %v2646, %v2774
      %v2886 = vadd.f32 %v2647, %v2806
      %v2887 = vadd.f32 %v2648, %v2838
      %v2888 = vadd.f32 %v2649, %v2870
      %v2889 = vadd.f32 %v2650, %v2777
      %v2890 = vadd.f32 %v2651, %v2809
      %v2891 = vadd.f32 %v2652, %v2841
      %v2892 = vadd.f32 %v2653, %v2873
      %v2893 = vadd.f32 %v2654, %v2780
      %v2894 = vadd.f32 %v2655, %v2812
      %v2895 = vadd.f32 %v2656, %v2844
      %v2896 = vadd.f32 %v2657, %v2876
      %v2897 = vadd.f32 %v2658, %v2783
      %v2898 = vadd.f32 %v2659, %v2815
      %v2899 = vadd.f32 %v2660, %v2847
      %v2900 = vadd.f32 %v2661, %v2879
      %2901 = vrot.lane.b32.xlu0 %v293, 120
      %v2902 = vpop.permute.xlu0 %2901
      %2903 = vrot.lane.b32.xlu0 %v298, 120
      %v2904 = vpop.permute.xlu0 %2903
      %2905 = vrot.lane.b32.xlu0 %v303, 120
      %v2906 = vpop.permute.xlu0 %2905
      %2907 = vrot.lane.b32.xlu0 %v308, 120
      %v2908 = vpop.permute.xlu0 %2907
      %2909 = vrot.lane.b32.xlu0 %v313, 120
      %v2910 = vpop.permute.xlu0 %2909
      %2911 = vrot.lane.b32.xlu0 %v279, 116
      %v2912 = vpop.permute.xlu0 %2911
      %2913 = vrot.lane.b32.xlu0 %v280, 116
      %v2914 = vpop.permute.xlu0 %2913
      %2915 = vrot.lane.b32.xlu0 %v281, 116
      %v2916 = vpop.permute.xlu0 %2915
      %2917 = vrot.lane.b32.xlu0 %v282, 116
      %v2918 = vpop.permute.xlu0 %2917
      %2919 = vrot.lane.b32.xlu0 %v283, 116
      %v2920 = vpop.permute.xlu0 %2919
      %2921 = vrot.lane.b32.xlu0 %v284, 116
      %v2922 = vpop.permute.xlu0 %2921
      %2923 = vrot.lane.b32.xlu0 %v285, 116
      %v2924 = vpop.permute.xlu0 %2923
      %2925 = vrot.lane.b32.xlu0 %v286, 116
      %v2926 = vpop.permute.xlu0 %2925
      %2927 = vrot.lane.b32.xlu0 %v287, 116
      %v2928 = vpop.permute.xlu0 %2927
      %2929 = vrot.lane.b32.xlu0 %v288, 116
      %v2930 = vpop.permute.xlu0 %2929
      %2931 = vrot.lane.b32.xlu0 %v289, 116
      %v2932 = vpop.permute.xlu0 %2931
      %2933 = vrot.lane.b32.xlu0 %v290, 116
      %v2934 = vpop.permute.xlu0 %2933
      %vm2935 = vcmask 949248
      %v2936 = vsel %vm2935, %v2912, %v2914
      %v2937 = vsel %vm2935, %v2914, %v2916
      %v2938 = vsel %vm2935, %v2916, %v2918
      %v2939 = vsel %vm2935, %v2920, %v2922
      %v2940 = vsel %vm2935, %v2922, %v2924
      %v2941 = vsel %vm2935, %v2924, %v2926
      %v2942 = vsel %vm2935, %v2928, %v2930
      %v2943 = vsel %vm2935, %v2930, %v2932
      %v2944 = vsel %vm2935, %v2932, %v2934
      %v2953 = vsel %vm385, %v2902, 0
      %v2955 = vsel %vm385, %v2904, 0
      %v2957 = vsel %vm385, %v2906, 0
      %v2959 = vsel %vm385, %v2908, 0
      %v2961 = vsel %vm385, %v2910, 0
      %v2963 = vsel %vm396, %v2942, 0
      %v2965 = vsel %vm396, %v2943, 0
      %v2967 = vsel %vm396, %v2944, 0
      %v2969 = vsel %vm396, %v2934, 0
      %2971 = vmatpush.msra.mxu0 0.0
      %2972 = vmatpush.msra.mxu0 0.0
      %2973 = vmatpush.msra.mxu0 0.0
      %2974 = vmatpush.msra.mxu0 0.0
      %2975 = vmatpush.msra.mxu0 0.0
      %2976 = vmatpush.msra.mxu0 0.0
      %2977 = vmatpush.msra.mxu0 0.0
      %2978 = vmatpush.msra.mxu0 0.0
      %2979 = vmatpush.msra.mxu0 0.0
      %2980 = vmatpush.msra.mxu0 0.0
      %2981 = vmatpush.msra.mxu0 0.0
      %2982 = vmatpush.msra.mxu0 0.0
      %2983 = vmatpush.msra.mxu0 0.0
      %2984 = vmatpush.msra.mxu0 %v2963
      %2985 = vmatpush.msra.mxu0 %v2939
      %2986 = vmatpush.msra.mxu0 %v2936
      %2987 = vmatmul.f32.gmra.mxu0 %v2953
      %v2988 = vpop.f32.mrf.mxu0
      %v2989 = vadd.f32 0.0, %v2988
      %2990 = vmatmul.f32.gmra.mxu0 %v2955
      %v2991 = vpop.f32.mrf.mxu0
      %v2992 = vadd.f32 0.0, %v2991
      %2993 = vmatmul.f32.gmra.mxu0 %v2957
      %v2994 = vpop.f32.mrf.mxu0
      %v2995 = vadd.f32 0.0, %v2994
      %2996 = vmatmul.f32.gmra.mxu0 %v2959
      %v2997 = vpop.f32.mrf.mxu0
      %v2998 = vadd.f32 0.0, %v2997
      %2999 = vmatmul.f32.gmra.mxu0 %v2961
      %v3000 = vpop.f32.mrf.mxu0
      %v3001 = vadd.f32 0.0, %v3000
      %3002 = vdwg.mxu0
      %3003 = vmatpush.msra.mxu0 0.0
      %3004 = vmatpush.msra.mxu0 0.0
      %3005 = vmatpush.msra.mxu0 0.0
      %3006 = vmatpush.msra.mxu0 0.0
      %3007 = vmatpush.msra.mxu0 0.0
      %3008 = vmatpush.msra.mxu0 0.0
      %3009 = vmatpush.msra.mxu0 0.0
      %3010 = vmatpush.msra.mxu0 0.0
      %3011 = vmatpush.msra.mxu0 0.0
      %3012 = vmatpush.msra.mxu0 0.0
      %3013 = vmatpush.msra.mxu0 0.0
      %3014 = vmatpush.msra.mxu0 0.0
      %3015 = vmatpush.msra.mxu0 0.0
      %3016 = vmatpush.msra.mxu0 %v2965
      %3017 = vmatpush.msra.mxu0 %v2940
      %3018 = vmatpush.msra.mxu0 %v2937
      %3019 = vmatmul.f32.gmra.mxu0 %v2953
      %v3020 = vpop.f32.mrf.mxu0
      %v3021 = vadd.f32 0.0, %v3020
      %3022 = vmatmul.f32.gmra.mxu0 %v2955
      %v3023 = vpop.f32.mrf.mxu0
      %v3024 = vadd.f32 0.0, %v3023
      %3025 = vmatmul.f32.gmra.mxu0 %v2957
      %v3026 = vpop.f32.mrf.mxu0
      %v3027 = vadd.f32 0.0, %v3026
      %3028 = vmatmul.f32.gmra.mxu0 %v2959
      %v3029 = vpop.f32.mrf.mxu0
      %v3030 = vadd.f32 0.0, %v3029
      %3031 = vmatmul.f32.gmra.mxu0 %v2961
      %v3032 = vpop.f32.mrf.mxu0
      %v3033 = vadd.f32 0.0, %v3032
      %3034 = vdwg.mxu0
      %3035 = vmatpush.msra.mxu0 0.0
      %3036 = vmatpush.msra.mxu0 0.0
      %3037 = vmatpush.msra.mxu0 0.0
      %3038 = vmatpush.msra.mxu0 0.0
      %3039 = vmatpush.msra.mxu0 0.0
      %3040 = vmatpush.msra.mxu0 0.0
      %3041 = vmatpush.msra.mxu0 0.0
      %3042 = vmatpush.msra.mxu0 0.0
      %3043 = vmatpush.msra.mxu0 0.0
      %3044 = vmatpush.msra.mxu0 0.0
      %3045 = vmatpush.msra.mxu0 0.0
      %3046 = vmatpush.msra.mxu0 0.0
      %3047 = vmatpush.msra.mxu0 0.0
      %3048 = vmatpush.msra.mxu0 %v2967
      %3049 = vmatpush.msra.mxu0 %v2941
      %3050 = vmatpush.msra.mxu0 %v2938
      %3051 = vmatmul.f32.gmra.mxu0 %v2953
      %v3052 = vpop.f32.mrf.mxu0
      %v3053 = vadd.f32 0.0, %v3052
      %3054 = vmatmul.f32.gmra.mxu0 %v2955
      %v3055 = vpop.f32.mrf.mxu0
      %v3056 = vadd.f32 0.0, %v3055
      %3057 = vmatmul.f32.gmra.mxu0 %v2957
      %v3058 = vpop.f32.mrf.mxu0
      %v3059 = vadd.f32 0.0, %v3058
      %3060 = vmatmul.f32.gmra.mxu0 %v2959
      %v3061 = vpop.f32.mrf.mxu0
      %v3062 = vadd.f32 0.0, %v3061
      %3063 = vmatmul.f32.gmra.mxu0 %v2961
      %v3064 = vpop.f32.mrf.mxu0
      %v3065 = vadd.f32 0.0, %v3064
      %3066 = vdwg.mxu0
      %3067 = vmatpush.msra.mxu0 0.0
      %3068 = vmatpush.msra.mxu0 0.0
      %3069 = vmatpush.msra.mxu0 0.0
      %3070 = vmatpush.msra.mxu0 0.0
      %3071 = vmatpush.msra.mxu0 0.0
      %3072 = vmatpush.msra.mxu0 0.0
      %3073 = vmatpush.msra.mxu0 0.0
      %3074 = vmatpush.msra.mxu0 0.0
      %3075 = vmatpush.msra.mxu0 0.0
      %3076 = vmatpush.msra.mxu0 0.0
      %3077 = vmatpush.msra.mxu0 0.0
      %3078 = vmatpush.msra.mxu0 0.0
      %3079 = vmatpush.msra.mxu0 0.0
      %3080 = vmatpush.msra.mxu0 %v2969
      %3081 = vmatpush.msra.mxu0 %v2926
      %3082 = vmatpush.msra.mxu0 %v2918
      %3083 = vmatmul.f32.gmra.mxu0 %v2953
      %v3084 = vpop.f32.mrf.mxu0
      %v3085 = vadd.f32 0.0, %v3084
      %3086 = vmatmul.f32.gmra.mxu0 %v2955
      %v3087 = vpop.f32.mrf.mxu0
      %v3088 = vadd.f32 0.0, %v3087
      %3089 = vmatmul.f32.gmra.mxu0 %v2957
      %v3090 = vpop.f32.mrf.mxu0
      %v3091 = vadd.f32 0.0, %v3090
      %3092 = vmatmul.f32.gmra.mxu0 %v2959
      %v3093 = vpop.f32.mrf.mxu0
      %v3094 = vadd.f32 0.0, %v3093
      %3095 = vmatmul.f32.gmra.mxu0 %v2961
      %v3096 = vpop.f32.mrf.mxu0
      %v3097 = vadd.f32 0.0, %v3096
      %3098 = vdwg.mxu0
      %v3099 = vadd.f32 %v2881, %v2989
      %v3100 = vadd.f32 %v2882, %v3021
      %v3101 = vadd.f32 %v2883, %v3053
      %v3102 = vadd.f32 %v2884, %v3085
      %v3103 = vadd.f32 %v2885, %v2992
      %v3104 = vadd.f32 %v2886, %v3024
      %v3105 = vadd.f32 %v2887, %v3056
      %v3106 = vadd.f32 %v2888, %v3088
      %v3107 = vadd.f32 %v2889, %v2995
      %v3108 = vadd.f32 %v2890, %v3027
      %v3109 = vadd.f32 %v2891, %v3059
      %v3110 = vadd.f32 %v2892, %v3091
      %v3111 = vadd.f32 %v2893, %v2998
      %v3112 = vadd.f32 %v2894, %v3030
      %v3113 = vadd.f32 %v2895, %v3062
      %v3114 = vadd.f32 %v2896, %v3094
      %v3115 = vadd.f32 %v2897, %v3001
      %v3116 = vadd.f32 %v2898, %v3033
      %v3117 = vadd.f32 %v2899, %v3065
      %v3118 = vadd.f32 %v2900, %v3097
      %3119 = vrot.lane.b32.xlu0 %v293, 98
      %v3120 = vpop.permute.xlu0 %3119
      %3121 = vrot.lane.b32.xlu0 %v298, 98
      %v3122 = vpop.permute.xlu0 %3121
      %3123 = vrot.lane.b32.xlu0 %v303, 98
      %v3124 = vpop.permute.xlu0 %3123
      %3125 = vrot.lane.b32.xlu0 %v308, 98
      %v3126 = vpop.permute.xlu0 %3125
      %3127 = vrot.lane.b32.xlu0 %v313, 98
      %v3128 = vpop.permute.xlu0 %3127
      %3129 = vrot.lane.b32.xlu0 %v279, 115
      %v3130 = vpop.permute.xlu0 %3129
      %3131 = vrot.lane.b32.xlu0 %v280, 115
      %v3132 = vpop.permute.xlu0 %3131
      %3133 = vrot.lane.b32.xlu0 %v281, 115
      %v3134 = vpop.permute.xlu0 %3133
      %3135 = vrot.lane.b32.xlu0 %v282, 115
      %v3136 = vpop.permute.xlu0 %3135
      %3137 = vrot.lane.b32.xlu0 %v283, 115
      %v3138 = vpop.permute.xlu0 %3137
      %3139 = vrot.lane.b32.xlu0 %v284, 115
      %v3140 = vpop.permute.xlu0 %3139
      %3141 = vrot.lane.b32.xlu0 %v285, 115
      %v3142 = vpop.permute.xlu0 %3141
      %3143 = vrot.lane.b32.xlu0 %v286, 115
      %v3144 = vpop.permute.xlu0 %3143
      %3145 = vrot.lane.b32.xlu0 %v287, 115
      %v3146 = vpop.permute.xlu0 %3145
      %3147 = vrot.lane.b32.xlu0 %v288, 115
      %v3148 = vpop.permute.xlu0 %3147
      %3149 = vrot.lane.b32.xlu0 %v289, 115
      %v3150 = vpop.permute.xlu0 %3149
      %3151 = vrot.lane.b32.xlu0 %v290, 115
      %v3152 = vpop.permute.xlu0 %3151
      %vm3153 = vcmask 941056
      %v3154 = vsel %vm3153, %v3130, %v3132
      %v3155 = vsel %vm3153, %v3132, %v3134
      %v3156 = vsel %vm3153, %v3134, %v3136
      %v3157 = vsel %vm3153, %v3138, %v3140
      %v3158 = vsel %vm3153, %v3140, %v3142
      %v3159 = vsel %vm3153, %v3142, %v3144
      %v3160 = vsel %vm3153, %v3146, %v3148
      %v3161 = vsel %vm3153, %v3148, %v3150
      %v3162 = vsel %vm3153, %v3150, %v3152
      %v3171 = vsel %vm385, %v3120, 0
      %v3173 = vsel %vm385, %v3122, 0
      %v3175 = vsel %vm385, %v3124, 0
      %v3177 = vsel %vm385, %v3126, 0
      %v3179 = vsel %vm385, %v3128, 0
      %v3181 = vsel %vm396, %v3160, 0
      %v3183 = vsel %vm396, %v3161, 0
      %v3185 = vsel %vm396, %v3162, 0
      %v3187 = vsel %vm396, %v3152, 0
      %3189 = vmatpush.msra.mxu0 0.0
      %3190 = vmatpush.msra.mxu0 0.0
      %3191 = vmatpush.msra.mxu0 0.0
      %3192 = vmatpush.msra.mxu0 0.0
      %3193 = vmatpush.msra.mxu0 0.0
      %3194 = vmatpush.msra.mxu0 0.0
      %3195 = vmatpush.msra.mxu0 0.0
      %3196 = vmatpush.msra.mxu0 0.0
      %3197 = vmatpush.msra.mxu0 0.0
      %3198 = vmatpush.msra.mxu0 0.0
      %3199 = vmatpush.msra.mxu0 0.0
      %3200 = vmatpush.msra.mxu0 0.0
      %3201 = vmatpush.msra.mxu0 0.0
      %3202 = vmatpush.msra.mxu0 %v3181
      %3203 = vmatpush.msra.mxu0 %v3157
      %3204 = vmatpush.msra.mxu0 %v3154
      %3205 = vmatmul.f32.gmra.mxu0 %v3171
      %v3206 = vpop.f32.mrf.mxu0
      %v3207 = vadd.f32 0.0, %v3206
      %3208 = vmatmul.f32.gmra.mxu0 %v3173
      %v3209 = vpop.f32.mrf.mxu0
      %v3210 = vadd.f32 0.0, %v3209
      %3211 = vmatmul.f32.gmra.mxu0 %v3175
      %v3212 = vpop.f32.mrf.mxu0
      %v3213 = vadd.f32 0.0, %v3212
      %3214 = vmatmul.f32.gmra.mxu0 %v3177
      %v3215 = vpop.f32.mrf.mxu0
      %v3216 = vadd.f32 0.0, %v3215
      %3217 = vmatmul.f32.gmra.mxu0 %v3179
      %v3218 = vpop.f32.mrf.mxu0
      %v3219 = vadd.f32 0.0, %v3218
      %3220 = vdwg.mxu0
      %3221 = vmatpush.msra.mxu0 0.0
      %3222 = vmatpush.msra.mxu0 0.0
      %3223 = vmatpush.msra.mxu0 0.0
      %3224 = vmatpush.msra.mxu0 0.0
      %3225 = vmatpush.msra.mxu0 0.0
      %3226 = vmatpush.msra.mxu0 0.0
      %3227 = vmatpush.msra.mxu0 0.0
      %3228 = vmatpush.msra.mxu0 0.0
      %3229 = vmatpush.msra.mxu0 0.0
      %3230 = vmatpush.msra.mxu0 0.0
      %3231 = vmatpush.msra.mxu0 0.0
      %3232 = vmatpush.msra.mxu0 0.0
      %3233 = vmatpush.msra.mxu0 0.0
      %3234 = vmatpush.msra.mxu0 %v3183
      %3235 = vmatpush.msra.mxu0 %v3158
      %3236 = vmatpush.msra.mxu0 %v3155
      %3237 = vmatmul.f32.gmra.mxu0 %v3171
      %v3238 = vpop.f32.mrf.mxu0
      %v3239 = vadd.f32 0.0, %v3238
      %3240 = vmatmul.f32.gmra.mxu0 %v3173
      %v3241 = vpop.f32.mrf.mxu0
      %v3242 = vadd.f32 0.0, %v3241
      %3243 = vmatmul.f32.gmra.mxu0 %v3175
      %v3244 = vpop.f32.mrf.mxu0
      %v3245 = vadd.f32 0.0, %v3244
      %3246 = vmatmul.f32.gmra.mxu0 %v3177
      %v3247 = vpop.f32.mrf.mxu0
      %v3248 = vadd.f32 0.0, %v3247
      %3249 = vmatmul.f32.gmra.mxu0 %v3179
      %v3250 = vpop.f32.mrf.mxu0
      %v3251 = vadd.f32 0.0, %v3250
      %3252 = vdwg.mxu0
      %3253 = vmatpush.msra.mxu0 0.0
      %3254 = vmatpush.msra.mxu0 0.0
      %3255 = vmatpush.msra.mxu0 0.0
      %3256 = vmatpush.msra.mxu0 0.0
      %3257 = vmatpush.msra.mxu0 0.0
      %3258 = vmatpush.msra.mxu0 0.0
      %3259 = vmatpush.msra.mxu0 0.0
      %3260 = vmatpush.msra.mxu0 0.0
      %3261 = vmatpush.msra.mxu0 0.0
      %3262 = vmatpush.msra.mxu0 0.0
      %3263 = vmatpush.msra.mxu0 0.0
      %3264 = vmatpush.msra.mxu0 0.0
      %3265 = vmatpush.msra.mxu0 0.0
      %3266 = vmatpush.msra.mxu0 %v3185
      %3267 = vmatpush.msra.mxu0 %v3159
      %3268 = vmatpush.msra.mxu0 %v3156
      %3269 = vmatmul.f32.gmra.mxu0 %v3171
      %v3270 = vpop.f32.mrf.mxu0
      %v3271 = vadd.f32 0.0, %v3270
      %3272 = vmatmul.f32.gmra.mxu0 %v3173
      %v3273 = vpop.f32.mrf.mxu0
      %v3274 = vadd.f32 0.0, %v3273
      %3275 = vmatmul.f32.gmra.mxu0 %v3175
      %v3276 = vpop.f32.mrf.mxu0
      %v3277 = vadd.f32 0.0, %v3276
      %3278 = vmatmul.f32.gmra.mxu0 %v3177
      %v3279 = vpop.f32.mrf.mxu0
      %v3280 = vadd.f32 0.0, %v3279
      %3281 = vmatmul.f32.gmra.mxu0 %v3179
      %v3282 = vpop.f32.mrf.mxu0
      %v3283 = vadd.f32 0.0, %v3282
      %3284 = vdwg.mxu0
      %3285 = vmatpush.msra.mxu0 0.0
      %3286 = vmatpush.msra.mxu0 0.0
      %3287 = vmatpush.msra.mxu0 0.0
      %3288 = vmatpush.msra.mxu0 0.0
      %3289 = vmatpush.msra.mxu0 0.0
      %3290 = vmatpush.msra.mxu0 0.0
      %3291 = vmatpush.msra.mxu0 0.0
      %3292 = vmatpush.msra.mxu0 0.0
      %3293 = vmatpush.msra.mxu0 0.0
      %3294 = vmatpush.msra.mxu0 0.0
      %3295 = vmatpush.msra.mxu0 0.0
      %3296 = vmatpush.msra.mxu0 0.0
      %3297 = vmatpush.msra.mxu0 0.0
      %3298 = vmatpush.msra.mxu0 %v3187
      %3299 = vmatpush.msra.mxu0 %v3144
      %3300 = vmatpush.msra.mxu0 %v3136
      %3301 = vmatmul.f32.gmra.mxu0 %v3171
      %v3302 = vpop.f32.mrf.mxu0
      %v3303 = vadd.f32 0.0, %v3302
      %3304 = vmatmul.f32.gmra.mxu0 %v3173
      %v3305 = vpop.f32.mrf.mxu0
      %v3306 = vadd.f32 0.0, %v3305
      %3307 = vmatmul.f32.gmra.mxu0 %v3175
      %v3308 = vpop.f32.mrf.mxu0
      %v3309 = vadd.f32 0.0, %v3308
      %3310 = vmatmul.f32.gmra.mxu0 %v3177
      %v3311 = vpop.f32.mrf.mxu0
      %v3312 = vadd.f32 0.0, %v3311
      %3313 = vmatmul.f32.gmra.mxu0 %v3179
      %v3314 = vpop.f32.mrf.mxu0
      %v3315 = vadd.f32 0.0, %v3314
      %3316 = vdwg.mxu0
      %v3317 = vadd.f32 %v3099, %v3207
      %v3318 = vadd.f32 %v3100, %v3239
      %v3319 = vadd.f32 %v3101, %v3271
      %v3320 = vadd.f32 %v3102, %v3303
      %v3321 = vadd.f32 %v3103, %v3210
      %v3322 = vadd.f32 %v3104, %v3242
      %v3323 = vadd.f32 %v3105, %v3274
      %v3324 = vadd.f32 %v3106, %v3306
      %v3325 = vadd.f32 %v3107, %v3213
      %v3326 = vadd.f32 %v3108, %v3245
      %v3327 = vadd.f32 %v3109, %v3277
      %v3328 = vadd.f32 %v3110, %v3309
      %v3329 = vadd.f32 %v3111, %v3216
      %v3330 = vadd.f32 %v3112, %v3248
      %v3331 = vadd.f32 %v3113, %v3280
      %v3332 = vadd.f32 %v3114, %v3312
      %v3333 = vadd.f32 %v3115, %v3219
      %v3334 = vadd.f32 %v3116, %v3251
      %v3335 = vadd.f32 %v3117, %v3283
      %v3336 = vadd.f32 %v3118, %v3315
      %3337 = vrot.lane.b32.xlu0 %v293, 76
      %v3338 = vpop.permute.xlu0 %3337
      %3339 = vrot.lane.b32.xlu0 %v298, 76
      %v3340 = vpop.permute.xlu0 %3339
      %3341 = vrot.lane.b32.xlu0 %v303, 76
      %v3342 = vpop.permute.xlu0 %3341
      %3343 = vrot.lane.b32.xlu0 %v308, 76
      %v3344 = vpop.permute.xlu0 %3343
      %3345 = vrot.lane.b32.xlu0 %v313, 76
      %v3346 = vpop.permute.xlu0 %3345
      %3347 = vrot.lane.b32.xlu0 %v279, 114
      %v3348 = vpop.permute.xlu0 %3347
      %3349 = vrot.lane.b32.xlu0 %v280, 114
      %v3350 = vpop.permute.xlu0 %3349
      %3351 = vrot.lane.b32.xlu0 %v281, 114
      %v3352 = vpop.permute.xlu0 %3351
      %3353 = vrot.lane.b32.xlu0 %v282, 114
      %v3354 = vpop.permute.xlu0 %3353
      %3355 = vrot.lane.b32.xlu0 %v283, 114
      %v3356 = vpop.permute.xlu0 %3355
      %3357 = vrot.lane.b32.xlu0 %v284, 114
      %v3358 = vpop.permute.xlu0 %3357
      %3359 = vrot.lane.b32.xlu0 %v285, 114
      %v3360 = vpop.permute.xlu0 %3359
      %3361 = vrot.lane.b32.xlu0 %v286, 114
      %v3362 = vpop.permute.xlu0 %3361
      %3363 = vrot.lane.b32.xlu0 %v287, 114
      %v3364 = vpop.permute.xlu0 %3363
      %3365 = vrot.lane.b32.xlu0 %v288, 114
      %v3366 = vpop.permute.xlu0 %3365
      %3367 = vrot.lane.b32.xlu0 %v289, 114
      %v3368 = vpop.permute.xlu0 %3367
      %3369 = vrot.lane.b32.xlu0 %v290, 114
      %v3370 = vpop.permute.xlu0 %3369
      %vm3371 = vcmask 932864
      %v3372 = vsel %vm3371, %v3348, %v3350
      %v3373 = vsel %vm3371, %v3350, %v3352
      %v3374 = vsel %vm3371, %v3352, %v3354
      %v3375 = vsel %vm3371, %v3356, %v3358
      %v3376 = vsel %vm3371, %v3358, %v3360
      %v3377 = vsel %vm3371, %v3360, %v3362
      %v3378 = vsel %vm3371, %v3364, %v3366
      %v3379 = vsel %vm3371, %v3366, %v3368
      %v3380 = vsel %vm3371, %v3368, %v3370
      %v3389 = vsel %vm385, %v3338, 0
      %v3391 = vsel %vm385, %v3340, 0
      %v3393 = vsel %vm385, %v3342, 0
      %v3395 = vsel %vm385, %v3344, 0
      %v3397 = vsel %vm385, %v3346, 0
      %v3399 = vsel %vm396, %v3378, 0
      %v3401 = vsel %vm396, %v3379, 0
      %v3403 = vsel %vm396, %v3380, 0
      %v3405 = vsel %vm396, %v3370, 0
      %3407 = vmatpush.msra.mxu0 0.0
      %3408 = vmatpush.msra.mxu0 0.0
      %3409 = vmatpush.msra.mxu0 0.0
      %3410 = vmatpush.msra.mxu0 0.0
      %3411 = vmatpush.msra.mxu0 0.0
      %3412 = vmatpush.msra.mxu0 0.0
      %3413 = vmatpush.msra.mxu0 0.0
      %3414 = vmatpush.msra.mxu0 0.0
      %3415 = vmatpush.msra.mxu0 0.0
      %3416 = vmatpush.msra.mxu0 0.0
      %3417 = vmatpush.msra.mxu0 0.0
      %3418 = vmatpush.msra.mxu0 0.0
      %3419 = vmatpush.msra.mxu0 0.0
      %3420 = vmatpush.msra.mxu0 %v3399
      %3421 = vmatpush.msra.mxu0 %v3375
      %3422 = vmatpush.msra.mxu0 %v3372
      %3423 = vmatmul.f32.gmra.mxu0 %v3389
      %v3424 = vpop.f32.mrf.mxu0
      %v3425 = vadd.f32 0.0, %v3424
      %3426 = vmatmul.f32.gmra.mxu0 %v3391
      %v3427 = vpop.f32.mrf.mxu0
      %v3428 = vadd.f32 0.0, %v3427
      %3429 = vmatmul.f32.gmra.mxu0 %v3393
      %v3430 = vpop.f32.mrf.mxu0
      %v3431 = vadd.f32 0.0, %v3430
      %3432 = vmatmul.f32.gmra.mxu0 %v3395
      %v3433 = vpop.f32.mrf.mxu0
      %v3434 = vadd.f32 0.0, %v3433
      %3435 = vmatmul.f32.gmra.mxu0 %v3397
      %v3436 = vpop.f32.mrf.mxu0
      %v3437 = vadd.f32 0.0, %v3436
      %3438 = vdwg.mxu0
      %3439 = vmatpush.msra.mxu0 0.0
      %3440 = vmatpush.msra.mxu0 0.0
      %3441 = vmatpush.msra.mxu0 0.0
      %3442 = vmatpush.msra.mxu0 0.0
      %3443 = vmatpush.msra.mxu0 0.0
      %3444 = vmatpush.msra.mxu0 0.0
      %3445 = vmatpush.msra.mxu0 0.0
      %3446 = vmatpush.msra.mxu0 0.0
      %3447 = vmatpush.msra.mxu0 0.0
      %3448 = vmatpush.msra.mxu0 0.0
      %3449 = vmatpush.msra.mxu0 0.0
      %3450 = vmatpush.msra.mxu0 0.0
      %3451 = vmatpush.msra.mxu0 0.0
      %3452 = vmatpush.msra.mxu0 %v3401
      %3453 = vmatpush.msra.mxu0 %v3376
      %3454 = vmatpush.msra.mxu0 %v3373
      %3455 = vmatmul.f32.gmra.mxu0 %v3389
      %v3456 = vpop.f32.mrf.mxu0
      %v3457 = vadd.f32 0.0, %v3456
      %3458 = vmatmul.f32.gmra.mxu0 %v3391
      %v3459 = vpop.f32.mrf.mxu0
      %v3460 = vadd.f32 0.0, %v3459
      %3461 = vmatmul.f32.gmra.mxu0 %v3393
      %v3462 = vpop.f32.mrf.mxu0
      %v3463 = vadd.f32 0.0, %v3462
      %3464 = vmatmul.f32.gmra.mxu0 %v3395
      %v3465 = vpop.f32.mrf.mxu0
      %v3466 = vadd.f32 0.0, %v3465
      %3467 = vmatmul.f32.gmra.mxu0 %v3397
      %v3468 = vpop.f32.mrf.mxu0
      %v3469 = vadd.f32 0.0, %v3468
      %3470 = vdwg.mxu0
      %3471 = vmatpush.msra.mxu0 0.0
      %3472 = vmatpush.msra.mxu0 0.0
      %3473 = vmatpush.msra.mxu0 0.0
      %3474 = vmatpush.msra.mxu0 0.0
      %3475 = vmatpush.msra.mxu0 0.0
      %3476 = vmatpush.msra.mxu0 0.0
      %3477 = vmatpush.msra.mxu0 0.0
      %3478 = vmatpush.msra.mxu0 0.0
      %3479 = vmatpush.msra.mxu0 0.0
      %3480 = vmatpush.msra.mxu0 0.0
      %3481 = vmatpush.msra.mxu0 0.0
      %3482 = vmatpush.msra.mxu0 0.0
      %3483 = vmatpush.msra.mxu0 0.0
      %3484 = vmatpush.msra.mxu0 %v3403
      %3485 = vmatpush.msra.mxu0 %v3377
      %3486 = vmatpush.msra.mxu0 %v3374
      %3487 = vmatmul.f32.gmra.mxu0 %v3389
      %v3488 = vpop.f32.mrf.mxu0
      %v3489 = vadd.f32 0.0, %v3488
      %3490 = vmatmul.f32.gmra.mxu0 %v3391
      %v3491 = vpop.f32.mrf.mxu0
      %v3492 = vadd.f32 0.0, %v3491
      %3493 = vmatmul.f32.gmra.mxu0 %v3393
      %v3494 = vpop.f32.mrf.mxu0
      %v3495 = vadd.f32 0.0, %v3494
      %3496 = vmatmul.f32.gmra.mxu0 %v3395
      %v3497 = vpop.f32.mrf.mxu0
      %v3498 = vadd.f32 0.0, %v3497
      %3499 = vmatmul.f32.gmra.mxu0 %v3397
      %v3500 = vpop.f32.mrf.mxu0
      %v3501 = vadd.f32 0.0, %v3500
      %3502 = vdwg.mxu0
      %3503 = vmatpush.msra.mxu0 0.0
      %3504 = vmatpush.msra.mxu0 0.0
      %3505 = vmatpush.msra.mxu0 0.0
      %3506 = vmatpush.msra.mxu0 0.0
      %3507 = vmatpush.msra.mxu0 0.0
      %3508 = vmatpush.msra.mxu0 0.0
      %3509 = vmatpush.msra.mxu0 0.0
      %3510 = vmatpush.msra.mxu0 0.0
      %3511 = vmatpush.msra.mxu0 0.0
      %3512 = vmatpush.msra.mxu0 0.0
      %3513 = vmatpush.msra.mxu0 0.0
      %3514 = vmatpush.msra.mxu0 0.0
      %3515 = vmatpush.msra.mxu0 0.0
      %3516 = vmatpush.msra.mxu0 %v3405
      %3517 = vmatpush.msra.mxu0 %v3362
      %3518 = vmatpush.msra.mxu0 %v3354
      %3519 = vmatmul.f32.gmra.mxu0 %v3389
      %v3520 = vpop.f32.mrf.mxu0
      %v3521 = vadd.f32 0.0, %v3520
      %3522 = vmatmul.f32.gmra.mxu0 %v3391
      %v3523 = vpop.f32.mrf.mxu0
      %v3524 = vadd.f32 0.0, %v3523
      %3525 = vmatmul.f32.gmra.mxu0 %v3393
      %v3526 = vpop.f32.mrf.mxu0
      %v3527 = vadd.f32 0.0, %v3526
      %3528 = vmatmul.f32.gmra.mxu0 %v3395
      %v3529 = vpop.f32.mrf.mxu0
      %v3530 = vadd.f32 0.0, %v3529
      %3531 = vmatmul.f32.gmra.mxu0 %v3397
      %v3532 = vpop.f32.mrf.mxu0
      %v3533 = vadd.f32 0.0, %v3532
      %3534 = vdwg.mxu0
      %v3535 = vadd.f32 %v3317, %v3425
      %v3536 = vadd.f32 %v3318, %v3457
      %v3537 = vadd.f32 %v3319, %v3489
      %v3538 = vadd.f32 %v3320, %v3521
      %v3539 = vadd.f32 %v3321, %v3428
      %v3540 = vadd.f32 %v3322, %v3460
      %v3541 = vadd.f32 %v3323, %v3492
      %v3542 = vadd.f32 %v3324, %v3524
      %v3543 = vadd.f32 %v3325, %v3431
      %v3544 = vadd.f32 %v3326, %v3463
      %v3545 = vadd.f32 %v3327, %v3495
      %v3546 = vadd.f32 %v3328, %v3527
      %v3547 = vadd.f32 %v3329, %v3434
      %v3548 = vadd.f32 %v3330, %v3466
      %v3549 = vadd.f32 %v3331, %v3498
      %v3550 = vadd.f32 %v3332, %v3530
      %v3551 = vadd.f32 %v3333, %v3437
      %v3552 = vadd.f32 %v3334, %v3469
      %v3553 = vadd.f32 %v3335, %v3501
      %v3554 = vadd.f32 %v3336, %v3533
      %3555 = vrot.lane.b32.xlu0 %v293, 54
      %v3556 = vpop.permute.xlu0 %3555
      %3557 = vrot.lane.b32.xlu0 %v298, 54
      %v3558 = vpop.permute.xlu0 %3557
      %3559 = vrot.lane.b32.xlu0 %v303, 54
      %v3560 = vpop.permute.xlu0 %3559
      %3561 = vrot.lane.b32.xlu0 %v308, 54
      %v3562 = vpop.permute.xlu0 %3561
      %3563 = vrot.lane.b32.xlu0 %v313, 54
      %v3564 = vpop.permute.xlu0 %3563
      %3565 = vrot.lane.b32.xlu0 %v279, 113
      %v3566 = vpop.permute.xlu0 %3565
      %3567 = vrot.lane.b32.xlu0 %v280, 113
      %v3568 = vpop.permute.xlu0 %3567
      %3569 = vrot.lane.b32.xlu0 %v281, 113
      %v3570 = vpop.permute.xlu0 %3569
      %3571 = vrot.lane.b32.xlu0 %v282, 113
      %v3572 = vpop.permute.xlu0 %3571
      %3573 = vrot.lane.b32.xlu0 %v283, 113
      %v3574 = vpop.permute.xlu0 %3573
      %3575 = vrot.lane.b32.xlu0 %v284, 113
      %v3576 = vpop.permute.xlu0 %3575
      %3577 = vrot.lane.b32.xlu0 %v285, 113
      %v3578 = vpop.permute.xlu0 %3577
      %3579 = vrot.lane.b32.xlu0 %v286, 113
      %v3580 = vpop.permute.xlu0 %3579
      %3581 = vrot.lane.b32.xlu0 %v287, 113
      %v3582 = vpop.permute.xlu0 %3581
      %3583 = vrot.lane.b32.xlu0 %v288, 113
      %v3584 = vpop.permute.xlu0 %3583
      %3585 = vrot.lane.b32.xlu0 %v289, 113
      %v3586 = vpop.permute.xlu0 %3585
      %3587 = vrot.lane.b32.xlu0 %v290, 113
      %v3588 = vpop.permute.xlu0 %3587
      %vm3589 = vcmask 924672
      %v3590 = vsel %vm3589, %v3566, %v3568
      %v3591 = vsel %vm3589, %v3568, %v3570
      %v3592 = vsel %vm3589, %v3570, %v3572
      %v3593 = vsel %vm3589, %v3574, %v3576
      %v3594 = vsel %vm3589, %v3576, %v3578
      %v3595 = vsel %vm3589, %v3578, %v3580
      %v3596 = vsel %vm3589, %v3582, %v3584
      %v3597 = vsel %vm3589, %v3584, %v3586
      %v3598 = vsel %vm3589, %v3586, %v3588
      %v3607 = vsel %vm385, %v3556, 0
      %v3609 = vsel %vm385, %v3558, 0
      %v3611 = vsel %vm385, %v3560, 0
      %v3613 = vsel %vm385, %v3562, 0
      %v3615 = vsel %vm385, %v3564, 0
      %v3617 = vsel %vm396, %v3596, 0
      %v3619 = vsel %vm396, %v3597, 0
      %v3621 = vsel %vm396, %v3598, 0
      %v3623 = vsel %vm396, %v3588, 0
      %3625 = vmatpush.msra.mxu0 0.0
      %3626 = vmatpush.msra.mxu0 0.0
      %3627 = vmatpush.msra.mxu0 0.0
      %3628 = vmatpush.msra.mxu0 0.0
      %3629 = vmatpush.msra.mxu0 0.0
      %3630 = vmatpush.msra.mxu0 0.0
      %3631 = vmatpush.msra.mxu0 0.0
      %3632 = vmatpush.msra.mxu0 0.0
      %3633 = vmatpush.msra.mxu0 0.0
      %3634 = vmatpush.msra.mxu0 0.0
      %3635 = vmatpush.msra.mxu0 0.0
      %3636 = vmatpush.msra.mxu0 0.0
      %3637 = vmatpush.msra.mxu0 0.0
      %3638 = vmatpush.msra.mxu0 %v3617
      %3639 = vmatpush.msra.mxu0 %v3593
      %3640 = vmatpush.msra.mxu0 %v3590
      %3641 = vmatmul.f32.gmra.mxu0 %v3607
      %v3642 = vpop.f32.mrf.mxu0
      %v3643 = vadd.f32 0.0, %v3642
      %3644 = vmatmul.f32.gmra.mxu0 %v3609
      %v3645 = vpop.f32.mrf.mxu0
      %v3646 = vadd.f32 0.0, %v3645
      %3647 = vmatmul.f32.gmra.mxu0 %v3611
      %v3648 = vpop.f32.mrf.mxu0
      %v3649 = vadd.f32 0.0, %v3648
      %3650 = vmatmul.f32.gmra.mxu0 %v3613
      %v3651 = vpop.f32.mrf.mxu0
      %v3652 = vadd.f32 0.0, %v3651
      %3653 = vmatmul.f32.gmra.mxu0 %v3615
      %v3654 = vpop.f32.mrf.mxu0
      %v3655 = vadd.f32 0.0, %v3654
      %3656 = vdwg.mxu0
      %3657 = vmatpush.msra.mxu0 0.0
      %3658 = vmatpush.msra.mxu0 0.0
      %3659 = vmatpush.msra.mxu0 0.0
      %3660 = vmatpush.msra.mxu0 0.0
      %3661 = vmatpush.msra.mxu0 0.0
      %3662 = vmatpush.msra.mxu0 0.0
      %3663 = vmatpush.msra.mxu0 0.0
      %3664 = vmatpush.msra.mxu0 0.0
      %3665 = vmatpush.msra.mxu0 0.0
      %3666 = vmatpush.msra.mxu0 0.0
      %3667 = vmatpush.msra.mxu0 0.0
      %3668 = vmatpush.msra.mxu0 0.0
      %3669 = vmatpush.msra.mxu0 0.0
      %3670 = vmatpush.msra.mxu0 %v3619
      %3671 = vmatpush.msra.mxu0 %v3594
      %3672 = vmatpush.msra.mxu0 %v3591
      %3673 = vmatmul.f32.gmra.mxu0 %v3607
      %v3674 = vpop.f32.mrf.mxu0
      %v3675 = vadd.f32 0.0, %v3674
      %3676 = vmatmul.f32.gmra.mxu0 %v3609
      %v3677 = vpop.f32.mrf.mxu0
      %v3678 = vadd.f32 0.0, %v3677
      %3679 = vmatmul.f32.gmra.mxu0 %v3611
      %v3680 = vpop.f32.mrf.mxu0
      %v3681 = vadd.f32 0.0, %v3680
      %3682 = vmatmul.f32.gmra.mxu0 %v3613
      %v3683 = vpop.f32.mrf.mxu0
      %v3684 = vadd.f32 0.0, %v3683
      %3685 = vmatmul.f32.gmra.mxu0 %v3615
      %v3686 = vpop.f32.mrf.mxu0
      %v3687 = vadd.f32 0.0, %v3686
      %3688 = vdwg.mxu0
      %3689 = vmatpush.msra.mxu0 0.0
      %3690 = vmatpush.msra.mxu0 0.0
      %3691 = vmatpush.msra.mxu0 0.0
      %3692 = vmatpush.msra.mxu0 0.0
      %3693 = vmatpush.msra.mxu0 0.0
      %3694 = vmatpush.msra.mxu0 0.0
      %3695 = vmatpush.msra.mxu0 0.0
      %3696 = vmatpush.msra.mxu0 0.0
      %3697 = vmatpush.msra.mxu0 0.0
      %3698 = vmatpush.msra.mxu0 0.0
      %3699 = vmatpush.msra.mxu0 0.0
      %3700 = vmatpush.msra.mxu0 0.0
      %3701 = vmatpush.msra.mxu0 0.0
      %3702 = vmatpush.msra.mxu0 %v3621
      %3703 = vmatpush.msra.mxu0 %v3595
      %3704 = vmatpush.msra.mxu0 %v3592
      %3705 = vmatmul.f32.gmra.mxu0 %v3607
      %v3706 = vpop.f32.mrf.mxu0
      %v3707 = vadd.f32 0.0, %v3706
      %3708 = vmatmul.f32.gmra.mxu0 %v3609
      %v3709 = vpop.f32.mrf.mxu0
      %v3710 = vadd.f32 0.0, %v3709
      %3711 = vmatmul.f32.gmra.mxu0 %v3611
      %v3712 = vpop.f32.mrf.mxu0
      %v3713 = vadd.f32 0.0, %v3712
      %3714 = vmatmul.f32.gmra.mxu0 %v3613
      %v3715 = vpop.f32.mrf.mxu0
      %v3716 = vadd.f32 0.0, %v3715
      %3717 = vmatmul.f32.gmra.mxu0 %v3615
      %v3718 = vpop.f32.mrf.mxu0
      %v3719 = vadd.f32 0.0, %v3718
      %3720 = vdwg.mxu0
      %3721 = vmatpush.msra.mxu0 0.0
      %3722 = vmatpush.msra.mxu0 0.0
      %3723 = vmatpush.msra.mxu0 0.0
      %3724 = vmatpush.msra.mxu0 0.0
      %3725 = vmatpush.msra.mxu0 0.0
      %3726 = vmatpush.msra.mxu0 0.0
      %3727 = vmatpush.msra.mxu0 0.0
      %3728 = vmatpush.msra.mxu0 0.0
      %3729 = vmatpush.msra.mxu0 0.0
      %3730 = vmatpush.msra.mxu0 0.0
      %3731 = vmatpush.msra.mxu0 0.0
      %3732 = vmatpush.msra.mxu0 0.0
      %3733 = vmatpush.msra.mxu0 0.0
      %3734 = vmatpush.msra.mxu0 %v3623
      %3735 = vmatpush.msra.mxu0 %v3580
      %3736 = vmatpush.msra.mxu0 %v3572
      %3737 = vmatmul.f32.gmra.mxu0 %v3607
      %v3738 = vpop.f32.mrf.mxu0
      %v3739 = vadd.f32 0.0, %v3738
      %3740 = vmatmul.f32.gmra.mxu0 %v3609
      %v3741 = vpop.f32.mrf.mxu0
      %v3742 = vadd.f32 0.0, %v3741
      %3743 = vmatmul.f32.gmra.mxu0 %v3611
      %v3744 = vpop.f32.mrf.mxu0
      %v3745 = vadd.f32 0.0, %v3744
      %3746 = vmatmul.f32.gmra.mxu0 %v3613
      %v3747 = vpop.f32.mrf.mxu0
      %v3748 = vadd.f32 0.0, %v3747
      %3749 = vmatmul.f32.gmra.mxu0 %v3615
      %v3750 = vpop.f32.mrf.mxu0
      %v3751 = vadd.f32 0.0, %v3750
      %3752 = vdwg.mxu0
      %v3753 = vadd.f32 %v3535, %v3643
      %v3754 = vadd.f32 %v3536, %v3675
      %v3755 = vadd.f32 %v3537, %v3707
      %v3756 = vadd.f32 %v3538, %v3739
      %v3757 = vadd.f32 %v3539, %v3646
      %v3758 = vadd.f32 %v3540, %v3678
      %v3759 = vadd.f32 %v3541, %v3710
      %v3760 = vadd.f32 %v3542, %v3742
      %v3761 = vadd.f32 %v3543, %v3649
      %v3762 = vadd.f32 %v3544, %v3681
      %v3763 = vadd.f32 %v3545, %v3713
      %v3764 = vadd.f32 %v3546, %v3745
      %v3765 = vadd.f32 %v3547, %v3652
      %v3766 = vadd.f32 %v3548, %v3684
      %v3767 = vadd.f32 %v3549, %v3716
      %v3768 = vadd.f32 %v3550, %v3748
      %v3769 = vadd.f32 %v3551, %v3655
      %v3770 = vadd.f32 %v3552, %v3687
      %v3771 = vadd.f32 %v3553, %v3719
      %v3772 = vadd.f32 %v3554, %v3751
      %3773 = vrot.lane.b32.xlu0 %v293, 32
      %v3774 = vpop.permute.xlu0 %3773
      %3775 = vrot.lane.b32.xlu0 %v298, 32
      %v3776 = vpop.permute.xlu0 %3775
      %3777 = vrot.lane.b32.xlu0 %v303, 32
      %v3778 = vpop.permute.xlu0 %3777
      %3779 = vrot.lane.b32.xlu0 %v308, 32
      %v3780 = vpop.permute.xlu0 %3779
      %3781 = vrot.lane.b32.xlu0 %v313, 32
      %v3782 = vpop.permute.xlu0 %3781
      %3783 = vrot.lane.b32.xlu0 %v279, 112
      %v3784 = vpop.permute.xlu0 %3783
      %3785 = vrot.lane.b32.xlu0 %v280, 112
      %v3786 = vpop.permute.xlu0 %3785
      %3787 = vrot.lane.b32.xlu0 %v281, 112
      %v3788 = vpop.permute.xlu0 %3787
      %3789 = vrot.lane.b32.xlu0 %v282, 112
      %v3790 = vpop.permute.xlu0 %3789
      %3791 = vrot.lane.b32.xlu0 %v283, 112
      %v3792 = vpop.permute.xlu0 %3791
      %3793 = vrot.lane.b32.xlu0 %v284, 112
      %v3794 = vpop.permute.xlu0 %3793
      %3795 = vrot.lane.b32.xlu0 %v285, 112
      %v3796 = vpop.permute.xlu0 %3795
      %3797 = vrot.lane.b32.xlu0 %v286, 112
      %v3798 = vpop.permute.xlu0 %3797
      %3799 = vrot.lane.b32.xlu0 %v287, 112
      %v3800 = vpop.permute.xlu0 %3799
      %3801 = vrot.lane.b32.xlu0 %v288, 112
      %v3802 = vpop.permute.xlu0 %3801
      %3803 = vrot.lane.b32.xlu0 %v289, 112
      %v3804 = vpop.permute.xlu0 %3803
      %3805 = vrot.lane.b32.xlu0 %v290, 112
      %v3806 = vpop.permute.xlu0 %3805
      %vm3807 = vcmask 916480
      %v3808 = vsel %vm3807, %v3784, %v3786
      %v3809 = vsel %vm3807, %v3786, %v3788
      %v3810 = vsel %vm3807, %v3788, %v3790
      %v3811 = vsel %vm3807, %v3792, %v3794
      %v3812 = vsel %vm3807, %v3794, %v3796
      %v3813 = vsel %vm3807, %v3796, %v3798
      %v3814 = vsel %vm3807, %v3800, %v3802
      %v3815 = vsel %vm3807, %v3802, %v3804
      %v3816 = vsel %vm3807, %v3804, %v3806
      %v3825 = vsel %vm385, %v3774, 0
      %v3827 = vsel %vm385, %v3776, 0
      %v3829 = vsel %vm385, %v3778, 0
      %v3831 = vsel %vm385, %v3780, 0
      %v3833 = vsel %vm385, %v3782, 0
      %v3835 = vsel %vm396, %v3814, 0
      %v3837 = vsel %vm396, %v3815, 0
      %v3839 = vsel %vm396, %v3816, 0
      %v3841 = vsel %vm396, %v3806, 0
      %3843 = vmatpush.msra.mxu0 0.0
      %3844 = vmatpush.msra.mxu0 0.0
      %3845 = vmatpush.msra.mxu0 0.0
      %3846 = vmatpush.msra.mxu0 0.0
      %3847 = vmatpush.msra.mxu0 0.0
      %3848 = vmatpush.msra.mxu0 0.0
      %3849 = vmatpush.msra.mxu0 0.0
      %3850 = vmatpush.msra.mxu0 0.0
      %3851 = vmatpush.msra.mxu0 0.0
      %3852 = vmatpush.msra.mxu0 0.0
      %3853 = vmatpush.msra.mxu0 0.0
      %3854 = vmatpush.msra.mxu0 0.0
      %3855 = vmatpush.msra.mxu0 0.0
      %3856 = vmatpush.msra.mxu0 %v3835
      %3857 = vmatpush.msra.mxu0 %v3811
      %3858 = vmatpush.msra.mxu0 %v3808
      %3859 = vmatmul.f32.gmra.mxu0 %v3825
      %v3860 = vpop.f32.mrf.mxu0
      %v3861 = vadd.f32 0.0, %v3860
      %3862 = vmatmul.f32.gmra.mxu0 %v3827
      %v3863 = vpop.f32.mrf.mxu0
      %v3864 = vadd.f32 0.0, %v3863
      %3865 = vmatmul.f32.gmra.mxu0 %v3829
      %v3866 = vpop.f32.mrf.mxu0
      %v3867 = vadd.f32 0.0, %v3866
      %3868 = vmatmul.f32.gmra.mxu0 %v3831
      %v3869 = vpop.f32.mrf.mxu0
      %v3870 = vadd.f32 0.0, %v3869
      %3871 = vmatmul.f32.gmra.mxu0 %v3833
      %v3872 = vpop.f32.mrf.mxu0
      %v3873 = vadd.f32 0.0, %v3872
      %3874 = vdwg.mxu0
      %3875 = vmatpush.msra.mxu0 0.0
      %3876 = vmatpush.msra.mxu0 0.0
      %3877 = vmatpush.msra.mxu0 0.0
      %3878 = vmatpush.msra.mxu0 0.0
      %3879 = vmatpush.msra.mxu0 0.0
      %3880 = vmatpush.msra.mxu0 0.0
      %3881 = vmatpush.msra.mxu0 0.0
      %3882 = vmatpush.msra.mxu0 0.0
      %3883 = vmatpush.msra.mxu0 0.0
      %3884 = vmatpush.msra.mxu0 0.0
      %3885 = vmatpush.msra.mxu0 0.0
      %3886 = vmatpush.msra.mxu0 0.0
      %3887 = vmatpush.msra.mxu0 0.0
      %3888 = vmatpush.msra.mxu0 %v3837
      %3889 = vmatpush.msra.mxu0 %v3812
      %3890 = vmatpush.msra.mxu0 %v3809
      %3891 = vmatmul.f32.gmra.mxu0 %v3825
      %v3892 = vpop.f32.mrf.mxu0
      %v3893 = vadd.f32 0.0, %v3892
      %3894 = vmatmul.f32.gmra.mxu0 %v3827
      %v3895 = vpop.f32.mrf.mxu0
      %v3896 = vadd.f32 0.0, %v3895
      %3897 = vmatmul.f32.gmra.mxu0 %v3829
      %v3898 = vpop.f32.mrf.mxu0
      %v3899 = vadd.f32 0.0, %v3898
      %3900 = vmatmul.f32.gmra.mxu0 %v3831
      %v3901 = vpop.f32.mrf.mxu0
      %v3902 = vadd.f32 0.0, %v3901
      %3903 = vmatmul.f32.gmra.mxu0 %v3833
      %v3904 = vpop.f32.mrf.mxu0
      %v3905 = vadd.f32 0.0, %v3904
      %3906 = vdwg.mxu0
      %3907 = vmatpush.msra.mxu0 0.0
      %3908 = vmatpush.msra.mxu0 0.0
      %3909 = vmatpush.msra.mxu0 0.0
      %3910 = vmatpush.msra.mxu0 0.0
      %3911 = vmatpush.msra.mxu0 0.0
      %3912 = vmatpush.msra.mxu0 0.0
      %3913 = vmatpush.msra.mxu0 0.0
      %3914 = vmatpush.msra.mxu0 0.0
      %3915 = vmatpush.msra.mxu0 0.0
      %3916 = vmatpush.msra.mxu0 0.0
      %3917 = vmatpush.msra.mxu0 0.0
      %3918 = vmatpush.msra.mxu0 0.0
      %3919 = vmatpush.msra.mxu0 0.0
      %3920 = vmatpush.msra.mxu0 %v3839
      %3921 = vmatpush.msra.mxu0 %v3813
      %3922 = vmatpush.msra.mxu0 %v3810
      %3923 = vmatmul.f32.gmra.mxu0 %v3825
      %v3924 = vpop.f32.mrf.mxu0
      %v3925 = vadd.f32 0.0, %v3924
      %3926 = vmatmul.f32.gmra.mxu0 %v3827
      %v3927 = vpop.f32.mrf.mxu0
      %v3928 = vadd.f32 0.0, %v3927
      %3929 = vmatmul.f32.gmra.mxu0 %v3829
      %v3930 = vpop.f32.mrf.mxu0
      %v3931 = vadd.f32 0.0, %v3930
      %3932 = vmatmul.f32.gmra.mxu0 %v3831
      %v3933 = vpop.f32.mrf.mxu0
      %v3934 = vadd.f32 0.0, %v3933
      %3935 = vmatmul.f32.gmra.mxu0 %v3833
      %v3936 = vpop.f32.mrf.mxu0
      %v3937 = vadd.f32 0.0, %v3936
      %3938 = vdwg.mxu0
      %3939 = vmatpush.msra.mxu0 0.0
      %3940 = vmatpush.msra.mxu0 0.0
      %3941 = vmatpush.msra.mxu0 0.0
      %3942 = vmatpush.msra.mxu0 0.0
      %3943 = vmatpush.msra.mxu0 0.0
      %3944 = vmatpush.msra.mxu0 0.0
      %3945 = vmatpush.msra.mxu0 0.0
      %3946 = vmatpush.msra.mxu0 0.0
      %3947 = vmatpush.msra.mxu0 0.0
      %3948 = vmatpush.msra.mxu0 0.0
      %3949 = vmatpush.msra.mxu0 0.0
      %3950 = vmatpush.msra.mxu0 0.0
      %3951 = vmatpush.msra.mxu0 0.0
      %3952 = vmatpush.msra.mxu0 %v3841
      %3953 = vmatpush.msra.mxu0 %v3798
      %3954 = vmatpush.msra.mxu0 %v3790
      %3955 = vmatmul.f32.gmra.mxu0 %v3825
      %v3956 = vpop.f32.mrf.mxu0
      %v3957 = vadd.f32 0.0, %v3956
      %3958 = vmatmul.f32.gmra.mxu0 %v3827
      %v3959 = vpop.f32.mrf.mxu0
      %v3960 = vadd.f32 0.0, %v3959
      %3961 = vmatmul.f32.gmra.mxu0 %v3829
      %v3962 = vpop.f32.mrf.mxu0
      %v3963 = vadd.f32 0.0, %v3962
      %3964 = vmatmul.f32.gmra.mxu0 %v3831
      %v3965 = vpop.f32.mrf.mxu0
      %v3966 = vadd.f32 0.0, %v3965
      %3967 = vmatmul.f32.gmra.mxu0 %v3833
      %v3968 = vpop.f32.mrf.mxu0
      %v3969 = vadd.f32 0.0, %v3968
      %3970 = vdwg.mxu0
      %v3971 = vadd.f32 %v3753, %v3861
      %v3972 = vadd.f32 %v3754, %v3893
      %v3973 = vadd.f32 %v3755, %v3925
      %v3974 = vadd.f32 %v3756, %v3957
      %v3975 = vadd.f32 %v3757, %v3864
      %v3976 = vadd.f32 %v3758, %v3896
      %v3977 = vadd.f32 %v3759, %v3928
      %v3978 = vadd.f32 %v3760, %v3960
      %v3979 = vadd.f32 %v3761, %v3867
      %v3980 = vadd.f32 %v3762, %v3899
      %v3981 = vadd.f32 %v3763, %v3931
      %v3982 = vadd.f32 %v3764, %v3963
      %v3983 = vadd.f32 %v3765, %v3870
      %v3984 = vadd.f32 %v3766, %v3902
      %v3985 = vadd.f32 %v3767, %v3934
      %v3986 = vadd.f32 %v3768, %v3966
      %v3987 = vadd.f32 %v3769, %v3873
      %v3988 = vadd.f32 %v3770, %v3905
      %v3989 = vadd.f32 %v3771, %v3937
      %v3990 = vadd.f32 %v3772, %v3969
      %3996 = vrot.lane.b32.xlu0 %v293, 10
      %v3997 = vpop.permute.xlu0 %3996
      %3998 = vrot.lane.b32.xlu0 %v294, 10
      %v3999 = vpop.permute.xlu0 %3998
      %4000 = vrot.lane.b32.xlu0 %v298, 10
      %v4001 = vpop.permute.xlu0 %4000
      %4002 = vrot.lane.b32.xlu0 %v299, 10
      %v4003 = vpop.permute.xlu0 %4002
      %4004 = vrot.lane.b32.xlu0 %v303, 10
      %v4005 = vpop.permute.xlu0 %4004
      %4006 = vrot.lane.b32.xlu0 %v304, 10
      %v4007 = vpop.permute.xlu0 %4006
      %4008 = vrot.lane.b32.xlu0 %v308, 10
      %v4009 = vpop.permute.xlu0 %4008
      %4010 = vrot.lane.b32.xlu0 %v309, 10
      %v4011 = vpop.permute.xlu0 %4010
      %4012 = vrot.lane.b32.xlu0 %v313, 10
      %v4013 = vpop.permute.xlu0 %4012
      %4014 = vrot.lane.b32.xlu0 %v314, 10
      %v4015 = vpop.permute.xlu0 %4014
      %vm4016 = vcmask 80896
      %v4017 = vsel %vm4016, %v3997, %v3999
      %v4018 = vsel %vm4016, %v4001, %v4003
      %v4019 = vsel %vm4016, %v4005, %v4007
      %v4020 = vsel %vm4016, %v4009, %v4011
      %v4021 = vsel %vm4016, %v4013, %v4015
      %4022 = vrot.lane.b32.xlu0 %v279, 111
      %v4023 = vpop.permute.xlu0 %4022
      %4024 = vrot.lane.b32.xlu0 %v280, 111
      %v4025 = vpop.permute.xlu0 %4024
      %4026 = vrot.lane.b32.xlu0 %v281, 111
      %v4027 = vpop.permute.xlu0 %4026
      %4028 = vrot.lane.b32.xlu0 %v282, 111
      %v4029 = vpop.permute.xlu0 %4028
      %4030 = vrot.lane.b32.xlu0 %v283, 111
      %v4031 = vpop.permute.xlu0 %4030
      %4032 = vrot.lane.b32.xlu0 %v284, 111
      %v4033 = vpop.permute.xlu0 %4032
      %4034 = vrot.lane.b32.xlu0 %v285, 111
      %v4035 = vpop.permute.xlu0 %4034
      %4036 = vrot.lane.b32.xlu0 %v286, 111
      %v4037 = vpop.permute.xlu0 %4036
      %4038 = vrot.lane.b32.xlu0 %v287, 111
      %v4039 = vpop.permute.xlu0 %4038
      %4040 = vrot.lane.b32.xlu0 %v288, 111
      %v4041 = vpop.permute.xlu0 %4040
      %4042 = vrot.lane.b32.xlu0 %v289, 111
      %v4043 = vpop.permute.xlu0 %4042
      %4044 = vrot.lane.b32.xlu0 %v290, 111
      %v4045 = vpop.permute.xlu0 %4044
      %vm4046 = vcmask 908288
      %v4047 = vsel %vm4046, %v4023, %v4025
      %v4048 = vsel %vm4046, %v4025, %v4027
      %v4049 = vsel %vm4046, %v4027, %v4029
      %v4050 = vsel %vm4046, %v4031, %v4033
      %v4051 = vsel %vm4046, %v4033, %v4035
      %v4052 = vsel %vm4046, %v4035, %v4037
      %v4053 = vsel %vm4046, %v4039, %v4041
      %v4054 = vsel %vm4046, %v4041, %v4043
      %v4055 = vsel %vm4046, %v4043, %v4045
      %v4064 = vsel %vm385, %v4017, 0
      %v4066 = vsel %vm385, %v4018, 0
      %v4068 = vsel %vm385, %v4019, 0
      %v4070 = vsel %vm385, %v4020, 0
      %v4072 = vsel %vm385, %v4021, 0
      %v4074 = vsel %vm396, %v4053, 0
      %v4076 = vsel %vm396, %v4054, 0
      %v4078 = vsel %vm396, %v4055, 0
      %v4080 = vsel %vm396, %v4045, 0
      %4082 = vmatpush.msra.mxu0 0.0
      %4083 = vmatpush.msra.mxu0 0.0
      %4084 = vmatpush.msra.mxu0 0.0
      %4085 = vmatpush.msra.mxu0 0.0
      %4086 = vmatpush.msra.mxu0 0.0
      %4087 = vmatpush.msra.mxu0 0.0
      %4088 = vmatpush.msra.mxu0 0.0
      %4089 = vmatpush.msra.mxu0 0.0
      %4090 = vmatpush.msra.mxu0 0.0
      %4091 = vmatpush.msra.mxu0 0.0
      %4092 = vmatpush.msra.mxu0 0.0
      %4093 = vmatpush.msra.mxu0 0.0
      %4094 = vmatpush.msra.mxu0 0.0
      %4095 = vmatpush.msra.mxu0 %v4074
      %4096 = vmatpush.msra.mxu0 %v4050
      %4097 = vmatpush.msra.mxu0 %v4047
      %4098 = vmatmul.f32.gmra.mxu0 %v4064
      %v4099 = vpop.f32.mrf.mxu0
      %v4100 = vadd.f32 0.0, %v4099
      %4101 = vmatmul.f32.gmra.mxu0 %v4066
      %v4102 = vpop.f32.mrf.mxu0
      %v4103 = vadd.f32 0.0, %v4102
      %4104 = vmatmul.f32.gmra.mxu0 %v4068
      %v4105 = vpop.f32.mrf.mxu0
      %v4106 = vadd.f32 0.0, %v4105
      %4107 = vmatmul.f32.gmra.mxu0 %v4070
      %v4108 = vpop.f32.mrf.mxu0
      %v4109 = vadd.f32 0.0, %v4108
      %4110 = vmatmul.f32.gmra.mxu0 %v4072
      %v4111 = vpop.f32.mrf.mxu0
      %v4112 = vadd.f32 0.0, %v4111
      %4113 = vdwg.mxu0
      %4114 = vmatpush.msra.mxu0 0.0
      %4115 = vmatpush.msra.mxu0 0.0
      %4116 = vmatpush.msra.mxu0 0.0
      %4117 = vmatpush.msra.mxu0 0.0
      %4118 = vmatpush.msra.mxu0 0.0
      %4119 = vmatpush.msra.mxu0 0.0
      %4120 = vmatpush.msra.mxu0 0.0
      %4121 = vmatpush.msra.mxu0 0.0
      %4122 = vmatpush.msra.mxu0 0.0
      %4123 = vmatpush.msra.mxu0 0.0
      %4124 = vmatpush.msra.mxu0 0.0
      %4125 = vmatpush.msra.mxu0 0.0
      %4126 = vmatpush.msra.mxu0 0.0
      %4127 = vmatpush.msra.mxu0 %v4076
      %4128 = vmatpush.msra.mxu0 %v4051
      %4129 = vmatpush.msra.mxu0 %v4048
      %4130 = vmatmul.f32.gmra.mxu0 %v4064
      %v4131 = vpop.f32.mrf.mxu0
      %v4132 = vadd.f32 0.0, %v4131
      %4133 = vmatmul.f32.gmra.mxu0 %v4066
      %v4134 = vpop.f32.mrf.mxu0
      %v4135 = vadd.f32 0.0, %v4134
      %4136 = vmatmul.f32.gmra.mxu0 %v4068
      %v4137 = vpop.f32.mrf.mxu0
      %v4138 = vadd.f32 0.0, %v4137
      %4139 = vmatmul.f32.gmra.mxu0 %v4070
      %v4140 = vpop.f32.mrf.mxu0
      %v4141 = vadd.f32 0.0, %v4140
      %4142 = vmatmul.f32.gmra.mxu0 %v4072
      %v4143 = vpop.f32.mrf.mxu0
      %v4144 = vadd.f32 0.0, %v4143
      %4145 = vdwg.mxu0
      %4146 = vmatpush.msra.mxu0 0.0
      %4147 = vmatpush.msra.mxu0 0.0
      %4148 = vmatpush.msra.mxu0 0.0
      %4149 = vmatpush.msra.mxu0 0.0
      %4150 = vmatpush.msra.mxu0 0.0
      %4151 = vmatpush.msra.mxu0 0.0
      %4152 = vmatpush.msra.mxu0 0.0
      %4153 = vmatpush.msra.mxu0 0.0
      %4154 = vmatpush.msra.mxu0 0.0
      %4155 = vmatpush.msra.mxu0 0.0
      %4156 = vmatpush.msra.mxu0 0.0
      %4157 = vmatpush.msra.mxu0 0.0
      %4158 = vmatpush.msra.mxu0 0.0
      %4159 = vmatpush.msra.mxu0 %v4078
      %4160 = vmatpush.msra.mxu0 %v4052
      %4161 = vmatpush.msra.mxu0 %v4049
      %4162 = vmatmul.f32.gmra.mxu0 %v4064
      %v4163 = vpop.f32.mrf.mxu0
      %v4164 = vadd.f32 0.0, %v4163
      %4165 = vmatmul.f32.gmra.mxu0 %v4066
      %v4166 = vpop.f32.mrf.mxu0
      %v4167 = vadd.f32 0.0, %v4166
      %4168 = vmatmul.f32.gmra.mxu0 %v4068
      %v4169 = vpop.f32.mrf.mxu0
      %v4170 = vadd.f32 0.0, %v4169
      %4171 = vmatmul.f32.gmra.mxu0 %v4070
      %v4172 = vpop.f32.mrf.mxu0
      %v4173 = vadd.f32 0.0, %v4172
      %4174 = vmatmul.f32.gmra.mxu0 %v4072
      %v4175 = vpop.f32.mrf.mxu0
      %v4176 = vadd.f32 0.0, %v4175
      %4177 = vdwg.mxu0
      %4178 = vmatpush.msra.mxu0 0.0
      %4179 = vmatpush.msra.mxu0 0.0
      %4180 = vmatpush.msra.mxu0 0.0
      %4181 = vmatpush.msra.mxu0 0.0
      %4182 = vmatpush.msra.mxu0 0.0
      %4183 = vmatpush.msra.mxu0 0.0
      %4184 = vmatpush.msra.mxu0 0.0
      %4185 = vmatpush.msra.mxu0 0.0
      %4186 = vmatpush.msra.mxu0 0.0
      %4187 = vmatpush.msra.mxu0 0.0
      %4188 = vmatpush.msra.mxu0 0.0
      %4189 = vmatpush.msra.mxu0 0.0
      %4190 = vmatpush.msra.mxu0 0.0
      %4191 = vmatpush.msra.mxu0 %v4080
      %4192 = vmatpush.msra.mxu0 %v4037
      %4193 = vmatpush.msra.mxu0 %v4029
      %4194 = vmatmul.f32.gmra.mxu0 %v4064
      %v4195 = vpop.f32.mrf.mxu0
      %v4196 = vadd.f32 0.0, %v4195
      %4197 = vmatmul.f32.gmra.mxu0 %v4066
      %v4198 = vpop.f32.mrf.mxu0
      %v4199 = vadd.f32 0.0, %v4198
      %4200 = vmatmul.f32.gmra.mxu0 %v4068
      %v4201 = vpop.f32.mrf.mxu0
      %v4202 = vadd.f32 0.0, %v4201
      %4203 = vmatmul.f32.gmra.mxu0 %v4070
      %v4204 = vpop.f32.mrf.mxu0
      %v4205 = vadd.f32 0.0, %v4204
      %4206 = vmatmul.f32.gmra.mxu0 %v4072
      %v4207 = vpop.f32.mrf.mxu0
      %v4208 = vadd.f32 0.0, %v4207
      %4209 = vdwg.mxu0
      %v4210 = vadd.f32 %v3971, %v4100
      %v4211 = vadd.f32 %v3972, %v4132
      %v4212 = vadd.f32 %v3973, %v4164
      %v4213 = vadd.f32 %v3974, %v4196
      %v4214 = vadd.f32 %v3975, %v4103
      %v4215 = vadd.f32 %v3976, %v4135
      %v4216 = vadd.f32 %v3977, %v4167
      %v4217 = vadd.f32 %v3978, %v4199
      %v4218 = vadd.f32 %v3979, %v4106
      %v4219 = vadd.f32 %v3980, %v4138
      %v4220 = vadd.f32 %v3981, %v4170
      %v4221 = vadd.f32 %v3982, %v4202
      %v4222 = vadd.f32 %v3983, %v4109
      %v4223 = vadd.f32 %v3984, %v4141
      %v4224 = vadd.f32 %v3985, %v4173
      %v4225 = vadd.f32 %v3986, %v4205
      %v4226 = vadd.f32 %v3987, %v4112
      %v4227 = vadd.f32 %v3988, %v4144
      %v4228 = vadd.f32 %v3989, %v4176
      %v4229 = vadd.f32 %v3990, %v4208
      %4230 = vrot.lane.b32.xlu0 %v294, 116
      %v4231 = vpop.permute.xlu0 %4230
      %4232 = vrot.lane.b32.xlu0 %v299, 116
      %v4233 = vpop.permute.xlu0 %4232
      %4234 = vrot.lane.b32.xlu0 %v304, 116
      %v4235 = vpop.permute.xlu0 %4234
      %4236 = vrot.lane.b32.xlu0 %v309, 116
      %v4237 = vpop.permute.xlu0 %4236
      %4238 = vrot.lane.b32.xlu0 %v314, 116
      %v4239 = vpop.permute.xlu0 %4238
      %4240 = vrot.lane.b32.xlu0 %v279, 110
      %v4241 = vpop.permute.xlu0 %4240
      %4242 = vrot.lane.b32.xlu0 %v280, 110
      %v4243 = vpop.permute.xlu0 %4242
      %4244 = vrot.lane.b32.xlu0 %v281, 110
      %v4245 = vpop.permute.xlu0 %4244
      %4246 = vrot.lane.b32.xlu0 %v282, 110
      %v4247 = vpop.permute.xlu0 %4246
      %4248 = vrot.lane.b32.xlu0 %v283, 110
      %v4249 = vpop.permute.xlu0 %4248
      %4250 = vrot.lane.b32.xlu0 %v284, 110
      %v4251 = vpop.permute.xlu0 %4250
      %4252 = vrot.lane.b32.xlu0 %v285, 110
      %v4253 = vpop.permute.xlu0 %4252
      %4254 = vrot.lane.b32.xlu0 %v286, 110
      %v4255 = vpop.permute.xlu0 %4254
      %4256 = vrot.lane.b32.xlu0 %v287, 110
      %v4257 = vpop.permute.xlu0 %4256
      %4258 = vrot.lane.b32.xlu0 %v288, 110
      %v4259 = vpop.permute.xlu0 %4258
      %4260 = vrot.lane.b32.xlu0 %v289, 110
      %v4261 = vpop.permute.xlu0 %4260
      %4262 = vrot.lane.b32.xlu0 %v290, 110
      %v4263 = vpop.permute.xlu0 %4262
      %vm4264 = vcmask 900096
      %v4265 = vsel %vm4264, %v4241, %v4243
      %v4266 = vsel %vm4264, %v4243, %v4245
      %v4267 = vsel %vm4264, %v4245, %v4247
      %v4268 = vsel %vm4264, %v4249, %v4251
      %v4269 = vsel %vm4264, %v4251, %v4253
      %v4270 = vsel %vm4264, %v4253, %v4255
      %v4271 = vsel %vm4264, %v4257, %v4259
      %v4272 = vsel %vm4264, %v4259, %v4261
      %v4273 = vsel %vm4264, %v4261, %v4263
      %v4282 = vsel %vm385, %v4231, 0
      %v4284 = vsel %vm385, %v4233, 0
      %v4286 = vsel %vm385, %v4235, 0
      %v4288 = vsel %vm385, %v4237, 0
      %v4290 = vsel %vm385, %v4239, 0
      %v4292 = vsel %vm396, %v4271, 0
      %v4294 = vsel %vm396, %v4272, 0
      %v4296 = vsel %vm396, %v4273, 0
      %v4298 = vsel %vm396, %v4263, 0
      %4300 = vmatpush.msra.mxu0 0.0
      %4301 = vmatpush.msra.mxu0 0.0
      %4302 = vmatpush.msra.mxu0 0.0
      %4303 = vmatpush.msra.mxu0 0.0
      %4304 = vmatpush.msra.mxu0 0.0
      %4305 = vmatpush.msra.mxu0 0.0
      %4306 = vmatpush.msra.mxu0 0.0
      %4307 = vmatpush.msra.mxu0 0.0
      %4308 = vmatpush.msra.mxu0 0.0
      %4309 = vmatpush.msra.mxu0 0.0
      %4310 = vmatpush.msra.mxu0 0.0
      %4311 = vmatpush.msra.mxu0 0.0
      %4312 = vmatpush.msra.mxu0 0.0
      %4313 = vmatpush.msra.mxu0 %v4292
      %4314 = vmatpush.msra.mxu0 %v4268
      %4315 = vmatpush.msra.mxu0 %v4265
      %4316 = vmatmul.f32.gmra.mxu0 %v4282
      %v4317 = vpop.f32.mrf.mxu0
      %v4318 = vadd.f32 0.0, %v4317
      %4319 = vmatmul.f32.gmra.mxu0 %v4284
      %v4320 = vpop.f32.mrf.mxu0
      %v4321 = vadd.f32 0.0, %v4320
      %4322 = vmatmul.f32.gmra.mxu0 %v4286
      %v4323 = vpop.f32.mrf.mxu0
      %v4324 = vadd.f32 0.0, %v4323
      %4325 = vmatmul.f32.gmra.mxu0 %v4288
      %v4326 = vpop.f32.mrf.mxu0
      %v4327 = vadd.f32 0.0, %v4326
      %4328 = vmatmul.f32.gmra.mxu0 %v4290
      %v4329 = vpop.f32.mrf.mxu0
      %v4330 = vadd.f32 0.0, %v4329
      %4331 = vdwg.mxu0
      %4332 = vmatpush.msra.mxu0 0.0
      %4333 = vmatpush.msra.mxu0 0.0
      %4334 = vmatpush.msra.mxu0 0.0
      %4335 = vmatpush.msra.mxu0 0.0
      %4336 = vmatpush.msra.mxu0 0.0
      %4337 = vmatpush.msra.mxu0 0.0
      %4338 = vmatpush.msra.mxu0 0.0
      %4339 = vmatpush.msra.mxu0 0.0
      %4340 = vmatpush.msra.mxu0 0.0
      %4341 = vmatpush.msra.mxu0 0.0
      %4342 = vmatpush.msra.mxu0 0.0
      %4343 = vmatpush.msra.mxu0 0.0
      %4344 = vmatpush.msra.mxu0 0.0
      %4345 = vmatpush.msra.mxu0 %v4294
      %4346 = vmatpush.msra.mxu0 %v4269
      %4347 = vmatpush.msra.mxu0 %v4266
      %4348 = vmatmul.f32.gmra.mxu0 %v4282
      %v4349 = vpop.f32.mrf.mxu0
      %v4350 = vadd.f32 0.0, %v4349
      %4351 = vmatmul.f32.gmra.mxu0 %v4284
      %v4352 = vpop.f32.mrf.mxu0
      %v4353 = vadd.f32 0.0, %v4352
      %4354 = vmatmul.f32.gmra.mxu0 %v4286
      %v4355 = vpop.f32.mrf.mxu0
      %v4356 = vadd.f32 0.0, %v4355
      %4357 = vmatmul.f32.gmra.mxu0 %v4288
      %v4358 = vpop.f32.mrf.mxu0
      %v4359 = vadd.f32 0.0, %v4358
      %4360 = vmatmul.f32.gmra.mxu0 %v4290
      %v4361 = vpop.f32.mrf.mxu0
      %v4362 = vadd.f32 0.0, %v4361
      %4363 = vdwg.mxu0
      %4364 = vmatpush.msra.mxu0 0.0
      %4365 = vmatpush.msra.mxu0 0.0
      %4366 = vmatpush.msra.mxu0 0.0
      %4367 = vmatpush.msra.mxu0 0.0
      %4368 = vmatpush.msra.mxu0 0.0
      %4369 = vmatpush.msra.mxu0 0.0
      %4370 = vmatpush.msra.mxu0 0.0
      %4371 = vmatpush.msra.mxu0 0.0
      %4372 = vmatpush.msra.mxu0 0.0
      %4373 = vmatpush.msra.mxu0 0.0
      %4374 = vmatpush.msra.mxu0 0.0
      %4375 = vmatpush.msra.mxu0 0.0
      %4376 = vmatpush.msra.mxu0 0.0
      %4377 = vmatpush.msra.mxu0 %v4296
      %4378 = vmatpush.msra.mxu0 %v4270
      %4379 = vmatpush.msra.mxu0 %v4267
      %4380 = vmatmul.f32.gmra.mxu0 %v4282
      %v4381 = vpop.f32.mrf.mxu0
      %v4382 = vadd.f32 0.0, %v4381
      %4383 = vmatmul.f32.gmra.mxu0 %v4284
      %v4384 = vpop.f32.mrf.mxu0
      %v4385 = vadd.f32 0.0, %v4384
      %4386 = vmatmul.f32.gmra.mxu0 %v4286
      %v4387 = vpop.f32.mrf.mxu0
      %v4388 = vadd.f32 0.0, %v4387
      %4389 = vmatmul.f32.gmra.mxu0 %v4288
      %v4390 = vpop.f32.mrf.mxu0
      %v4391 = vadd.f32 0.0, %v4390
      %4392 = vmatmul.f32.gmra.mxu0 %v4290
      %v4393 = vpop.f32.mrf.mxu0
      %v4394 = vadd.f32 0.0, %v4393
      %4395 = vdwg.mxu0
      %4396 = vmatpush.msra.mxu0 0.0
      %4397 = vmatpush.msra.mxu0 0.0
      %4398 = vmatpush.msra.mxu0 0.0
      %4399 = vmatpush.msra.mxu0 0.0
      %4400 = vmatpush.msra.mxu0 0.0
      %4401 = vmatpush.msra.mxu0 0.0
      %4402 = vmatpush.msra.mxu0 0.0
      %4403 = vmatpush.msra.mxu0 0.0
      %4404 = vmatpush.msra.mxu0 0.0
      %4405 = vmatpush.msra.mxu0 0.0
      %4406 = vmatpush.msra.mxu0 0.0
      %4407 = vmatpush.msra.mxu0 0.0
      %4408 = vmatpush.msra.mxu0 0.0
      %4409 = vmatpush.msra.mxu0 %v4298
      %4410 = vmatpush.msra.mxu0 %v4255
      %4411 = vmatpush.msra.mxu0 %v4247
      %4412 = vmatmul.f32.gmra.mxu0 %v4282
      %v4413 = vpop.f32.mrf.mxu0
      %v4414 = vadd.f32 0.0, %v4413
      %4415 = vmatmul.f32.gmra.mxu0 %v4284
      %v4416 = vpop.f32.mrf.mxu0
      %v4417 = vadd.f32 0.0, %v4416
      %4418 = vmatmul.f32.gmra.mxu0 %v4286
      %v4419 = vpop.f32.mrf.mxu0
      %v4420 = vadd.f32 0.0, %v4419
      %4421 = vmatmul.f32.gmra.mxu0 %v4288
      %v4422 = vpop.f32.mrf.mxu0
      %v4423 = vadd.f32 0.0, %v4422
      %4424 = vmatmul.f32.gmra.mxu0 %v4290
      %v4425 = vpop.f32.mrf.mxu0
      %v4426 = vadd.f32 0.0, %v4425
      %4427 = vdwg.mxu0
      %v4428 = vadd.f32 %v4210, %v4318
      %v4429 = vadd.f32 %v4211, %v4350
      %v4430 = vadd.f32 %v4212, %v4382
      %v4431 = vadd.f32 %v4213, %v4414
      %v4432 = vadd.f32 %v4214, %v4321
      %v4433 = vadd.f32 %v4215, %v4353
      %v4434 = vadd.f32 %v4216, %v4385
      %v4435 = vadd.f32 %v4217, %v4417
      %v4436 = vadd.f32 %v4218, %v4324
      %v4437 = vadd.f32 %v4219, %v4356
      %v4438 = vadd.f32 %v4220, %v4388
      %v4439 = vadd.f32 %v4221, %v4420
      %v4440 = vadd.f32 %v4222, %v4327
      %v4441 = vadd.f32 %v4223, %v4359
      %v4442 = vadd.f32 %v4224, %v4391
      %v4443 = vadd.f32 %v4225, %v4423
      %v4444 = vadd.f32 %v4226, %v4330
      %v4445 = vadd.f32 %v4227, %v4362
      %v4446 = vadd.f32 %v4228, %v4394
      %v4447 = vadd.f32 %v4229, %v4426
      %4448 = vrot.lane.b32.xlu0 %v294, 94
      %v4449 = vpop.permute.xlu0 %4448
      %4450 = vrot.lane.b32.xlu0 %v299, 94
      %v4451 = vpop.permute.xlu0 %4450
      %4452 = vrot.lane.b32.xlu0 %v304, 94
      %v4453 = vpop.permute.xlu0 %4452
      %4454 = vrot.lane.b32.xlu0 %v309, 94
      %v4455 = vpop.permute.xlu0 %4454
      %4456 = vrot.lane.b32.xlu0 %v314, 94
      %v4457 = vpop.permute.xlu0 %4456
      %4458 = vrot.lane.b32.xlu0 %v279, 109
      %v4459 = vpop.permute.xlu0 %4458
      %4460 = vrot.lane.b32.xlu0 %v280, 109
      %v4461 = vpop.permute.xlu0 %4460
      %4462 = vrot.lane.b32.xlu0 %v281, 109
      %v4463 = vpop.permute.xlu0 %4462
      %4464 = vrot.lane.b32.xlu0 %v282, 109
      %v4465 = vpop.permute.xlu0 %4464
      %4466 = vrot.lane.b32.xlu0 %v283, 109
      %v4467 = vpop.permute.xlu0 %4466
      %4468 = vrot.lane.b32.xlu0 %v284, 109
      %v4469 = vpop.permute.xlu0 %4468
      %4470 = vrot.lane.b32.xlu0 %v285, 109
      %v4471 = vpop.permute.xlu0 %4470
      %4472 = vrot.lane.b32.xlu0 %v286, 109
      %v4473 = vpop.permute.xlu0 %4472
      %4474 = vrot.lane.b32.xlu0 %v287, 109
      %v4475 = vpop.permute.xlu0 %4474
      %4476 = vrot.lane.b32.xlu0 %v288, 109
      %v4477 = vpop.permute.xlu0 %4476
      %4478 = vrot.lane.b32.xlu0 %v289, 109
      %v4479 = vpop.permute.xlu0 %4478
      %4480 = vrot.lane.b32.xlu0 %v290, 109
      %v4481 = vpop.permute.xlu0 %4480
      %vm4482 = vcmask 891904
      %v4483 = vsel %vm4482, %v4459, %v4461
      %v4484 = vsel %vm4482, %v4461, %v4463
      %v4485 = vsel %vm4482, %v4463, %v4465
      %v4486 = vsel %vm4482, %v4467, %v4469
      %v4487 = vsel %vm4482, %v4469, %v4471
      %v4488 = vsel %vm4482, %v4471, %v4473
      %v4489 = vsel %vm4482, %v4475, %v4477
      %v4490 = vsel %vm4482, %v4477, %v4479
      %v4491 = vsel %vm4482, %v4479, %v4481
      %v4500 = vsel %vm385, %v4449, 0
      %v4502 = vsel %vm385, %v4451, 0
      %v4504 = vsel %vm385, %v4453, 0
      %v4506 = vsel %vm385, %v4455, 0
      %v4508 = vsel %vm385, %v4457, 0
      %v4510 = vsel %vm396, %v4489, 0
      %v4512 = vsel %vm396, %v4490, 0
      %v4514 = vsel %vm396, %v4491, 0
      %v4516 = vsel %vm396, %v4481, 0
      %4518 = vmatpush.msra.mxu0 0.0
      %4519 = vmatpush.msra.mxu0 0.0
      %4520 = vmatpush.msra.mxu0 0.0
      %4521 = vmatpush.msra.mxu0 0.0
      %4522 = vmatpush.msra.mxu0 0.0
      %4523 = vmatpush.msra.mxu0 0.0
      %4524 = vmatpush.msra.mxu0 0.0
      %4525 = vmatpush.msra.mxu0 0.0
      %4526 = vmatpush.msra.mxu0 0.0
      %4527 = vmatpush.msra.mxu0 0.0
      %4528 = vmatpush.msra.mxu0 0.0
      %4529 = vmatpush.msra.mxu0 0.0
      %4530 = vmatpush.msra.mxu0 0.0
      %4531 = vmatpush.msra.mxu0 %v4510
      %4532 = vmatpush.msra.mxu0 %v4486
      %4533 = vmatpush.msra.mxu0 %v4483
      %4534 = vmatmul.f32.gmra.mxu0 %v4500
      %v4535 = vpop.f32.mrf.mxu0
      %v4536 = vadd.f32 0.0, %v4535
      %4537 = vmatmul.f32.gmra.mxu0 %v4502
      %v4538 = vpop.f32.mrf.mxu0
      %v4539 = vadd.f32 0.0, %v4538
      %4540 = vmatmul.f32.gmra.mxu0 %v4504
      %v4541 = vpop.f32.mrf.mxu0
      %v4542 = vadd.f32 0.0, %v4541
      %4543 = vmatmul.f32.gmra.mxu0 %v4506
      %v4544 = vpop.f32.mrf.mxu0
      %v4545 = vadd.f32 0.0, %v4544
      %4546 = vmatmul.f32.gmra.mxu0 %v4508
      %v4547 = vpop.f32.mrf.mxu0
      %v4548 = vadd.f32 0.0, %v4547
      %4549 = vdwg.mxu0
      %4550 = vmatpush.msra.mxu0 0.0
      %4551 = vmatpush.msra.mxu0 0.0
      %4552 = vmatpush.msra.mxu0 0.0
      %4553 = vmatpush.msra.mxu0 0.0
      %4554 = vmatpush.msra.mxu0 0.0
      %4555 = vmatpush.msra.mxu0 0.0
      %4556 = vmatpush.msra.mxu0 0.0
      %4557 = vmatpush.msra.mxu0 0.0
      %4558 = vmatpush.msra.mxu0 0.0
      %4559 = vmatpush.msra.mxu0 0.0
      %4560 = vmatpush.msra.mxu0 0.0
      %4561 = vmatpush.msra.mxu0 0.0
      %4562 = vmatpush.msra.mxu0 0.0
      %4563 = vmatpush.msra.mxu0 %v4512
      %4564 = vmatpush.msra.mxu0 %v4487
      %4565 = vmatpush.msra.mxu0 %v4484
      %4566 = vmatmul.f32.gmra.mxu0 %v4500
      %v4567 = vpop.f32.mrf.mxu0
      %v4568 = vadd.f32 0.0, %v4567
      %4569 = vmatmul.f32.gmra.mxu0 %v4502
      %v4570 = vpop.f32.mrf.mxu0
      %v4571 = vadd.f32 0.0, %v4570
      %4572 = vmatmul.f32.gmra.mxu0 %v4504
      %v4573 = vpop.f32.mrf.mxu0
      %v4574 = vadd.f32 0.0, %v4573
      %4575 = vmatmul.f32.gmra.mxu0 %v4506
      %v4576 = vpop.f32.mrf.mxu0
      %v4577 = vadd.f32 0.0, %v4576
      %4578 = vmatmul.f32.gmra.mxu0 %v4508
      %v4579 = vpop.f32.mrf.mxu0
      %v4580 = vadd.f32 0.0, %v4579
      %4581 = vdwg.mxu0
      %4582 = vmatpush.msra.mxu0 0.0
      %4583 = vmatpush.msra.mxu0 0.0
      %4584 = vmatpush.msra.mxu0 0.0
      %4585 = vmatpush.msra.mxu0 0.0
      %4586 = vmatpush.msra.mxu0 0.0
      %4587 = vmatpush.msra.mxu0 0.0
      %4588 = vmatpush.msra.mxu0 0.0
      %4589 = vmatpush.msra.mxu0 0.0
      %4590 = vmatpush.msra.mxu0 0.0
      %4591 = vmatpush.msra.mxu0 0.0
      %4592 = vmatpush.msra.mxu0 0.0
      %4593 = vmatpush.msra.mxu0 0.0
      %4594 = vmatpush.msra.mxu0 0.0
      %4595 = vmatpush.msra.mxu0 %v4514
      %4596 = vmatpush.msra.mxu0 %v4488
      %4597 = vmatpush.msra.mxu0 %v4485
      %4598 = vmatmul.f32.gmra.mxu0 %v4500
      %v4599 = vpop.f32.mrf.mxu0
      %v4600 = vadd.f32 0.0, %v4599
      %4601 = vmatmul.f32.gmra.mxu0 %v4502
      %v4602 = vpop.f32.mrf.mxu0
      %v4603 = vadd.f32 0.0, %v4602
      %4604 = vmatmul.f32.gmra.mxu0 %v4504
      %v4605 = vpop.f32.mrf.mxu0
      %v4606 = vadd.f32 0.0, %v4605
      %4607 = vmatmul.f32.gmra.mxu0 %v4506
      %v4608 = vpop.f32.mrf.mxu0
      %v4609 = vadd.f32 0.0, %v4608
      %4610 = vmatmul.f32.gmra.mxu0 %v4508
      %v4611 = vpop.f32.mrf.mxu0
      %v4612 = vadd.f32 0.0, %v4611
      %4613 = vdwg.mxu0
      %4614 = vmatpush.msra.mxu0 0.0
      %4615 = vmatpush.msra.mxu0 0.0
      %4616 = vmatpush.msra.mxu0 0.0
      %4617 = vmatpush.msra.mxu0 0.0
      %4618 = vmatpush.msra.mxu0 0.0
      %4619 = vmatpush.msra.mxu0 0.0
      %4620 = vmatpush.msra.mxu0 0.0
      %4621 = vmatpush.msra.mxu0 0.0
      %4622 = vmatpush.msra.mxu0 0.0
      %4623 = vmatpush.msra.mxu0 0.0
      %4624 = vmatpush.msra.mxu0 0.0
      %4625 = vmatpush.msra.mxu0 0.0
      %4626 = vmatpush.msra.mxu0 0.0
      %4627 = vmatpush.msra.mxu0 %v4516
      %4628 = vmatpush.msra.mxu0 %v4473
      %4629 = vmatpush.msra.mxu0 %v4465
      %4630 = vmatmul.f32.gmra.mxu0 %v4500
      %v4631 = vpop.f32.mrf.mxu0
      %v4632 = vadd.f32 0.0, %v4631
      %4633 = vmatmul.f32.gmra.mxu0 %v4502
      %v4634 = vpop.f32.mrf.mxu0
      %v4635 = vadd.f32 0.0, %v4634
      %4636 = vmatmul.f32.gmra.mxu0 %v4504
      %v4637 = vpop.f32.mrf.mxu0
      %v4638 = vadd.f32 0.0, %v4637
      %4639 = vmatmul.f32.gmra.mxu0 %v4506
      %v4640 = vpop.f32.mrf.mxu0
      %v4641 = vadd.f32 0.0, %v4640
      %4642 = vmatmul.f32.gmra.mxu0 %v4508
      %v4643 = vpop.f32.mrf.mxu0
      %v4644 = vadd.f32 0.0, %v4643
      %4645 = vdwg.mxu0
      %v4646 = vadd.f32 %v4428, %v4536
      %v4647 = vadd.f32 %v4429, %v4568
      %v4648 = vadd.f32 %v4430, %v4600
      %v4649 = vadd.f32 %v4431, %v4632
      %v4650 = vadd.f32 %v4432, %v4539
      %v4651 = vadd.f32 %v4433, %v4571
      %v4652 = vadd.f32 %v4434, %v4603
      %v4653 = vadd.f32 %v4435, %v4635
      %v4654 = vadd.f32 %v4436, %v4542
      %v4655 = vadd.f32 %v4437, %v4574
      %v4656 = vadd.f32 %v4438, %v4606
      %v4657 = vadd.f32 %v4439, %v4638
      %v4658 = vadd.f32 %v4440, %v4545
      %v4659 = vadd.f32 %v4441, %v4577
      %v4660 = vadd.f32 %v4442, %v4609
      %v4661 = vadd.f32 %v4443, %v4641
      %v4662 = vadd.f32 %v4444, %v4548
      %v4663 = vadd.f32 %v4445, %v4580
      %v4664 = vadd.f32 %v4446, %v4612
      %v4665 = vadd.f32 %v4447, %v4644
      %4666 = vrot.lane.b32.xlu0 %v294, 72
      %v4667 = vpop.permute.xlu0 %4666
      %4668 = vrot.lane.b32.xlu0 %v299, 72
      %v4669 = vpop.permute.xlu0 %4668
      %4670 = vrot.lane.b32.xlu0 %v304, 72
      %v4671 = vpop.permute.xlu0 %4670
      %4672 = vrot.lane.b32.xlu0 %v309, 72
      %v4673 = vpop.permute.xlu0 %4672
      %4674 = vrot.lane.b32.xlu0 %v314, 72
      %v4675 = vpop.permute.xlu0 %4674
      %4676 = vrot.lane.b32.xlu0 %v279, 108
      %v4677 = vpop.permute.xlu0 %4676
      %4678 = vrot.lane.b32.xlu0 %v280, 108
      %v4679 = vpop.permute.xlu0 %4678
      %4680 = vrot.lane.b32.xlu0 %v281, 108
      %v4681 = vpop.permute.xlu0 %4680
      %4682 = vrot.lane.b32.xlu0 %v282, 108
      %v4683 = vpop.permute.xlu0 %4682
      %4684 = vrot.lane.b32.xlu0 %v283, 108
      %v4685 = vpop.permute.xlu0 %4684
      %4686 = vrot.lane.b32.xlu0 %v284, 108
      %v4687 = vpop.permute.xlu0 %4686
      %4688 = vrot.lane.b32.xlu0 %v285, 108
      %v4689 = vpop.permute.xlu0 %4688
      %4690 = vrot.lane.b32.xlu0 %v286, 108
      %v4691 = vpop.permute.xlu0 %4690
      %4692 = vrot.lane.b32.xlu0 %v287, 108
      %v4693 = vpop.permute.xlu0 %4692
      %4694 = vrot.lane.b32.xlu0 %v288, 108
      %v4695 = vpop.permute.xlu0 %4694
      %4696 = vrot.lane.b32.xlu0 %v289, 108
      %v4697 = vpop.permute.xlu0 %4696
      %4698 = vrot.lane.b32.xlu0 %v290, 108
      %v4699 = vpop.permute.xlu0 %4698
      %vm4700 = vcmask 883712
      %v4701 = vsel %vm4700, %v4677, %v4679
      %v4702 = vsel %vm4700, %v4679, %v4681
      %v4703 = vsel %vm4700, %v4681, %v4683
      %v4704 = vsel %vm4700, %v4685, %v4687
      %v4705 = vsel %vm4700, %v4687, %v4689
      %v4706 = vsel %vm4700, %v4689, %v4691
      %v4707 = vsel %vm4700, %v4693, %v4695
      %v4708 = vsel %vm4700, %v4695, %v4697
      %v4709 = vsel %vm4700, %v4697, %v4699
      %v4718 = vsel %vm385, %v4667, 0
      %v4720 = vsel %vm385, %v4669, 0
      %v4722 = vsel %vm385, %v4671, 0
      %v4724 = vsel %vm385, %v4673, 0
      %v4726 = vsel %vm385, %v4675, 0
      %v4728 = vsel %vm396, %v4707, 0
      %v4730 = vsel %vm396, %v4708, 0
      %v4732 = vsel %vm396, %v4709, 0
      %v4734 = vsel %vm396, %v4699, 0
      %4736 = vmatpush.msra.mxu0 0.0
      %4737 = vmatpush.msra.mxu0 0.0
      %4738 = vmatpush.msra.mxu0 0.0
      %4739 = vmatpush.msra.mxu0 0.0
      %4740 = vmatpush.msra.mxu0 0.0
      %4741 = vmatpush.msra.mxu0 0.0
      %4742 = vmatpush.msra.mxu0 0.0
      %4743 = vmatpush.msra.mxu0 0.0
      %4744 = vmatpush.msra.mxu0 0.0
      %4745 = vmatpush.msra.mxu0 0.0
      %4746 = vmatpush.msra.mxu0 0.0
      %4747 = vmatpush.msra.mxu0 0.0
      %4748 = vmatpush.msra.mxu0 0.0
      %4749 = vmatpush.msra.mxu0 %v4728
      %4750 = vmatpush.msra.mxu0 %v4704
      %4751 = vmatpush.msra.mxu0 %v4701
      %4752 = vmatmul.f32.gmra.mxu0 %v4718
      %v4753 = vpop.f32.mrf.mxu0
      %v4754 = vadd.f32 0.0, %v4753
      %4755 = vmatmul.f32.gmra.mxu0 %v4720
      %v4756 = vpop.f32.mrf.mxu0
      %v4757 = vadd.f32 0.0, %v4756
      %4758 = vmatmul.f32.gmra.mxu0 %v4722
      %v4759 = vpop.f32.mrf.mxu0
      %v4760 = vadd.f32 0.0, %v4759
      %4761 = vmatmul.f32.gmra.mxu0 %v4724
      %v4762 = vpop.f32.mrf.mxu0
      %v4763 = vadd.f32 0.0, %v4762
      %4764 = vmatmul.f32.gmra.mxu0 %v4726
      %v4765 = vpop.f32.mrf.mxu0
      %v4766 = vadd.f32 0.0, %v4765
      %4767 = vdwg.mxu0
      %4768 = vmatpush.msra.mxu0 0.0
      %4769 = vmatpush.msra.mxu0 0.0
      %4770 = vmatpush.msra.mxu0 0.0
      %4771 = vmatpush.msra.mxu0 0.0
      %4772 = vmatpush.msra.mxu0 0.0
      %4773 = vmatpush.msra.mxu0 0.0
      %4774 = vmatpush.msra.mxu0 0.0
      %4775 = vmatpush.msra.mxu0 0.0
      %4776 = vmatpush.msra.mxu0 0.0
      %4777 = vmatpush.msra.mxu0 0.0
      %4778 = vmatpush.msra.mxu0 0.0
      %4779 = vmatpush.msra.mxu0 0.0
      %4780 = vmatpush.msra.mxu0 0.0
      %4781 = vmatpush.msra.mxu0 %v4730
      %4782 = vmatpush.msra.mxu0 %v4705
      %4783 = vmatpush.msra.mxu0 %v4702
      %4784 = vmatmul.f32.gmra.mxu0 %v4718
      %v4785 = vpop.f32.mrf.mxu0
      %v4786 = vadd.f32 0.0, %v4785
      %4787 = vmatmul.f32.gmra.mxu0 %v4720
      %v4788 = vpop.f32.mrf.mxu0
      %v4789 = vadd.f32 0.0, %v4788
      %4790 = vmatmul.f32.gmra.mxu0 %v4722
      %v4791 = vpop.f32.mrf.mxu0
      %v4792 = vadd.f32 0.0, %v4791
      %4793 = vmatmul.f32.gmra.mxu0 %v4724
      %v4794 = vpop.f32.mrf.mxu0
      %v4795 = vadd.f32 0.0, %v4794
      %4796 = vmatmul.f32.gmra.mxu0 %v4726
      %v4797 = vpop.f32.mrf.mxu0
      %v4798 = vadd.f32 0.0, %v4797
      %4799 = vdwg.mxu0
      %4800 = vmatpush.msra.mxu0 0.0
      %4801 = vmatpush.msra.mxu0 0.0
      %4802 = vmatpush.msra.mxu0 0.0
      %4803 = vmatpush.msra.mxu0 0.0
      %4804 = vmatpush.msra.mxu0 0.0
      %4805 = vmatpush.msra.mxu0 0.0
      %4806 = vmatpush.msra.mxu0 0.0
      %4807 = vmatpush.msra.mxu0 0.0
      %4808 = vmatpush.msra.mxu0 0.0
      %4809 = vmatpush.msra.mxu0 0.0
      %4810 = vmatpush.msra.mxu0 0.0
      %4811 = vmatpush.msra.mxu0 0.0
      %4812 = vmatpush.msra.mxu0 0.0
      %4813 = vmatpush.msra.mxu0 %v4732
      %4814 = vmatpush.msra.mxu0 %v4706
      %4815 = vmatpush.msra.mxu0 %v4703
      %4816 = vmatmul.f32.gmra.mxu0 %v4718
      %v4817 = vpop.f32.mrf.mxu0
      %v4818 = vadd.f32 0.0, %v4817
      %4819 = vmatmul.f32.gmra.mxu0 %v4720
      %v4820 = vpop.f32.mrf.mxu0
      %v4821 = vadd.f32 0.0, %v4820
      %4822 = vmatmul.f32.gmra.mxu0 %v4722
      %v4823 = vpop.f32.mrf.mxu0
      %v4824 = vadd.f32 0.0, %v4823
      %4825 = vmatmul.f32.gmra.mxu0 %v4724
      %v4826 = vpop.f32.mrf.mxu0
      %v4827 = vadd.f32 0.0, %v4826
      %4828 = vmatmul.f32.gmra.mxu0 %v4726
      %v4829 = vpop.f32.mrf.mxu0
      %v4830 = vadd.f32 0.0, %v4829
      %4831 = vdwg.mxu0
      %4832 = vmatpush.msra.mxu0 0.0
      %4833 = vmatpush.msra.mxu0 0.0
      %4834 = vmatpush.msra.mxu0 0.0
      %4835 = vmatpush.msra.mxu0 0.0
      %4836 = vmatpush.msra.mxu0 0.0
      %4837 = vmatpush.msra.mxu0 0.0
      %4838 = vmatpush.msra.mxu0 0.0
      %4839 = vmatpush.msra.mxu0 0.0
      %4840 = vmatpush.msra.mxu0 0.0
      %4841 = vmatpush.msra.mxu0 0.0
      %4842 = vmatpush.msra.mxu0 0.0
      %4843 = vmatpush.msra.mxu0 0.0
      %4844 = vmatpush.msra.mxu0 0.0
      %4845 = vmatpush.msra.mxu0 %v4734
      %4846 = vmatpush.msra.mxu0 %v4691
      %4847 = vmatpush.msra.mxu0 %v4683
      %4848 = vmatmul.f32.gmra.mxu0 %v4718
      %v4849 = vpop.f32.mrf.mxu0
      %v4850 = vadd.f32 0.0, %v4849
      %4851 = vmatmul.f32.gmra.mxu0 %v4720
      %v4852 = vpop.f32.mrf.mxu0
      %v4853 = vadd.f32 0.0, %v4852
      %4854 = vmatmul.f32.gmra.mxu0 %v4722
      %v4855 = vpop.f32.mrf.mxu0
      %v4856 = vadd.f32 0.0, %v4855
      %4857 = vmatmul.f32.gmra.mxu0 %v4724
      %v4858 = vpop.f32.mrf.mxu0
      %v4859 = vadd.f32 0.0, %v4858
      %4860 = vmatmul.f32.gmra.mxu0 %v4726
      %v4861 = vpop.f32.mrf.mxu0
      %v4862 = vadd.f32 0.0, %v4861
      %4863 = vdwg.mxu0
      %v4864 = vadd.f32 %v4646, %v4754
      %v4865 = vadd.f32 %v4647, %v4786
      %v4866 = vadd.f32 %v4648, %v4818
      %v4867 = vadd.f32 %v4649, %v4850
      %v4868 = vadd.f32 %v4650, %v4757
      %v4869 = vadd.f32 %v4651, %v4789
      %v4870 = vadd.f32 %v4652, %v4821
      %v4871 = vadd.f32 %v4653, %v4853
      %v4872 = vadd.f32 %v4654, %v4760
      %v4873 = vadd.f32 %v4655, %v4792
      %v4874 = vadd.f32 %v4656, %v4824
      %v4875 = vadd.f32 %v4657, %v4856
      %v4876 = vadd.f32 %v4658, %v4763
      %v4877 = vadd.f32 %v4659, %v4795
      %v4878 = vadd.f32 %v4660, %v4827
      %v4879 = vadd.f32 %v4661, %v4859
      %v4880 = vadd.f32 %v4662, %v4766
      %v4881 = vadd.f32 %v4663, %v4798
      %v4882 = vadd.f32 %v4664, %v4830
      %v4883 = vadd.f32 %v4665, %v4862
      %4884 = vrot.lane.b32.xlu0 %v294, 50
      %v4885 = vpop.permute.xlu0 %4884
      %4886 = vrot.lane.b32.xlu0 %v299, 50
      %v4887 = vpop.permute.xlu0 %4886
      %4888 = vrot.lane.b32.xlu0 %v304, 50
      %v4889 = vpop.permute.xlu0 %4888
      %4890 = vrot.lane.b32.xlu0 %v309, 50
      %v4891 = vpop.permute.xlu0 %4890
      %4892 = vrot.lane.b32.xlu0 %v314, 50
      %v4893 = vpop.permute.xlu0 %4892
      %4894 = vrot.lane.b32.xlu0 %v279, 107
      %v4895 = vpop.permute.xlu0 %4894
      %4896 = vrot.lane.b32.xlu0 %v280, 107
      %v4897 = vpop.permute.xlu0 %4896
      %4898 = vrot.lane.b32.xlu0 %v281, 107
      %v4899 = vpop.permute.xlu0 %4898
      %4900 = vrot.lane.b32.xlu0 %v282, 107
      %v4901 = vpop.permute.xlu0 %4900
      %4902 = vrot.lane.b32.xlu0 %v283, 107
      %v4903 = vpop.permute.xlu0 %4902
      %4904 = vrot.lane.b32.xlu0 %v284, 107
      %v4905 = vpop.permute.xlu0 %4904
      %4906 = vrot.lane.b32.xlu0 %v285, 107
      %v4907 = vpop.permute.xlu0 %4906
      %4908 = vrot.lane.b32.xlu0 %v286, 107
      %v4909 = vpop.permute.xlu0 %4908
      %4910 = vrot.lane.b32.xlu0 %v287, 107
      %v4911 = vpop.permute.xlu0 %4910
      %4912 = vrot.lane.b32.xlu0 %v288, 107
      %v4913 = vpop.permute.xlu0 %4912
      %4914 = vrot.lane.b32.xlu0 %v289, 107
      %v4915 = vpop.permute.xlu0 %4914
      %4916 = vrot.lane.b32.xlu0 %v290, 107
      %v4917 = vpop.permute.xlu0 %4916
      %vm4918 = vcmask 875520
      %v4919 = vsel %vm4918, %v4895, %v4897
      %v4920 = vsel %vm4918, %v4897, %v4899
      %v4921 = vsel %vm4918, %v4899, %v4901
      %v4922 = vsel %vm4918, %v4903, %v4905
      %v4923 = vsel %vm4918, %v4905, %v4907
      %v4924 = vsel %vm4918, %v4907, %v4909
      %v4925 = vsel %vm4918, %v4911, %v4913
      %v4926 = vsel %vm4918, %v4913, %v4915
      %v4927 = vsel %vm4918, %v4915, %v4917
      %v4936 = vsel %vm385, %v4885, 0
      %v4938 = vsel %vm385, %v4887, 0
      %v4940 = vsel %vm385, %v4889, 0
      %v4942 = vsel %vm385, %v4891, 0
      %v4944 = vsel %vm385, %v4893, 0
      %v4946 = vsel %vm396, %v4925, 0
      %v4948 = vsel %vm396, %v4926, 0
      %v4950 = vsel %vm396, %v4927, 0
      %v4952 = vsel %vm396, %v4917, 0
      %4954 = vmatpush.msra.mxu0 0.0
      %4955 = vmatpush.msra.mxu0 0.0
      %4956 = vmatpush.msra.mxu0 0.0
      %4957 = vmatpush.msra.mxu0 0.0
      %4958 = vmatpush.msra.mxu0 0.0
      %4959 = vmatpush.msra.mxu0 0.0
      %4960 = vmatpush.msra.mxu0 0.0
      %4961 = vmatpush.msra.mxu0 0.0
      %4962 = vmatpush.msra.mxu0 0.0
      %4963 = vmatpush.msra.mxu0 0.0
      %4964 = vmatpush.msra.mxu0 0.0
      %4965 = vmatpush.msra.mxu0 0.0
      %4966 = vmatpush.msra.mxu0 0.0
      %4967 = vmatpush.msra.mxu0 %v4946
      %4968 = vmatpush.msra.mxu0 %v4922
      %4969 = vmatpush.msra.mxu0 %v4919
      %4970 = vmatmul.f32.gmra.mxu0 %v4936
      %v4971 = vpop.f32.mrf.mxu0
      %v4972 = vadd.f32 0.0, %v4971
      %4973 = vmatmul.f32.gmra.mxu0 %v4938
      %v4974 = vpop.f32.mrf.mxu0
      %v4975 = vadd.f32 0.0, %v4974
      %4976 = vmatmul.f32.gmra.mxu0 %v4940
      %v4977 = vpop.f32.mrf.mxu0
      %v4978 = vadd.f32 0.0, %v4977
      %4979 = vmatmul.f32.gmra.mxu0 %v4942
      %v4980 = vpop.f32.mrf.mxu0
      %v4981 = vadd.f32 0.0, %v4980
      %4982 = vmatmul.f32.gmra.mxu0 %v4944
      %v4983 = vpop.f32.mrf.mxu0
      %v4984 = vadd.f32 0.0, %v4983
      %4985 = vdwg.mxu0
      %4986 = vmatpush.msra.mxu0 0.0
      %4987 = vmatpush.msra.mxu0 0.0
      %4988 = vmatpush.msra.mxu0 0.0
      %4989 = vmatpush.msra.mxu0 0.0
      %4990 = vmatpush.msra.mxu0 0.0
      %4991 = vmatpush.msra.mxu0 0.0
      %4992 = vmatpush.msra.mxu0 0.0
      %4993 = vmatpush.msra.mxu0 0.0
      %4994 = vmatpush.msra.mxu0 0.0
      %4995 = vmatpush.msra.mxu0 0.0
      %4996 = vmatpush.msra.mxu0 0.0
      %4997 = vmatpush.msra.mxu0 0.0
      %4998 = vmatpush.msra.mxu0 0.0
      %4999 = vmatpush.msra.mxu0 %v4948
      %5000 = vmatpush.msra.mxu0 %v4923
      %5001 = vmatpush.msra.mxu0 %v4920
      %5002 = vmatmul.f32.gmra.mxu0 %v4936
      %v5003 = vpop.f32.mrf.mxu0
      %v5004 = vadd.f32 0.0, %v5003
      %5005 = vmatmul.f32.gmra.mxu0 %v4938
      %v5006 = vpop.f32.mrf.mxu0
      %v5007 = vadd.f32 0.0, %v5006
      %5008 = vmatmul.f32.gmra.mxu0 %v4940
      %v5009 = vpop.f32.mrf.mxu0
      %v5010 = vadd.f32 0.0, %v5009
      %5011 = vmatmul.f32.gmra.mxu0 %v4942
      %v5012 = vpop.f32.mrf.mxu0
      %v5013 = vadd.f32 0.0, %v5012
      %5014 = vmatmul.f32.gmra.mxu0 %v4944
      %v5015 = vpop.f32.mrf.mxu0
      %v5016 = vadd.f32 0.0, %v5015
      %5017 = vdwg.mxu0
      %5018 = vmatpush.msra.mxu0 0.0
      %5019 = vmatpush.msra.mxu0 0.0
      %5020 = vmatpush.msra.mxu0 0.0
      %5021 = vmatpush.msra.mxu0 0.0
      %5022 = vmatpush.msra.mxu0 0.0
      %5023 = vmatpush.msra.mxu0 0.0
      %5024 = vmatpush.msra.mxu0 0.0
      %5025 = vmatpush.msra.mxu0 0.0
      %5026 = vmatpush.msra.mxu0 0.0
      %5027 = vmatpush.msra.mxu0 0.0
      %5028 = vmatpush.msra.mxu0 0.0
      %5029 = vmatpush.msra.mxu0 0.0
      %5030 = vmatpush.msra.mxu0 0.0
      %5031 = vmatpush.msra.mxu0 %v4950
      %5032 = vmatpush.msra.mxu0 %v4924
      %5033 = vmatpush.msra.mxu0 %v4921
      %5034 = vmatmul.f32.gmra.mxu0 %v4936
      %v5035 = vpop.f32.mrf.mxu0
      %v5036 = vadd.f32 0.0, %v5035
      %5037 = vmatmul.f32.gmra.mxu0 %v4938
      %v5038 = vpop.f32.mrf.mxu0
      %v5039 = vadd.f32 0.0, %v5038
      %5040 = vmatmul.f32.gmra.mxu0 %v4940
      %v5041 = vpop.f32.mrf.mxu0
      %v5042 = vadd.f32 0.0, %v5041
      %5043 = vmatmul.f32.gmra.mxu0 %v4942
      %v5044 = vpop.f32.mrf.mxu0
      %v5045 = vadd.f32 0.0, %v5044
      %5046 = vmatmul.f32.gmra.mxu0 %v4944
      %v5047 = vpop.f32.mrf.mxu0
      %v5048 = vadd.f32 0.0, %v5047
      %5049 = vdwg.mxu0
      %5050 = vmatpush.msra.mxu0 0.0
      %5051 = vmatpush.msra.mxu0 0.0
      %5052 = vmatpush.msra.mxu0 0.0
      %5053 = vmatpush.msra.mxu0 0.0
      %5054 = vmatpush.msra.mxu0 0.0
      %5055 = vmatpush.msra.mxu0 0.0
      %5056 = vmatpush.msra.mxu0 0.0
      %5057 = vmatpush.msra.mxu0 0.0
      %5058 = vmatpush.msra.mxu0 0.0
      %5059 = vmatpush.msra.mxu0 0.0
      %5060 = vmatpush.msra.mxu0 0.0
      %5061 = vmatpush.msra.mxu0 0.0
      %5062 = vmatpush.msra.mxu0 0.0
      %5063 = vmatpush.msra.mxu0 %v4952
      %5064 = vmatpush.msra.mxu0 %v4909
      %5065 = vmatpush.msra.mxu0 %v4901
      %5066 = vmatmul.f32.gmra.mxu0 %v4936
      %v5067 = vpop.f32.mrf.mxu0
      %v5068 = vadd.f32 0.0, %v5067
      %5069 = vmatmul.f32.gmra.mxu0 %v4938
      %v5070 = vpop.f32.mrf.mxu0
      %v5071 = vadd.f32 0.0, %v5070
      %5072 = vmatmul.f32.gmra.mxu0 %v4940
      %v5073 = vpop.f32.mrf.mxu0
      %v5074 = vadd.f32 0.0, %v5073
      %5075 = vmatmul.f32.gmra.mxu0 %v4942
      %v5076 = vpop.f32.mrf.mxu0
      %v5077 = vadd.f32 0.0, %v5076
      %5078 = vmatmul.f32.gmra.mxu0 %v4944
      %v5079 = vpop.f32.mrf.mxu0
      %v5080 = vadd.f32 0.0, %v5079
      %5081 = vdwg.mxu0
      %v5082 = vadd.f32 %v4864, %v4972
      %v5083 = vadd.f32 %v4865, %v5004
      %v5084 = vadd.f32 %v4866, %v5036
      %v5085 = vadd.f32 %v4867, %v5068
      %v5086 = vadd.f32 %v4868, %v4975
      %v5087 = vadd.f32 %v4869, %v5007
      %v5088 = vadd.f32 %v4870, %v5039
      %v5089 = vadd.f32 %v4871, %v5071
      %v5090 = vadd.f32 %v4872, %v4978
      %v5091 = vadd.f32 %v4873, %v5010
      %v5092 = vadd.f32 %v4874, %v5042
      %v5093 = vadd.f32 %v4875, %v5074
      %v5094 = vadd.f32 %v4876, %v4981
      %v5095 = vadd.f32 %v4877, %v5013
      %v5096 = vadd.f32 %v4878, %v5045
      %v5097 = vadd.f32 %v4879, %v5077
      %v5098 = vadd.f32 %v4880, %v4984
      %v5099 = vadd.f32 %v4881, %v5016
      %v5100 = vadd.f32 %v4882, %v5048
      %v5101 = vadd.f32 %v4883, %v5080
      %5102 = vrot.lane.b32.xlu0 %v294, 28
      %v5103 = vpop.permute.xlu0 %5102
      %5104 = vrot.lane.b32.xlu0 %v299, 28
      %v5105 = vpop.permute.xlu0 %5104
      %5106 = vrot.lane.b32.xlu0 %v304, 28
      %v5107 = vpop.permute.xlu0 %5106
      %5108 = vrot.lane.b32.xlu0 %v309, 28
      %v5109 = vpop.permute.xlu0 %5108
      %5110 = vrot.lane.b32.xlu0 %v314, 28
      %v5111 = vpop.permute.xlu0 %5110
      %5112 = vrot.lane.b32.xlu0 %v279, 106
      %v5113 = vpop.permute.xlu0 %5112
      %5114 = vrot.lane.b32.xlu0 %v280, 106
      %v5115 = vpop.permute.xlu0 %5114
      %5116 = vrot.lane.b32.xlu0 %v281, 106
      %v5117 = vpop.permute.xlu0 %5116
      %5118 = vrot.lane.b32.xlu0 %v282, 106
      %v5119 = vpop.permute.xlu0 %5118
      %5120 = vrot.lane.b32.xlu0 %v283, 106
      %v5121 = vpop.permute.xlu0 %5120
      %5122 = vrot.lane.b32.xlu0 %v284, 106
      %v5123 = vpop.permute.xlu0 %5122
      %5124 = vrot.lane.b32.xlu0 %v285, 106
      %v5125 = vpop.permute.xlu0 %5124
      %5126 = vrot.lane.b32.xlu0 %v286, 106
      %v5127 = vpop.permute.xlu0 %5126
      %5128 = vrot.lane.b32.xlu0 %v287, 106
      %v5129 = vpop.permute.xlu0 %5128
      %5130 = vrot.lane.b32.xlu0 %v288, 106
      %v5131 = vpop.permute.xlu0 %5130
      %5132 = vrot.lane.b32.xlu0 %v289, 106
      %v5133 = vpop.permute.xlu0 %5132
      %5134 = vrot.lane.b32.xlu0 %v290, 106
      %v5135 = vpop.permute.xlu0 %5134
      %vm5136 = vcmask 867328
      %v5137 = vsel %vm5136, %v5113, %v5115
      %v5138 = vsel %vm5136, %v5115, %v5117
      %v5139 = vsel %vm5136, %v5117, %v5119
      %v5140 = vsel %vm5136, %v5121, %v5123
      %v5141 = vsel %vm5136, %v5123, %v5125
      %v5142 = vsel %vm5136, %v5125, %v5127
      %v5143 = vsel %vm5136, %v5129, %v5131
      %v5144 = vsel %vm5136, %v5131, %v5133
      %v5145 = vsel %vm5136, %v5133, %v5135
      %v5154 = vsel %vm385, %v5103, 0
      %v5156 = vsel %vm385, %v5105, 0
      %v5158 = vsel %vm385, %v5107, 0
      %v5160 = vsel %vm385, %v5109, 0
      %v5162 = vsel %vm385, %v5111, 0
      %v5164 = vsel %vm396, %v5143, 0
      %v5166 = vsel %vm396, %v5144, 0
      %v5168 = vsel %vm396, %v5145, 0
      %v5170 = vsel %vm396, %v5135, 0
      %5172 = vmatpush.msra.mxu0 0.0
      %5173 = vmatpush.msra.mxu0 0.0
      %5174 = vmatpush.msra.mxu0 0.0
      %5175 = vmatpush.msra.mxu0 0.0
      %5176 = vmatpush.msra.mxu0 0.0
      %5177 = vmatpush.msra.mxu0 0.0
      %5178 = vmatpush.msra.mxu0 0.0
      %5179 = vmatpush.msra.mxu0 0.0
      %5180 = vmatpush.msra.mxu0 0.0
      %5181 = vmatpush.msra.mxu0 0.0
      %5182 = vmatpush.msra.mxu0 0.0
      %5183 = vmatpush.msra.mxu0 0.0
      %5184 = vmatpush.msra.mxu0 0.0
      %5185 = vmatpush.msra.mxu0 %v5164
      %5186 = vmatpush.msra.mxu0 %v5140
      %5187 = vmatpush.msra.mxu0 %v5137
      %5188 = vmatmul.f32.gmra.mxu0 %v5154
      %v5189 = vpop.f32.mrf.mxu0
      %v5190 = vadd.f32 0.0, %v5189
      %5191 = vmatmul.f32.gmra.mxu0 %v5156
      %v5192 = vpop.f32.mrf.mxu0
      %v5193 = vadd.f32 0.0, %v5192
      %5194 = vmatmul.f32.gmra.mxu0 %v5158
      %v5195 = vpop.f32.mrf.mxu0
      %v5196 = vadd.f32 0.0, %v5195
      %5197 = vmatmul.f32.gmra.mxu0 %v5160
      %v5198 = vpop.f32.mrf.mxu0
      %v5199 = vadd.f32 0.0, %v5198
      %5200 = vmatmul.f32.gmra.mxu0 %v5162
      %v5201 = vpop.f32.mrf.mxu0
      %v5202 = vadd.f32 0.0, %v5201
      %5203 = vdwg.mxu0
      %5204 = vmatpush.msra.mxu0 0.0
      %5205 = vmatpush.msra.mxu0 0.0
      %5206 = vmatpush.msra.mxu0 0.0
      %5207 = vmatpush.msra.mxu0 0.0
      %5208 = vmatpush.msra.mxu0 0.0
      %5209 = vmatpush.msra.mxu0 0.0
      %5210 = vmatpush.msra.mxu0 0.0
      %5211 = vmatpush.msra.mxu0 0.0
      %5212 = vmatpush.msra.mxu0 0.0
      %5213 = vmatpush.msra.mxu0 0.0
      %5214 = vmatpush.msra.mxu0 0.0
      %5215 = vmatpush.msra.mxu0 0.0
      %5216 = vmatpush.msra.mxu0 0.0
      %5217 = vmatpush.msra.mxu0 %v5166
      %5218 = vmatpush.msra.mxu0 %v5141
      %5219 = vmatpush.msra.mxu0 %v5138
      %5220 = vmatmul.f32.gmra.mxu0 %v5154
      %v5221 = vpop.f32.mrf.mxu0
      %v5222 = vadd.f32 0.0, %v5221
      %5223 = vmatmul.f32.gmra.mxu0 %v5156
      %v5224 = vpop.f32.mrf.mxu0
      %v5225 = vadd.f32 0.0, %v5224
      %5226 = vmatmul.f32.gmra.mxu0 %v5158
      %v5227 = vpop.f32.mrf.mxu0
      %v5228 = vadd.f32 0.0, %v5227
      %5229 = vmatmul.f32.gmra.mxu0 %v5160
      %v5230 = vpop.f32.mrf.mxu0
      %v5231 = vadd.f32 0.0, %v5230
      %5232 = vmatmul.f32.gmra.mxu0 %v5162
      %v5233 = vpop.f32.mrf.mxu0
      %v5234 = vadd.f32 0.0, %v5233
      %5235 = vdwg.mxu0
      %5236 = vmatpush.msra.mxu0 0.0
      %5237 = vmatpush.msra.mxu0 0.0
      %5238 = vmatpush.msra.mxu0 0.0
      %5239 = vmatpush.msra.mxu0 0.0
      %5240 = vmatpush.msra.mxu0 0.0
      %5241 = vmatpush.msra.mxu0 0.0
      %5242 = vmatpush.msra.mxu0 0.0
      %5243 = vmatpush.msra.mxu0 0.0
      %5244 = vmatpush.msra.mxu0 0.0
      %5245 = vmatpush.msra.mxu0 0.0
      %5246 = vmatpush.msra.mxu0 0.0
      %5247 = vmatpush.msra.mxu0 0.0
      %5248 = vmatpush.msra.mxu0 0.0
      %5249 = vmatpush.msra.mxu0 %v5168
      %5250 = vmatpush.msra.mxu0 %v5142
      %5251 = vmatpush.msra.mxu0 %v5139
      %5252 = vmatmul.f32.gmra.mxu0 %v5154
      %v5253 = vpop.f32.mrf.mxu0
      %v5254 = vadd.f32 0.0, %v5253
      %5255 = vmatmul.f32.gmra.mxu0 %v5156
      %v5256 = vpop.f32.mrf.mxu0
      %v5257 = vadd.f32 0.0, %v5256
      %5258 = vmatmul.f32.gmra.mxu0 %v5158
      %v5259 = vpop.f32.mrf.mxu0
      %v5260 = vadd.f32 0.0, %v5259
      %5261 = vmatmul.f32.gmra.mxu0 %v5160
      %v5262 = vpop.f32.mrf.mxu0
      %v5263 = vadd.f32 0.0, %v5262
      %5264 = vmatmul.f32.gmra.mxu0 %v5162
      %v5265 = vpop.f32.mrf.mxu0
      %v5266 = vadd.f32 0.0, %v5265
      %5267 = vdwg.mxu0
      %5268 = vmatpush.msra.mxu0 0.0
      %5269 = vmatpush.msra.mxu0 0.0
      %5270 = vmatpush.msra.mxu0 0.0
      %5271 = vmatpush.msra.mxu0 0.0
      %5272 = vmatpush.msra.mxu0 0.0
      %5273 = vmatpush.msra.mxu0 0.0
      %5274 = vmatpush.msra.mxu0 0.0
      %5275 = vmatpush.msra.mxu0 0.0
      %5276 = vmatpush.msra.mxu0 0.0
      %5277 = vmatpush.msra.mxu0 0.0
      %5278 = vmatpush.msra.mxu0 0.0
      %5279 = vmatpush.msra.mxu0 0.0
      %5280 = vmatpush.msra.mxu0 0.0
      %5281 = vmatpush.msra.mxu0 %v5170
      %5282 = vmatpush.msra.mxu0 %v5127
      %5283 = vmatpush.msra.mxu0 %v5119
      %5284 = vmatmul.f32.gmra.mxu0 %v5154
      %v5285 = vpop.f32.mrf.mxu0
      %v5286 = vadd.f32 0.0, %v5285
      %5287 = vmatmul.f32.gmra.mxu0 %v5156
      %v5288 = vpop.f32.mrf.mxu0
      %v5289 = vadd.f32 0.0, %v5288
      %5290 = vmatmul.f32.gmra.mxu0 %v5158
      %v5291 = vpop.f32.mrf.mxu0
      %v5292 = vadd.f32 0.0, %v5291
      %5293 = vmatmul.f32.gmra.mxu0 %v5160
      %v5294 = vpop.f32.mrf.mxu0
      %v5295 = vadd.f32 0.0, %v5294
      %5296 = vmatmul.f32.gmra.mxu0 %v5162
      %v5297 = vpop.f32.mrf.mxu0
      %v5298 = vadd.f32 0.0, %v5297
      %5299 = vdwg.mxu0
      %v5300 = vadd.f32 %v5082, %v5190
      %v5301 = vadd.f32 %v5083, %v5222
      %v5302 = vadd.f32 %v5084, %v5254
      %v5303 = vadd.f32 %v5085, %v5286
      %v5304 = vadd.f32 %v5086, %v5193
      %v5305 = vadd.f32 %v5087, %v5225
      %v5306 = vadd.f32 %v5088, %v5257
      %v5307 = vadd.f32 %v5089, %v5289
      %v5308 = vadd.f32 %v5090, %v5196
      %v5309 = vadd.f32 %v5091, %v5228
      %v5310 = vadd.f32 %v5092, %v5260
      %v5311 = vadd.f32 %v5093, %v5292
      %v5312 = vadd.f32 %v5094, %v5199
      %v5313 = vadd.f32 %v5095, %v5231
      %v5314 = vadd.f32 %v5096, %v5263
      %v5315 = vadd.f32 %v5097, %v5295
      %v5316 = vadd.f32 %v5098, %v5202
      %v5317 = vadd.f32 %v5099, %v5234
      %v5318 = vadd.f32 %v5100, %v5266
      %v5319 = vadd.f32 %v5101, %v5298
      %5325 = vrot.lane.b32.xlu0 %v294, 6
      %v5326 = vpop.permute.xlu0 %5325
      %5327 = vrot.lane.b32.xlu0 %v295, 6
      %v5328 = vpop.permute.xlu0 %5327
      %5329 = vrot.lane.b32.xlu0 %v299, 6
      %v5330 = vpop.permute.xlu0 %5329
      %5331 = vrot.lane.b32.xlu0 %v300, 6
      %v5332 = vpop.permute.xlu0 %5331
      %5333 = vrot.lane.b32.xlu0 %v304, 6
      %v5334 = vpop.permute.xlu0 %5333
      %5335 = vrot.lane.b32.xlu0 %v305, 6
      %v5336 = vpop.permute.xlu0 %5335
      %5337 = vrot.lane.b32.xlu0 %v309, 6
      %v5338 = vpop.permute.xlu0 %5337
      %5339 = vrot.lane.b32.xlu0 %v310, 6
      %v5340 = vpop.permute.xlu0 %5339
      %5341 = vrot.lane.b32.xlu0 %v314, 6
      %v5342 = vpop.permute.xlu0 %5341
      %5343 = vrot.lane.b32.xlu0 %v315, 6
      %v5344 = vpop.permute.xlu0 %5343
      %vm5345 = vcmask 48128
      %v5346 = vsel %vm5345, %v5326, %v5328
      %v5347 = vsel %vm5345, %v5330, %v5332
      %v5348 = vsel %vm5345, %v5334, %v5336
      %v5349 = vsel %vm5345, %v5338, %v5340
      %v5350 = vsel %vm5345, %v5342, %v5344
      %5351 = vrot.lane.b32.xlu0 %v279, 105
      %v5352 = vpop.permute.xlu0 %5351
      %5353 = vrot.lane.b32.xlu0 %v280, 105
      %v5354 = vpop.permute.xlu0 %5353
      %5355 = vrot.lane.b32.xlu0 %v281, 105
      %v5356 = vpop.permute.xlu0 %5355
      %5357 = vrot.lane.b32.xlu0 %v282, 105
      %v5358 = vpop.permute.xlu0 %5357
      %5359 = vrot.lane.b32.xlu0 %v283, 105
      %v5360 = vpop.permute.xlu0 %5359
      %5361 = vrot.lane.b32.xlu0 %v284, 105
      %v5362 = vpop.permute.xlu0 %5361
      %5363 = vrot.lane.b32.xlu0 %v285, 105
      %v5364 = vpop.permute.xlu0 %5363
      %5365 = vrot.lane.b32.xlu0 %v286, 105
      %v5366 = vpop.permute.xlu0 %5365
      %5367 = vrot.lane.b32.xlu0 %v287, 105
      %v5368 = vpop.permute.xlu0 %5367
      %5369 = vrot.lane.b32.xlu0 %v288, 105
      %v5370 = vpop.permute.xlu0 %5369
      %5371 = vrot.lane.b32.xlu0 %v289, 105
      %v5372 = vpop.permute.xlu0 %5371
      %5373 = vrot.lane.b32.xlu0 %v290, 105
      %v5374 = vpop.permute.xlu0 %5373
      %vm5375 = vcmask 859136
      %v5376 = vsel %vm5375, %v5352, %v5354
      %v5377 = vsel %vm5375, %v5354, %v5356
      %v5378 = vsel %vm5375, %v5356, %v5358
      %v5379 = vsel %vm5375, %v5360, %v5362
      %v5380 = vsel %vm5375, %v5362, %v5364
      %v5381 = vsel %vm5375, %v5364, %v5366
      %v5382 = vsel %vm5375, %v5368, %v5370
      %v5383 = vsel %vm5375, %v5370, %v5372
      %v5384 = vsel %vm5375, %v5372, %v5374
      %v5393 = vsel %vm385, %v5346, 0
      %v5395 = vsel %vm385, %v5347, 0
      %v5397 = vsel %vm385, %v5348, 0
      %v5399 = vsel %vm385, %v5349, 0
      %v5401 = vsel %vm385, %v5350, 0
      %v5403 = vsel %vm396, %v5382, 0
      %v5405 = vsel %vm396, %v5383, 0
      %v5407 = vsel %vm396, %v5384, 0
      %v5409 = vsel %vm396, %v5374, 0
      %5411 = vmatpush.msra.mxu0 0.0
      %5412 = vmatpush.msra.mxu0 0.0
      %5413 = vmatpush.msra.mxu0 0.0
      %5414 = vmatpush.msra.mxu0 0.0
      %5415 = vmatpush.msra.mxu0 0.0
      %5416 = vmatpush.msra.mxu0 0.0
      %5417 = vmatpush.msra.mxu0 0.0
      %5418 = vmatpush.msra.mxu0 0.0
      %5419 = vmatpush.msra.mxu0 0.0
      %5420 = vmatpush.msra.mxu0 0.0
      %5421 = vmatpush.msra.mxu0 0.0
      %5422 = vmatpush.msra.mxu0 0.0
      %5423 = vmatpush.msra.mxu0 0.0
      %5424 = vmatpush.msra.mxu0 %v5403
      %5425 = vmatpush.msra.mxu0 %v5379
      %5426 = vmatpush.msra.mxu0 %v5376
      %5427 = vmatmul.f32.gmra.mxu0 %v5393
      %v5428 = vpop.f32.mrf.mxu0
      %v5429 = vadd.f32 0.0, %v5428
      %5430 = vmatmul.f32.gmra.mxu0 %v5395
      %v5431 = vpop.f32.mrf.mxu0
      %v5432 = vadd.f32 0.0, %v5431
      %5433 = vmatmul.f32.gmra.mxu0 %v5397
      %v5434 = vpop.f32.mrf.mxu0
      %v5435 = vadd.f32 0.0, %v5434
      %5436 = vmatmul.f32.gmra.mxu0 %v5399
      %v5437 = vpop.f32.mrf.mxu0
      %v5438 = vadd.f32 0.0, %v5437
      %5439 = vmatmul.f32.gmra.mxu0 %v5401
      %v5440 = vpop.f32.mrf.mxu0
      %v5441 = vadd.f32 0.0, %v5440
      %5442 = vdwg.mxu0
      %5443 = vmatpush.msra.mxu0 0.0
      %5444 = vmatpush.msra.mxu0 0.0
      %5445 = vmatpush.msra.mxu0 0.0
      %5446 = vmatpush.msra.mxu0 0.0
      %5447 = vmatpush.msra.mxu0 0.0
      %5448 = vmatpush.msra.mxu0 0.0
      %5449 = vmatpush.msra.mxu0 0.0
      %5450 = vmatpush.msra.mxu0 0.0
      %5451 = vmatpush.msra.mxu0 0.0
      %5452 = vmatpush.msra.mxu0 0.0
      %5453 = vmatpush.msra.mxu0 0.0
      %5454 = vmatpush.msra.mxu0 0.0
      %5455 = vmatpush.msra.mxu0 0.0
      %5456 = vmatpush.msra.mxu0 %v5405
      %5457 = vmatpush.msra.mxu0 %v5380
      %5458 = vmatpush.msra.mxu0 %v5377
      %5459 = vmatmul.f32.gmra.mxu0 %v5393
      %v5460 = vpop.f32.mrf.mxu0
      %v5461 = vadd.f32 0.0, %v5460
      %5462 = vmatmul.f32.gmra.mxu0 %v5395
      %v5463 = vpop.f32.mrf.mxu0
      %v5464 = vadd.f32 0.0, %v5463
      %5465 = vmatmul.f32.gmra.mxu0 %v5397
      %v5466 = vpop.f32.mrf.mxu0
      %v5467 = vadd.f32 0.0, %v5466
      %5468 = vmatmul.f32.gmra.mxu0 %v5399
      %v5469 = vpop.f32.mrf.mxu0
      %v5470 = vadd.f32 0.0, %v5469
      %5471 = vmatmul.f32.gmra.mxu0 %v5401
      %v5472 = vpop.f32.mrf.mxu0
      %v5473 = vadd.f32 0.0, %v5472
      %5474 = vdwg.mxu0
      %5475 = vmatpush.msra.mxu0 0.0
      %5476 = vmatpush.msra.mxu0 0.0
      %5477 = vmatpush.msra.mxu0 0.0
      %5478 = vmatpush.msra.mxu0 0.0
      %5479 = vmatpush.msra.mxu0 0.0
      %5480 = vmatpush.msra.mxu0 0.0
      %5481 = vmatpush.msra.mxu0 0.0
      %5482 = vmatpush.msra.mxu0 0.0
      %5483 = vmatpush.msra.mxu0 0.0
      %5484 = vmatpush.msra.mxu0 0.0
      %5485 = vmatpush.msra.mxu0 0.0
      %5486 = vmatpush.msra.mxu0 0.0
      %5487 = vmatpush.msra.mxu0 0.0
      %5488 = vmatpush.msra.mxu0 %v5407
      %5489 = vmatpush.msra.mxu0 %v5381
      %5490 = vmatpush.msra.mxu0 %v5378
      %5491 = vmatmul.f32.gmra.mxu0 %v5393
      %v5492 = vpop.f32.mrf.mxu0
      %v5493 = vadd.f32 0.0, %v5492
      %5494 = vmatmul.f32.gmra.mxu0 %v5395
      %v5495 = vpop.f32.mrf.mxu0
      %v5496 = vadd.f32 0.0, %v5495
      %5497 = vmatmul.f32.gmra.mxu0 %v5397
      %v5498 = vpop.f32.mrf.mxu0
      %v5499 = vadd.f32 0.0, %v5498
      %5500 = vmatmul.f32.gmra.mxu0 %v5399
      %v5501 = vpop.f32.mrf.mxu0
      %v5502 = vadd.f32 0.0, %v5501
      %5503 = vmatmul.f32.gmra.mxu0 %v5401
      %v5504 = vpop.f32.mrf.mxu0
      %v5505 = vadd.f32 0.0, %v5504
      %5506 = vdwg.mxu0
      %5507 = vmatpush.msra.mxu0 0.0
      %5508 = vmatpush.msra.mxu0 0.0
      %5509 = vmatpush.msra.mxu0 0.0
      %5510 = vmatpush.msra.mxu0 0.0
      %5511 = vmatpush.msra.mxu0 0.0
      %5512 = vmatpush.msra.mxu0 0.0
      %5513 = vmatpush.msra.mxu0 0.0
      %5514 = vmatpush.msra.mxu0 0.0
      %5515 = vmatpush.msra.mxu0 0.0
      %5516 = vmatpush.msra.mxu0 0.0
      %5517 = vmatpush.msra.mxu0 0.0
      %5518 = vmatpush.msra.mxu0 0.0
      %5519 = vmatpush.msra.mxu0 0.0
      %5520 = vmatpush.msra.mxu0 %v5409
      %5521 = vmatpush.msra.mxu0 %v5366
      %5522 = vmatpush.msra.mxu0 %v5358
      %5523 = vmatmul.f32.gmra.mxu0 %v5393
      %v5524 = vpop.f32.mrf.mxu0
      %v5525 = vadd.f32 0.0, %v5524
      %5526 = vmatmul.f32.gmra.mxu0 %v5395
      %v5527 = vpop.f32.mrf.mxu0
      %v5528 = vadd.f32 0.0, %v5527
      %5529 = vmatmul.f32.gmra.mxu0 %v5397
      %v5530 = vpop.f32.mrf.mxu0
      %v5531 = vadd.f32 0.0, %v5530
      %5532 = vmatmul.f32.gmra.mxu0 %v5399
      %v5533 = vpop.f32.mrf.mxu0
      %v5534 = vadd.f32 0.0, %v5533
      %5535 = vmatmul.f32.gmra.mxu0 %v5401
      %v5536 = vpop.f32.mrf.mxu0
      %v5537 = vadd.f32 0.0, %v5536
      %5538 = vdwg.mxu0
      %v5539 = vadd.f32 %v5300, %v5429
      %v5540 = vadd.f32 %v5301, %v5461
      %v5541 = vadd.f32 %v5302, %v5493
      %v5542 = vadd.f32 %v5303, %v5525
      %v5543 = vadd.f32 %v5304, %v5432
      %v5544 = vadd.f32 %v5305, %v5464
      %v5545 = vadd.f32 %v5306, %v5496
      %v5546 = vadd.f32 %v5307, %v5528
      %v5547 = vadd.f32 %v5308, %v5435
      %v5548 = vadd.f32 %v5309, %v5467
      %v5549 = vadd.f32 %v5310, %v5499
      %v5550 = vadd.f32 %v5311, %v5531
      %v5551 = vadd.f32 %v5312, %v5438
      %v5552 = vadd.f32 %v5313, %v5470
      %v5553 = vadd.f32 %v5314, %v5502
      %v5554 = vadd.f32 %v5315, %v5534
      %v5555 = vadd.f32 %v5316, %v5441
      %v5556 = vadd.f32 %v5317, %v5473
      %v5557 = vadd.f32 %v5318, %v5505
      %v5558 = vadd.f32 %v5319, %v5537
      %5559 = vrot.lane.b32.xlu0 %v295, 112
      %v5560 = vpop.permute.xlu0 %5559
      %5561 = vrot.lane.b32.xlu0 %v300, 112
      %v5562 = vpop.permute.xlu0 %5561
      %5563 = vrot.lane.b32.xlu0 %v305, 112
      %v5564 = vpop.permute.xlu0 %5563
      %5565 = vrot.lane.b32.xlu0 %v310, 112
      %v5566 = vpop.permute.xlu0 %5565
      %5567 = vrot.lane.b32.xlu0 %v315, 112
      %v5568 = vpop.permute.xlu0 %5567
      %5569 = vrot.lane.b32.xlu0 %v279, 104
      %v5570 = vpop.permute.xlu0 %5569
      %5571 = vrot.lane.b32.xlu0 %v280, 104
      %v5572 = vpop.permute.xlu0 %5571
      %5573 = vrot.lane.b32.xlu0 %v281, 104
      %v5574 = vpop.permute.xlu0 %5573
      %5575 = vrot.lane.b32.xlu0 %v282, 104
      %v5576 = vpop.permute.xlu0 %5575
      %5577 = vrot.lane.b32.xlu0 %v283, 104
      %v5578 = vpop.permute.xlu0 %5577
      %5579 = vrot.lane.b32.xlu0 %v284, 104
      %v5580 = vpop.permute.xlu0 %5579
      %5581 = vrot.lane.b32.xlu0 %v285, 104
      %v5582 = vpop.permute.xlu0 %5581
      %5583 = vrot.lane.b32.xlu0 %v286, 104
      %v5584 = vpop.permute.xlu0 %5583
      %5585 = vrot.lane.b32.xlu0 %v287, 104
      %v5586 = vpop.permute.xlu0 %5585
      %5587 = vrot.lane.b32.xlu0 %v288, 104
      %v5588 = vpop.permute.xlu0 %5587
      %5589 = vrot.lane.b32.xlu0 %v289, 104
      %v5590 = vpop.permute.xlu0 %5589
      %5591 = vrot.lane.b32.xlu0 %v290, 104
      %v5592 = vpop.permute.xlu0 %5591
      %vm5593 = vcmask 850944
      %v5594 = vsel %vm5593, %v5570, %v5572
      %v5595 = vsel %vm5593, %v5572, %v5574
      %v5596 = vsel %vm5593, %v5574, %v5576
      %v5597 = vsel %vm5593, %v5578, %v5580
      %v5598 = vsel %vm5593, %v5580, %v5582
      %v5599 = vsel %vm5593, %v5582, %v5584
      %v5600 = vsel %vm5593, %v5586, %v5588
      %v5601 = vsel %vm5593, %v5588, %v5590
      %v5602 = vsel %vm5593, %v5590, %v5592
      %v5611 = vsel %vm385, %v5560, 0
      %v5613 = vsel %vm385, %v5562, 0
      %v5615 = vsel %vm385, %v5564, 0
      %v5617 = vsel %vm385, %v5566, 0
      %v5619 = vsel %vm385, %v5568, 0
      %v5621 = vsel %vm396, %v5600, 0
      %v5623 = vsel %vm396, %v5601, 0
      %v5625 = vsel %vm396, %v5602, 0
      %v5627 = vsel %vm396, %v5592, 0
      %5629 = vmatpush.msra.mxu0 0.0
      %5630 = vmatpush.msra.mxu0 0.0
      %5631 = vmatpush.msra.mxu0 0.0
      %5632 = vmatpush.msra.mxu0 0.0
      %5633 = vmatpush.msra.mxu0 0.0
      %5634 = vmatpush.msra.mxu0 0.0
      %5635 = vmatpush.msra.mxu0 0.0
      %5636 = vmatpush.msra.mxu0 0.0
      %5637 = vmatpush.msra.mxu0 0.0
      %5638 = vmatpush.msra.mxu0 0.0
      %5639 = vmatpush.msra.mxu0 0.0
      %5640 = vmatpush.msra.mxu0 0.0
      %5641 = vmatpush.msra.mxu0 0.0
      %5642 = vmatpush.msra.mxu0 %v5621
      %5643 = vmatpush.msra.mxu0 %v5597
      %5644 = vmatpush.msra.mxu0 %v5594
      %5645 = vmatmul.f32.gmra.mxu0 %v5611
      %v5646 = vpop.f32.mrf.mxu0
      %v5647 = vadd.f32 0.0, %v5646
      %5648 = vmatmul.f32.gmra.mxu0 %v5613
      %v5649 = vpop.f32.mrf.mxu0
      %v5650 = vadd.f32 0.0, %v5649
      %5651 = vmatmul.f32.gmra.mxu0 %v5615
      %v5652 = vpop.f32.mrf.mxu0
      %v5653 = vadd.f32 0.0, %v5652
      %5654 = vmatmul.f32.gmra.mxu0 %v5617
      %v5655 = vpop.f32.mrf.mxu0
      %v5656 = vadd.f32 0.0, %v5655
      %5657 = vmatmul.f32.gmra.mxu0 %v5619
      %v5658 = vpop.f32.mrf.mxu0
      %v5659 = vadd.f32 0.0, %v5658
      %5660 = vdwg.mxu0
      %5661 = vmatpush.msra.mxu0 0.0
      %5662 = vmatpush.msra.mxu0 0.0
      %5663 = vmatpush.msra.mxu0 0.0
      %5664 = vmatpush.msra.mxu0 0.0
      %5665 = vmatpush.msra.mxu0 0.0
      %5666 = vmatpush.msra.mxu0 0.0
      %5667 = vmatpush.msra.mxu0 0.0
      %5668 = vmatpush.msra.mxu0 0.0
      %5669 = vmatpush.msra.mxu0 0.0
      %5670 = vmatpush.msra.mxu0 0.0
      %5671 = vmatpush.msra.mxu0 0.0
      %5672 = vmatpush.msra.mxu0 0.0
      %5673 = vmatpush.msra.mxu0 0.0
      %5674 = vmatpush.msra.mxu0 %v5623
      %5675 = vmatpush.msra.mxu0 %v5598
      %5676 = vmatpush.msra.mxu0 %v5595
      %5677 = vmatmul.f32.gmra.mxu0 %v5611
      %v5678 = vpop.f32.mrf.mxu0
      %v5679 = vadd.f32 0.0, %v5678
      %5680 = vmatmul.f32.gmra.mxu0 %v5613
      %v5681 = vpop.f32.mrf.mxu0
      %v5682 = vadd.f32 0.0, %v5681
      %5683 = vmatmul.f32.gmra.mxu0 %v5615
      %v5684 = vpop.f32.mrf.mxu0
      %v5685 = vadd.f32 0.0, %v5684
      %5686 = vmatmul.f32.gmra.mxu0 %v5617
      %v5687 = vpop.f32.mrf.mxu0
      %v5688 = vadd.f32 0.0, %v5687
      %5689 = vmatmul.f32.gmra.mxu0 %v5619
      %v5690 = vpop.f32.mrf.mxu0
      %v5691 = vadd.f32 0.0, %v5690
      %5692 = vdwg.mxu0
      %5693 = vmatpush.msra.mxu0 0.0
      %5694 = vmatpush.msra.mxu0 0.0
      %5695 = vmatpush.msra.mxu0 0.0
      %5696 = vmatpush.msra.mxu0 0.0
      %5697 = vmatpush.msra.mxu0 0.0
      %5698 = vmatpush.msra.mxu0 0.0
      %5699 = vmatpush.msra.mxu0 0.0
      %5700 = vmatpush.msra.mxu0 0.0
      %5701 = vmatpush.msra.mxu0 0.0
      %5702 = vmatpush.msra.mxu0 0.0
      %5703 = vmatpush.msra.mxu0 0.0
      %5704 = vmatpush.msra.mxu0 0.0
      %5705 = vmatpush.msra.mxu0 0.0
      %5706 = vmatpush.msra.mxu0 %v5625
      %5707 = vmatpush.msra.mxu0 %v5599
      %5708 = vmatpush.msra.mxu0 %v5596
      %5709 = vmatmul.f32.gmra.mxu0 %v5611
      %v5710 = vpop.f32.mrf.mxu0
      %v5711 = vadd.f32 0.0, %v5710
      %5712 = vmatmul.f32.gmra.mxu0 %v5613
      %v5713 = vpop.f32.mrf.mxu0
      %v5714 = vadd.f32 0.0, %v5713
      %5715 = vmatmul.f32.gmra.mxu0 %v5615
      %v5716 = vpop.f32.mrf.mxu0
      %v5717 = vadd.f32 0.0, %v5716
      %5718 = vmatmul.f32.gmra.mxu0 %v5617
      %v5719 = vpop.f32.mrf.mxu0
      %v5720 = vadd.f32 0.0, %v5719
      %5721 = vmatmul.f32.gmra.mxu0 %v5619
      %v5722 = vpop.f32.mrf.mxu0
      %v5723 = vadd.f32 0.0, %v5722
      %5724 = vdwg.mxu0
      %5725 = vmatpush.msra.mxu0 0.0
      %5726 = vmatpush.msra.mxu0 0.0
      %5727 = vmatpush.msra.mxu0 0.0
      %5728 = vmatpush.msra.mxu0 0.0
      %5729 = vmatpush.msra.mxu0 0.0
      %5730 = vmatpush.msra.mxu0 0.0
      %5731 = vmatpush.msra.mxu0 0.0
      %5732 = vmatpush.msra.mxu0 0.0
      %5733 = vmatpush.msra.mxu0 0.0
      %5734 = vmatpush.msra.mxu0 0.0
      %5735 = vmatpush.msra.mxu0 0.0
      %5736 = vmatpush.msra.mxu0 0.0
      %5737 = vmatpush.msra.mxu0 0.0
      %5738 = vmatpush.msra.mxu0 %v5627
      %5739 = vmatpush.msra.mxu0 %v5584
      %5740 = vmatpush.msra.mxu0 %v5576
      %5741 = vmatmul.f32.gmra.mxu0 %v5611
      %v5742 = vpop.f32.mrf.mxu0
      %v5743 = vadd.f32 0.0, %v5742
      %5744 = vmatmul.f32.gmra.mxu0 %v5613
      %v5745 = vpop.f32.mrf.mxu0
      %v5746 = vadd.f32 0.0, %v5745
      %5747 = vmatmul.f32.gmra.mxu0 %v5615
      %v5748 = vpop.f32.mrf.mxu0
      %v5749 = vadd.f32 0.0, %v5748
      %5750 = vmatmul.f32.gmra.mxu0 %v5617
      %v5751 = vpop.f32.mrf.mxu0
      %v5752 = vadd.f32 0.0, %v5751
      %5753 = vmatmul.f32.gmra.mxu0 %v5619
      %v5754 = vpop.f32.mrf.mxu0
      %v5755 = vadd.f32 0.0, %v5754
      %5756 = vdwg.mxu0
      %v5757 = vadd.f32 %v5539, %v5647
      %v5758 = vadd.f32 %v5540, %v5679
      %v5759 = vadd.f32 %v5541, %v5711
      %v5760 = vadd.f32 %v5542, %v5743
      %v5761 = vadd.f32 %v5543, %v5650
      %v5762 = vadd.f32 %v5544, %v5682
      %v5763 = vadd.f32 %v5545, %v5714
      %v5764 = vadd.f32 %v5546, %v5746
      %v5765 = vadd.f32 %v5547, %v5653
      %v5766 = vadd.f32 %v5548, %v5685
      %v5767 = vadd.f32 %v5549, %v5717
      %v5768 = vadd.f32 %v5550, %v5749
      %v5769 = vadd.f32 %v5551, %v5656
      %v5770 = vadd.f32 %v5552, %v5688
      %v5771 = vadd.f32 %v5553, %v5720
      %v5772 = vadd.f32 %v5554, %v5752
      %v5773 = vadd.f32 %v5555, %v5659
      %v5774 = vadd.f32 %v5556, %v5691
      %v5775 = vadd.f32 %v5557, %v5723
      %v5776 = vadd.f32 %v5558, %v5755
      %v5777 = vld [vmem:[%s2] sm:$0xff]
      %v5778 = vld [vmem:[%s2 + $0x8] sm:$0xff]
      %v5779 = vld [vmem:[%s2 + $0x10] sm:$0xff]
      %v5780 = vld [vmem:[%s2 + $0x18] sm:$0xff]
      %v5781 = vld [vmem:[%s2 + $0x20] sm:$0xff]
      %5783 = vset.pattern.permute.xlu0 0
      %5784 = vperm.xlu0 %5783, %v5777
      %v5785 = vpop.permute.xlu0 %5784
      %5788 = vset.pattern.permute.xlu0 0
      %5789 = vperm.xlu0 %5788, %v5778
      %v5790 = vpop.permute.xlu0 %5789
      %5793 = vset.pattern.permute.xlu0 0
      %5794 = vperm.xlu0 %5793, %v5779
      %v5795 = vpop.permute.xlu0 %5794
      %5798 = vset.pattern.permute.xlu0 0
      %5799 = vperm.xlu0 %5798, %v5780
      %v5800 = vpop.permute.xlu0 %5799
      %5803 = vset.pattern.permute.xlu0 0
      %5804 = vperm.xlu0 %5803, %v5781
      %v5805 = vpop.permute.xlu0 %5804
      %v5807 = vmul.f32 %v5757, %v5785
      %v5808 = vmul.f32 %v5758, %v5785
      %v5809 = vmul.f32 %v5759, %v5785
      %v5810 = vmul.f32 %v5760, %v5785
      %v5811 = vmul.f32 %v5761, %v5790
      %v5812 = vmul.f32 %v5762, %v5790
      %v5813 = vmul.f32 %v5763, %v5790
      %v5814 = vmul.f32 %v5764, %v5790
      %v5815 = vmul.f32 %v5765, %v5795
      %v5816 = vmul.f32 %v5766, %v5795
      %v5817 = vmul.f32 %v5767, %v5795
      %v5818 = vmul.f32 %v5768, %v5795
      %v5819 = vmul.f32 %v5769, %v5800
      %v5820 = vmul.f32 %v5770, %v5800
      %v5821 = vmul.f32 %v5771, %v5800
      %v5822 = vmul.f32 %v5772, %v5800
      %v5823 = vmul.f32 %v5773, %v5805
      %v5824 = vmul.f32 %v5774, %v5805
      %v5825 = vmul.f32 %v5775, %v5805
      %v5826 = vmul.f32 %v5776, %v5805
      %v5827 = vld [vmem:[%s3] sm:$0xff]
      %v5828 = vld [vmem:[%s3 + $0x8] sm:$0xff]
      %v5829 = vld [vmem:[%s3 + $0x10] sm:$0xff]
      %v5830 = vld [vmem:[%s3 + $0x18] sm:$0xff]
      %v5831 = vld [vmem:[%s3 + $0x20] sm:$0xff]
      %5833 = vset.pattern.permute.xlu0 0
      %5834 = vperm.xlu0 %5833, %v5827
      %v5835 = vpop.permute.xlu0 %5834
      %5838 = vset.pattern.permute.xlu0 0
      %5839 = vperm.xlu0 %5838, %v5828
      %v5840 = vpop.permute.xlu0 %5839
      %5843 = vset.pattern.permute.xlu0 0
      %5844 = vperm.xlu0 %5843, %v5829
      %v5845 = vpop.permute.xlu0 %5844
      %5848 = vset.pattern.permute.xlu0 0
      %5849 = vperm.xlu0 %5848, %v5830
      %v5850 = vpop.permute.xlu0 %5849
      %5853 = vset.pattern.permute.xlu0 0
      %5854 = vperm.xlu0 %5853, %v5831
      %v5855 = vpop.permute.xlu0 %5854
      %v5857 = vadd.f32 %v5807, %v5835
      %v5858 = vadd.f32 %v5808, %v5835
      %v5859 = vadd.f32 %v5809, %v5835
      %v5860 = vadd.f32 %v5810, %v5835
      %v5861 = vadd.f32 %v5811, %v5840
      %v5862 = vadd.f32 %v5812, %v5840
      %v5863 = vadd.f32 %v5813, %v5840
      %v5864 = vadd.f32 %v5814, %v5840
      %v5865 = vadd.f32 %v5815, %v5845
      %v5866 = vadd.f32 %v5816, %v5845
      %v5867 = vadd.f32 %v5817, %v5845
      %v5868 = vadd.f32 %v5818, %v5845
      %v5869 = vadd.f32 %v5819, %v5850
      %v5870 = vadd.f32 %v5820, %v5850
      %v5871 = vadd.f32 %v5821, %v5850
      %v5872 = vadd.f32 %v5822, %v5850
      %v5873 = vadd.f32 %v5823, %v5855
      %v5874 = vadd.f32 %v5824, %v5855
      %v5875 = vadd.f32 %v5825, %v5855
      %v5876 = vadd.f32 %v5826, %v5855
      %vm5877 = vcmp.gt.f32.partialorder %v5857, 0.0
      %vm5878 = vcmp.gt.f32.partialorder %v5858, 0.0
      %vm5879 = vcmp.gt.f32.partialorder %v5859, 0.0
      %vm5880 = vcmp.gt.f32.partialorder %v5860, 0.0
      %vm5881 = vcmp.gt.f32.partialorder %v5861, 0.0
      %vm5882 = vcmp.gt.f32.partialorder %v5862, 0.0
      %vm5883 = vcmp.gt.f32.partialorder %v5863, 0.0
      %vm5884 = vcmp.gt.f32.partialorder %v5864, 0.0
      %vm5885 = vcmp.gt.f32.partialorder %v5865, 0.0
      %vm5886 = vcmp.gt.f32.partialorder %v5866, 0.0
      %vm5887 = vcmp.gt.f32.partialorder %v5867, 0.0
      %vm5888 = vcmp.gt.f32.partialorder %v5868, 0.0
      %vm5889 = vcmp.gt.f32.partialorder %v5869, 0.0
      %vm5890 = vcmp.gt.f32.partialorder %v5870, 0.0
      %vm5891 = vcmp.gt.f32.partialorder %v5871, 0.0
      %vm5892 = vcmp.gt.f32.partialorder %v5872, 0.0
      %vm5893 = vcmp.gt.f32.partialorder %v5873, 0.0
      %vm5894 = vcmp.gt.f32.partialorder %v5874, 0.0
      %vm5895 = vcmp.gt.f32.partialorder %v5875, 0.0
      %vm5896 = vcmp.gt.f32.partialorder %v5876, 0.0
      %v5897 = vmin.f32 %v5857, 0.0
      %v5898 = vmin.f32 %v5858, 0.0
      %v5899 = vmin.f32 %v5859, 0.0
      %v5900 = vmin.f32 %v5860, 0.0
      %v5901 = vmin.f32 %v5861, 0.0
      %v5902 = vmin.f32 %v5862, 0.0
      %v5903 = vmin.f32 %v5863, 0.0
      %v5904 = vmin.f32 %v5864, 0.0
      %v5905 = vmin.f32 %v5865, 0.0
      %v5906 = vmin.f32 %v5866, 0.0
      %v5907 = vmin.f32 %v5867, 0.0
      %v5908 = vmin.f32 %v5868, 0.0
      %v5909 = vmin.f32 %v5869, 0.0
      %v5910 = vmin.f32 %v5870, 0.0
      %v5911 = vmin.f32 %v5871, 0.0
      %v5912 = vmin.f32 %v5872, 0.0
      %v5913 = vmin.f32 %v5873, 0.0
      %v5914 = vmin.f32 %v5874, 0.0
      %v5915 = vmin.f32 %v5875, 0.0
      %v5916 = vmin.f32 %v5876, 0.0
      %v5917 = vmul.f32 %v5897, 1.442695
      %v5918 = vpow.pop %v5917
      %v5919 = vmul.f32 %v5898, 1.442695
      %v5920 = vpow.pop %v5919
      %v5921 = vmul.f32 %v5899, 1.442695
      %v5922 = vpow.pop %v5921
      %v5923 = vmul.f32 %v5900, 1.442695
      %v5924 = vpow.pop %v5923
      %v5925 = vmul.f32 %v5901, 1.442695
      %v5926 = vpow.pop %v5925
      %v5927 = vmul.f32 %v5902, 1.442695
      %v5928 = vpow.pop %v5927
      %v5929 = vmul.f32 %v5903, 1.442695
      %v5930 = vpow.pop %v5929
      %v5931 = vmul.f32 %v5904, 1.442695
      %v5932 = vpow.pop %v5931
      %v5933 = vmul.f32 %v5905, 1.442695
      %v5934 = vpow.pop %v5933
      %v5935 = vmul.f32 %v5906, 1.442695
      %v5936 = vpow.pop %v5935
      %v5937 = vmul.f32 %v5907, 1.442695
      %v5938 = vpow.pop %v5937
      %v5939 = vmul.f32 %v5908, 1.442695
      %v5940 = vpow.pop %v5939
      %v5941 = vmul.f32 %v5909, 1.442695
      %v5942 = vpow.pop %v5941
      %v5943 = vmul.f32 %v5910, 1.442695
      %v5944 = vpow.pop %v5943
      %v5945 = vmul.f32 %v5911, 1.442695
      %v5946 = vpow.pop %v5945
      %v5947 = vmul.f32 %v5912, 1.442695
      %v5948 = vpow.pop %v5947
      %v5949 = vmul.f32 %v5913, 1.442695
      %v5950 = vpow.pop %v5949
      %v5951 = vmul.f32 %v5914, 1.442695
      %v5952 = vpow.pop %v5951
      %v5953 = vmul.f32 %v5915, 1.442695
      %v5954 = vpow.pop %v5953
      %v5955 = vmul.f32 %v5916, 1.442695
      %v5956 = vpow.pop %v5955
      %v5957 = vsub.f32 %v5918, 1.0
      %v5958 = vsub.f32 %v5920, 1.0
      %v5959 = vsub.f32 %v5922, 1.0
      %v5960 = vsub.f32 %v5924, 1.0
      %v5961 = vsub.f32 %v5926, 1.0
      %v5962 = vsub.f32 %v5928, 1.0
      %v5963 = vsub.f32 %v5930, 1.0
      %v5964 = vsub.f32 %v5932, 1.0
      %v5965 = vsub.f32 %v5934, 1.0
      %v5966 = vsub.f32 %v5936, 1.0
      %v5967 = vsub.f32 %v5938, 1.0
      %v5968 = vsub.f32 %v5940, 1.0
      %v5969 = vsub.f32 %v5942, 1.0
      %v5970 = vsub.f32 %v5944, 1.0
      %v5971 = vsub.f32 %v5946, 1.0
      %v5972 = vsub.f32 %v5948, 1.0
      %v5973 = vsub.f32 %v5950, 1.0
      %v5974 = vsub.f32 %v5952, 1.0
      %v5975 = vsub.f32 %v5954, 1.0
      %v5976 = vsub.f32 %v5956, 1.0
      %v5977 = vsel %vm5877, %v5857, %v5957
      %v5978 = vsel %vm5878, %v5858, %v5958
      %v5979 = vsel %vm5879, %v5859, %v5959
      %v5980 = vsel %vm5880, %v5860, %v5960
      %v5981 = vsel %vm5881, %v5861, %v5961
      %v5982 = vsel %vm5882, %v5862, %v5962
      %v5983 = vsel %vm5883, %v5863, %v5963
      %v5984 = vsel %vm5884, %v5864, %v5964
      %v5985 = vsel %vm5885, %v5865, %v5965
      %v5986 = vsel %vm5886, %v5866, %v5966
      %v5987 = vsel %vm5887, %v5867, %v5967
      %v5988 = vsel %vm5888, %v5868, %v5968
      %v5989 = vsel %vm5889, %v5869, %v5969
      %v5990 = vsel %vm5890, %v5870, %v5970
      %v5991 = vsel %vm5891, %v5871, %v5971
      %v5992 = vsel %vm5892, %v5872, %v5972
      %v5993 = vsel %vm5893, %v5873, %v5973
      %v5994 = vsel %vm5894, %v5874, %v5974
      %v5995 = vsel %vm5895, %v5875, %v5975
      %v5996 = vsel %vm5896, %v5876, %v5976
      %v5997 = vld [vmem:[%s4] sm:$0xff]
      %v5998 = vld [vmem:[%s4 + $0x8] sm:$0xff]
      %v5999 = vld [vmem:[%s4 + $0x10] sm:$0xff]
      %v6000 = vld [vmem:[%s4 + $0x18] sm:$0xff]
      %v6001 = vld [vmem:[%s4 + $0x20] sm:$0xff]
      %v6002 = vld [vmem:[%s4 + $0x28] sm:$0xff]
      %v6003 = vld [vmem:[%s4 + $0x30] sm:$0xff]
      %v6004 = vld [vmem:[%s4 + $0x38] sm:$0xff]
      %v6005 = vld [vmem:[%s4 + $0x40] sm:$0xff]
      %v6006 = vld [vmem:[%s4 + $0x48] sm:$0xff]
      %v6007 = vld [vmem:[%s4 + $0x50] sm:$0xff]
      %v6008 = vld [vmem:[%s4 + $0x58] sm:$0xff]
      %v6009 = vld [vmem:[%s4 + $0x60] sm:$0xff]
      %v6010 = vld [vmem:[%s4 + $0x68] sm:$0xff]
      %v6011 = vld [vmem:[%s4 + $0x70] sm:$0xff]
      %v6012 = vld [vmem:[%s4 + $0x78] sm:$0xff]
      %v6013 = vld [vmem:[%s4 + $0x80] sm:$0xff]
      %v6014 = vld [vmem:[%s4 + $0x88] sm:$0xff]
      %v6015 = vld [vmem:[%s4 + $0x90] sm:$0xff]
      %v6016 = vld [vmem:[%s4 + $0x98] sm:$0xff]
      %v6017 = vld [vmem:[%s4 + $0xa0] sm:$0xff]
      %v6018 = vld [vmem:[%s4 + $0xa8] sm:$0xff]
      %v6019 = vld [vmem:[%s4 + $0xb0] sm:$0xff]
      %v6020 = vld [vmem:[%s4 + $0xb8] sm:$0xff]
      %v6021 = vld [vmem:[%s4 + $0xc0] sm:$0xff]
      %v6022 = vld [vmem:[%s4 + $0xc8] sm:$0xff]
      %v6023 = vld [vmem:[%s4 + $0xd0] sm:$0xff]
      %v6024 = vld [vmem:[%s4 + $0xd8] sm:$0xff]
      %v6025 = vld [vmem:[%s4 + $0xe0] sm:$0xff]
      %v6026 = vld [vmem:[%s4 + $0xe8] sm:$0xff]
      %v6027 = vld [vmem:[%s4 + $0xf0] sm:$0xff]
      %v6028 = vld [vmem:[%s4 + $0xf8] sm:$0xff]
      %v6029 = vld [vmem:[%s4 + $0x100] sm:$0xff]
      %v6030 = vld [vmem:[%s4 + $0x108] sm:$0xff]
      %v6031 = vld [vmem:[%s4 + $0x110] sm:$0xff]
      %v6032 = vld [vmem:[%s4 + $0x118] sm:$0xff]
      %v6033 = vld [vmem:[%s4 + $0x120] sm:$0xff]
      %v6034 = vld [vmem:[%s4 + $0x128] sm:$0xff]
      %v6035 = vld [vmem:[%s4 + $0x130] sm:$0xff]
      %v6036 = vld [vmem:[%s4 + $0x138] sm:$0xff]
      %v6037 = vld [vmem:[%s4 + $0x140] sm:$0xff]
      %v6038 = vld [vmem:[%s4 + $0x148] sm:$0xff]
      %v6039 = vld [vmem:[%s4 + $0x150] sm:$0xff]
      %v6040 = vld [vmem:[%s4 + $0x158] sm:$0xff]
      %v6041 = vld [vmem:[%s4 + $0x160] sm:$0xff]
      %v6042 = vld [vmem:[%s4 + $0x168] sm:$0xff]
      %v6043 = vld [vmem:[%s4 + $0x170] sm:$0xff]
      %v6044 = vld [vmem:[%s4 + $0x178] sm:$0xff]
      %v6045 = vld [vmem:[%s4 + $0x180] sm:$0x3f]
      %v6047 = vsel %vm5345, %v5980, 0
      %v6050 = vsel %vm5345, %v5984, 0
      %v6053 = vsel %vm5345, %v5988, 0
      %v6056 = vsel %vm5345, %v5992, 0
      %v6059 = vsel %vm5345, %v5996, 0
      %v6062 = vsel %vm396, %v6045, 0
      %6064 = vmatpush.msra.mxu0 %v6012
      %6065 = vmatpush.msra.mxu0 %v6011
      %6066 = vmatpush.msra.mxu0 %v6010
      %6067 = vmatpush.msra.mxu0 %v6009
      %6068 = vmatpush.msra.mxu0 %v6008
      %6069 = vmatpush.msra.mxu0 %v6007
      %6070 = vmatpush.msra.mxu0 %v6006
      %6071 = vmatpush.msra.mxu0 %v6005
      %6072 = vmatpush.msra.mxu0 %v6004
      %6073 = vmatpush.msra.mxu0 %v6003
      %6074 = vmatpush.msra.mxu0 %v6002
      %6075 = vmatpush.msra.mxu0 %v6001
      %6076 = vmatpush.msra.mxu0 %v6000
      %6077 = vmatpush.msra.mxu0 %v5999
      %6078 = vmatpush.msra.mxu0 %v5998
      %6079 = vmatpush.msra.mxu0 %v5997
      %6080 = vmatmul.f32.gmra.mxu0 %v5977
      %v6081 = vpop.f32.mrf.mxu0
      %v6082 = vadd.f32 0.0, %v6081
      %6083 = vmatmul.f32.gmra.mxu0 %v5981
      %v6084 = vpop.f32.mrf.mxu0
      %v6085 = vadd.f32 0.0, %v6084
      %6086 = vmatmul.f32.gmra.mxu0 %v5985
      %v6087 = vpop.f32.mrf.mxu0
      %v6088 = vadd.f32 0.0, %v6087
      %6089 = vmatmul.f32.gmra.mxu0 %v5989
      %v6090 = vpop.f32.mrf.mxu0
      %v6091 = vadd.f32 0.0, %v6090
      %6092 = vmatmul.f32.gmra.mxu0 %v5993
      %v6093 = vpop.f32.mrf.mxu0
      %v6094 = vadd.f32 0.0, %v6093
      %6095 = vdwg.mxu0
      %6096 = vmatpush.msra.mxu0 %v6028
      %6097 = vmatpush.msra.mxu0 %v6027
      %6098 = vmatpush.msra.mxu0 %v6026
      %6099 = vmatpush.msra.mxu0 %v6025
      %6100 = vmatpush.msra.mxu0 %v6024
      %6101 = vmatpush.msra.mxu0 %v6023
      %6102 = vmatpush.msra.mxu0 %v6022
      %6103 = vmatpush.msra.mxu0 %v6021
      %6104 = vmatpush.msra.mxu0 %v6020
      %6105 = vmatpush.msra.mxu0 %v6019
      %6106 = vmatpush.msra.mxu0 %v6018
      %6107 = vmatpush.msra.mxu0 %v6017
      %6108 = vmatpush.msra.mxu0 %v6016
      %6109 = vmatpush.msra.mxu0 %v6015
      %6110 = vmatpush.msra.mxu0 %v6014
      %6111 = vmatpush.msra.mxu0 %v6013
      %6112 = vmatmul.f32.gmra.mxu0 %v5978
      %v6113 = vpop.f32.mrf.mxu0
      %v6114 = vadd.f32 %v6082, %v6113
      %6115 = vmatmul.f32.gmra.mxu0 %v5982
      %v6116 = vpop.f32.mrf.mxu0
      %v6117 = vadd.f32 %v6085, %v6116
      %6118 = vmatmul.f32.gmra.mxu0 %v5986
      %v6119 = vpop.f32.mrf.mxu0
      %v6120 = vadd.f32 %v6088, %v6119
      %6121 = vmatmul.f32.gmra.mxu0 %v5990
      %v6122 = vpop.f32.mrf.mxu0
      %v6123 = vadd.f32 %v6091, %v6122
      %6124 = vmatmul.f32.gmra.mxu0 %v5994
      %v6125 = vpop.f32.mrf.mxu0
      %v6126 = vadd.f32 %v6094, %v6125
      %6127 = vdwg.mxu0
      %6128 = vmatpush.msra.mxu0 %v6044
      %6129 = vmatpush.msra.mxu0 %v6043
      %6130 = vmatpush.msra.mxu0 %v6042
      %6131 = vmatpush.msra.mxu0 %v6041
      %6132 = vmatpush.msra.mxu0 %v6040
      %6133 = vmatpush.msra.mxu0 %v6039
      %6134 = vmatpush.msra.mxu0 %v6038
      %6135 = vmatpush.msra.mxu0 %v6037
      %6136 = vmatpush.msra.mxu0 %v6036
      %6137 = vmatpush.msra.mxu0 %v6035
      %6138 = vmatpush.msra.mxu0 %v6034
      %6139 = vmatpush.msra.mxu0 %v6033
      %6140 = vmatpush.msra.mxu0 %v6032
      %6141 = vmatpush.msra.mxu0 %v6031
      %6142 = vmatpush.msra.mxu0 %v6030
      %6143 = vmatpush.msra.mxu0 %v6029
      %6144 = vmatmul.f32.gmra.mxu0 %v5979
      %v6145 = vpop.f32.mrf.mxu0
      %v6146 = vadd.f32 %v6114, %v6145
      %6147 = vmatmul.f32.gmra.mxu0 %v5983
      %v6148 = vpop.f32.mrf.mxu0
      %v6149 = vadd.f32 %v6117, %v6148
      %6150 = vmatmul.f32.gmra.mxu0 %v5987
      %v6151 = vpop.f32.mrf.mxu0
      %v6152 = vadd.f32 %v6120, %v6151
      %6153 = vmatmul.f32.gmra.mxu0 %v5991
      %v6154 = vpop.f32.mrf.mxu0
      %v6155 = vadd.f32 %v6123, %v6154
      %6156 = vmatmul.f32.gmra.mxu0 %v5995
      %v6157 = vpop.f32.mrf.mxu0
      %v6158 = vadd.f32 %v6126, %v6157
      %6159 = vdwg.mxu0
      %6160 = vmatpush.msra.mxu0 0.0
      %6161 = vmatpush.msra.mxu0 0.0
      %6162 = vmatpush.msra.mxu0 0.0
      %6163 = vmatpush.msra.mxu0 0.0
      %6164 = vmatpush.msra.mxu0 0.0
      %6165 = vmatpush.msra.mxu0 0.0
      %6166 = vmatpush.msra.mxu0 0.0
      %6167 = vmatpush.msra.mxu0 0.0
      %6168 = vmatpush.msra.mxu0 0.0
      %6169 = vmatpush.msra.mxu0 0.0
      %6170 = vmatpush.msra.mxu0 0.0
      %6171 = vmatpush.msra.mxu0 0.0
      %6172 = vmatpush.msra.mxu0 0.0
      %6173 = vmatpush.msra.mxu0 0.0
      %6174 = vmatpush.msra.mxu0 0.0
      %6175 = vmatpush.msra.mxu0 %v6062
      %6176 = vmatmul.f32.gmra.mxu0 %v6047
      %v6177 = vpop.f32.mrf.mxu0
      %v6178 = vadd.f32 %v6146, %v6177
      %6179 = vmatmul.f32.gmra.mxu0 %v6050
      %v6180 = vpop.f32.mrf.mxu0
      %v6181 = vadd.f32 %v6149, %v6180
      %6182 = vmatmul.f32.gmra.mxu0 %v6053
      %v6183 = vpop.f32.mrf.mxu0
      %v6184 = vadd.f32 %v6152, %v6183
      %6185 = vmatmul.f32.gmra.mxu0 %v6056
      %v6186 = vpop.f32.mrf.mxu0
      %v6187 = vadd.f32 %v6155, %v6186
      %6188 = vmatmul.f32.gmra.mxu0 %v6059
      %v6189 = vpop.f32.mrf.mxu0
      %v6190 = vadd.f32 %v6158, %v6189
      %6191 = vdwg.mxu0
      %v6192 = vld [vmem:[%s5] sm:$0xff]
      %v6193 = vld [vmem:[%s5 + $0x8] sm:$0xff]
      %v6194 = vld [vmem:[%s5 + $0x10] sm:$0xff]
      %v6195 = vld [vmem:[%s5 + $0x18] sm:$0xff]
      %v6196 = vld [vmem:[%s5 + $0x20] sm:$0xff]
      %v6197 = vld [vmem:[%s6] sm:$0x1]
      %v6199 = vperm.slane %v6197, 0
      %6201 = vxpose.xlu0.b32.start [1/16] %v6178, 128
      %6202 = vxpose.xlu0.b32.cont [2/16] %v6181, 128
      %6203 = vxpose.xlu0.b32.cont [3/16] %v6184, 128
      %6204 = vxpose.xlu0.b32.cont [4/16] %v6187, 128
      %6205 = vxpose.xlu0.b32.cont [5/16] %v6190, 128
      %6206 = vxpose.xlu0.b32.cont [6/16] 0.0, 128
      %6207 = vxpose.xlu0.b32.cont [7/16] 0.0, 128
      %6208 = vxpose.xlu0.b32.cont [8/16] 0.0, 128
      %6209 = vxpose.xlu0.b32.cont [9/16] 0.0, 128
      %6210 = vxpose.xlu0.b32.cont [10/16] 0.0, 128
      %6211 = vxpose.xlu0.b32.cont [11/16] 0.0, 128
      %6212 = vxpose.xlu0.b32.cont [12/16] 0.0, 128
      %6213 = vxpose.xlu0.b32.cont [13/16] 0.0, 128
      %6214 = vxpose.xlu0.b32.cont [14/16] 0.0, 128
      %6215 = vxpose.xlu0.b32.cont [15/16] 0.0, 128
      %6216 = vxpose.xlu0.b32.end [16/16] 0.0, 128
      %v6217 = vpop.trf.xlu0
      %v6218 = vpop.trf.xlu0
      %v6219 = vpop.trf.xlu0
      %v6220 = vpop.trf.xlu0
      %v6221 = vpop.trf.xlu0
      %v6222 = vpop.trf.xlu0
      %v6223 = vpop.trf.xlu0
      %v6224 = vpop.trf.xlu0
      %v6225 = vpop.trf.xlu0
      %v6226 = vpop.trf.xlu0
      %v6227 = vpop.trf.xlu0
      %v6228 = vpop.trf.xlu0
      %v6229 = vpop.trf.xlu0
      %v6230 = vpop.trf.xlu0
      %v6231 = vpop.trf.xlu0
      %v6232 = vpop.trf.xlu0
      %vm6233 = vcmask 326656
      %v6235 = vsel %vm6233, %v6217, 0
      %v6238 = vsel %vm6233, %v6218, 0
      %v6241 = vsel %vm6233, %v6219, 0
      %6243 = vmatpush.msra.mxu0 0.0
      %6244 = vmatpush.msra.mxu0 0.0
      %6245 = vmatpush.msra.mxu0 0.0
      %6246 = vmatpush.msra.mxu0 0.0
      %6247 = vmatpush.msra.mxu0 0.0
      %6248 = vmatpush.msra.mxu0 0.0
      %6249 = vmatpush.msra.mxu0 0.0
      %6250 = vmatpush.msra.mxu0 0.0
      %6251 = vmatpush.msra.mxu0 0.0
      %6252 = vmatpush.msra.mxu0 0.0
      %6253 = vmatpush.msra.mxu0 0.0
      %6254 = vmatpush.msra.mxu0 %v6196
      %6255 = vmatpush.msra.mxu0 %v6195
      %6256 = vmatpush.msra.mxu0 %v6194
      %6257 = vmatpush.msra.mxu0 %v6193
      %6258 = vmatpush.msra.mxu0 %v6192
      %6259 = vmatmul.f32.gmra.mxu0 %v6235
      %v6260 = vpop.f32.mrf.mxu0
      %v6261 = vadd.f32 %v6199, %v6260
      %6262 = vmatmul.f32.gmra.mxu0 %v6238
      %v6263 = vpop.f32.mrf.mxu0
      %v6264 = vadd.f32 %v6199, %v6263
      %6265 = vmatmul.f32.gmra.mxu0 %v6241
      %v6266 = vpop.f32.mrf.mxu0
      %v6267 = vadd.f32 %v6199, %v6266
      %6268 = vdwg.mxu0
      %6269 = vst.msk [vmem:[%s278] sm:$0xff] %vm6233, %v6261
      %6270 = vst.msk [vmem:[%s278 + $0x8] sm:$0xff] %vm6233, %v6264
      %vm6271 = vcmask 324608
      %6272 = vst.msk [vmem:[%s278 + $0x10] sm:$0x3f] %vm6271, %v6267
      %p6273 = scmp.lt.s32.totalorder %s18, 1
      %s6274 = scalar_select %p6273, %s18, 1
      %s6275 = smul.addr %s6274, 3
      %s6276 = smul.addr %s6275, 8
      %s6277 = scalar_lea.vmem %s7, %s6276
      // Predicated region
      $region49: #{conformer_forward.3} parent=47 // pred_check
        %p6278 = pneg %p188
      $region50: #{conformer_forward.3} parent=47 // pred_check_branch
        %6280 = sbr.rel (%p6278) target = $region52
      $region51: #{conformer_forward.3} parent=47 // pred_region
        _
      $region52: #{conformer_forward.3} parent=47 // pred_fallthru
        _
    $region48: #{conformer_forward.3} parent=5 // pred_fallthru
      _
    %p6281 = scmp.le.s32.totalorder 2, %s13
    // Predicated region
    $region53: #{conformer_forward.3} parent=5 // pred_check
      %p6282 = pneg %p6281
    $region54: #{conformer_forward.3} parent=5 // pred_check_branch
      %6284 = sbr.rel (%p6282) target = $region56
    $region55: #{conformer_forward.3} parent=5 // pred_region
      %s6285 = ssub.s32 %s13, 2
      // Predicated region
      $region57: #{conformer_forward.3} parent=55 // pred_check
        %p6286 = pneg %p194
      $region58: #{conformer_forward.3} parent=55 // pred_check_branch
        %6288 = sbr.rel (%p6286) target = $region60
      $region59: #{conformer_forward.3} parent=55 // pred_region
        %p6289 = scmp.lt.s32.totalorder %s19, 1
        %s6290 = scalar_select %p6289, %s19, 1
        %s6291 = smul.addr %s6290, 3
        %s6292 = smul.addr %s6291, 8
        %s6293 = scalar_lea.vmem %s7, %s6292
      $region60: #{conformer_forward.3} parent=55 // pred_fallthru
        _
    $region56: #{conformer_forward.3} parent=5 // pred_fallthru
      _
  $region6: #{conformer_forward.3} parent=0 // loop_footer
    %s17 = sadd.s32 1, %s13
  $region7: #{conformer_forward.3} parent=0 // loop_footer_branch
    %12 = sbr.rel target = $region3
  $region8: #{conformer_forward.3} parent=0 // loop_exit
    _

// kernel: conformer_forward.5
$region0: #{conformer_forward.5}
  #allocation0 [shape = 'u32[]', space=smem, size = 0x4, offset = 0x4, fixed_abs, tag = 'smem constant byte address 0x4 - core index']
  #allocation1 [shape = 'u32[72,128]{1,0:T(1,128)}', space=vmem, size = 0x9000, scoped, tag = 'internal scratch']
  %s0 = inlined_call_operand.vmem [shape: f32[2,880], index: 0, kind: input, shape index: {}]
  %s1 = inlined_call_operand.hbm [shape: f32[880,256], index: 1, kind: input, shape index: {}]
  %s2 = inlined_call_operand.vmem [shape: f32[1,256], index: 2, kind: input, shape index: {}]
  %s3 = inlined_call_operand.vmem [shape: f32[256,32], index: 3, kind: input, shape index: {}]
  %s4 = inlined_call_operand.vmem [shape: f32[1,32], index: 4, kind: input, shape index: {}]
  %s5 = inlined_call_operand.vmem [shape: f32[32,4], index: 5, kind: input, shape index: {}]
  %s6 = inlined_call_operand.vmem [shape: f32[1,4], index: 6, kind: input, shape index: {}]
  %s7 = inlined_call_operand.hbm [shape: f32[2,4], index: 7, kind: output, shape index: {}]
  %s8 = sld [smem:[#allocation0]]
  $region42: #{conformer_forward.5} parent=0
    _
  %s10 = ssub.s32 1, %s8
  %s11 = scalar_select 0, %s10, %s8
  $region1: #{conformer_forward.5} parent=0
    #allocation2 [shape = 'u8[901120]{0}', space=vmem, size = 0xdc000, scoped, tag = 'input window, operand 1, single buffered']
    #allocation3 [shape = 's32[1]{0}', space=sflag, size = 0x4, scoped, tag = 'scoped memory for conformer_forward.5']
    #allocation4 [shape = 's32[1]{0}', space=sflag, size = 0x4, scoped, tag = 'scoped memory for conformer_forward.5']
    #allocation5 [shape = 'u8[1024]{0}', space=vmem, size = 0x400, scoped, tag = 'output window, operand 0, single buffered']
    %12 = vsyncpa [#allocation3], 0
    %13 = vsyncpa [#allocation4], 0
    // Predicated region
    $region2: #{conformer_forward.5} parent=1 // pred_check
      _
    $region3: #{conformer_forward.5} parent=1 // pred_check_branch
      %15 = sbr.rel (0) target = $region5
    $region4: #{conformer_forward.5} parent=1 // pred_region
      _
    $region5: #{conformer_forward.5} parent=1 // pred_fallthru
      _
    // Predicated region
    $region6: #{conformer_forward.5} parent=1 // pred_check
      _
    $region7: #{conformer_forward.5} parent=1 // pred_check_branch
      %17 = sbr.rel (0) target = $region9
    $region8: #{conformer_forward.5} parent=1 // pred_region
      %19 = vsyncadd [#allocation3], 0
      %s20 = sshll.u32 %s1, 4
      %s21 = int_to_ptr.hbm [resolvable:$true] %s20
      %s22 = sshll.u32 [#allocation2], 4
      %s23 = int_to_ptr.vmem [resolvable:$true] %s22
      %28 = dma.hbm_to_vmem [thread:$0]  %s21, 28160, %s23, [#allocation3], 256, 256, 16
    $region9: #{conformer_forward.5} parent=1 // pred_fallthru
      _
    // Predicated region
    $region10: #{conformer_forward.5} parent=1 // pred_check
      _
    $region11: #{conformer_forward.5} parent=1 // pred_check_branch
      %30 = sbr.rel (0) target = $region13
    $region12: #{conformer_forward.5} parent=1 // pred_region
      _
    $region13: #{conformer_forward.5} parent=1 // pred_fallthru
      _
    // Predicated region
    $region14: #{conformer_forward.5} parent=1 // pred_check
      _
    $region15: #{conformer_forward.5} parent=1 // pred_check_branch
      %32 = sbr.rel (0) target = $region17
    $region16: #{conformer_forward.5} parent=1 // pred_region
      _
    $region17: #{conformer_forward.5} parent=1 // pred_fallthru
      _
    // Predicated region
    $region18: #{conformer_forward.5} parent=1 // pred_check
      _
    $region19: #{conformer_forward.5} parent=1 // pred_check_branch
      %34 = sbr.rel (0) target = $region21
    $region20: #{conformer_forward.5} parent=1 // pred_region
      _
    $region21: #{conformer_forward.5} parent=1 // pred_fallthru
      _
    // Predicated region
    $region22: #{conformer_forward.5} parent=1 // pred_check
      _
    $region23: #{conformer_forward.5} parent=1 // pred_check_branch
      %36 = sbr.rel (0) target = $region25
    $region24: #{conformer_forward.5} parent=1 // pred_region
      _
    $region25: #{conformer_forward.5} parent=1 // pred_fallthru
      _
    // Predicated region
    $region26: #{conformer_forward.5} parent=1 // pred_check
      _
    $region27: #{conformer_forward.5} parent=1 // pred_check_branch
      %38 = sbr.rel (0) target = $region29
    $region28: #{conformer_forward.5} parent=1 // pred_region
      _
    $region29: #{conformer_forward.5} parent=1 // pred_fallthru
      _
    // Predicated region
    $region30: #{conformer_forward.5} parent=1 // pred_check
      _
    $region31: #{conformer_forward.5} parent=1 // pred_check_branch
      %40 = sbr.rel (0) target = $region33
    $region32: #{conformer_forward.5} parent=1 // pred_region
      %42 = dma.done [#allocation3], 28160
    $region33: #{conformer_forward.5} parent=1 // pred_fallthru
      _
    %v43 = vld [vmem:[%s0] sm:$0xff]
    %v44 = vld [vmem:[%s0 + $0x8] sm:$0x3f]
    %v45 = vld [vmem:[#allocation2] sm:$0xff]
    %v46 = vld [vmem:[#allocation2 + $0x8] sm:$0xff]
    %v47 = vld [vmem:[#allocation2 + $0x10] sm:$0xff]
    %v48 = vld [vmem:[#allocation2 + $0x18] sm:$0xff]
    %v49 = vld [vmem:[#allocation2 + $0x20] sm:$0xff]
    %v50 = vld [vmem:[#allocation2 + $0x28] sm:$0xff]
    %v51 = vld [vmem:[#allocation2 + $0x30] sm:$0xff]
    %v52 = vld [vmem:[#allocation2 + $0x38] sm:$0xff]
    %v53 = vld [vmem:[#allocation2 + $0x40] sm:$0xff]
    %v54 = vld [vmem:[#allocation2 + $0x48] sm:$0xff]
    %v55 = vld [vmem:[#allocation2 + $0x50] sm:$0xff]
    %v56 = vld [vmem:[#allocation2 + $0x58] sm:$0xff]
    %v57 = vld [vmem:[#allocation2 + $0x60] sm:$0xff]
    %v58 = vld [vmem:[#allocation2 + $0x68] sm:$0xff]
    %v59 = vld [vmem:[#allocation2 + $0x70] sm:$0xff]
    %v60 = vld [vmem:[#allocation2 + $0x78] sm:$0xff]
    %v61 = vld [vmem:[#allocation2 + $0x80] sm:$0xff]
    %v62 = vld [vmem:[#allocation2 + $0x88] sm:$0xff]
    %v63 = vld [vmem:[#allocation2 + $0x90] sm:$0xff]
    %v64 = vld [vmem:[#allocation2 + $0x98] sm:$0xff]
    %v65 = vld [vmem:[#allocation2 + $0xa0] sm:$0xff]
    %v66 = vld [vmem:[#allocation2 + $0xa8] sm:$0xff]
    %v67 = vld [vmem:[#allocation2 + $0xb0] sm:$0xff]
    %v68 = vld [vmem:[#allocation2 + $0xb8] sm:$0xff]
    %v69 = vld [vmem:[#allocation2 + $0xc0] sm:$0xff]
    %v70 = vld [vmem:[#allocation2 + $0xc8] sm:$0xff]
    %v71 = vld [vmem:[#allocation2 + $0xd0] sm:$0xff]
    %v72 = vld [vmem:[#allocation2 + $0xd8] sm:$0xff]
    %v73 = vld [vmem:[#allocation2 + $0xe0] sm:$0xff]
    %v74 = vld [vmem:[#allocation2 + $0xe8] sm:$0xff]
    %v75 = vld [vmem:[#allocation2 + $0xf0] sm:$0xff]
    %v76 = vld [vmem:[#allocation2 + $0xf8] sm:$0xff]
    %v77 = vld [vmem:[#allocation2 + $0x100] sm:$0xff]
    %v78 = vld [vmem:[#allocation2 + $0x108] sm:$0xff]
    %v79 = vld [vmem:[#allocation2 + $0x110] sm:$0xff]
    %v80 = vld [vmem:[#allocation2 + $0x118] sm:$0xff]
    %v81 = vld [vmem:[#allocation2 + $0x120] sm:$0xff]
    %v82 = vld [vmem:[#allocation2 + $0x128] sm:$0xff]
    %v83 = vld [vmem:[#allocation2 + $0x130] sm:$0xff]
    %v84 = vld [vmem:[#allocation2 + $0x138] sm:$0xff]
    %v85 = vld [vmem:[#allocation2 + $0x140] sm:$0xff]
    %v86 = vld [vmem:[#allocation2 + $0x148] sm:$0xff]
    %v87 = vld [vmem:[#allocation2 + $0x150] sm:$0xff]
    %v88 = vld [vmem:[#allocation2 + $0x158] sm:$0xff]
    %v89 = vld [vmem:[#allocation2 + $0x160] sm:$0xff]
    %v90 = vld [vmem:[#allocation2 + $0x168] sm:$0xff]
    %v91 = vld [vmem:[#allocation2 + $0x170] sm:$0xff]
    %v92 = vld [vmem:[#allocation2 + $0x178] sm:$0xff]
    %v93 = vld [vmem:[#allocation2 + $0x180] sm:$0xff]
    %v94 = vld [vmem:[#allocation2 + $0x188] sm:$0xff]
    %v95 = vld [vmem:[#allocation2 + $0x190] sm:$0xff]
    %v96 = vld [vmem:[#allocation2 + $0x198] sm:$0xff]
    %v97 = vld [vmem:[#allocation2 + $0x1a0] sm:$0xff]
    %v98 = vld [vmem:[#allocation2 + $0x1a8] sm:$0xff]
    %v99 = vld [vmem:[#allocation2 + $0x1b0] sm:$0xff]
    %v100 = vld [vmem:[#allocation2 + $0x1b8] sm:$0xff]
    %v101 = vld [vmem:[#allocation2 + $0x1c0] sm:$0xff]
    %v102 = vld [vmem:[#allocation2 + $0x1c8] sm:$0xff]
    %v103 = vld [vmem:[#allocation2 + $0x1d0] sm:$0xff]
    %v104 = vld [vmem:[#allocation2 + $0x1d8] sm:$0xff]
    %v105 = vld [vmem:[#allocation2 + $0x1e0] sm:$0xff]
    %v106 = vld [vmem:[#allocation2 + $0x1e8] sm:$0xff]
    %v107 = vld [vmem:[#allocation2 + $0x1f0] sm:$0xff]
    %v108 = vld [vmem:[#allocation2 + $0x1f8] sm:$0xff]
    %v109 = vld [vmem:[#allocation2 + $0x200] sm:$0xff]
    %v110 = vld [vmem:[#allocation2 + $0x208] sm:$0xff]
    %v111 = vld [vmem:[#allocation2 + $0x210] sm:$0xff]
    %v112 = vld [vmem:[#allocation2 + $0x218] sm:$0xff]
    %v113 = vld [vmem:[#allocation2 + $0x220] sm:$0xff]
    %v114 = vld [vmem:[#allocation2 + $0x228] sm:$0xff]
    %v115 = vld [vmem:[#allocation2 + $0x230] sm:$0xff]
    %v116 = vld [vmem:[#allocation2 + $0x238] sm:$0xff]
    %v117 = vld [vmem:[#allocation2 + $0x240] sm:$0xff]
    %v118 = vld [vmem:[#allocation2 + $0x248] sm:$0xff]
    %v119 = vld [vmem:[#allocation2 + $0x250] sm:$0xff]
    %v120 = vld [vmem:[#allocation2 + $0x258] sm:$0xff]
    %v121 = vld [vmem:[#allocation2 + $0x260] sm:$0xff]
    %v122 = vld [vmem:[#allocation2 + $0x268] sm:$0xff]
    %v123 = vld [vmem:[#allocation2 + $0x270] sm:$0xff]
    %v124 = vld [vmem:[#allocation2 + $0x278] sm:$0xff]
    %v125 = vld [vmem:[#allocation2 + $0x280] sm:$0xff]
    %v126 = vld [vmem:[#allocation2 + $0x288] sm:$0xff]
    %v127 = vld [vmem:[#allocation2 + $0x290] sm:$0xff]
    %v128 = vld [vmem:[#allocation2 + $0x298] sm:$0xff]
    %v129 = vld [vmem:[#allocation2 + $0x2a0] sm:$0xff]
    %v130 = vld [vmem:[#allocation2 + $0x2a8] sm:$0xff]
    %v131 = vld [vmem:[#allocation2 + $0x2b0] sm:$0xff]
    %v132 = vld [vmem:[#allocation2 + $0x2b8] sm:$0xff]
    %v133 = vld [vmem:[#allocation2 + $0x2c0] sm:$0xff]
    %v134 = vld [vmem:[#allocation2 + $0x2c8] sm:$0xff]
    %v135 = vld [vmem:[#allocation2 + $0x2d0] sm:$0xff]
    %v136 = vld [vmem:[#allocation2 + $0x2d8] sm:$0xff]
    %v137 = vld [vmem:[#allocation2 + $0x2e0] sm:$0xff]
    %v138 = vld [vmem:[#allocation2 + $0x2e8] sm:$0xff]
    %v139 = vld [vmem:[#allocation2 + $0x2f0] sm:$0xff]
    %v140 = vld [vmem:[#allocation2 + $0x2f8] sm:$0xff]
    %v141 = vld [vmem:[#allocation2 + $0x300] sm:$0xff]
    %v142 = vld [vmem:[#allocation2 + $0x308] sm:$0xff]
    %v143 = vld [vmem:[#allocation2 + $0x310] sm:$0xff]
    %v144 = vld [vmem:[#allocation2 + $0x318] sm:$0xff]
    %v145 = vld [vmem:[#allocation2 + $0x320] sm:$0xff]
    %v146 = vld [vmem:[#allocation2 + $0x328] sm:$0xff]
    %v147 = vld [vmem:[#allocation2 + $0x330] sm:$0xff]
    %v148 = vld [vmem:[#allocation2 + $0x338] sm:$0xff]
    %v149 = vld [vmem:[#allocation2 + $0x340] sm:$0xff]
    %v150 = vld [vmem:[#allocation2 + $0x348] sm:$0xff]
    %v151 = vld [vmem:[#allocation2 + $0x350] sm:$0xff]
    %v152 = vld [vmem:[#allocation2 + $0x358] sm:$0xff]
    %v153 = vld [vmem:[#allocation2 + $0x360] sm:$0xff]
    %v154 = vld [vmem:[#allocation2 + $0x368] sm:$0xff]
    %v155 = vld [vmem:[#allocation2 + $0x370] sm:$0xff]
    %v156 = vld [vmem:[#allocation2 + $0x378] sm:$0xff]
    %v157 = vld [vmem:[#allocation2 + $0x380] sm:$0xff]
    %v158 = vld [vmem:[#allocation2 + $0x388] sm:$0xff]
    %v159 = vld [vmem:[#allocation2 + $0x390] sm:$0xff]
    %v160 = vld [vmem:[#allocation2 + $0x398] sm:$0xff]
    %v161 = vld [vmem:[#allocation2 + $0x3a0] sm:$0xff]
    %v162 = vld [vmem:[#allocation2 + $0x3a8] sm:$0xff]
    %v163 = vld [vmem:[#allocation2 + $0x3b0] sm:$0xff]
    %v164 = vld [vmem:[#allocation2 + $0x3b8] sm:$0xff]
    %v165 = vld [vmem:[#allocation2 + $0x3c0] sm:$0xff]
    %v166 = vld [vmem:[#allocation2 + $0x3c8] sm:$0xff]
    %v167 = vld [vmem:[#allocation2 + $0x3d0] sm:$0xff]
    %v168 = vld [vmem:[#allocation2 + $0x3d8] sm:$0xff]
    %v169 = vld [vmem:[#allocation2 + $0x3e0] sm:$0xff]
    %v170 = vld [vmem:[#allocation2 + $0x3e8] sm:$0xff]
    %v171 = vld [vmem:[#allocation2 + $0x3f0] sm:$0xff]
    %v172 = vld [vmem:[#allocation2 + $0x3f8] sm:$0xff]
    %v173 = vld [vmem:[#allocation2 + $0x400] sm:$0xff]
    %v174 = vld [vmem:[#allocation2 + $0x408] sm:$0xff]
    %v175 = vld [vmem:[#allocation2 + $0x410] sm:$0xff]
    %v176 = vld [vmem:[#allocation2 + $0x418] sm:$0xff]
    %v177 = vld [vmem:[#allocation2 + $0x420] sm:$0xff]
    %v178 = vld [vmem:[#allocation2 + $0x428] sm:$0xff]
    %v179 = vld [vmem:[#allocation2 + $0x430] sm:$0xff]
    %v180 = vld [vmem:[#allocation2 + $0x438] sm:$0xff]
    %v181 = vld [vmem:[#allocation2 + $0x440] sm:$0xff]
    %v182 = vld [vmem:[#allocation2 + $0x448] sm:$0xff]
    %v183 = vld [vmem:[#allocation2 + $0x450] sm:$0xff]
    %v184 = vld [vmem:[#allocation2 + $0x458] sm:$0xff]
    %v185 = vld [vmem:[#allocation2 + $0x460] sm:$0xff]
    %v186 = vld [vmem:[#allocation2 + $0x468] sm:$0xff]
    %v187 = vld [vmem:[#allocation2 + $0x470] sm:$0xff]
    %v188 = vld [vmem:[#allocation2 + $0x478] sm:$0xff]
    %v189 = vld [vmem:[#allocation2 + $0x480] sm:$0xff]
    %v190 = vld [vmem:[#allocation2 + $0x488] sm:$0xff]
    %v191 = vld [vmem:[#allocation2 + $0x490] sm:$0xff]
    %v192 = vld [vmem:[#allocation2 + $0x498] sm:$0xff]
    %v193 = vld [vmem:[#allocation2 + $0x4a0] sm:$0xff]
    %v194 = vld [vmem:[#allocation2 + $0x4a8] sm:$0xff]
    %v195 = vld [vmem:[#allocation2 + $0x4b0] sm:$0xff]
    %v196 = vld [vmem:[#allocation2 + $0x4b8] sm:$0xff]
    %v197 = vld [vmem:[#allocation2 + $0x4c0] sm:$0xff]
    %v198 = vld [vmem:[#allocation2 + $0x4c8] sm:$0xff]
    %v199 = vld [vmem:[#allocation2 + $0x4d0] sm:$0xff]
    %v200 = vld [vmem:[#allocation2 + $0x4d8] sm:$0xff]
    %v201 = vld [vmem:[#allocation2 + $0x4e0] sm:$0xff]
    %v202 = vld [vmem:[#allocation2 + $0x4e8] sm:$0xff]
    %v203 = vld [vmem:[#allocation2 + $0x4f0] sm:$0xff]
    %v204 = vld [vmem:[#allocation2 + $0x4f8] sm:$0xff]
    %v205 = vld [vmem:[#allocation2 + $0x500] sm:$0xff]
    %v206 = vld [vmem:[#allocation2 + $0x508] sm:$0xff]
    %v207 = vld [vmem:[#allocation2 + $0x510] sm:$0xff]
    %v208 = vld [vmem:[#allocation2 + $0x518] sm:$0xff]
    %v209 = vld [vmem:[#allocation2 + $0x520] sm:$0xff]
    %v210 = vld [vmem:[#allocation2 + $0x528] sm:$0xff]
    %v211 = vld [vmem:[#allocation2 + $0x530] sm:$0xff]
    %v212 = vld [vmem:[#allocation2 + $0x538] sm:$0xff]
    %v213 = vld [vmem:[#allocation2 + $0x540] sm:$0xff]
    %v214 = vld [vmem:[#allocation2 + $0x548] sm:$0xff]
    %v215 = vld [vmem:[#allocation2 + $0x550] sm:$0xff]
    %v216 = vld [vmem:[#allocation2 + $0x558] sm:$0xff]
    %v217 = vld [vmem:[#allocation2 + $0x560] sm:$0xff]
    %v218 = vld [vmem:[#allocation2 + $0x568] sm:$0xff]
    %v219 = vld [vmem:[#allocation2 + $0x570] sm:$0xff]
    %v220 = vld [vmem:[#allocation2 + $0x578] sm:$0xff]
    %v221 = vld [vmem:[#allocation2 + $0x580] sm:$0xff]
    %v222 = vld [vmem:[#allocation2 + $0x588] sm:$0xff]
    %v223 = vld [vmem:[#allocation2 + $0x590] sm:$0xff]
    %v224 = vld [vmem:[#allocation2 + $0x598] sm:$0xff]
    %v225 = vld [vmem:[#allocation2 + $0x5a0] sm:$0xff]
    %v226 = vld [vmem:[#allocation2 + $0x5a8] sm:$0xff]
    %v227 = vld [vmem:[#allocation2 + $0x5b0] sm:$0xff]
    %v228 = vld [vmem:[#allocation2 + $0x5b8] sm:$0xff]
    %v229 = vld [vmem:[#allocation2 + $0x5c0] sm:$0xff]
    %v230 = vld [vmem:[#allocation2 + $0x5c8] sm:$0xff]
    %v231 = vld [vmem:[#allocation2 + $0x5d0] sm:$0xff]
    %v232 = vld [vmem:[#allocation2 + $0x5d8] sm:$0xff]
    %v233 = vld [vmem:[#allocation2 + $0x5e0] sm:$0xff]
    %v234 = vld [vmem:[#allocation2 + $0x5e8] sm:$0xff]
    %v235 = vld [vmem:[#allocation2 + $0x5f0] sm:$0xff]
    %v236 = vld [vmem:[#allocation2 + $0x5f8] sm:$0xff]
    %v237 = vld [vmem:[#allocation2 + $0x600] sm:$0xff]
    %v238 = vld [vmem:[#allocation2 + $0x608] sm:$0xff]
    %v239 = vld [vmem:[#allocation2 + $0x610] sm:$0xff]
    %v240 = vld [vmem:[#allocation2 + $0x618] sm:$0xff]
    %v241 = vld [vmem:[#allocation2 + $0x620] sm:$0xff]
    %v242 = vld [vmem:[#allocation2 + $0x628] sm:$0xff]
    %v243 = vld [vmem:[#allocation2 + $0x630] sm:$0xff]
    %v244 = vld [vmem:[#allocation2 + $0x638] sm:$0xff]
    %v245 = vld [vmem:[#allocation2 + $0x640] sm:$0xff]
    %v246 = vld [vmem:[#allocation2 + $0x648] sm:$0xff]
    %v247 = vld [vmem:[#allocation2 + $0x650] sm:$0xff]
    %v248 = vld [vmem:[#allocation2 + $0x658] sm:$0xff]
    %v249 = vld [vmem:[#allocation2 + $0x660] sm:$0xff]
    %v250 = vld [vmem:[#allocation2 + $0x668] sm:$0xff]
    %v251 = vld [vmem:[#allocation2 + $0x670] sm:$0xff]
    %v252 = vld [vmem:[#allocation2 + $0x678] sm:$0xff]
    %v253 = vld [vmem:[#allocation2 + $0x680] sm:$0xff]
    %v254 = vld [vmem:[#allocation2 + $0x688] sm:$0xff]
    %v255 = vld [vmem:[#allocation2 + $0x690] sm:$0xff]
    %v256 = vld [vmem:[#allocation2 + $0x698] sm:$0xff]
    %v257 = vld [vmem:[#allocation2 + $0x6a0] sm:$0xff]
    %v258 = vld [vmem:[#allocation2 + $0x6a8] sm:$0xff]
    %v259 = vld [vmem:[#allocation2 + $0x6b0] sm:$0xff]
    %v260 = vld [vmem:[#allocation2 + $0x6b8] sm:$0xff]
    %v261 = vld [vmem:[#allocation2 + $0x6c0] sm:$0xff]
    %v262 = vld [vmem:[#allocation2 + $0x6c8] sm:$0xff]
    %v263 = vld [vmem:[#allocation2 + $0x6d0] sm:$0xff]
    %v264 = vld [vmem:[#allocation2 + $0x6d8] sm:$0xff]
    %v265 = vld [vmem:[%s2] sm:$0x3]
    %v267 = vperm.slane %v265, 0
    %v268 = vperm.slane %v265, 1
    %273 = vst [vmem:[#allocation1] ss:$4 sm:$0xff] %v43
    %s274 = scalar_lea.vmem [#allocation1], 32
    %275 = vst [vmem:[%s274] ss:$4 sm:$0xff] %v44
    %v276 = vld.sshfl [vmem:[#allocation1] sm:$0xff pattern:$0x73625140]
    %v277 = vld.sshfl [vmem:[#allocation1 + $0x8] sm:$0xff pattern:$0x73625140]
    %v278 = vld.sshfl [vmem:[#allocation1 + $0x10] sm:$0xff pattern:$0x73625140]
    %v279 = vld.sshfl [vmem:[#allocation1 + $0x18] sm:$0xff pattern:$0x73625140]
    %v280 = vld.sshfl [vmem:[#allocation1 + $0x20] sm:$0xff pattern:$0x73625140]
    %v281 = vld.sshfl [vmem:[#allocation1 + $0x28] sm:$0xff pattern:$0x73625140]
    %v282 = vld.sshfl [vmem:[#allocation1 + $0x30] sm:$0xff pattern:$0x73625140]
    %vm289 = vcmask 916480
    %v290 = vsel %vm289, %v282, 0
    %292 = vmatpush.msra.mxu0 %v75
    %293 = vmatpush.msra.mxu0 %v73
    %294 = vmatpush.msra.mxu0 %v71
    %295 = vmatpush.msra.mxu0 %v69
    %296 = vmatpush.msra.mxu0 %v67
    %297 = vmatpush.msra.mxu0 %v65
    %298 = vmatpush.msra.mxu0 %v63
    %299 = vmatpush.msra.mxu0 %v61
    %300 = vmatpush.msra.mxu0 %v59
    %301 = vmatpush.msra.mxu0 %v57
    %302 = vmatpush.msra.mxu0 %v55
    %303 = vmatpush.msra.mxu0 %v53
    %304 = vmatpush.msra.mxu0 %v51
    %305 = vmatpush.msra.mxu0 %v49
    %306 = vmatpush.msra.mxu0 %v47
    %307 = vmatpush.msra.mxu0 %v45
    %308 = vmatmul.f32.gmra.mxu0 %v276
    %v309 = vpop.f32.mrf.mxu0
    %v310 = vadd.f32 %v267, %v309
    %311 = vdwg.mxu0
    %312 = vmatpush.msra.mxu0 %v107
    %313 = vmatpush.msra.mxu0 %v105
    %314 = vmatpush.msra.mxu0 %v103
    %315 = vmatpush.msra.mxu0 %v101
    %316 = vmatpush.msra.mxu0 %v99
    %317 = vmatpush.msra.mxu0 %v97
    %318 = vmatpush.msra.mxu0 %v95
    %319 = vmatpush.msra.mxu0 %v93
    %320 = vmatpush.msra.mxu0 %v91
    %321 = vmatpush.msra.mxu0 %v89
    %322 = vmatpush.msra.mxu0 %v87
    %323 = vmatpush.msra.mxu0 %v85
    %324 = vmatpush.msra.mxu0 %v83
    %325 = vmatpush.msra.mxu0 %v81
    %326 = vmatpush.msra.mxu0 %v79
    %327 = vmatpush.msra.mxu0 %v77
    %328 = vmatmul.f32.gmra.mxu0 %v277
    %v329 = vpop.f32.mrf.mxu0
    %v330 = vadd.f32 %v310, %v329
    %331 = vdwg.mxu0
    %332 = vmatpush.msra.mxu0 %v139
    %333 = vmatpush.msra.mxu0 %v137
    %334 = vmatpush.msra.mxu0 %v135
    %335 = vmatpush.msra.mxu0 %v133
    %336 = vmatpush.msra.mxu0 %v131
    %337 = vmatpush.msra.mxu0 %v129
    %338 = vmatpush.msra.mxu0 %v127
    %339 = vmatpush.msra.mxu0 %v125
    %340 = vmatpush.msra.mxu0 %v123
    %341 = vmatpush.msra.mxu0 %v121
    %342 = vmatpush.msra.mxu0 %v119
    %343 = vmatpush.msra.mxu0 %v117
    %344 = vmatpush.msra.mxu0 %v115
    %345 = vmatpush.msra.mxu0 %v113
    %346 = vmatpush.msra.mxu0 %v111
    %347 = vmatpush.msra.mxu0 %v109
    %348 = vmatmul.f32.gmra.mxu0 %v278
    %v349 = vpop.f32.mrf.mxu0
    %v350 = vadd.f32 %v330, %v349
    %351 = vdwg.mxu0
    %352 = vmatpush.msra.mxu0 %v171
    %353 = vmatpush.msra.mxu0 %v169
    %354 = vmatpush.msra.mxu0 %v167
    %355 = vmatpush.msra.mxu0 %v165
    %356 = vmatpush.msra.mxu0 %v163
    %357 = vmatpush.msra.mxu0 %v161
    %358 = vmatpush.msra.mxu0 %v159
    %359 = vmatpush.msra.mxu0 %v157
    %360 = vmatpush.msra.mxu0 %v155
    %361 = vmatpush.msra.mxu0 %v153
    %362 = vmatpush.msra.mxu0 %v151
    %363 = vmatpush.msra.mxu0 %v149
    %364 = vmatpush.msra.mxu0 %v147
    %365 = vmatpush.msra.mxu0 %v145
    %366 = vmatpush.msra.mxu0 %v143
    %367 = vmatpush.msra.mxu0 %v141
    %368 = vmatmul.f32.gmra.mxu0 %v279
    %v369 = vpop.f32.mrf.mxu0
    %v370 = vadd.f32 %v350, %v369
    %371 = vdwg.mxu0
    %372 = vmatpush.msra.mxu0 %v203
    %373 = vmatpush.msra.mxu0 %v201
    %374 = vmatpush.msra.mxu0 %v199
    %375 = vmatpush.msra.mxu0 %v197
    %376 = vmatpush.msra.mxu0 %v195
    %377 = vmatpush.msra.mxu0 %v193
    %378 = vmatpush.msra.mxu0 %v191
    %379 = vmatpush.msra.mxu0 %v189
    %380 = vmatpush.msra.mxu0 %v187
    %381 = vmatpush.msra.mxu0 %v185
    %382 = vmatpush.msra.mxu0 %v183
    %383 = vmatpush.msra.mxu0 %v181
    %384 = vmatpush.msra.mxu0 %v179
    %385 = vmatpush.msra.mxu0 %v177
    %386 = vmatpush.msra.mxu0 %v175
    %387 = vmatpush.msra.mxu0 %v173
    %388 = vmatmul.f32.gmra.mxu0 %v280
    %v389 = vpop.f32.mrf.mxu0
    %v390 = vadd.f32 %v370, %v389
    %391 = vdwg.mxu0
    %392 = vmatpush.msra.mxu0 %v235
    %393 = vmatpush.msra.mxu0 %v233
    %394 = vmatpush.msra.mxu0 %v231
    %395 = vmatpush.msra.mxu0 %v229
    %396 = vmatpush.msra.mxu0 %v227
    %397 = vmatpush.msra.mxu0 %v225
    %398 = vmatpush.msra.mxu0 %v223
    %399 = vmatpush.msra.mxu0 %v221
    %400 = vmatpush.msra.mxu0 %v219
    %401 = vmatpush.msra.mxu0 %v217
    %402 = vmatpush.msra.mxu0 %v215
    %403 = vmatpush.msra.mxu0 %v213
    %404 = vmatpush.msra.mxu0 %v211
    %405 = vmatpush.msra.mxu0 %v209
    %406 = vmatpush.msra.mxu0 %v207
    %407 = vmatpush.msra.mxu0 %v205
    %408 = vmatmul.f32.gmra.mxu0 %v281
    %v409 = vpop.f32.mrf.mxu0
    %v410 = vadd.f32 %v390, %v409
    %411 = vdwg.mxu0
    %412 = vmatpush.msra.mxu0 0.0
    %413 = vmatpush.msra.mxu0 0.0
    %414 = vmatpush.msra.mxu0 %v263
    %415 = vmatpush.msra.mxu0 %v261
    %416 = vmatpush.msra.mxu0 %v259
    %417 = vmatpush.msra.mxu0 %v257
    %418 = vmatpush.msra.mxu0 %v255
    %419 = vmatpush.msra.mxu0 %v253
    %420 = vmatpush.msra.mxu0 %v251
    %421 = vmatpush.msra.mxu0 %v249
    %422 = vmatpush.msra.mxu0 %v247
    %423 = vmatpush.msra.mxu0 %v245
    %424 = vmatpush.msra.mxu0 %v243
    %425 = vmatpush.msra.mxu0 %v241
    %426 = vmatpush.msra.mxu0 %v239
    %427 = vmatpush.msra.mxu0 %v237
    %428 = vmatmul.f32.gmra.mxu0 %v290
    %v429 = vpop.f32.mrf.mxu0
    %v430 = vadd.f32 %v410, %v429
    %431 = vdwg.mxu0
    %432 = vmatpush.msra.mxu0 %v76
    %433 = vmatpush.msra.mxu0 %v74
    %434 = vmatpush.msra.mxu0 %v72
    %435 = vmatpush.msra.mxu0 %v70
    %436 = vmatpush.msra.mxu0 %v68
    %437 = vmatpush.msra.mxu0 %v66
    %438 = vmatpush.msra.mxu0 %v64
    %439 = vmatpush.msra.mxu0 %v62
    %440 = vmatpush.msra.mxu0 %v60
    %441 = vmatpush.msra.mxu0 %v58
    %442 = vmatpush.msra.mxu0 %v56
    %443 = vmatpush.msra.mxu0 %v54
    %444 = vmatpush.msra.mxu0 %v52
    %445 = vmatpush.msra.mxu0 %v50
    %446 = vmatpush.msra.mxu0 %v48
    %447 = vmatpush.msra.mxu0 %v46
    %448 = vmatmul.f32.gmra.mxu0 %v276
    %v449 = vpop.f32.mrf.mxu0
    %v450 = vadd.f32 %v268, %v449
    %451 = vdwg.mxu0
    %452 = vmatpush.msra.mxu0 %v108
    %453 = vmatpush.msra.mxu0 %v106
    %454 = vmatpush.msra.mxu0 %v104
    %455 = vmatpush.msra.mxu0 %v102
    %456 = vmatpush.msra.mxu0 %v100
    %457 = vmatpush.msra.mxu0 %v98
    %458 = vmatpush.msra.mxu0 %v96
    %459 = vmatpush.msra.mxu0 %v94
    %460 = vmatpush.msra.mxu0 %v92
    %461 = vmatpush.msra.mxu0 %v90
    %462 = vmatpush.msra.mxu0 %v88
    %463 = vmatpush.msra.mxu0 %v86
    %464 = vmatpush.msra.mxu0 %v84
    %465 = vmatpush.msra.mxu0 %v82
    %466 = vmatpush.msra.mxu0 %v80
    %467 = vmatpush.msra.mxu0 %v78
    %468 = vmatmul.f32.gmra.mxu0 %v277
    %v469 = vpop.f32.mrf.mxu0
    %v470 = vadd.f32 %v450, %v469
    %471 = vdwg.mxu0
    %472 = vmatpush.msra.mxu0 %v140
    %473 = vmatpush.msra.mxu0 %v138
    %474 = vmatpush.msra.mxu0 %v136
    %475 = vmatpush.msra.mxu0 %v134
    %476 = vmatpush.msra.mxu0 %v132
    %477 = vmatpush.msra.mxu0 %v130
    %478 = vmatpush.msra.mxu0 %v128
    %479 = vmatpush.msra.mxu0 %v126
    %480 = vmatpush.msra.mxu0 %v124
    %481 = vmatpush.msra.mxu0 %v122
    %482 = vmatpush.msra.mxu0 %v120
    %483 = vmatpush.msra.mxu0 %v118
    %484 = vmatpush.msra.mxu0 %v116
    %485 = vmatpush.msra.mxu0 %v114
    %486 = vmatpush.msra.mxu0 %v112
    %487 = vmatpush.msra.mxu0 %v110
    %488 = vmatmul.f32.gmra.mxu0 %v278
    %v489 = vpop.f32.mrf.mxu0
    %v490 = vadd.f32 %v470, %v489
    %491 = vdwg.mxu0
    %492 = vmatpush.msra.mxu0 %v172
    %493 = vmatpush.msra.mxu0 %v170
    %494 = vmatpush.msra.mxu0 %v168
    %495 = vmatpush.msra.mxu0 %v166
    %496 = vmatpush.msra.mxu0 %v164
    %497 = vmatpush.msra.mxu0 %v162
    %498 = vmatpush.msra.mxu0 %v160
    %499 = vmatpush.msra.mxu0 %v158
    %500 = vmatpush.msra.mxu0 %v156
    %501 = vmatpush.msra.mxu0 %v154
    %502 = vmatpush.msra.mxu0 %v152
    %503 = vmatpush.msra.mxu0 %v150
    %504 = vmatpush.msra.mxu0 %v148
    %505 = vmatpush.msra.mxu0 %v146
    %506 = vmatpush.msra.mxu0 %v144
    %507 = vmatpush.msra.mxu0 %v142
    %508 = vmatmul.f32.gmra.mxu0 %v279
    %v509 = vpop.f32.mrf.mxu0
    %v510 = vadd.f32 %v490, %v509
    %511 = vdwg.mxu0
    %512 = vmatpush.msra.mxu0 %v204
    %513 = vmatpush.msra.mxu0 %v202
    %514 = vmatpush.msra.mxu0 %v200
    %515 = vmatpush.msra.mxu0 %v198
    %516 = vmatpush.msra.mxu0 %v196
    %517 = vmatpush.msra.mxu0 %v194
    %518 = vmatpush.msra.mxu0 %v192
    %519 = vmatpush.msra.mxu0 %v190
    %520 = vmatpush.msra.mxu0 %v188
    %521 = vmatpush.msra.mxu0 %v186
    %522 = vmatpush.msra.mxu0 %v184
    %523 = vmatpush.msra.mxu0 %v182
    %524 = vmatpush.msra.mxu0 %v180
    %525 = vmatpush.msra.mxu0 %v178
    %526 = vmatpush.msra.mxu0 %v176
    %527 = vmatpush.msra.mxu0 %v174
    %528 = vmatmul.f32.gmra.mxu0 %v280
    %v529 = vpop.f32.mrf.mxu0
    %v530 = vadd.f32 %v510, %v529
    %531 = vdwg.mxu0
    %532 = vmatpush.msra.mxu0 %v236
    %533 = vmatpush.msra.mxu0 %v234
    %534 = vmatpush.msra.mxu0 %v232
    %535 = vmatpush.msra.mxu0 %v230
    %536 = vmatpush.msra.mxu0 %v228
    %537 = vmatpush.msra.mxu0 %v226
    %538 = vmatpush.msra.mxu0 %v224
    %539 = vmatpush.msra.mxu0 %v222
    %540 = vmatpush.msra.mxu0 %v220
    %541 = vmatpush.msra.mxu0 %v218
    %542 = vmatpush.msra.mxu0 %v216
    %543 = vmatpush.msra.mxu0 %v214
    %544 = vmatpush.msra.mxu0 %v212
    %545 = vmatpush.msra.mxu0 %v210
    %546 = vmatpush.msra.mxu0 %v208
    %547 = vmatpush.msra.mxu0 %v206
    %548 = vmatmul.f32.gmra.mxu0 %v281
    %v549 = vpop.f32.mrf.mxu0
    %v550 = vadd.f32 %v530, %v549
    %551 = vdwg.mxu0
    %552 = vmatpush.msra.mxu0 0.0
    %553 = vmatpush.msra.mxu0 0.0
    %554 = vmatpush.msra.mxu0 %v264
    %555 = vmatpush.msra.mxu0 %v262
    %556 = vmatpush.msra.mxu0 %v260
    %557 = vmatpush.msra.mxu0 %v258
    %558 = vmatpush.msra.mxu0 %v256
    %559 = vmatpush.msra.mxu0 %v254
    %560 = vmatpush.msra.mxu0 %v252
    %561 = vmatpush.msra.mxu0 %v250
    %562 = vmatpush.msra.mxu0 %v248
    %563 = vmatpush.msra.mxu0 %v246
    %564 = vmatpush.msra.mxu0 %v244
    %565 = vmatpush.msra.mxu0 %v242
    %566 = vmatpush.msra.mxu0 %v240
    %567 = vmatpush.msra.mxu0 %v238
    %568 = vmatmul.f32.gmra.mxu0 %v290
    %v569 = vpop.f32.mrf.mxu0
    %v570 = vadd.f32 %v550, %v569
    %571 = vdwg.mxu0
    %vm572 = vcmp.gt.f32.partialorder %v430, 0.0
    %vm573 = vcmp.gt.f32.partialorder %v570, 0.0
    %v574 = vmin.f32 %v430, 0.0
    %v575 = vmin.f32 %v570, 0.0
    %v576 = vmul.f32 %v574, 1.442695
    %v577 = vpow.pop %v576
    %v578 = vmul.f32 %v575, 1.442695
    %v579 = vpow.pop %v578
    %v580 = vsub.f32 %v577, 1.0
    %v581 = vsub.f32 %v579, 1.0
    %v582 = vsel %vm572, %v430, %v580
    %v583 = vsel %vm573, %v570, %v581
    %v584 = vld [vmem:[%s3] sm:$0xff]
    %v585 = vld [vmem:[%s3 + $0x8] sm:$0xff]
    %v586 = vld [vmem:[%s3 + $0x10] sm:$0xff]
    %v587 = vld [vmem:[%s3 + $0x18] sm:$0xff]
    %v588 = vld [vmem:[%s3 + $0x20] sm:$0xff]
    %v589 = vld [vmem:[%s3 + $0x28] sm:$0xff]
    %v590 = vld [vmem:[%s3 + $0x30] sm:$0xff]
    %v591 = vld [vmem:[%s3 + $0x38] sm:$0xff]
    %v592 = vld [vmem:[%s3 + $0x40] sm:$0xff]
    %v593 = vld [vmem:[%s3 + $0x48] sm:$0xff]
    %v594 = vld [vmem:[%s3 + $0x50] sm:$0xff]
    %v595 = vld [vmem:[%s3 + $0x58] sm:$0xff]
    %v596 = vld [vmem:[%s3 + $0x60] sm:$0xff]
    %v597 = vld [vmem:[%s3 + $0x68] sm:$0xff]
    %v598 = vld [vmem:[%s3 + $0x70] sm:$0xff]
    %v599 = vld [vmem:[%s3 + $0x78] sm:$0xff]
    %v600 = vld [vmem:[%s3 + $0x80] sm:$0xff]
    %v601 = vld [vmem:[%s3 + $0x88] sm:$0xff]
    %v602 = vld [vmem:[%s3 + $0x90] sm:$0xff]
    %v603 = vld [vmem:[%s3 + $0x98] sm:$0xff]
    %v604 = vld [vmem:[%s3 + $0xa0] sm:$0xff]
    %v605 = vld [vmem:[%s3 + $0xa8] sm:$0xff]
    %v606 = vld [vmem:[%s3 + $0xb0] sm:$0xff]
    %v607 = vld [vmem:[%s3 + $0xb8] sm:$0xff]
    %v608 = vld [vmem:[%s3 + $0xc0] sm:$0xff]
    %v609 = vld [vmem:[%s3 + $0xc8] sm:$0xff]
    %v610 = vld [vmem:[%s3 + $0xd0] sm:$0xff]
    %v611 = vld [vmem:[%s3 + $0xd8] sm:$0xff]
    %v612 = vld [vmem:[%s3 + $0xe0] sm:$0xff]
    %v613 = vld [vmem:[%s3 + $0xe8] sm:$0xff]
    %v614 = vld [vmem:[%s3 + $0xf0] sm:$0xff]
    %v615 = vld [vmem:[%s3 + $0xf8] sm:$0xff]
    %v616 = vld [vmem:[%s4] sm:$0x1]
    %v618 = vperm.slane %v616, 0
    %620 = vmatpush.msra.mxu0 %v599
    %621 = vmatpush.msra.mxu0 %v598
    %622 = vmatpush.msra.mxu0 %v597
    %623 = vmatpush.msra.mxu0 %v596
    %624 = vmatpush.msra.mxu0 %v595
    %625 = vmatpush.msra.mxu0 %v594
    %626 = vmatpush.msra.mxu0 %v593
    %627 = vmatpush.msra.mxu0 %v592
    %628 = vmatpush.msra.mxu0 %v591
    %629 = vmatpush.msra.mxu0 %v590
    %630 = vmatpush.msra.mxu0 %v589
    %631 = vmatpush.msra.mxu0 %v588
    %632 = vmatpush.msra.mxu0 %v587
    %633 = vmatpush.msra.mxu0 %v586
    %634 = vmatpush.msra.mxu0 %v585
    %635 = vmatpush.msra.mxu0 %v584
    %636 = vmatmul.f32.gmra.mxu0 %v582
    %v637 = vpop.f32.mrf.mxu0
    %v638 = vadd.f32 %v618, %v637
    %639 = vdwg.mxu0
    %640 = vmatpush.msra.mxu0 %v615
    %641 = vmatpush.msra.mxu0 %v614
    %642 = vmatpush.msra.mxu0 %v613
    %643 = vmatpush.msra.mxu0 %v612
    %644 = vmatpush.msra.mxu0 %v611
    %645 = vmatpush.msra.mxu0 %v610
    %646 = vmatpush.msra.mxu0 %v609
    %647 = vmatpush.msra.mxu0 %v608
    %648 = vmatpush.msra.mxu0 %v607
    %649 = vmatpush.msra.mxu0 %v606
    %650 = vmatpush.msra.mxu0 %v605
    %651 = vmatpush.msra.mxu0 %v604
    %652 = vmatpush.msra.mxu0 %v603
    %653 = vmatpush.msra.mxu0 %v602
    %654 = vmatpush.msra.mxu0 %v601
    %655 = vmatpush.msra.mxu0 %v600
    %656 = vmatmul.f32.gmra.mxu0 %v583
    %v657 = vpop.f32.mrf.mxu0
    %v658 = vadd.f32 %v638, %v657
    %659 = vdwg.mxu0
    %vm660 = vcmp.gt.f32.partialorder %v658, 0.0
    %v661 = vmin.f32 %v658, 0.0
    %v662 = vmul.f32 %v661, 1.442695
    %v663 = vpow.pop %v662
    %v664 = vsub.f32 %v663, 1.0
    %v665 = vsel %vm660, %v658, %v664
    %v666 = vld [vmem:[%s5] sm:$0xff]
    %v667 = vld [vmem:[%s5 + $0x8] sm:$0xff]
    %v668 = vld [vmem:[%s5 + $0x10] sm:$0xff]
    %v669 = vld [vmem:[%s5 + $0x18] sm:$0xff]
    %v670 = vld [vmem:[%s6] sm:$0x1]
    %v672 = vperm.slane %v670, 0
    %vm674 = vcmask 261120
    %v676 = vsel %vm674, %v665, 0
    %678 = vmatpush.msra.mxu0 0.0
    %679 = vmatpush.msra.mxu0 0.0
    %680 = vmatpush.msra.mxu0 0.0
    %681 = vmatpush.msra.mxu0 0.0
    %682 = vmatpush.msra.mxu0 0.0
    %683 = vmatpush.msra.mxu0 0.0
    %684 = vmatpush.msra.mxu0 0.0
    %685 = vmatpush.msra.mxu0 0.0
    %686 = vmatpush.msra.mxu0 0.0
    %687 = vmatpush.msra.mxu0 0.0
    %688 = vmatpush.msra.mxu0 0.0
    %689 = vmatpush.msra.mxu0 0.0
    %690 = vmatpush.msra.mxu0 %v669
    %691 = vmatpush.msra.mxu0 %v668
    %692 = vmatpush.msra.mxu0 %v667
    %693 = vmatpush.msra.mxu0 %v666
    %694 = vmatmul.f32.gmra.mxu0 %v676
    %v695 = vpop.f32.mrf.mxu0
    %v696 = vadd.f32 %v672, %v695
    %697 = vdwg.mxu0
    %vm698 = vcmask 25600
    %699 = vst.msk [vmem:[#allocation5] sm:$0x3] %vm698, %v696
    // Predicated region
    $region34: #{conformer_forward.5} parent=1 // pred_check
      _
    $region35: #{conformer_forward.5} parent=1 // pred_check_branch
      %701 = sbr.rel (0) target = $region37
    $region36: #{conformer_forward.5} parent=1 // pred_region
      %703 = vsyncadd [#allocation4], 0
      %s705 = sshll.u32 [#allocation5], 4
      %s706 = int_to_ptr.vmem [resolvable:$true] %s705
      %s707 = sshll.u32 %s7, 4
      %s708 = int_to_ptr.hbm [resolvable:$true] %s707
      %710 = dma.vmem_to_hbm [thread:$0]  %s706, 32, %s708, [#allocation4]
    $region37: #{conformer_forward.5} parent=1 // pred_fallthru
      _
    // Predicated region
    $region38: #{conformer_forward.5} parent=1 // pred_check
      _
    $region39: #{conformer_forward.5} parent=1 // pred_check_branch
      %712 = sbr.rel (0) target = $region41
    $region40: #{conformer_forward.5} parent=1 // pred_region
      %714 = dma.done [#allocation4], 32
    $region41: #{conformer_forward.5} parent=1 // pred_fallthru
      _
    %715 = vsyncpa [#allocation3], 1
    %716 = vsyncpa [#allocation4], 1

// kernel: conformer_forward.4
$region0: #{conformer_forward.4}
  #allocation0 [shape = 'u32[]', space=smem, size = 0x4, offset = 0x4, fixed_abs, tag = 'smem constant byte address 0x4 - core index']
  #allocation1 [shape = 'u32[72,128]{1,0:T(1,128)}', space=vmem, size = 0x9000, scoped, tag = 'internal scratch']
  %s0 = inlined_call_operand.vmem [shape: f32[2,22,40], index: 0, kind: input, shape index: {}]
  %s1 = inlined_call_operand.vmem [shape: f32[6,1,40], index: 1, kind: input, shape index: {}]
  %s2 = inlined_call_operand.vmem [shape: f32[6,1,40], index: 2, kind: input, shape index: {}]
  %s3 = inlined_call_operand.vmem [shape: f32[6,40,120], index: 3, kind: input, shape index: {}]
  %s4 = inlined_call_operand.vmem [shape: f32[6,1,120], index: 4, kind: input, shape index: {}]
  %s5 = inlined_call_operand.vmem [shape: f32[6,40,40], index: 5, kind: input, shape index: {}]
  %s6 = inlined_call_operand.vmem [shape: f32[6,1,40], index: 6, kind: input, shape index: {}]
  %s7 = inlined_call_operand.vmem [shape: f32[6,1,40], index: 7, kind: input, shape index: {}]
  %s8 = inlined_call_operand.vmem [shape: f32[6,1,40], index: 8, kind: input, shape index: {}]
  %s9 = inlined_call_operand.vmem [shape: f32[6,40,160], index: 9, kind: input, shape index: {}]
  %s10 = inlined_call_operand.vmem [shape: f32[6,1,160], index: 10, kind: input, shape index: {}]
  %s11 = inlined_call_operand.vmem [shape: f32[6,160,40], index: 11, kind: input, shape index: {}]
  %s12 = inlined_call_operand.vmem [shape: f32[6,1,40], index: 12, kind: input, shape index: {}]
  %s13 = inlined_call_operand.vmem [shape: f32[2,22,40], index: 13, kind: output, shape index: {}]
  %s14 = sld [smem:[#allocation0]]
  $region89: #{conformer_forward.4} parent=0
    _
  %s16 = ssub.s32 1, %s14
  %s17 = scalar_select 0, %s16, %s14
  loop: start=0, step=1, limit=14
  $region2: #{conformer_forward.4} parent=0 // loop_pre_header
    _
  $region3: #{conformer_forward.4} parent=0 // loop_header
    %s19 = sphi 0, %s23
    %p20 = scmp.ge.s32.totalorder %s19, 14
    %s26 = sphi 0, %s38
    %s27 = sphi 0, %s34
    %s28 = sphi 0, %s26
    %s29 = sphi 0, %s27
    %s30 = sphi 0, %s28
    %s31 = sphi 0, %s29
    %s41 = sphi 0, %s43
    %s44 = sphi 0, %s41
    %s45 = sphi 0, %s44
    %s61 = sphi 0, %s45
    %s67 = sphi 0, %s69
    %s70 = sphi 0, %s67
    %s71 = sphi 0, %s70
    %s87 = sphi 0, %s71
    %s93 = sphi 0, %s95
    %s96 = sphi 0, %s93
    %s97 = sphi 0, %s96
    %s113 = sphi 0, %s97
    %s119 = sphi 0, %s121
    %s122 = sphi 0, %s119
    %s123 = sphi 0, %s122
    %s139 = sphi 0, %s123
    %s145 = sphi 0, %s147
    %s148 = sphi 0, %s145
    %s149 = sphi 0, %s148
    %s165 = sphi 0, %s149
    %s171 = sphi 0, %s173
    %s174 = sphi 0, %s171
    %s175 = sphi 0, %s174
    %s191 = sphi 0, %s175
    %s197 = sphi 0, %s199
    %s200 = sphi 0, %s197
    %s201 = sphi 0, %s200
    %s217 = sphi 0, %s201
    %s223 = sphi 0, %s225
    %s226 = sphi 0, %s223
    %s227 = sphi 0, %s226
    %s243 = sphi 0, %s227
    %s249 = sphi 0, %s251
    %s252 = sphi 0, %s249
    %s253 = sphi 0, %s252
    %s269 = sphi 0, %s253
    %s275 = sphi 0, %s277
    %s278 = sphi 0, %s275
    %s279 = sphi 0, %s278
    %s295 = sphi 0, %s279
    %s301 = sphi 0, %s303
    %s304 = sphi 0, %s301
    %s305 = sphi 0, %s304
    %s321 = sphi 0, %s305
    %s327 = sphi 0, %s329
    %s330 = sphi 0, %s327
    %s331 = sphi 0, %s330
    %s347 = sphi 0, %s331
    %s353 = sphi 0, %s355
    %s356 = sphi 0, %s353
    %s357 = sphi 0, %s356
    %s373 = sphi 0, %s357
    %s379 = sphi 0, %s381
    %s382 = sphi 0, %s379
    %s383 = sphi 0, %s382
    %s399 = sphi 0, %s383
  $region4: #{conformer_forward.4} parent=0 // loop_header_branch
    %22 = sbr.rel (%p20) target = $region8
  $region5: #{conformer_forward.4} parent=0 // loop_body
    %s24 = ssub.s32 %s19, 1
    %s25 = ssub.s32 %s19, 2
    %s32 = sadd.s32 1, %s27
    %p33 = scmp.ge.s32.totalorder %s32, 6
    %s34 = scalar_select %p33, 0, %s32
    %s35 = sadd.s32 1, %s26
    %s36 = scalar_select %p33, %s35, %s26
    %p37 = scmp.ge.s32.totalorder %s36, 2
    %s38 = scalar_select %p37, 0, %s36
    %s39 = ssub.s32 %s26, %s38
    %p40 = scmp.eq.s32.totalorder %s39, 0
    %s42 = sadd.s32 %s41, 1
    %s43 = scalar_select %p40, %s41, %s42
    %p46 = pneg %p40
    %p47 = scmp.eq.s32.totalorder %s19, 11
    %p48 = por %p46, %p47
    %p49 = scmp.ne.s32.totalorder %s41, %s44
    %p50 = scmp.eq.s32.totalorder %s19, 0
    %p51 = por %p49, %p50
    %p52 = scmp.ne.s32.totalorder %s41, %s44
    %p53 = scmp.eq.s32.totalorder %s24, 11
    %p54 = por %p52, %p53
    %p55 = scmp.ne.s32.totalorder %s44, %s45
    %p56 = scmp.eq.s32.totalorder %s24, 0
    %p57 = por %p55, %p56
    %p58 = scmp.ne.s32.totalorder %s44, %s45
    %p59 = scmp.eq.s32.totalorder %s25, 11
    %p60 = por %p58, %p59
    %p62 = scmp.ne.s32.totalorder %s45, %s61
    %p63 = scmp.eq.s32.totalorder %s25, 0
    %p64 = por %p62, %p63
    %s65 = ssub.s32 %s27, %s34
    %p66 = scmp.eq.s32.totalorder %s65, 0
    %s68 = sadd.s32 %s67, 1
    %s69 = scalar_select %p66, %s67, %s68
    %p72 = pneg %p66
    %p73 = scmp.eq.s32.totalorder %s19, 11
    %p74 = por %p72, %p73
    %p75 = scmp.ne.s32.totalorder %s67, %s70
    %p76 = scmp.eq.s32.totalorder %s19, 0
    %p77 = por %p75, %p76
    %p78 = scmp.ne.s32.totalorder %s67, %s70
    %p79 = scmp.eq.s32.totalorder %s24, 11
    %p80 = por %p78, %p79
    %p81 = scmp.ne.s32.totalorder %s70, %s71
    %p82 = scmp.eq.s32.totalorder %s24, 0
    %p83 = por %p81, %p82
    %p84 = scmp.ne.s32.totalorder %s70, %s71
    %p85 = scmp.eq.s32.totalorder %s25, 11
    %p86 = por %p84, %p85
    %p88 = scmp.ne.s32.totalorder %s71, %s87
    %p89 = scmp.eq.s32.totalorder %s25, 0
    %p90 = por %p88, %p89
    %s91 = ssub.s32 %s27, %s34
    %p92 = scmp.eq.s32.totalorder %s91, 0
    %s94 = sadd.s32 %s93, 1
    %s95 = scalar_select %p92, %s93, %s94
    %p98 = pneg %p92
    %p99 = scmp.eq.s32.totalorder %s19, 11
    %p100 = por %p98, %p99
    %p101 = scmp.ne.s32.totalorder %s93, %s96
    %p102 = scmp.eq.s32.totalorder %s19, 0
    %p103 = por %p101, %p102
    %p104 = scmp.ne.s32.totalorder %s93, %s96
    %p105 = scmp.eq.s32.totalorder %s24, 11
    %p106 = por %p104, %p105
    %p107 = scmp.ne.s32.totalorder %s96, %s97
    %p108 = scmp.eq.s32.totalorder %s24, 0
    %p109 = por %p107, %p108
    %p110 = scmp.ne.s32.totalorder %s96, %s97
    %p111 = scmp.eq.s32.totalorder %s25, 11
    %p112 = por %p110, %p111
    %p114 = scmp.ne.s32.totalorder %s97, %s113
    %p115 = scmp.eq.s32.totalorder %s25, 0
    %p116 = por %p114, %p115
    %s117 = ssub.s32 %s27, %s34
    %p118 = scmp.eq.s32.totalorder %s117, 0
    %s120 = sadd.s32 %s119, 1
    %s121 = scalar_select %p118, %s119, %s120
    %p124 = pneg %p118
    %p125 = scmp.eq.s32.totalorder %s19, 11
    %p126 = por %p124, %p125
    %p127 = scmp.ne.s32.totalorder %s119, %s122
    %p128 = scmp.eq.s32.totalorder %s19, 0
    %p129 = por %p127, %p128
    %p130 = scmp.ne.s32.totalorder %s119, %s122
    %p131 = scmp.eq.s32.totalorder %s24, 11
    %p132 = por %p130, %p131
    %p133 = scmp.ne.s32.totalorder %s122, %s123
    %p134 = scmp.eq.s32.totalorder %s24, 0
    %p135 = por %p133, %p134
    %p136 = scmp.ne.s32.totalorder %s122, %s123
    %p137 = scmp.eq.s32.totalorder %s25, 11
    %p138 = por %p136, %p137
    %p140 = scmp.ne.s32.totalorder %s123, %s139
    %p141 = scmp.eq.s32.totalorder %s25, 0
    %p142 = por %p140, %p141
    %s143 = ssub.s32 %s27, %s34
    %p144 = scmp.eq.s32.totalorder %s143, 0
    %s146 = sadd.s32 %s145, 1
    %s147 = scalar_select %p144, %s145, %s146
    %p150 = pneg %p144
    %p151 = scmp.eq.s32.totalorder %s19, 11
    %p152 = por %p150, %p151
    %p153 = scmp.ne.s32.totalorder %s145, %s148
    %p154 = scmp.eq.s32.totalorder %s19, 0
    %p155 = por %p153, %p154
    %p156 = scmp.ne.s32.totalorder %s145, %s148
    %p157 = scmp.eq.s32.totalorder %s24, 11
    %p158 = por %p156, %p157
    %p159 = scmp.ne.s32.totalorder %s148, %s149
    %p160 = scmp.eq.s32.totalorder %s24, 0
    %p161 = por %p159, %p160
    %p162 = scmp.ne.s32.totalorder %s148, %s149
    %p163 = scmp.eq.s32.totalorder %s25, 11
    %p164 = por %p162, %p163
    %p166 = scmp.ne.s32.totalorder %s149, %s165
    %p167 = scmp.eq.s32.totalorder %s25, 0
    %p168 = por %p166, %p167
    %s169 = ssub.s32 %s27, %s34
    %p170 = scmp.eq.s32.totalorder %s169, 0
    %s172 = sadd.s32 %s171, 1
    %s173 = scalar_select %p170, %s171, %s172
    %p176 = pneg %p170
    %p177 = scmp.eq.s32.totalorder %s19, 11
    %p178 = por %p176, %p177
    %p179 = scmp.ne.s32.totalorder %s171, %s174
    %p180 = scmp.eq.s32.totalorder %s19, 0
    %p181 = por %p179, %p180
    %p182 = scmp.ne.s32.totalorder %s171, %s174
    %p183 = scmp.eq.s32.totalorder %s24, 11
    %p184 = por %p182, %p183
    %p185 = scmp.ne.s32.totalorder %s174, %s175
    %p186 = scmp.eq.s32.totalorder %s24, 0
    %p187 = por %p185, %p186
    %p188 = scmp.ne.s32.totalorder %s174, %s175
    %p189 = scmp.eq.s32.totalorder %s25, 11
    %p190 = por %p188, %p189
    %p192 = scmp.ne.s32.totalorder %s175, %s191
    %p193 = scmp.eq.s32.totalorder %s25, 0
    %p194 = por %p192, %p193
    %s195 = ssub.s32 %s27, %s34
    %p196 = scmp.eq.s32.totalorder %s195, 0
    %s198 = sadd.s32 %s197, 1
    %s199 = scalar_select %p196, %s197, %s198
    %p202 = pneg %p196
    %p203 = scmp.eq.s32.totalorder %s19, 11
    %p204 = por %p202, %p203
    %p205 = scmp.ne.s32.totalorder %s197, %s200
    %p206 = scmp.eq.s32.totalorder %s19, 0
    %p207 = por %p205, %p206
    %p208 = scmp.ne.s32.totalorder %s197, %s200
    %p209 = scmp.eq.s32.totalorder %s24, 11
    %p210 = por %p208, %p209
    %p211 = scmp.ne.s32.totalorder %s200, %s201
    %p212 = scmp.eq.s32.totalorder %s24, 0
    %p213 = por %p211, %p212
    %p214 = scmp.ne.s32.totalorder %s200, %s201
    %p215 = scmp.eq.s32.totalorder %s25, 11
    %p216 = por %p214, %p215
    %p218 = scmp.ne.s32.totalorder %s201, %s217
    %p219 = scmp.eq.s32.totalorder %s25, 0
    %p220 = por %p218, %p219
    %s221 = ssub.s32 %s27, %s34
    %p222 = scmp.eq.s32.totalorder %s221, 0
    %s224 = sadd.s32 %s223, 1
    %s225 = scalar_select %p222, %s223, %s224
    %p228 = pneg %p222
    %p229 = scmp.eq.s32.totalorder %s19, 11
    %p230 = por %p228, %p229
    %p231 = scmp.ne.s32.totalorder %s223, %s226
    %p232 = scmp.eq.s32.totalorder %s19, 0
    %p233 = por %p231, %p232
    %p234 = scmp.ne.s32.totalorder %s223, %s226
    %p235 = scmp.eq.s32.totalorder %s24, 11
    %p236 = por %p234, %p235
    %p237 = scmp.ne.s32.totalorder %s226, %s227
    %p238 = scmp.eq.s32.totalorder %s24, 0
    %p239 = por %p237, %p238
    %p240 = scmp.ne.s32.totalorder %s226, %s227
    %p241 = scmp.eq.s32.totalorder %s25, 11
    %p242 = por %p240, %p241
    %p244 = scmp.ne.s32.totalorder %s227, %s243
    %p245 = scmp.eq.s32.totalorder %s25, 0
    %p246 = por %p244, %p245
    %s247 = ssub.s32 %s27, %s34
    %p248 = scmp.eq.s32.totalorder %s247, 0
    %s250 = sadd.s32 %s249, 1
    %s251 = scalar_select %p248, %s249, %s250
    %p254 = pneg %p248
    %p255 = scmp.eq.s32.totalorder %s19, 11
    %p256 = por %p254, %p255
    %p257 = scmp.ne.s32.totalorder %s249, %s252
    %p258 = scmp.eq.s32.totalorder %s19, 0
    %p259 = por %p257, %p258
    %p260 = scmp.ne.s32.totalorder %s249, %s252
    %p261 = scmp.eq.s32.totalorder %s24, 11
    %p262 = por %p260, %p261
    %p263 = scmp.ne.s32.totalorder %s252, %s253
    %p264 = scmp.eq.s32.totalorder %s24, 0
    %p265 = por %p263, %p264
    %p266 = scmp.ne.s32.totalorder %s252, %s253
    %p267 = scmp.eq.s32.totalorder %s25, 11
    %p268 = por %p266, %p267
    %p270 = scmp.ne.s32.totalorder %s253, %s269
    %p271 = scmp.eq.s32.totalorder %s25, 0
    %p272 = por %p270, %p271
    %s273 = ssub.s32 %s27, %s34
    %p274 = scmp.eq.s32.totalorder %s273, 0
    %s276 = sadd.s32 %s275, 1
    %s277 = scalar_select %p274, %s275, %s276
    %p280 = pneg %p274
    %p281 = scmp.eq.s32.totalorder %s19, 11
    %p282 = por %p280, %p281
    %p283 = scmp.ne.s32.totalorder %s275, %s278
    %p284 = scmp.eq.s32.totalorder %s19, 0
    %p285 = por %p283, %p284
    %p286 = scmp.ne.s32.totalorder %s275, %s278
    %p287 = scmp.eq.s32.totalorder %s24, 11
    %p288 = por %p286, %p287
    %p289 = scmp.ne.s32.totalorder %s278, %s279
    %p290 = scmp.eq.s32.totalorder %s24, 0
    %p291 = por %p289, %p290
    %p292 = scmp.ne.s32.totalorder %s278, %s279
    %p293 = scmp.eq.s32.totalorder %s25, 11
    %p294 = por %p292, %p293
    %p296 = scmp.ne.s32.totalorder %s279, %s295
    %p297 = scmp.eq.s32.totalorder %s25, 0
    %p298 = por %p296, %p297
    %s299 = ssub.s32 %s27, %s34
    %p300 = scmp.eq.s32.totalorder %s299, 0
    %s302 = sadd.s32 %s301, 1
    %s303 = scalar_select %p300, %s301, %s302
    %p306 = pneg %p300
    %p307 = scmp.eq.s32.totalorder %s19, 11
    %p308 = por %p306, %p307
    %p309 = scmp.ne.s32.totalorder %s301, %s304
    %p310 = scmp.eq.s32.totalorder %s19, 0
    %p311 = por %p309, %p310
    %p312 = scmp.ne.s32.totalorder %s301, %s304
    %p313 = scmp.eq.s32.totalorder %s24, 11
    %p314 = por %p312, %p313
    %p315 = scmp.ne.s32.totalorder %s304, %s305
    %p316 = scmp.eq.s32.totalorder %s24, 0
    %p317 = por %p315, %p316
    %p318 = scmp.ne.s32.totalorder %s304, %s305
    %p319 = scmp.eq.s32.totalorder %s25, 11
    %p320 = por %p318, %p319
    %p322 = scmp.ne.s32.totalorder %s305, %s321
    %p323 = scmp.eq.s32.totalorder %s25, 0
    %p324 = por %p322, %p323
    %s325 = ssub.s32 %s27, %s34
    %p326 = scmp.eq.s32.totalorder %s325, 0
    %s328 = sadd.s32 %s327, 1
    %s329 = scalar_select %p326, %s327, %s328
    %p332 = pneg %p326
    %p333 = scmp.eq.s32.totalorder %s19, 11
    %p334 = por %p332, %p333
    %p335 = scmp.ne.s32.totalorder %s327, %s330
    %p336 = scmp.eq.s32.totalorder %s19, 0
    %p337 = por %p335, %p336
    %p338 = scmp.ne.s32.totalorder %s327, %s330
    %p339 = scmp.eq.s32.totalorder %s24, 11
    %p340 = por %p338, %p339
    %p341 = scmp.ne.s32.totalorder %s330, %s331
    %p342 = scmp.eq.s32.totalorder %s24, 0
    %p343 = por %p341, %p342
    %p344 = scmp.ne.s32.totalorder %s330, %s331
    %p345 = scmp.eq.s32.totalorder %s25, 11
    %p346 = por %p344, %p345
    %p348 = scmp.ne.s32.totalorder %s331, %s347
    %p349 = scmp.eq.s32.totalorder %s25, 0
    %p350 = por %p348, %p349
    %s351 = ssub.s32 %s27, %s34
    %p352 = scmp.eq.s32.totalorder %s351, 0
    %s354 = sadd.s32 %s353, 1
    %s355 = scalar_select %p352, %s353, %s354
    %p358 = pneg %p352
    %p359 = scmp.eq.s32.totalorder %s19, 11
    %p360 = por %p358, %p359
    %p361 = scmp.ne.s32.totalorder %s353, %s356
    %p362 = scmp.eq.s32.totalorder %s19, 0
    %p363 = por %p361, %p362
    %p364 = scmp.ne.s32.totalorder %s353, %s356
    %p365 = scmp.eq.s32.totalorder %s24, 11
    %p366 = por %p364, %p365
    %p367 = scmp.ne.s32.totalorder %s356, %s357
    %p368 = scmp.eq.s32.totalorder %s24, 0
    %p369 = por %p367, %p368
    %p370 = scmp.ne.s32.totalorder %s356, %s357
    %p371 = scmp.eq.s32.totalorder %s25, 11
    %p372 = por %p370, %p371
    %p374 = scmp.ne.s32.totalorder %s357, %s373
    %p375 = scmp.eq.s32.totalorder %s25, 0
    %p376 = por %p374, %p375
    %s377 = ssub.s32 %s26, %s38
    %p378 = scmp.eq.s32.totalorder %s377, 0
    %s380 = sadd.s32 %s379, 1
    %s381 = scalar_select %p378, %s379, %s380
    %p384 = pneg %p378
    %p385 = scmp.eq.s32.totalorder %s19, 11
    %p386 = por %p384, %p385
    %p387 = scmp.ne.s32.totalorder %s379, %s382
    %p388 = scmp.eq.s32.totalorder %s19, 0
    %p389 = por %p387, %p388
    %p390 = scmp.ne.s32.totalorder %s379, %s382
    %p391 = scmp.eq.s32.totalorder %s24, 11
    %p392 = por %p390, %p391
    %p393 = scmp.ne.s32.totalorder %s382, %s383
    %p394 = scmp.eq.s32.totalorder %s24, 0
    %p395 = por %p393, %p394
    %p396 = scmp.ne.s32.totalorder %s382, %s383
    %p397 = scmp.eq.s32.totalorder %s25, 11
    %p398 = por %p396, %p397
    %p400 = scmp.ne.s32.totalorder %s383, %s399
    %p401 = scmp.eq.s32.totalorder %s25, 0
    %p402 = por %p400, %p401
    %p403 = scmp.le.s32.totalorder 1, %s19
    %p404 = scmp.lt.s32.totalorder %s19, 13
    %p405 = pnand %p403, %p404
    %p406 = pneg %p405
    // Predicated region
    $region9: #{conformer_forward.4} parent=5 // pred_check
      _
    $region10: #{conformer_forward.4} parent=5 // pred_check_branch
      %408 = sbr.rel (%p405) target = $region12
    $region11: #{conformer_forward.4} parent=5 // pred_region
      %s409 = ssub.s32 %s19, 1
    $region12: #{conformer_forward.4} parent=5 // pred_fallthru
      _
    %p410 = scmp.lt.s32.totalorder %s19, 12
    // Predicated region
    $region13: #{conformer_forward.4} parent=5 // pred_check
      %p411 = pneg %p410
    $region14: #{conformer_forward.4} parent=5 // pred_check_branch
      %413 = sbr.rel (%p411) target = $region16
    $region15: #{conformer_forward.4} parent=5 // pred_region
      // Predicated region
      $region17: #{conformer_forward.4} parent=15 // pred_check
        %p414 = pneg %p51
      $region18: #{conformer_forward.4} parent=15 // pred_check_branch
        %416 = sbr.rel (%p414) target = $region20
      $region19: #{conformer_forward.4} parent=15 // pred_region
        %p417 = scmp.lt.s32.totalorder %s26, 1
        %s418 = scalar_select %p417, %s26, 1
        %s419 = smul.addr %s418, 3
        %s420 = smul.addr %s419, 8
        %s421 = scalar_lea.vmem %s0, %s420
      $region20: #{conformer_forward.4} parent=15 // pred_fallthru
        _
      // Predicated region
      $region21: #{conformer_forward.4} parent=15 // pred_check
        %p422 = pneg %p77
      $region22: #{conformer_forward.4} parent=15 // pred_check_branch
        %424 = sbr.rel (%p422) target = $region24
      $region23: #{conformer_forward.4} parent=15 // pred_region
        %p425 = scmp.lt.s32.totalorder %s27, 5
        %s426 = scalar_select %p425, %s27, 5
        %s427 = scalar_lea.vmem %s1, %s426
      $region24: #{conformer_forward.4} parent=15 // pred_fallthru
        _
      // Predicated region
      $region25: #{conformer_forward.4} parent=15 // pred_check
        %p428 = pneg %p103
      $region26: #{conformer_forward.4} parent=15 // pred_check_branch
        %430 = sbr.rel (%p428) target = $region28
      $region27: #{conformer_forward.4} parent=15 // pred_region
        %p431 = scmp.lt.s32.totalorder %s27, 5
        %s432 = scalar_select %p431, %s27, 5
        %s433 = scalar_lea.vmem %s2, %s432
      $region28: #{conformer_forward.4} parent=15 // pred_fallthru
        _
      // Predicated region
      $region29: #{conformer_forward.4} parent=15 // pred_check
        %p434 = pneg %p129
      $region30: #{conformer_forward.4} parent=15 // pred_check_branch
        %436 = sbr.rel (%p434) target = $region32
      $region31: #{conformer_forward.4} parent=15 // pred_region
        %p437 = scmp.lt.s32.totalorder %s27, 5
        %s438 = scalar_select %p437, %s27, 5
        %s439 = smul.addr %s438, 5
        %s440 = smul.addr %s439, 8
        %s441 = scalar_lea.vmem %s3, %s440
      $region32: #{conformer_forward.4} parent=15 // pred_fallthru
        _
      // Predicated region
      $region33: #{conformer_forward.4} parent=15 // pred_check
        %p442 = pneg %p155
      $region34: #{conformer_forward.4} parent=15 // pred_check_branch
        %444 = sbr.rel (%p442) target = $region36
      $region35: #{conformer_forward.4} parent=15 // pred_region
        %p445 = scmp.lt.s32.totalorder %s27, 5
        %s446 = scalar_select %p445, %s27, 5
        %s447 = scalar_lea.vmem %s4, %s446
      $region36: #{conformer_forward.4} parent=15 // pred_fallthru
        _
      // Predicated region
      $region37: #{conformer_forward.4} parent=15 // pred_check
        %p448 = pneg %p181
      $region38: #{conformer_forward.4} parent=15 // pred_check_branch
        %450 = sbr.rel (%p448) target = $region40
      $region39: #{conformer_forward.4} parent=15 // pred_region
        %p451 = scmp.lt.s32.totalorder %s27, 5
        %s452 = scalar_select %p451, %s27, 5
        %s453 = smul.addr %s452, 5
        %s454 = smul.addr %s453, 8
        %s455 = scalar_lea.vmem %s5, %s454
      $region40: #{conformer_forward.4} parent=15 // pred_fallthru
        _
      // Predicated region
      $region41: #{conformer_forward.4} parent=15 // pred_check
        %p456 = pneg %p207
      $region42: #{conformer_forward.4} parent=15 // pred_check_branch
        %458 = sbr.rel (%p456) target = $region44
      $region43: #{conformer_forward.4} parent=15 // pred_region
        %p459 = scmp.lt.s32.totalorder %s27, 5
        %s460 = scalar_select %p459, %s27, 5
        %s461 = scalar_lea.vmem %s6, %s460
      $region44: #{conformer_forward.4} parent=15 // pred_fallthru
        _
      // Predicated region
      $region45: #{conformer_forward.4} parent=15 // pred_check
        %p462 = pneg %p233
      $region46: #{conformer_forward.4} parent=15 // pred_check_branch
        %464 = sbr.rel (%p462) target = $region48
      $region47: #{conformer_forward.4} parent=15 // pred_region
        %p465 = scmp.lt.s32.totalorder %s27, 5
        %s466 = scalar_select %p465, %s27, 5
        %s467 = scalar_lea.vmem %s7, %s466
      $region48: #{conformer_forward.4} parent=15 // pred_fallthru
        _
      // Predicated region
      $region49: #{conformer_forward.4} parent=15 // pred_check
        %p468 = pneg %p259
      $region50: #{conformer_forward.4} parent=15 // pred_check_branch
        %470 = sbr.rel (%p468) target = $region52
      $region51: #{conformer_forward.4} parent=15 // pred_region
        %p471 = scmp.lt.s32.totalorder %s27, 5
        %s472 = scalar_select %p471, %s27, 5
        %s473 = scalar_lea.vmem %s8, %s472
      $region52: #{conformer_forward.4} parent=15 // pred_fallthru
        _
      // Predicated region
      $region53: #{conformer_forward.4} parent=15 // pred_check
        %p474 = pneg %p285
      $region54: #{conformer_forward.4} parent=15 // pred_check_branch
        %476 = sbr.rel (%p474) target = $region56
      $region55: #{conformer_forward.4} parent=15 // pred_region
        %p477 = scmp.lt.s32.totalorder %s27, 5
        %s478 = scalar_select %p477, %s27, 5
        %s479 = smul.addr %s478, 10
        %s480 = smul.addr %s479, 8
        %s481 = scalar_lea.vmem %s9, %s480
      $region56: #{conformer_forward.4} parent=15 // pred_fallthru
        _
      // Predicated region
      $region57: #{conformer_forward.4} parent=15 // pred_check
        %p482 = pneg %p311
      $region58: #{conformer_forward.4} parent=15 // pred_check_branch
        %484 = sbr.rel (%p482) target = $region60
      $region59: #{conformer_forward.4} parent=15 // pred_region
        %p485 = scmp.lt.s32.totalorder %s27, 5
        %s486 = scalar_select %p485, %s27, 5
        %s487 = smul.addr %s486, 2
        %s488 = scalar_lea.vmem %s10, %s487
      $region60: #{conformer_forward.4} parent=15 // pred_fallthru
        _
      // Predicated region
      $region61: #{conformer_forward.4} parent=15 // pred_check
        %p489 = pneg %p337
      $region62: #{conformer_forward.4} parent=15 // pred_check_branch
        %491 = sbr.rel (%p489) target = $region64
      $region63: #{conformer_forward.4} parent=15 // pred_region
        %p492 = scmp.lt.s32.totalorder %s27, 5
        %s493 = scalar_select %p492, %s27, 5
        %s494 = smul.addr %s493, 20
        %s495 = smul.addr %s494, 8
        %s496 = scalar_lea.vmem %s11, %s495
      $region64: #{conformer_forward.4} parent=15 // pred_fallthru
        _
      // Predicated region
      $region65: #{conformer_forward.4} parent=15 // pred_check
        %p497 = pneg %p363
      $region66: #{conformer_forward.4} parent=15 // pred_check_branch
        %499 = sbr.rel (%p497) target = $region68
      $region67: #{conformer_forward.4} parent=15 // pred_region
        %p500 = scmp.lt.s32.totalorder %s27, 5
        %s501 = scalar_select %p500, %s27, 5
        %s502 = scalar_lea.vmem %s12, %s501
      $region68: #{conformer_forward.4} parent=15 // pred_fallthru
        _
    $region16: #{conformer_forward.4} parent=5 // pred_fallthru
      _
    %p503 = scmp.le.s32.totalorder 1, %s19
    %p504 = scmp.lt.s32.totalorder %s19, 13
    %p505 = pnand %p503, %p504
    %p506 = pneg %p505
    // Predicated region
    $region69: #{conformer_forward.4} parent=5 // pred_check
      _
    $region70: #{conformer_forward.4} parent=5 // pred_check_branch
      %508 = sbr.rel (%p505) target = $region72
    $region71: #{conformer_forward.4} parent=5 // pred_region
      %s509 = ssub.s32 %s19, 1
      %p510 = scmp.lt.s32.totalorder %s28, 1
      %s511 = scalar_select %p510, %s28, 1
      %s512 = smul.addr %s511, 3
      %s513 = smul.addr %s512, 8
      %s514 = scalar_lea.vmem %s0, %s513
      %p515 = pneg %p57
      %p516 = pneg %p54
      %p517 = scmp.lt.s32.totalorder %s29, 5
      %s518 = scalar_select %p517, %s29, 5
      %s519 = scalar_lea.vmem %s1, %s518
      %p520 = pneg %p83
      %p521 = pneg %p80
      %p522 = scmp.lt.s32.totalorder %s29, 5
      %s523 = scalar_select %p522, %s29, 5
      %s524 = scalar_lea.vmem %s2, %s523
      %p525 = pneg %p109
      %p526 = pneg %p106
      %p527 = scmp.lt.s32.totalorder %s29, 5
      %s528 = scalar_select %p527, %s29, 5
      %s529 = smul.addr %s528, 5
      %s530 = smul.addr %s529, 8
      %s531 = scalar_lea.vmem %s3, %s530
      %p532 = pneg %p135
      %p533 = pneg %p132
      %p534 = scmp.lt.s32.totalorder %s29, 5
      %s535 = scalar_select %p534, %s29, 5
      %s536 = scalar_lea.vmem %s4, %s535
      %p537 = pneg %p161
      %p538 = pneg %p158
      %p539 = scmp.lt.s32.totalorder %s29, 5
      %s540 = scalar_select %p539, %s29, 5
      %s541 = smul.addr %s540, 5
      %s542 = smul.addr %s541, 8
      %s543 = scalar_lea.vmem %s5, %s542
      %p544 = pneg %p187
      %p545 = pneg %p184
      %p546 = scmp.lt.s32.totalorder %s29, 5
      %s547 = scalar_select %p546, %s29, 5
      %s548 = scalar_lea.vmem %s6, %s547
      %p549 = pneg %p213
      %p550 = pneg %p210
      %p551 = scmp.lt.s32.totalorder %s29, 5
      %s552 = scalar_select %p551, %s29, 5
      %s553 = scalar_lea.vmem %s7, %s552
      %p554 = pneg %p239
      %p555 = pneg %p236
      %p556 = scmp.lt.s32.totalorder %s29, 5
      %s557 = scalar_select %p556, %s29, 5
      %s558 = scalar_lea.vmem %s8, %s557
      %p559 = pneg %p265
      %p560 = pneg %p262
      %p561 = scmp.lt.s32.totalorder %s29, 5
      %s562 = scalar_select %p561, %s29, 5
      %s563 = smul.addr %s562, 10
      %s564 = smul.addr %s563, 8
      %s565 = scalar_lea.vmem %s9, %s564
      %p566 = pneg %p291
      %p567 = pneg %p288
      %p568 = scmp.lt.s32.totalorder %s29, 5
      %s569 = scalar_select %p568, %s29, 5
      %s570 = smul.addr %s569, 2
      %s571 = scalar_lea.vmem %s10, %s570
      %p572 = pneg %p317
      %p573 = pneg %p314
      %p574 = scmp.lt.s32.totalorder %s29, 5
      %s575 = scalar_select %p574, %s29, 5
      %s576 = smul.addr %s575, 20
      %s577 = smul.addr %s576, 8
      %s578 = scalar_lea.vmem %s11, %s577
      %p579 = pneg %p343
      %p580 = pneg %p340
      %p581 = scmp.lt.s32.totalorder %s29, 5
      %s582 = scalar_select %p581, %s29, 5
      %s583 = scalar_lea.vmem %s12, %s582
      %p584 = pneg %p369
      %p585 = pneg %p366
      %p586 = pneg %p395
      %p587 = pneg %p392
      %p588 = scmp.lt.s32.totalorder %s28, 1
      %s589 = scalar_select %p588, %s28, 1
      %s590 = smul.addr %s589, 3
      %s591 = smul.addr %s590, 8
      %s592 = scalar_lea.vmem %s13, %s591
      %p593 = scmp.lt.s32.totalorder %s28, 1
      %s594 = scalar_select %p593, %s28, 1
      %s595 = smul.addr %s594, 3
      %s596 = smul.addr %s595, 8
      %s597 = scalar_lea.vmem %s0, %s596
      %p598 = scmp.lt.s32.totalorder %s29, 5
      %s599 = scalar_select %p598, %s29, 5
      %s600 = scalar_lea.vmem %s1, %s599
      %p601 = scmp.lt.s32.totalorder %s29, 5
      %s602 = scalar_select %p601, %s29, 5
      %s603 = scalar_lea.vmem %s2, %s602
      %p604 = scmp.lt.s32.totalorder %s29, 5
      %s605 = scalar_select %p604, %s29, 5
      %s606 = smul.addr %s605, 5
      %s607 = smul.addr %s606, 8
      %s608 = scalar_lea.vmem %s3, %s607
      %p609 = scmp.lt.s32.totalorder %s29, 5
      %s610 = scalar_select %p609, %s29, 5
      %s611 = scalar_lea.vmem %s4, %s610
      %p612 = scmp.lt.s32.totalorder %s29, 5
      %s613 = scalar_select %p612, %s29, 5
      %s614 = smul.addr %s613, 5
      %s615 = smul.addr %s614, 8
      %s616 = scalar_lea.vmem %s5, %s615
      %p617 = scmp.lt.s32.totalorder %s29, 5
      %s618 = scalar_select %p617, %s29, 5
      %s619 = scalar_lea.vmem %s6, %s618
      %p620 = scmp.lt.s32.totalorder %s29, 5
      %s621 = scalar_select %p620, %s29, 5
      %s622 = scalar_lea.vmem %s7, %s621
      %p623 = scmp.lt.s32.totalorder %s29, 5
      %s624 = scalar_select %p623, %s29, 5
      %s625 = scalar_lea.vmem %s8, %s624
      %p626 = scmp.lt.s32.totalorder %s29, 5
      %s627 = scalar_select %p626, %s29, 5
      %s628 = smul.addr %s627, 10
      %s629 = smul.addr %s628, 8
      %s630 = scalar_lea.vmem %s9, %s629
      %p631 = scmp.lt.s32.totalorder %s29, 5
      %s632 = scalar_select %p631, %s29, 5
      %s633 = smul.addr %s632, 2
      %s634 = scalar_lea.vmem %s10, %s633
      %p635 = scmp.lt.s32.totalorder %s29, 5
      %s636 = scalar_select %p635, %s29, 5
      %s637 = smul.addr %s636, 20
      %s638 = smul.addr %s637, 8
      %s639 = scalar_lea.vmem %s11, %s638
      %p640 = scmp.lt.s32.totalorder %s29, 5
      %s641 = scalar_select %p640, %s29, 5
      %s642 = scalar_lea.vmem %s12, %s641
      %p643 = scmp.lt.s32.totalorder %s28, 1
      %s644 = scalar_select %p643, %s28, 1
      %s645 = smul.addr %s644, 3
      %s646 = smul.addr %s645, 8
      %s647 = scalar_lea.vmem %s13, %s646
      %p648 = scmp.eq.s32.totalorder %s29, 0
      // Predicated region
      $region73: #{conformer_forward.4} parent=71 // pred_check
        %p649 = pneg %p648
      $region74: #{conformer_forward.4} parent=71 // pred_check_branch
        %651 = sbr.rel (%p649) target = $region76
      $region75: #{conformer_forward.4} parent=71 // pred_region
        %v652 = vld [vmem:[%s597] sm:$0xff]
        %v653 = vld [vmem:[%s597 + $0x8] sm:$0xff]
        %v654 = vld [vmem:[%s597 + $0x10] sm:$0x3f]
        %vm655 = vcmask 326656
        %656 = vst.msk [vmem:[%s647] sm:$0xff] %vm655, %v652
        %657 = vst.msk [vmem:[%s647 + $0x8] sm:$0xff] %vm655, %v653
        %vm658 = vcmask 324608
        %659 = vst.msk [vmem:[%s647 + $0x10] sm:$0x3f] %vm658, %v654
      $region76: #{conformer_forward.4} parent=71 // pred_fallthru
        _
      %v660 = vld [vmem:[%s647] sm:$0xff]
      %v661 = vld [vmem:[%s647 + $0x8] sm:$0xff]
      %v662 = vld [vmem:[%s647 + $0x10] sm:$0x3f]
      %v663 = vld [vmem:[%s600] sm:$0x1]
      %v664 = vld [vmem:[%s603] sm:$0x1]
      %vm665 = vcmask 326656
      %v666 = vsel %vm665, %v660, 0.0
      %667 = vadd.xlane.f32.xlu0 %v666
      %v668 = vpop.xlane.xlu0 %667
      %v669 = vsel %vm665, %v661, 0.0
      %670 = vadd.xlane.f32.xlu0 %v669
      %v671 = vpop.xlane.xlu0 %670
      %vm672 = vcmask 324608
      %v673 = vsel %vm672, %v662, 0.0
      %674 = vadd.xlane.f32.xlu0 %v673
      %v675 = vpop.xlane.xlu0 %674
      %v676 = vrcp.pop 40.0
      %v677 = vmul.f32 40.0, %v676
      %v678 = vsub.f32 1.0, %v677
      %v679 = vmul.f32 %v676, %v678
      %v680 = vadd.f32 %v676, %v679
      %vm681 = vweird.f32 %v676
      %v682 = vsel %vm681, %v676, %v680
      %v683 = vmul.f32 %v668, %v682
      %v684 = vmul.f32 %v671, %v682
      %v685 = vmul.f32 %v675, %v682
      %v686 = vsub.f32 %v660, %v683
      %v687 = vsub.f32 %v661, %v684
      %v688 = vsub.f32 %v662, %v685
      %v689 = vmul.f32 %v686, %v686
      %v690 = vmul.f32 %v687, %v687
      %v691 = vmul.f32 %v688, %v688
      %v692 = vsel %vm665, %v689, 0.0
      %693 = vadd.xlane.f32.xlu0 %v692
      %v694 = vpop.xlane.xlu0 %693
      %v695 = vsel %vm665, %v690, 0.0
      %696 = vadd.xlane.f32.xlu0 %v695
      %v697 = vpop.xlane.xlu0 %696
      %v698 = vsel %vm672, %v691, 0.0
      %699 = vadd.xlane.f32.xlu0 %v698
      %v700 = vpop.xlane.xlu0 %699
      %v701 = vmul.f32 %v694, %v682
      %v702 = vmul.f32 %v697, %v682
      %v703 = vmul.f32 %v700, %v682
      %v704 = vadd.f32 %v701, 1e-05
      %v705 = vadd.f32 %v702, 1e-05
      %v706 = vadd.f32 %v703, 1e-05
      %v707 = vrsqrt.pop %v704
      %v708 = vmul.f32 %v707, %v704
      %v709 = vmul.f32 %v708, %v707
      %v710 = vmul.f32 0.5, %v709
      %v711 = vsub.f32 1.5, %v710
      %v712 = vmul.f32 %v707, %v711
      %vm713 = vweird.f32 %v704
      %vm714 = vweird.f32 %v707
      %vm715 = vmor %vm713, %vm714
      %v716 = vsel %vm715, %v707, %v712
      %v717 = vrsqrt.pop %v705
      %v718 = vmul.f32 %v717, %v705
      %v719 = vmul.f32 %v718, %v717
      %v720 = vmul.f32 0.5, %v719
      %v721 = vsub.f32 1.5, %v720
      %v722 = vmul.f32 %v717, %v721
      %vm723 = vweird.f32 %v705
      %vm724 = vweird.f32 %v717
      %vm725 = vmor %vm723, %vm724
      %v726 = vsel %vm725, %v717, %v722
      %v727 = vrsqrt.pop %v706
      %v728 = vmul.f32 %v727, %v706
      %v729 = vmul.f32 %v728, %v727
      %v730 = vmul.f32 0.5, %v729
      %v731 = vsub.f32 1.5, %v730
      %v732 = vmul.f32 %v727, %v731
      %vm733 = vweird.f32 %v706
      %vm734 = vweird.f32 %v727
      %vm735 = vmor %vm733, %vm734
      %v736 = vsel %vm735, %v727, %v732
      %v737 = vmul.f32 %v686, %v716
      %v738 = vmul.f32 %v687, %v726
      %v739 = vmul.f32 %v688, %v736
      %v741 = vperm.slane %v663, 0
      %v743 = vmul.f32 %v737, %v741
      %v744 = vmul.f32 %v738, %v741
      %v745 = vmul.f32 %v739, %v741
      %v747 = vperm.slane %v664, 0
      %v749 = vadd.f32 %v743, %v747
      %v750 = vadd.f32 %v744, %v747
      %v751 = vadd.f32 %v745, %v747
      %v752 = vld [vmem:[%s608] sm:$0xff]
      %v753 = vld [vmem:[%s608 + $0x8] sm:$0xff]
      %v754 = vld [vmem:[%s608 + $0x10] sm:$0xff]
      %v755 = vld [vmem:[%s608 + $0x18] sm:$0xff]
      %v756 = vld [vmem:[%s608 + $0x20] sm:$0xff]
      %v757 = vld [vmem:[%s611] sm:$0x1]
      %v759 = vperm.slane %v757, 0
      %v762 = vsel %vm665, %v749, 0
      %v765 = vsel %vm665, %v750, 0
      %v768 = vsel %vm665, %v751, 0
      %770 = vmatpush.msra.mxu0 0.0
      %771 = vmatpush.msra.mxu0 0.0
      %772 = vmatpush.msra.mxu0 0.0
      %773 = vmatpush.msra.mxu0 0.0
      %774 = vmatpush.msra.mxu0 0.0
      %775 = vmatpush.msra.mxu0 0.0
      %776 = vmatpush.msra.mxu0 0.0
      %777 = vmatpush.msra.mxu0 0.0
      %778 = vmatpush.msra.mxu0 0.0
      %779 = vmatpush.msra.mxu0 0.0
      %780 = vmatpush.msra.mxu0 0.0
      %781 = vmatpush.msra.mxu0 %v756
      %782 = vmatpush.msra.mxu0 %v755
      %783 = vmatpush.msra.mxu0 %v754
      %784 = vmatpush.msra.mxu0 %v753
      %785 = vmatpush.msra.mxu0 %v752
      %786 = vmatmul.f32.gmra.mxu0 %v762
      %v787 = vpop.f32.mrf.mxu0
      %v788 = vadd.f32 %v759, %v787
      %789 = vmatmul.f32.gmra.mxu0 %v765
      %v790 = vpop.f32.mrf.mxu0
      %v791 = vadd.f32 %v759, %v790
      %792 = vmatmul.f32.gmra.mxu0 %v768
      %v793 = vpop.f32.mrf.mxu0
      %v794 = vadd.f32 %v759, %v793
      %795 = vdwg.mxu0
      %799 = vrot.lane.b32.xlu0 %v788, 124
      %v800 = vpop.permute.xlu0 %799
      %801 = vrot.lane.b32.xlu0 %v791, 124
      %v802 = vpop.permute.xlu0 %801
      %803 = vrot.lane.b32.xlu0 %v794, 124
      %v804 = vpop.permute.xlu0 %803
      %805 = vrot.lane.b32.xlu0 %v788, 120
      %v806 = vpop.permute.xlu0 %805
      %807 = vrot.lane.b32.xlu0 %v791, 120
      %v808 = vpop.permute.xlu0 %807
      %809 = vrot.lane.b32.xlu0 %v794, 120
      %v810 = vpop.permute.xlu0 %809
      %811 = vrot.lane.b32.xlu0 %v788, 116
      %v812 = vpop.permute.xlu0 %811
      %813 = vrot.lane.b32.xlu0 %v791, 116
      %v814 = vpop.permute.xlu0 %813
      %815 = vrot.lane.b32.xlu0 %v794, 116
      %v816 = vpop.permute.xlu0 %815
      %817 = vrot.lane.b32.xlu0 %v788, 112
      %v818 = vpop.permute.xlu0 %817
      %819 = vrot.lane.b32.xlu0 %v791, 112
      %v820 = vpop.permute.xlu0 %819
      %821 = vrot.lane.b32.xlu0 %v794, 112
      %v822 = vpop.permute.xlu0 %821
      %823 = vrot.lane.b32.xlu0 %v788, 108
      %v824 = vpop.permute.xlu0 %823
      %825 = vrot.lane.b32.xlu0 %v791, 108
      %v826 = vpop.permute.xlu0 %825
      %827 = vrot.lane.b32.xlu0 %v794, 108
      %v828 = vpop.permute.xlu0 %827
      %829 = vrot.lane.b32.xlu0 %v788, 104
      %v830 = vpop.permute.xlu0 %829
      %831 = vrot.lane.b32.xlu0 %v791, 104
      %v832 = vpop.permute.xlu0 %831
      %833 = vrot.lane.b32.xlu0 %v794, 104
      %v834 = vpop.permute.xlu0 %833
      %835 = vrot.lane.b32.xlu0 %v788, 100
      %v836 = vpop.permute.xlu0 %835
      %837 = vrot.lane.b32.xlu0 %v791, 100
      %v838 = vpop.permute.xlu0 %837
      %839 = vrot.lane.b32.xlu0 %v794, 100
      %v840 = vpop.permute.xlu0 %839
      %841 = vrot.lane.b32.xlu0 %v788, 96
      %v842 = vpop.permute.xlu0 %841
      %843 = vrot.lane.b32.xlu0 %v791, 96
      %v844 = vpop.permute.xlu0 %843
      %845 = vrot.lane.b32.xlu0 %v794, 96
      %v846 = vpop.permute.xlu0 %845
      %847 = vrot.lane.b32.xlu0 %v788, 92
      %v848 = vpop.permute.xlu0 %847
      %849 = vrot.lane.b32.xlu0 %v791, 92
      %v850 = vpop.permute.xlu0 %849
      %851 = vrot.lane.b32.xlu0 %v794, 92
      %v852 = vpop.permute.xlu0 %851
      %853 = vrot.lane.b32.xlu0 %v788, 88
      %v854 = vpop.permute.xlu0 %853
      %855 = vrot.lane.b32.xlu0 %v791, 88
      %v856 = vpop.permute.xlu0 %855
      %857 = vrot.lane.b32.xlu0 %v794, 88
      %v858 = vpop.permute.xlu0 %857
      %vm859 = vcmask 31744
      %v860 = vsel %vm859, %v788, 0
      %v862 = vsel %vm859, %v791, 0
      %v864 = vsel %vm859, %v794, 0
      %v866 = vsel %vm859, %v854, 0
      %v868 = vsel %vm859, %v856, 0
      %v870 = vsel %vm859, %v858, 0
      %872 = vmatpush.xpose.msra.mxu0 0.0
      %873 = vmatpush.xpose.msra.mxu0 0.0
      %874 = vmatpush.xpose.msra.mxu0 0.0
      %875 = vmatpush.xpose.msra.mxu0 0.0
      %876 = vmatpush.xpose.msra.mxu0 0.0
      %877 = vmatpush.xpose.msra.mxu0 0.0
      %878 = vmatpush.xpose.msra.mxu0 0.0
      %879 = vmatpush.xpose.msra.mxu0 0.0
      %880 = vmatpush.xpose.msra.mxu0 0.0
      %881 = vmatpush.xpose.msra.mxu0 0.0
      %882 = vmatpush.xpose.msra.mxu0 0.0
      %883 = vmatpush.xpose.msra.mxu0 0.0
      %884 = vmatpush.xpose.msra.mxu0 0.0
      %885 = vmatpush.xpose.msra.mxu0 %v870
      %886 = vmatpush.xpose.msra.mxu0 %v868
      %887 = vmatpush.xpose.msra.mxu0 %v866
      %888 = vmatmul.f32.gmra.mxu0 %v860
      %v889 = vpop.f32.mrf.mxu0
      %v890 = vadd.f32 0.0, %v889
      %891 = vmatmul.f32.gmra.mxu0 %v862
      %v892 = vpop.f32.mrf.mxu0
      %v893 = vadd.f32 0.0, %v892
      %894 = vmatmul.f32.gmra.mxu0 %v864
      %v895 = vpop.f32.mrf.mxu0
      %v896 = vadd.f32 0.0, %v895
      %897 = vdwg.mxu0
      %898 = vrot.lane.b32.xlu0 %v800, 88
      %v899 = vpop.permute.xlu0 %898
      %900 = vrot.lane.b32.xlu0 %v802, 88
      %v901 = vpop.permute.xlu0 %900
      %902 = vrot.lane.b32.xlu0 %v804, 88
      %v903 = vpop.permute.xlu0 %902
      %v904 = vsel %vm859, %v800, 0
      %v906 = vsel %vm859, %v802, 0
      %v908 = vsel %vm859, %v804, 0
      %v910 = vsel %vm859, %v899, 0
      %v912 = vsel %vm859, %v901, 0
      %v914 = vsel %vm859, %v903, 0
      %916 = vmatpush.xpose.msra.mxu0 0.0
      %917 = vmatpush.xpose.msra.mxu0 0.0
      %918 = vmatpush.xpose.msra.mxu0 0.0
      %919 = vmatpush.xpose.msra.mxu0 0.0
      %920 = vmatpush.xpose.msra.mxu0 0.0
      %921 = vmatpush.xpose.msra.mxu0 0.0
      %922 = vmatpush.xpose.msra.mxu0 0.0
      %923 = vmatpush.xpose.msra.mxu0 0.0
      %924 = vmatpush.xpose.msra.mxu0 0.0
      %925 = vmatpush.xpose.msra.mxu0 0.0
      %926 = vmatpush.xpose.msra.mxu0 0.0
      %927 = vmatpush.xpose.msra.mxu0 0.0
      %928 = vmatpush.xpose.msra.mxu0 0.0
      %929 = vmatpush.xpose.msra.mxu0 %v914
      %930 = vmatpush.xpose.msra.mxu0 %v912
      %931 = vmatpush.xpose.msra.mxu0 %v910
      %932 = vmatmul.f32.gmra.mxu0 %v904
      %v933 = vpop.f32.mrf.mxu0
      %v934 = vadd.f32 0.0, %v933
      %935 = vmatmul.f32.gmra.mxu0 %v906
      %v936 = vpop.f32.mrf.mxu0
      %v937 = vadd.f32 0.0, %v936
      %938 = vmatmul.f32.gmra.mxu0 %v908
      %v939 = vpop.f32.mrf.mxu0
      %v940 = vadd.f32 0.0, %v939
      %941 = vdwg.mxu0
      %942 = vrot.lane.b32.xlu0 %v806, 88
      %v943 = vpop.permute.xlu0 %942
      %944 = vrot.lane.b32.xlu0 %v808, 88
      %v945 = vpop.permute.xlu0 %944
      %946 = vrot.lane.b32.xlu0 %v810, 88
      %v947 = vpop.permute.xlu0 %946
      %v948 = vsel %vm859, %v806, 0
      %v950 = vsel %vm859, %v808, 0
      %v952 = vsel %vm859, %v810, 0
      %v954 = vsel %vm859, %v943, 0
      %v956 = vsel %vm859, %v945, 0
      %v958 = vsel %vm859, %v947, 0
      %960 = vmatpush.xpose.msra.mxu0 0.0
      %961 = vmatpush.xpose.msra.mxu0 0.0
      %962 = vmatpush.xpose.msra.mxu0 0.0
      %963 = vmatpush.xpose.msra.mxu0 0.0
      %964 = vmatpush.xpose.msra.mxu0 0.0
      %965 = vmatpush.xpose.msra.mxu0 0.0
      %966 = vmatpush.xpose.msra.mxu0 0.0
      %967 = vmatpush.xpose.msra.mxu0 0.0
      %968 = vmatpush.xpose.msra.mxu0 0.0
      %969 = vmatpush.xpose.msra.mxu0 0.0
      %970 = vmatpush.xpose.msra.mxu0 0.0
      %971 = vmatpush.xpose.msra.mxu0 0.0
      %972 = vmatpush.xpose.msra.mxu0 0.0
      %973 = vmatpush.xpose.msra.mxu0 %v958
      %974 = vmatpush.xpose.msra.mxu0 %v956
      %975 = vmatpush.xpose.msra.mxu0 %v954
      %976 = vmatmul.f32.gmra.mxu0 %v948
      %v977 = vpop.f32.mrf.mxu0
      %v978 = vadd.f32 0.0, %v977
      %979 = vmatmul.f32.gmra.mxu0 %v950
      %v980 = vpop.f32.mrf.mxu0
      %v981 = vadd.f32 0.0, %v980
      %982 = vmatmul.f32.gmra.mxu0 %v952
      %v983 = vpop.f32.mrf.mxu0
      %v984 = vadd.f32 0.0, %v983
      %985 = vdwg.mxu0
      %986 = vrot.lane.b32.xlu0 %v812, 88
      %v987 = vpop.permute.xlu0 %986
      %988 = vrot.lane.b32.xlu0 %v814, 88
      %v989 = vpop.permute.xlu0 %988
      %990 = vrot.lane.b32.xlu0 %v816, 88
      %v991 = vpop.permute.xlu0 %990
      %v992 = vsel %vm859, %v812, 0
      %v994 = vsel %vm859, %v814, 0
      %v996 = vsel %vm859, %v816, 0
      %v998 = vsel %vm859, %v987, 0
      %v1000 = vsel %vm859, %v989, 0
      %v1002 = vsel %vm859, %v991, 0
      %1004 = vmatpush.xpose.msra.mxu0 0.0
      %1005 = vmatpush.xpose.msra.mxu0 0.0
      %1006 = vmatpush.xpose.msra.mxu0 0.0
      %1007 = vmatpush.xpose.msra.mxu0 0.0
      %1008 = vmatpush.xpose.msra.mxu0 0.0
      %1009 = vmatpush.xpose.msra.mxu0 0.0
      %1010 = vmatpush.xpose.msra.mxu0 0.0
      %1011 = vmatpush.xpose.msra.mxu0 0.0
      %1012 = vmatpush.xpose.msra.mxu0 0.0
      %1013 = vmatpush.xpose.msra.mxu0 0.0
      %1014 = vmatpush.xpose.msra.mxu0 0.0
      %1015 = vmatpush.xpose.msra.mxu0 0.0
      %1016 = vmatpush.xpose.msra.mxu0 0.0
      %1017 = vmatpush.xpose.msra.mxu0 %v1002
      %1018 = vmatpush.xpose.msra.mxu0 %v1000
      %1019 = vmatpush.xpose.msra.mxu0 %v998
      %1020 = vmatmul.f32.gmra.mxu0 %v992
      %v1021 = vpop.f32.mrf.mxu0
      %v1022 = vadd.f32 0.0, %v1021
      %1023 = vmatmul.f32.gmra.mxu0 %v994
      %v1024 = vpop.f32.mrf.mxu0
      %v1025 = vadd.f32 0.0, %v1024
      %1026 = vmatmul.f32.gmra.mxu0 %v996
      %v1027 = vpop.f32.mrf.mxu0
      %v1028 = vadd.f32 0.0, %v1027
      %1029 = vdwg.mxu0
      %1030 = vrot.lane.b32.xlu0 %v818, 88
      %v1031 = vpop.permute.xlu0 %1030
      %1032 = vrot.lane.b32.xlu0 %v820, 88
      %v1033 = vpop.permute.xlu0 %1032
      %1034 = vrot.lane.b32.xlu0 %v822, 88
      %v1035 = vpop.permute.xlu0 %1034
      %v1036 = vsel %vm859, %v818, 0
      %v1038 = vsel %vm859, %v820, 0
      %v1040 = vsel %vm859, %v822, 0
      %v1042 = vsel %vm859, %v1031, 0
      %v1044 = vsel %vm859, %v1033, 0
      %v1046 = vsel %vm859, %v1035, 0
      %1048 = vmatpush.xpose.msra.mxu0 0.0
      %1049 = vmatpush.xpose.msra.mxu0 0.0
      %1050 = vmatpush.xpose.msra.mxu0 0.0
      %1051 = vmatpush.xpose.msra.mxu0 0.0
      %1052 = vmatpush.xpose.msra.mxu0 0.0
      %1053 = vmatpush.xpose.msra.mxu0 0.0
      %1054 = vmatpush.xpose.msra.mxu0 0.0
      %1055 = vmatpush.xpose.msra.mxu0 0.0
      %1056 = vmatpush.xpose.msra.mxu0 0.0
      %1057 = vmatpush.xpose.msra.mxu0 0.0
      %1058 = vmatpush.xpose.msra.mxu0 0.0
      %1059 = vmatpush.xpose.msra.mxu0 0.0
      %1060 = vmatpush.xpose.msra.mxu0 0.0
      %1061 = vmatpush.xpose.msra.mxu0 %v1046
      %1062 = vmatpush.xpose.msra.mxu0 %v1044
      %1063 = vmatpush.xpose.msra.mxu0 %v1042
      %1064 = vmatmul.f32.gmra.mxu0 %v1036
      %v1065 = vpop.f32.mrf.mxu0
      %v1066 = vadd.f32 0.0, %v1065
      %1067 = vmatmul.f32.gmra.mxu0 %v1038
      %v1068 = vpop.f32.mrf.mxu0
      %v1069 = vadd.f32 0.0, %v1068
      %1070 = vmatmul.f32.gmra.mxu0 %v1040
      %v1071 = vpop.f32.mrf.mxu0
      %v1072 = vadd.f32 0.0, %v1071
      %1073 = vdwg.mxu0
      %1074 = vrot.lane.b32.xlu0 %v824, 88
      %v1075 = vpop.permute.xlu0 %1074
      %1076 = vrot.lane.b32.xlu0 %v826, 88
      %v1077 = vpop.permute.xlu0 %1076
      %1078 = vrot.lane.b32.xlu0 %v828, 88
      %v1079 = vpop.permute.xlu0 %1078
      %v1080 = vsel %vm859, %v824, 0
      %v1082 = vsel %vm859, %v826, 0
      %v1084 = vsel %vm859, %v828, 0
      %v1086 = vsel %vm859, %v1075, 0
      %v1088 = vsel %vm859, %v1077, 0
      %v1090 = vsel %vm859, %v1079, 0
      %1092 = vmatpush.xpose.msra.mxu0 0.0
      %1093 = vmatpush.xpose.msra.mxu0 0.0
      %1094 = vmatpush.xpose.msra.mxu0 0.0
      %1095 = vmatpush.xpose.msra.mxu0 0.0
      %1096 = vmatpush.xpose.msra.mxu0 0.0
      %1097 = vmatpush.xpose.msra.mxu0 0.0
      %1098 = vmatpush.xpose.msra.mxu0 0.0
      %1099 = vmatpush.xpose.msra.mxu0 0.0
      %1100 = vmatpush.xpose.msra.mxu0 0.0
      %1101 = vmatpush.xpose.msra.mxu0 0.0
      %1102 = vmatpush.xpose.msra.mxu0 0.0
      %1103 = vmatpush.xpose.msra.mxu0 0.0
      %1104 = vmatpush.xpose.msra.mxu0 0.0
      %1105 = vmatpush.xpose.msra.mxu0 %v1090
      %1106 = vmatpush.xpose.msra.mxu0 %v1088
      %1107 = vmatpush.xpose.msra.mxu0 %v1086
      %1108 = vmatmul.f32.gmra.mxu0 %v1080
      %v1109 = vpop.f32.mrf.mxu0
      %v1110 = vadd.f32 0.0, %v1109
      %1111 = vmatmul.f32.gmra.mxu0 %v1082
      %v1112 = vpop.f32.mrf.mxu0
      %v1113 = vadd.f32 0.0, %v1112
      %1114 = vmatmul.f32.gmra.mxu0 %v1084
      %v1115 = vpop.f32.mrf.mxu0
      %v1116 = vadd.f32 0.0, %v1115
      %1117 = vdwg.mxu0
      %1118 = vrot.lane.b32.xlu0 %v830, 88
      %v1119 = vpop.permute.xlu0 %1118
      %1120 = vrot.lane.b32.xlu0 %v832, 88
      %v1121 = vpop.permute.xlu0 %1120
      %1122 = vrot.lane.b32.xlu0 %v834, 88
      %v1123 = vpop.permute.xlu0 %1122
      %v1124 = vsel %vm859, %v830, 0
      %v1126 = vsel %vm859, %v832, 0
      %v1128 = vsel %vm859, %v834, 0
      %v1130 = vsel %vm859, %v1119, 0
      %v1132 = vsel %vm859, %v1121, 0
      %v1134 = vsel %vm859, %v1123, 0
      %1136 = vmatpush.xpose.msra.mxu0 0.0
      %1137 = vmatpush.xpose.msra.mxu0 0.0
      %1138 = vmatpush.xpose.msra.mxu0 0.0
      %1139 = vmatpush.xpose.msra.mxu0 0.0
      %1140 = vmatpush.xpose.msra.mxu0 0.0
      %1141 = vmatpush.xpose.msra.mxu0 0.0
      %1142 = vmatpush.xpose.msra.mxu0 0.0
      %1143 = vmatpush.xpose.msra.mxu0 0.0
      %1144 = vmatpush.xpose.msra.mxu0 0.0
      %1145 = vmatpush.xpose.msra.mxu0 0.0
      %1146 = vmatpush.xpose.msra.mxu0 0.0
      %1147 = vmatpush.xpose.msra.mxu0 0.0
      %1148 = vmatpush.xpose.msra.mxu0 0.0
      %1149 = vmatpush.xpose.msra.mxu0 %v1134
      %1150 = vmatpush.xpose.msra.mxu0 %v1132
      %1151 = vmatpush.xpose.msra.mxu0 %v1130
      %1152 = vmatmul.f32.gmra.mxu0 %v1124
      %v1153 = vpop.f32.mrf.mxu0
      %v1154 = vadd.f32 0.0, %v1153
      %1155 = vmatmul.f32.gmra.mxu0 %v1126
      %v1156 = vpop.f32.mrf.mxu0
      %v1157 = vadd.f32 0.0, %v1156
      %1158 = vmatmul.f32.gmra.mxu0 %v1128
      %v1159 = vpop.f32.mrf.mxu0
      %v1160 = vadd.f32 0.0, %v1159
      %1161 = vdwg.mxu0
      %1162 = vrot.lane.b32.xlu0 %v836, 88
      %v1163 = vpop.permute.xlu0 %1162
      %1164 = vrot.lane.b32.xlu0 %v838, 88
      %v1165 = vpop.permute.xlu0 %1164
      %1166 = vrot.lane.b32.xlu0 %v840, 88
      %v1167 = vpop.permute.xlu0 %1166
      %v1168 = vsel %vm859, %v836, 0
      %v1170 = vsel %vm859, %v838, 0
      %v1172 = vsel %vm859, %v840, 0
      %v1174 = vsel %vm859, %v1163, 0
      %v1176 = vsel %vm859, %v1165, 0
      %v1178 = vsel %vm859, %v1167, 0
      %1180 = vmatpush.xpose.msra.mxu0 0.0
      %1181 = vmatpush.xpose.msra.mxu0 0.0
      %1182 = vmatpush.xpose.msra.mxu0 0.0
      %1183 = vmatpush.xpose.msra.mxu0 0.0
      %1184 = vmatpush.xpose.msra.mxu0 0.0
      %1185 = vmatpush.xpose.msra.mxu0 0.0
      %1186 = vmatpush.xpose.msra.mxu0 0.0
      %1187 = vmatpush.xpose.msra.mxu0 0.0
      %1188 = vmatpush.xpose.msra.mxu0 0.0
      %1189 = vmatpush.xpose.msra.mxu0 0.0
      %1190 = vmatpush.xpose.msra.mxu0 0.0
      %1191 = vmatpush.xpose.msra.mxu0 0.0
      %1192 = vmatpush.xpose.msra.mxu0 0.0
      %1193 = vmatpush.xpose.msra.mxu0 %v1178
      %1194 = vmatpush.xpose.msra.mxu0 %v1176
      %1195 = vmatpush.xpose.msra.mxu0 %v1174
      %1196 = vmatmul.f32.gmra.mxu0 %v1168
      %v1197 = vpop.f32.mrf.mxu0
      %v1198 = vadd.f32 0.0, %v1197
      %1199 = vmatmul.f32.gmra.mxu0 %v1170
      %v1200 = vpop.f32.mrf.mxu0
      %v1201 = vadd.f32 0.0, %v1200
      %1202 = vmatmul.f32.gmra.mxu0 %v1172
      %v1203 = vpop.f32.mrf.mxu0
      %v1204 = vadd.f32 0.0, %v1203
      %1205 = vdwg.mxu0
      %1206 = vrot.lane.b32.xlu0 %v842, 88
      %v1207 = vpop.permute.xlu0 %1206
      %1208 = vrot.lane.b32.xlu0 %v844, 88
      %v1209 = vpop.permute.xlu0 %1208
      %1210 = vrot.lane.b32.xlu0 %v846, 88
      %v1211 = vpop.permute.xlu0 %1210
      %v1212 = vsel %vm859, %v842, 0
      %v1214 = vsel %vm859, %v844, 0
      %v1216 = vsel %vm859, %v846, 0
      %v1218 = vsel %vm859, %v1207, 0
      %v1220 = vsel %vm859, %v1209, 0
      %v1222 = vsel %vm859, %v1211, 0
      %1224 = vmatpush.xpose.msra.mxu0 0.0
      %1225 = vmatpush.xpose.msra.mxu0 0.0
      %1226 = vmatpush.xpose.msra.mxu0 0.0
      %1227 = vmatpush.xpose.msra.mxu0 0.0
      %1228 = vmatpush.xpose.msra.mxu0 0.0
      %1229 = vmatpush.xpose.msra.mxu0 0.0
      %1230 = vmatpush.xpose.msra.mxu0 0.0
      %1231 = vmatpush.xpose.msra.mxu0 0.0
      %1232 = vmatpush.xpose.msra.mxu0 0.0
      %1233 = vmatpush.xpose.msra.mxu0 0.0
      %1234 = vmatpush.xpose.msra.mxu0 0.0
      %1235 = vmatpush.xpose.msra.mxu0 0.0
      %1236 = vmatpush.xpose.msra.mxu0 0.0
      %1237 = vmatpush.xpose.msra.mxu0 %v1222
      %1238 = vmatpush.xpose.msra.mxu0 %v1220
      %1239 = vmatpush.xpose.msra.mxu0 %v1218
      %1240 = vmatmul.f32.gmra.mxu0 %v1212
      %v1241 = vpop.f32.mrf.mxu0
      %v1242 = vadd.f32 0.0, %v1241
      %1243 = vmatmul.f32.gmra.mxu0 %v1214
      %v1244 = vpop.f32.mrf.mxu0
      %v1245 = vadd.f32 0.0, %v1244
      %1246 = vmatmul.f32.gmra.mxu0 %v1216
      %v1247 = vpop.f32.mrf.mxu0
      %v1248 = vadd.f32 0.0, %v1247
      %1249 = vdwg.mxu0
      %1250 = vrot.lane.b32.xlu0 %v848, 88
      %v1251 = vpop.permute.xlu0 %1250
      %1252 = vrot.lane.b32.xlu0 %v850, 88
      %v1253 = vpop.permute.xlu0 %1252
      %1254 = vrot.lane.b32.xlu0 %v852, 88
      %v1255 = vpop.permute.xlu0 %1254
      %v1256 = vsel %vm859, %v848, 0
      %v1258 = vsel %vm859, %v850, 0
      %v1260 = vsel %vm859, %v852, 0
      %v1262 = vsel %vm859, %v1251, 0
      %v1264 = vsel %vm859, %v1253, 0
      %v1266 = vsel %vm859, %v1255, 0
      %1268 = vmatpush.xpose.msra.mxu0 0.0
      %1269 = vmatpush.xpose.msra.mxu0 0.0
      %1270 = vmatpush.xpose.msra.mxu0 0.0
      %1271 = vmatpush.xpose.msra.mxu0 0.0
      %1272 = vmatpush.xpose.msra.mxu0 0.0
      %1273 = vmatpush.xpose.msra.mxu0 0.0
      %1274 = vmatpush.xpose.msra.mxu0 0.0
      %1275 = vmatpush.xpose.msra.mxu0 0.0
      %1276 = vmatpush.xpose.msra.mxu0 0.0
      %1277 = vmatpush.xpose.msra.mxu0 0.0
      %1278 = vmatpush.xpose.msra.mxu0 0.0
      %1279 = vmatpush.xpose.msra.mxu0 0.0
      %1280 = vmatpush.xpose.msra.mxu0 0.0
      %1281 = vmatpush.xpose.msra.mxu0 %v1266
      %1282 = vmatpush.xpose.msra.mxu0 %v1264
      %1283 = vmatpush.xpose.msra.mxu0 %v1262
      %1284 = vmatmul.f32.gmra.mxu0 %v1256
      %v1285 = vpop.f32.mrf.mxu0
      %v1286 = vadd.f32 0.0, %v1285
      %1287 = vmatmul.f32.gmra.mxu0 %v1258
      %v1288 = vpop.f32.mrf.mxu0
      %v1289 = vadd.f32 0.0, %v1288
      %1290 = vmatmul.f32.gmra.mxu0 %v1260
      %v1291 = vpop.f32.mrf.mxu0
      %v1292 = vadd.f32 0.0, %v1291
      %1293 = vdwg.mxu0
      %v1294 = vmul.f32 %v890, 0.15811388
      %v1295 = vmul.f32 %v893, 0.15811388
      %v1296 = vmul.f32 %v896, 0.15811388
      %v1297 = vmul.f32 %v934, 0.15811388
      %v1298 = vmul.f32 %v937, 0.15811388
      %v1299 = vmul.f32 %v940, 0.15811388
      %v1300 = vmul.f32 %v978, 0.15811388
      %v1301 = vmul.f32 %v981, 0.15811388
      %v1302 = vmul.f32 %v984, 0.15811388
      %v1303 = vmul.f32 %v1022, 0.15811388
      %v1304 = vmul.f32 %v1025, 0.15811388
      %v1305 = vmul.f32 %v1028, 0.15811388
      %v1306 = vmul.f32 %v1066, 0.15811388
      %v1307 = vmul.f32 %v1069, 0.15811388
      %v1308 = vmul.f32 %v1072, 0.15811388
      %v1309 = vmul.f32 %v1110, 0.15811388
      %v1310 = vmul.f32 %v1113, 0.15811388
      %v1311 = vmul.f32 %v1116, 0.15811388
      %v1312 = vmul.f32 %v1154, 0.15811388
      %v1313 = vmul.f32 %v1157, 0.15811388
      %v1314 = vmul.f32 %v1160, 0.15811388
      %v1315 = vmul.f32 %v1198, 0.15811388
      %v1316 = vmul.f32 %v1201, 0.15811388
      %v1317 = vmul.f32 %v1204, 0.15811388
      %v1318 = vmul.f32 %v1242, 0.15811388
      %v1319 = vmul.f32 %v1245, 0.15811388
      %v1320 = vmul.f32 %v1248, 0.15811388
      %v1321 = vmul.f32 %v1286, 0.15811388
      %v1322 = vmul.f32 %v1289, 0.15811388
      %v1323 = vmul.f32 %v1292, 0.15811388
      %vm1324 = vcmask 179200
      %v1325 = vsel %vm1324, %v1294, -inf
      %1326 = vmax.xlane.f32.xlu0 %v1325
      %v1327 = vpop.xlane.xlu0 %1326
      %v1328 = vsel %vm1324, %v1295, -inf
      %1329 = vmax.xlane.f32.xlu0 %v1328
      %v1330 = vpop.xlane.xlu0 %1329
      %vm1331 = vcmask 177152
      %v1332 = vsel %vm1331, %v1296, -inf
      %1333 = vmax.xlane.f32.xlu0 %v1332
      %v1334 = vpop.xlane.xlu0 %1333
      %v1335 = vsel %vm1324, %v1297, -inf
      %1336 = vmax.xlane.f32.xlu0 %v1335
      %v1337 = vpop.xlane.xlu0 %1336
      %v1338 = vsel %vm1324, %v1298, -inf
      %1339 = vmax.xlane.f32.xlu0 %v1338
      %v1340 = vpop.xlane.xlu0 %1339
      %v1341 = vsel %vm1331, %v1299, -inf
      %1342 = vmax.xlane.f32.xlu0 %v1341
      %v1343 = vpop.xlane.xlu0 %1342
      %v1344 = vsel %vm1324, %v1300, -inf
      %1345 = vmax.xlane.f32.xlu0 %v1344
      %v1346 = vpop.xlane.xlu0 %1345
      %v1347 = vsel %vm1324, %v1301, -inf
      %1348 = vmax.xlane.f32.xlu0 %v1347
      %v1349 = vpop.xlane.xlu0 %1348
      %v1350 = vsel %vm1331, %v1302, -inf
      %1351 = vmax.xlane.f32.xlu0 %v1350
      %v1352 = vpop.xlane.xlu0 %1351
      %v1353 = vsel %vm1324, %v1303, -inf
      %1354 = vmax.xlane.f32.xlu0 %v1353
      %v1355 = vpop.xlane.xlu0 %1354
      %v1356 = vsel %vm1324, %v1304, -inf
      %1357 = vmax.xlane.f32.xlu0 %v1356
      %v1358 = vpop.xlane.xlu0 %1357
      %v1359 = vsel %vm1331, %v1305, -inf
      %1360 = vmax.xlane.f32.xlu0 %v1359
      %v1361 = vpop.xlane.xlu0 %1360
      %v1362 = vsel %vm1324, %v1306, -inf
      %1363 = vmax.xlane.f32.xlu0 %v1362
      %v1364 = vpop.xlane.xlu0 %1363
      %v1365 = vsel %vm1324, %v1307, -inf
      %1366 = vmax.xlane.f32.xlu0 %v1365
      %v1367 = vpop.xlane.xlu0 %1366
      %v1368 = vsel %vm1331, %v1308, -inf
      %1369 = vmax.xlane.f32.xlu0 %v1368
      %v1370 = vpop.xlane.xlu0 %1369
      %v1371 = vsel %vm1324, %v1309, -inf
      %1372 = vmax.xlane.f32.xlu0 %v1371
      %v1373 = vpop.xlane.xlu0 %1372
      %v1374 = vsel %vm1324, %v1310, -inf
      %1375 = vmax.xlane.f32.xlu0 %v1374
      %v1376 = vpop.xlane.xlu0 %1375
      %v1377 = vsel %vm1331, %v1311, -inf
      %1378 = vmax.xlane.f32.xlu0 %v1377
      %v1379 = vpop.xlane.xlu0 %1378
      %v1380 = vsel %vm1324, %v1312, -inf
      %1381 = vmax.xlane.f32.xlu0 %v1380
      %v1382 = vpop.xlane.xlu0 %1381
      %v1383 = vsel %vm1324, %v1313, -inf
      %1384 = vmax.xlane.f32.xlu0 %v1383
      %v1385 = vpop.xlane.xlu0 %1384
      %v1386 = vsel %vm1331, %v1314, -inf
      %1387 = vmax.xlane.f32.xlu0 %v1386
      %v1388 = vpop.xlane.xlu0 %1387
      %v1389 = vsel %vm1324, %v1315, -inf
      %1390 = vmax.xlane.f32.xlu0 %v1389
      %v1391 = vpop.xlane.xlu0 %1390
      %v1392 = vsel %vm1324, %v1316, -inf
      %1393 = vmax.xlane.f32.xlu0 %v1392
      %v1394 = vpop.xlane.xlu0 %1393
      %v1395 = vsel %vm1331, %v1317, -inf
      %1396 = vmax.xlane.f32.xlu0 %v1395
      %v1397 = vpop.xlane.xlu0 %1396
      %v1398 = vsel %vm1324, %v1318, -inf
      %1399 = vmax.xlane.f32.xlu0 %v1398
      %v1400 = vpop.xlane.xlu0 %1399
      %v1401 = vsel %vm1324, %v1319, -inf
      %1402 = vmax.xlane.f32.xlu0 %v1401
      %v1403 = vpop.xlane.xlu0 %1402
      %v1404 = vsel %vm1331, %v1320, -inf
      %1405 = vmax.xlane.f32.xlu0 %v1404
      %v1406 = vpop.xlane.xlu0 %1405
      %v1407 = vsel %vm1324, %v1321, -inf
      %1408 = vmax.xlane.f32.xlu0 %v1407
      %v1409 = vpop.xlane.xlu0 %1408
      %v1410 = vsel %vm1324, %v1322, -inf
      %1411 = vmax.xlane.f32.xlu0 %v1410
      %v1412 = vpop.xlane.xlu0 %1411
      %v1413 = vsel %vm1331, %v1323, -inf
      %1414 = vmax.xlane.f32.xlu0 %v1413
      %v1415 = vpop.xlane.xlu0 %1414
      %v1416 = vsub.f32 %v1294, %v1327
      %v1417 = vsub.f32 %v1295, %v1330
      %v1418 = vsub.f32 %v1296, %v1334
      %v1419 = vsub.f32 %v1297, %v1337
      %v1420 = vsub.f32 %v1298, %v1340
      %v1421 = vsub.f32 %v1299, %v1343
      %v1422 = vsub.f32 %v1300, %v1346
      %v1423 = vsub.f32 %v1301, %v1349
      %v1424 = vsub.f32 %v1302, %v1352
      %v1425 = vsub.f32 %v1303, %v1355
      %v1426 = vsub.f32 %v1304, %v1358
      %v1427 = vsub.f32 %v1305, %v1361
      %v1428 = vsub.f32 %v1306, %v1364
      %v1429 = vsub.f32 %v1307, %v1367
      %v1430 = vsub.f32 %v1308, %v1370
      %v1431 = vsub.f32 %v1309, %v1373
      %v1432 = vsub.f32 %v1310, %v1376
      %v1433 = vsub.f32 %v1311, %v1379
      %v1434 = vsub.f32 %v1312, %v1382
      %v1435 = vsub.f32 %v1313, %v1385
      %v1436 = vsub.f32 %v1314, %v1388
      %v1437 = vsub.f32 %v1315, %v1391
      %v1438 = vsub.f32 %v1316, %v1394
      %v1439 = vsub.f32 %v1317, %v1397
      %v1440 = vsub.f32 %v1318, %v1400
      %v1441 = vsub.f32 %v1319, %v1403
      %v1442 = vsub.f32 %v1320, %v1406
      %v1443 = vsub.f32 %v1321, %v1409
      %v1444 = vsub.f32 %v1322, %v1412
      %v1445 = vsub.f32 %v1323, %v1415
      %v1446 = vmul.f32 %v1416, 1.442695
      %v1447 = vpow.pop %v1446
      %v1448 = vmul.f32 %v1417, 1.442695
      %v1449 = vpow.pop %v1448
      %v1450 = vmul.f32 %v1418, 1.442695
      %v1451 = vpow.pop %v1450
      %v1452 = vmul.f32 %v1419, 1.442695
      %v1453 = vpow.pop %v1452
      %v1454 = vmul.f32 %v1420, 1.442695
      %v1455 = vpow.pop %v1454
      %v1456 = vmul.f32 %v1421, 1.442695
      %v1457 = vpow.pop %v1456
      %v1458 = vmul.f32 %v1422, 1.442695
      %v1459 = vpow.pop %v1458
      %v1460 = vmul.f32 %v1423, 1.442695
      %v1461 = vpow.pop %v1460
      %v1462 = vmul.f32 %v1424, 1.442695
      %v1463 = vpow.pop %v1462
      %v1464 = vmul.f32 %v1425, 1.442695
      %v1465 = vpow.pop %v1464
      %v1466 = vmul.f32 %v1426, 1.442695
      %v1467 = vpow.pop %v1466
      %v1468 = vmul.f32 %v1427, 1.442695
      %v1469 = vpow.pop %v1468
      %v1470 = vmul.f32 %v1428, 1.442695
      %v1471 = vpow.pop %v1470
      %v1472 = vmul.f32 %v1429, 1.442695
      %v1473 = vpow.pop %v1472
      %v1474 = vmul.f32 %v1430, 1.442695
      %v1475 = vpow.pop %v1474
      %v1476 = vmul.f32 %v1431, 1.442695
      %v1477 = vpow.pop %v1476
      %v1478 = vmul.f32 %v1432, 1.442695
      %v1479 = vpow.pop %v1478
      %v1480 = vmul.f32 %v1433, 1.442695
      %v1481 = vpow.pop %v1480
      %v1482 = vmul.f32 %v1434, 1.442695
      %v1483 = vpow.pop %v1482
      %v1484 = vmul.f32 %v1435, 1.442695
      %v1485 = vpow.pop %v1484
      %v1486 = vmul.f32 %v1436, 1.442695
      %v1487 = vpow.pop %v1486
      %v1488 = vmul.f32 %v1437, 1.442695
      %v1489 = vpow.pop %v1488
      %v1490 = vmul.f32 %v1438, 1.442695
      %v1491 = vpow.pop %v1490
      %v1492 = vmul.f32 %v1439, 1.442695
      %v1493 = vpow.pop %v1492
      %v1494 = vmul.f32 %v1440, 1.442695
      %v1495 = vpow.pop %v1494
      %v1496 = vmul.f32 %v1441, 1.442695
      %v1497 = vpow.pop %v1496
      %v1498 = vmul.f32 %v1442, 1.442695
      %v1499 = vpow.pop %v1498
      %v1500 = vmul.f32 %v1443, 1.442695
      %v1501 = vpow.pop %v1500
      %v1502 = vmul.f32 %v1444, 1.442695
      %v1503 = vpow.pop %v1502
      %v1504 = vmul.f32 %v1445, 1.442695
      %v1505 = vpow.pop %v1504
      %v1506 = vsel %vm1324, %v1447, 0.0
      %1507 = vadd.xlane.f32.xlu0 %v1506
      %v1508 = vpop.xlane.xlu0 %1507
      %v1509 = vsel %vm1324, %v1449, 0.0
      %1510 = vadd.xlane.f32.xlu0 %v1509
      %v1511 = vpop.xlane.xlu0 %1510
      %v1512 = vsel %vm1331, %v1451, 0.0
      %1513 = vadd.xlane.f32.xlu0 %v1512
      %v1514 = vpop.xlane.xlu0 %1513
      %v1515 = vsel %vm1324, %v1453, 0.0
      %1516 = vadd.xlane.f32.xlu0 %v1515
      %v1517 = vpop.xlane.xlu0 %1516
      %v1518 = vsel %vm1324, %v1455, 0.0
      %1519 = vadd.xlane.f32.xlu0 %v1518
      %v1520 = vpop.xlane.xlu0 %1519
      %v1521 = vsel %vm1331, %v1457, 0.0
      %1522 = vadd.xlane.f32.xlu0 %v1521
      %v1523 = vpop.xlane.xlu0 %1522
      %v1524 = vsel %vm1324, %v1459, 0.0
      %1525 = vadd.xlane.f32.xlu0 %v1524
      %v1526 = vpop.xlane.xlu0 %1525
      %v1527 = vsel %vm1324, %v1461, 0.0
      %1528 = vadd.xlane.f32.xlu0 %v1527
      %v1529 = vpop.xlane.xlu0 %1528
      %v1530 = vsel %vm1331, %v1463, 0.0
      %1531 = vadd.xlane.f32.xlu0 %v1530
      %v1532 = vpop.xlane.xlu0 %1531
      %v1533 = vsel %vm1324, %v1465, 0.0
      %1534 = vadd.xlane.f32.xlu0 %v1533
      %v1535 = vpop.xlane.xlu0 %1534
      %v1536 = vsel %vm1324, %v1467, 0.0
      %1537 = vadd.xlane.f32.xlu0 %v1536
      %v1538 = vpop.xlane.xlu0 %1537
      %v1539 = vsel %vm1331, %v1469, 0.0
      %1540 = vadd.xlane.f32.xlu0 %v1539
      %v1541 = vpop.xlane.xlu0 %1540
      %v1542 = vsel %vm1324, %v1471, 0.0
      %1543 = vadd.xlane.f32.xlu0 %v1542
      %v1544 = vpop.xlane.xlu0 %1543
      %v1545 = vsel %vm1324, %v1473, 0.0
      %1546 = vadd.xlane.f32.xlu0 %v1545
      %v1547 = vpop.xlane.xlu0 %1546
      %v1548 = vsel %vm1331, %v1475, 0.0
      %1549 = vadd.xlane.f32.xlu0 %v1548
      %v1550 = vpop.xlane.xlu0 %1549
      %v1551 = vsel %vm1324, %v1477, 0.0
      %1552 = vadd.xlane.f32.xlu0 %v1551
      %v1553 = vpop.xlane.xlu0 %1552
      %v1554 = vsel %vm1324, %v1479, 0.0
      %1555 = vadd.xlane.f32.xlu0 %v1554
      %v1556 = vpop.xlane.xlu0 %1555
      %v1557 = vsel %vm1331, %v1481, 0.0
      %1558 = vadd.xlane.f32.xlu0 %v1557
      %v1559 = vpop.xlane.xlu0 %1558
      %v1560 = vsel %vm1324, %v1483, 0.0
      %1561 = vadd.xlane.f32.xlu0 %v1560
      %v1562 = vpop.xlane.xlu0 %1561
      %v1563 = vsel %vm1324, %v1485, 0.0
      %1564 = vadd.xlane.f32.xlu0 %v1563
      %v1565 = vpop.xlane.xlu0 %1564
      %v1566 = vsel %vm1331, %v1487, 0.0
      %1567 = vadd.xlane.f32.xlu0 %v1566
      %v1568 = vpop.xlane.xlu0 %1567
      %v1569 = vsel %vm1324, %v1489, 0.0
      %1570 = vadd.xlane.f32.xlu0 %v1569
      %v1571 = vpop.xlane.xlu0 %1570
      %v1572 = vsel %vm1324, %v1491, 0.0
      %1573 = vadd.xlane.f32.xlu0 %v1572
      %v1574 = vpop.xlane.xlu0 %1573
      %v1575 = vsel %vm1331, %v1493, 0.0
      %1576 = vadd.xlane.f32.xlu0 %v1575
      %v1577 = vpop.xlane.xlu0 %1576
      %v1578 = vsel %vm1324, %v1495, 0.0
      %1579 = vadd.xlane.f32.xlu0 %v1578
      %v1580 = vpop.xlane.xlu0 %1579
      %v1581 = vsel %vm1324, %v1497, 0.0
      %1582 = vadd.xlane.f32.xlu0 %v1581
      %v1583 = vpop.xlane.xlu0 %1582
      %v1584 = vsel %vm1331, %v1499, 0.0
      %1585 = vadd.xlane.f32.xlu0 %v1584
      %v1586 = vpop.xlane.xlu0 %1585
      %v1587 = vsel %vm1324, %v1501, 0.0
      %1588 = vadd.xlane.f32.xlu0 %v1587
      %v1589 = vpop.xlane.xlu0 %1588
      %v1590 = vsel %vm1324, %v1503, 0.0
      %1591 = vadd.xlane.f32.xlu0 %v1590
      %v1592 = vpop.xlane.xlu0 %1591
      %v1593 = vsel %vm1331, %v1505, 0.0
      %1594 = vadd.xlane.f32.xlu0 %v1593
      %v1595 = vpop.xlane.xlu0 %1594
      %v1596 = vrcp.pop %v1508
      %v1597 = vmul.f32 %v1508, %v1596
      %v1598 = vsub.f32 1.0, %v1597
      %v1599 = vmul.f32 %v1596, %v1598
      %v1600 = vadd.f32 %v1596, %v1599
      %vm1601 = vweird.f32 %v1508
      %vm1602 = vweird.f32 %v1596
      %vm1603 = vmor %vm1601, %vm1602
      %v1604 = vsel %vm1603, %v1596, %v1600
      %v1605 = vand.u32 2147483647, %v1508
      %vm1606 = vcmp.eq.f32.partialorder %v1605, 8.507059e+37
      %v1607 = vand.u32 %v1508, 2147483648
      %v1608 = vor.u32 1.1754944e-38, %v1607
      %v1609 = vsel %vm1606, %v1608, %v1604
      %v1610 = vmul.f32 %v1447, %v1609
      %v1611 = vrcp.pop %v1511
      %v1612 = vmul.f32 %v1511, %v1611
      %v1613 = vsub.f32 1.0, %v1612
      %v1614 = vmul.f32 %v1611, %v1613
      %v1615 = vadd.f32 %v1611, %v1614
      %vm1616 = vweird.f32 %v1511
      %vm1617 = vweird.f32 %v1611
      %vm1618 = vmor %vm1616, %vm1617
      %v1619 = vsel %vm1618, %v1611, %v1615
      %v1620 = vand.u32 2147483647, %v1511
      %vm1621 = vcmp.eq.f32.partialorder %v1620, 8.507059e+37
      %v1622 = vand.u32 %v1511, 2147483648
      %v1623 = vor.u32 1.1754944e-38, %v1622
      %v1624 = vsel %vm1621, %v1623, %v1619
      %v1625 = vmul.f32 %v1449, %v1624
      %v1626 = vrcp.pop %v1514
      %v1627 = vmul.f32 %v1514, %v1626
      %v1628 = vsub.f32 1.0, %v1627
      %v1629 = vmul.f32 %v1626, %v1628
      %v1630 = vadd.f32 %v1626, %v1629
      %vm1631 = vweird.f32 %v1514
      %vm1632 = vweird.f32 %v1626
      %vm1633 = vmor %vm1631, %vm1632
      %v1634 = vsel %vm1633, %v1626, %v1630
      %v1635 = vand.u32 2147483647, %v1514
      %vm1636 = vcmp.eq.f32.partialorder %v1635, 8.507059e+37
      %v1637 = vand.u32 %v1514, 2147483648
      %v1638 = vor.u32 1.1754944e-38, %v1637
      %v1639 = vsel %vm1636, %v1638, %v1634
      %v1640 = vmul.f32 %v1451, %v1639
      %v1641 = vrcp.pop %v1517
      %v1642 = vmul.f32 %v1517, %v1641
      %v1643 = vsub.f32 1.0, %v1642
      %v1644 = vmul.f32 %v1641, %v1643
      %v1645 = vadd.f32 %v1641, %v1644
      %vm1646 = vweird.f32 %v1517
      %vm1647 = vweird.f32 %v1641
      %vm1648 = vmor %vm1646, %vm1647
      %v1649 = vsel %vm1648, %v1641, %v1645
      %v1650 = vand.u32 2147483647, %v1517
      %vm1651 = vcmp.eq.f32.partialorder %v1650, 8.507059e+37
      %v1652 = vand.u32 %v1517, 2147483648
      %v1653 = vor.u32 1.1754944e-38, %v1652
      %v1654 = vsel %vm1651, %v1653, %v1649
      %v1655 = vmul.f32 %v1453, %v1654
      %v1656 = vrcp.pop %v1520
      %v1657 = vmul.f32 %v1520, %v1656
      %v1658 = vsub.f32 1.0, %v1657
      %v1659 = vmul.f32 %v1656, %v1658
      %v1660 = vadd.f32 %v1656, %v1659
      %vm1661 = vweird.f32 %v1520
      %vm1662 = vweird.f32 %v1656
      %vm1663 = vmor %vm1661, %vm1662
      %v1664 = vsel %vm1663, %v1656, %v1660
      %v1665 = vand.u32 2147483647, %v1520
      %vm1666 = vcmp.eq.f32.partialorder %v1665, 8.507059e+37
      %v1667 = vand.u32 %v1520, 2147483648
      %v1668 = vor.u32 1.1754944e-38, %v1667
      %v1669 = vsel %vm1666, %v1668, %v1664
      %v1670 = vmul.f32 %v1455, %v1669
      %v1671 = vrcp.pop %v1523
      %v1672 = vmul.f32 %v1523, %v1671
      %v1673 = vsub.f32 1.0, %v1672
      %v1674 = vmul.f32 %v1671, %v1673
      %v1675 = vadd.f32 %v1671, %v1674
      %vm1676 = vweird.f32 %v1523
      %vm1677 = vweird.f32 %v1671
      %vm1678 = vmor %vm1676, %vm1677
      %v1679 = vsel %vm1678, %v1671, %v1675
      %v1680 = vand.u32 2147483647, %v1523
      %vm1681 = vcmp.eq.f32.partialorder %v1680, 8.507059e+37
      %v1682 = vand.u32 %v1523, 2147483648
      %v1683 = vor.u32 1.1754944e-38, %v1682
      %v1684 = vsel %vm1681, %v1683, %v1679
      %v1685 = vmul.f32 %v1457, %v1684
      %v1686 = vrcp.pop %v1526
      %v1687 = vmul.f32 %v1526, %v1686
      %v1688 = vsub.f32 1.0, %v1687
      %v1689 = vmul.f32 %v1686, %v1688
      %v1690 = vadd.f32 %v1686, %v1689
      %vm1691 = vweird.f32 %v1526
      %vm1692 = vweird.f32 %v1686
      %vm1693 = vmor %vm1691, %vm1692
      %v1694 = vsel %vm1693, %v1686, %v1690
      %v1695 = vand.u32 2147483647, %v1526
      %vm1696 = vcmp.eq.f32.partialorder %v1695, 8.507059e+37
      %v1697 = vand.u32 %v1526, 2147483648
      %v1698 = vor.u32 1.1754944e-38, %v1697
      %v1699 = vsel %vm1696, %v1698, %v1694
      %v1700 = vmul.f32 %v1459, %v1699
      %v1701 = vrcp.pop %v1529
      %v1702 = vmul.f32 %v1529, %v1701
      %v1703 = vsub.f32 1.0, %v1702
      %v1704 = vmul.f32 %v1701, %v1703
      %v1705 = vadd.f32 %v1701, %v1704
      %vm1706 = vweird.f32 %v1529
      %vm1707 = vweird.f32 %v1701
      %vm1708 = vmor %vm1706, %vm1707
      %v1709 = vsel %vm1708, %v1701, %v1705
      %v1710 = vand.u32 2147483647, %v1529
      %vm1711 = vcmp.eq.f32.partialorder %v1710, 8.507059e+37
      %v1712 = vand.u32 %v1529, 2147483648
      %v1713 = vor.u32 1.1754944e-38, %v1712
      %v1714 = vsel %vm1711, %v1713, %v1709
      %v1715 = vmul.f32 %v1461, %v1714
      %v1716 = vrcp.pop %v1532
      %v1717 = vmul.f32 %v1532, %v1716
      %v1718 = vsub.f32 1.0, %v1717
      %v1719 = vmul.f32 %v1716, %v1718
      %v1720 = vadd.f32 %v1716, %v1719
      %vm1721 = vweird.f32 %v1532
      %vm1722 = vweird.f32 %v1716
      %vm1723 = vmor %vm1721, %vm1722
      %v1724 = vsel %vm1723, %v1716, %v1720
      %v1725 = vand.u32 2147483647, %v1532
      %vm1726 = vcmp.eq.f32.partialorder %v1725, 8.507059e+37
      %v1727 = vand.u32 %v1532, 2147483648
      %v1728 = vor.u32 1.1754944e-38, %v1727
      %v1729 = vsel %vm1726, %v1728, %v1724
      %v1730 = vmul.f32 %v1463, %v1729
      %v1731 = vrcp.pop %v1535
      %v1732 = vmul.f32 %v1535, %v1731
      %v1733 = vsub.f32 1.0, %v1732
      %v1734 = vmul.f32 %v1731, %v1733
      %v1735 = vadd.f32 %v1731, %v1734
      %vm1736 = vweird.f32 %v1535
      %vm1737 = vweird.f32 %v1731
      %vm1738 = vmor %vm1736, %vm1737
      %v1739 = vsel %vm1738, %v1731, %v1735
      %v1740 = vand.u32 2147483647, %v1535
      %vm1741 = vcmp.eq.f32.partialorder %v1740, 8.507059e+37
      %v1742 = vand.u32 %v1535, 2147483648
      %v1743 = vor.u32 1.1754944e-38, %v1742
      %v1744 = vsel %vm1741, %v1743, %v1739
      %v1745 = vmul.f32 %v1465, %v1744
      %v1746 = vrcp.pop %v1538
      %v1747 = vmul.f32 %v1538, %v1746
      %v1748 = vsub.f32 1.0, %v1747
      %v1749 = vmul.f32 %v1746, %v1748
      %v1750 = vadd.f32 %v1746, %v1749
      %vm1751 = vweird.f32 %v1538
      %vm1752 = vweird.f32 %v1746
      %vm1753 = vmor %vm1751, %vm1752
      %v1754 = vsel %vm1753, %v1746, %v1750
      %v1755 = vand.u32 2147483647, %v1538
      %vm1756 = vcmp.eq.f32.partialorder %v1755, 8.507059e+37
      %v1757 = vand.u32 %v1538, 2147483648
      %v1758 = vor.u32 1.1754944e-38, %v1757
      %v1759 = vsel %vm1756, %v1758, %v1754
      %v1760 = vmul.f32 %v1467, %v1759
      %v1761 = vrcp.pop %v1541
      %v1762 = vmul.f32 %v1541, %v1761
      %v1763 = vsub.f32 1.0, %v1762
      %v1764 = vmul.f32 %v1761, %v1763
      %v1765 = vadd.f32 %v1761, %v1764
      %vm1766 = vweird.f32 %v1541
      %vm1767 = vweird.f32 %v1761
      %vm1768 = vmor %vm1766, %vm1767
      %v1769 = vsel %vm1768, %v1761, %v1765
      %v1770 = vand.u32 2147483647, %v1541
      %vm1771 = vcmp.eq.f32.partialorder %v1770, 8.507059e+37
      %v1772 = vand.u32 %v1541, 2147483648
      %v1773 = vor.u32 1.1754944e-38, %v1772
      %v1774 = vsel %vm1771, %v1773, %v1769
      %v1775 = vmul.f32 %v1469, %v1774
      %v1776 = vrcp.pop %v1544
      %v1777 = vmul.f32 %v1544, %v1776
      %v1778 = vsub.f32 1.0, %v1777
      %v1779 = vmul.f32 %v1776, %v1778
      %v1780 = vadd.f32 %v1776, %v1779
      %vm1781 = vweird.f32 %v1544
      %vm1782 = vweird.f32 %v1776
      %vm1783 = vmor %vm1781, %vm1782
      %v1784 = vsel %vm1783, %v1776, %v1780
      %v1785 = vand.u32 2147483647, %v1544
      %vm1786 = vcmp.eq.f32.partialorder %v1785, 8.507059e+37
      %v1787 = vand.u32 %v1544, 2147483648
      %v1788 = vor.u32 1.1754944e-38, %v1787
      %v1789 = vsel %vm1786, %v1788, %v1784
      %v1790 = vmul.f32 %v1471, %v1789
      %v1791 = vrcp.pop %v1547
      %v1792 = vmul.f32 %v1547, %v1791
      %v1793 = vsub.f32 1.0, %v1792
      %v1794 = vmul.f32 %v1791, %v1793
      %v1795 = vadd.f32 %v1791, %v1794
      %vm1796 = vweird.f32 %v1547
      %vm1797 = vweird.f32 %v1791
      %vm1798 = vmor %vm1796, %vm1797
      %v1799 = vsel %vm1798, %v1791, %v1795
      %v1800 = vand.u32 2147483647, %v1547
      %vm1801 = vcmp.eq.f32.partialorder %v1800, 8.507059e+37
      %v1802 = vand.u32 %v1547, 2147483648
      %v1803 = vor.u32 1.1754944e-38, %v1802
      %v1804 = vsel %vm1801, %v1803, %v1799
      %v1805 = vmul.f32 %v1473, %v1804
      %v1806 = vrcp.pop %v1550
      %v1807 = vmul.f32 %v1550, %v1806
      %v1808 = vsub.f32 1.0, %v1807
      %v1809 = vmul.f32 %v1806, %v1808
      %v1810 = vadd.f32 %v1806, %v1809
      %vm1811 = vweird.f32 %v1550
      %vm1812 = vweird.f32 %v1806
      %vm1813 = vmor %vm1811, %vm1812
      %v1814 = vsel %vm1813, %v1806, %v1810
      %v1815 = vand.u32 2147483647, %v1550
      %vm1816 = vcmp.eq.f32.partialorder %v1815, 8.507059e+37
      %v1817 = vand.u32 %v1550, 2147483648
      %v1818 = vor.u32 1.1754944e-38, %v1817
      %v1819 = vsel %vm1816, %v1818, %v1814
      %v1820 = vmul.f32 %v1475, %v1819
      %v1821 = vrcp.pop %v1553
      %v1822 = vmul.f32 %v1553, %v1821
      %v1823 = vsub.f32 1.0, %v1822
      %v1824 = vmul.f32 %v1821, %v1823
      %v1825 = vadd.f32 %v1821, %v1824
      %vm1826 = vweird.f32 %v1553
      %vm1827 = vweird.f32 %v1821
      %vm1828 = vmor %vm1826, %vm1827
      %v1829 = vsel %vm1828, %v1821, %v1825
      %v1830 = vand.u32 2147483647, %v1553
      %vm1831 = vcmp.eq.f32.partialorder %v1830, 8.507059e+37
      %v1832 = vand.u32 %v1553, 2147483648
      %v1833 = vor.u32 1.1754944e-38, %v1832
      %v1834 = vsel %vm1831, %v1833, %v1829
      %v1835 = vmul.f32 %v1477, %v1834
      %v1836 = vrcp.pop %v1556
      %v1837 = vmul.f32 %v1556, %v1836
      %v1838 = vsub.f32 1.0, %v1837
      %v1839 = vmul.f32 %v1836, %v1838
      %v1840 = vadd.f32 %v1836, %v1839
      %vm1841 = vweird.f32 %v1556
      %vm1842 = vweird.f32 %v1836
      %vm1843 = vmor %vm1841, %vm1842
      %v1844 = vsel %vm1843, %v1836, %v1840
      %v1845 = vand.u32 2147483647, %v1556
      %vm1846 = vcmp.eq.f32.partialorder %v1845, 8.507059e+37
      %v1847 = vand.u32 %v1556, 2147483648
      %v1848 = vor.u32 1.1754944e-38, %v1847
      %v1849 = vsel %vm1846, %v1848, %v1844
      %v1850 = vmul.f32 %v1479, %v1849
      %v1851 = vrcp.pop %v1559
      %v1852 = vmul.f32 %v1559, %v1851
      %v1853 = vsub.f32 1.0, %v1852
      %v1854 = vmul.f32 %v1851, %v1853
      %v1855 = vadd.f32 %v1851, %v1854
      %vm1856 = vweird.f32 %v1559
      %vm1857 = vweird.f32 %v1851
      %vm1858 = vmor %vm1856, %vm1857
      %v1859 = vsel %vm1858, %v1851, %v1855
      %v1860 = vand.u32 2147483647, %v1559
      %vm1861 = vcmp.eq.f32.partialorder %v1860, 8.507059e+37
      %v1862 = vand.u32 %v1559, 2147483648
      %v1863 = vor.u32 1.1754944e-38, %v1862
      %v1864 = vsel %vm1861, %v1863, %v1859
      %v1865 = vmul.f32 %v1481, %v1864
      %v1866 = vrcp.pop %v1562
      %v1867 = vmul.f32 %v1562, %v1866
      %v1868 = vsub.f32 1.0, %v1867
      %v1869 = vmul.f32 %v1866, %v1868
      %v1870 = vadd.f32 %v1866, %v1869
      %vm1871 = vweird.f32 %v1562
      %vm1872 = vweird.f32 %v1866
      %vm1873 = vmor %vm1871, %vm1872
      %v1874 = vsel %vm1873, %v1866, %v1870
      %v1875 = vand.u32 2147483647, %v1562
      %vm1876 = vcmp.eq.f32.partialorder %v1875, 8.507059e+37
      %v1877 = vand.u32 %v1562, 2147483648
      %v1878 = vor.u32 1.1754944e-38, %v1877
      %v1879 = vsel %vm1876, %v1878, %v1874
      %v1880 = vmul.f32 %v1483, %v1879
      %v1881 = vrcp.pop %v1565
      %v1882 = vmul.f32 %v1565, %v1881
      %v1883 = vsub.f32 1.0, %v1882
      %v1884 = vmul.f32 %v1881, %v1883
      %v1885 = vadd.f32 %v1881, %v1884
      %vm1886 = vweird.f32 %v1565
      %vm1887 = vweird.f32 %v1881
      %vm1888 = vmor %vm1886, %vm1887
      %v1889 = vsel %vm1888, %v1881, %v1885
      %v1890 = vand.u32 2147483647, %v1565
      %vm1891 = vcmp.eq.f32.partialorder %v1890, 8.507059e+37
      %v1892 = vand.u32 %v1565, 2147483648
      %v1893 = vor.u32 1.1754944e-38, %v1892
      %v1894 = vsel %vm1891, %v1893, %v1889
      %v1895 = vmul.f32 %v1485, %v1894
      %v1896 = vrcp.pop %v1568
      %v1897 = vmul.f32 %v1568, %v1896
      %v1898 = vsub.f32 1.0, %v1897
      %v1899 = vmul.f32 %v1896, %v1898
      %v1900 = vadd.f32 %v1896, %v1899
      %vm1901 = vweird.f32 %v1568
      %vm1902 = vweird.f32 %v1896
      %vm1903 = vmor %vm1901, %vm1902
      %v1904 = vsel %vm1903, %v1896, %v1900
      %v1905 = vand.u32 2147483647, %v1568
      %vm1906 = vcmp.eq.f32.partialorder %v1905, 8.507059e+37
      %v1907 = vand.u32 %v1568, 2147483648
      %v1908 = vor.u32 1.1754944e-38, %v1907
      %v1909 = vsel %vm1906, %v1908, %v1904
      %v1910 = vmul.f32 %v1487, %v1909
      %v1911 = vrcp.pop %v1571
      %v1912 = vmul.f32 %v1571, %v1911
      %v1913 = vsub.f32 1.0, %v1912
      %v1914 = vmul.f32 %v1911, %v1913
      %v1915 = vadd.f32 %v1911, %v1914
      %vm1916 = vweird.f32 %v1571
      %vm1917 = vweird.f32 %v1911
      %vm1918 = vmor %vm1916, %vm1917
      %v1919 = vsel %vm1918, %v1911, %v1915
      %v1920 = vand.u32 2147483647, %v1571
      %vm1921 = vcmp.eq.f32.partialorder %v1920, 8.507059e+37
      %v1922 = vand.u32 %v1571, 2147483648
      %v1923 = vor.u32 1.1754944e-38, %v1922
      %v1924 = vsel %vm1921, %v1923, %v1919
      %v1925 = vmul.f32 %v1489, %v1924
      %v1926 = vrcp.pop %v1574
      %v1927 = vmul.f32 %v1574, %v1926
      %v1928 = vsub.f32 1.0, %v1927
      %v1929 = vmul.f32 %v1926, %v1928
      %v1930 = vadd.f32 %v1926, %v1929
      %vm1931 = vweird.f32 %v1574
      %vm1932 = vweird.f32 %v1926
      %vm1933 = vmor %vm1931, %vm1932
      %v1934 = vsel %vm1933, %v1926, %v1930
      %v1935 = vand.u32 2147483647, %v1574
      %vm1936 = vcmp.eq.f32.partialorder %v1935, 8.507059e+37
      %v1937 = vand.u32 %v1574, 2147483648
      %v1938 = vor.u32 1.1754944e-38, %v1937
      %v1939 = vsel %vm1936, %v1938, %v1934
      %v1940 = vmul.f32 %v1491, %v1939
      %v1941 = vrcp.pop %v1577
      %v1942 = vmul.f32 %v1577, %v1941
      %v1943 = vsub.f32 1.0, %v1942
      %v1944 = vmul.f32 %v1941, %v1943
      %v1945 = vadd.f32 %v1941, %v1944
      %vm1946 = vweird.f32 %v1577
      %vm1947 = vweird.f32 %v1941
      %vm1948 = vmor %vm1946, %vm1947
      %v1949 = vsel %vm1948, %v1941, %v1945
      %v1950 = vand.u32 2147483647, %v1577
      %vm1951 = vcmp.eq.f32.partialorder %v1950, 8.507059e+37
      %v1952 = vand.u32 %v1577, 2147483648
      %v1953 = vor.u32 1.1754944e-38, %v1952
      %v1954 = vsel %vm1951, %v1953, %v1949
      %v1955 = vmul.f32 %v1493, %v1954
      %v1956 = vrcp.pop %v1580
      %v1957 = vmul.f32 %v1580, %v1956
      %v1958 = vsub.f32 1.0, %v1957
      %v1959 = vmul.f32 %v1956, %v1958
      %v1960 = vadd.f32 %v1956, %v1959
      %vm1961 = vweird.f32 %v1580
      %vm1962 = vweird.f32 %v1956
      %vm1963 = vmor %vm1961, %vm1962
      %v1964 = vsel %vm1963, %v1956, %v1960
      %v1965 = vand.u32 2147483647, %v1580
      %vm1966 = vcmp.eq.f32.partialorder %v1965, 8.507059e+37
      %v1967 = vand.u32 %v1580, 2147483648
      %v1968 = vor.u32 1.1754944e-38, %v1967
      %v1969 = vsel %vm1966, %v1968, %v1964
      %v1970 = vmul.f32 %v1495, %v1969
      %v1971 = vrcp.pop %v1583
      %v1972 = vmul.f32 %v1583, %v1971
      %v1973 = vsub.f32 1.0, %v1972
      %v1974 = vmul.f32 %v1971, %v1973
      %v1975 = vadd.f32 %v1971, %v1974
      %vm1976 = vweird.f32 %v1583
      %vm1977 = vweird.f32 %v1971
      %vm1978 = vmor %vm1976, %vm1977
      %v1979 = vsel %vm1978, %v1971, %v1975
      %v1980 = vand.u32 2147483647, %v1583
      %vm1981 = vcmp.eq.f32.partialorder %v1980, 8.507059e+37
      %v1982 = vand.u32 %v1583, 2147483648
      %v1983 = vor.u32 1.1754944e-38, %v1982
      %v1984 = vsel %vm1981, %v1983, %v1979
      %v1985 = vmul.f32 %v1497, %v1984
      %v1986 = vrcp.pop %v1586
      %v1987 = vmul.f32 %v1586, %v1986
      %v1988 = vsub.f32 1.0, %v1987
      %v1989 = vmul.f32 %v1986, %v1988
      %v1990 = vadd.f32 %v1986, %v1989
      %vm1991 = vweird.f32 %v1586
      %vm1992 = vweird.f32 %v1986
      %vm1993 = vmor %vm1991, %vm1992
      %v1994 = vsel %vm1993, %v1986, %v1990
      %v1995 = vand.u32 2147483647, %v1586
      %vm1996 = vcmp.eq.f32.partialorder %v1995, 8.507059e+37
      %v1997 = vand.u32 %v1586, 2147483648
      %v1998 = vor.u32 1.1754944e-38, %v1997
      %v1999 = vsel %vm1996, %v1998, %v1994
      %v2000 = vmul.f32 %v1499, %v1999
      %v2001 = vrcp.pop %v1589
      %v2002 = vmul.f32 %v1589, %v2001
      %v2003 = vsub.f32 1.0, %v2002
      %v2004 = vmul.f32 %v2001, %v2003
      %v2005 = vadd.f32 %v2001, %v2004
      %vm2006 = vweird.f32 %v1589
      %vm2007 = vweird.f32 %v2001
      %vm2008 = vmor %vm2006, %vm2007
      %v2009 = vsel %vm2008, %v2001, %v2005
      %v2010 = vand.u32 2147483647, %v1589
      %vm2011 = vcmp.eq.f32.partialorder %v2010, 8.507059e+37
      %v2012 = vand.u32 %v1589, 2147483648
      %v2013 = vor.u32 1.1754944e-38, %v2012
      %v2014 = vsel %vm2011, %v2013, %v2009
      %v2015 = vmul.f32 %v1501, %v2014
      %v2016 = vrcp.pop %v1592
      %v2017 = vmul.f32 %v1592, %v2016
      %v2018 = vsub.f32 1.0, %v2017
      %v2019 = vmul.f32 %v2016, %v2018
      %v2020 = vadd.f32 %v2016, %v2019
      %vm2021 = vweird.f32 %v1592
      %vm2022 = vweird.f32 %v2016
      %vm2023 = vmor %vm2021, %vm2022
      %v2024 = vsel %vm2023, %v2016, %v2020
      %v2025 = vand.u32 2147483647, %v1592
      %vm2026 = vcmp.eq.f32.partialorder %v2025, 8.507059e+37
      %v2027 = vand.u32 %v1592, 2147483648
      %v2028 = vor.u32 1.1754944e-38, %v2027
      %v2029 = vsel %vm2026, %v2028, %v2024
      %v2030 = vmul.f32 %v1503, %v2029
      %v2031 = vrcp.pop %v1595
      %v2032 = vmul.f32 %v1595, %v2031
      %v2033 = vsub.f32 1.0, %v2032
      %v2034 = vmul.f32 %v2031, %v2033
      %v2035 = vadd.f32 %v2031, %v2034
      %vm2036 = vweird.f32 %v1595
      %vm2037 = vweird.f32 %v2031
      %vm2038 = vmor %vm2036, %vm2037
      %v2039 = vsel %vm2038, %v2031, %v2035
      %v2040 = vand.u32 2147483647, %v1595
      %vm2041 = vcmp.eq.f32.partialorder %v2040, 8.507059e+37
      %v2042 = vand.u32 %v1595, 2147483648
      %v2043 = vor.u32 1.1754944e-38, %v2042
      %v2044 = vsel %vm2041, %v2043, %v2039
      %v2045 = vmul.f32 %v1505, %v2044
      %2046 = vrot.lane.b32.xlu0 %v788, 48
      %v2047 = vpop.permute.xlu0 %2046
      %2048 = vrot.lane.b32.xlu0 %v791, 48
      %v2049 = vpop.permute.xlu0 %2048
      %2050 = vrot.lane.b32.xlu0 %v794, 48
      %v2051 = vpop.permute.xlu0 %2050
      %v2055 = vsel %vm1324, %v1610, 0
      %v2058 = vsel %vm1324, %v1625, 0
      %v2061 = vsel %vm1324, %v1640, 0
      %vm2063 = vcmask 1045504
      %v2064 = vsel %vm2063, %v2051, 0
      %2066 = vmatpush.msra.mxu0 0.0
      %2067 = vmatpush.msra.mxu0 0.0
      %2068 = vmatpush.msra.mxu0 0.0
      %2069 = vmatpush.msra.mxu0 0.0
      %2070 = vmatpush.msra.mxu0 0.0
      %2071 = vmatpush.msra.mxu0 0.0
      %2072 = vmatpush.msra.mxu0 0.0
      %2073 = vmatpush.msra.mxu0 0.0
      %2074 = vmatpush.msra.mxu0 0.0
      %2075 = vmatpush.msra.mxu0 0.0
      %2076 = vmatpush.msra.mxu0 0.0
      %2077 = vmatpush.msra.mxu0 0.0
      %2078 = vmatpush.msra.mxu0 0.0
      %2079 = vmatpush.msra.mxu0 %v2064
      %2080 = vmatpush.msra.mxu0 %v2049
      %2081 = vmatpush.msra.mxu0 %v2047
      %2082 = vmatmul.f32.gmra.mxu0 %v2055
      %v2083 = vpop.f32.mrf.mxu0
      %v2084 = vadd.f32 0.0, %v2083
      %2085 = vmatmul.f32.gmra.mxu0 %v2058
      %v2086 = vpop.f32.mrf.mxu0
      %v2087 = vadd.f32 0.0, %v2086
      %2088 = vmatmul.f32.gmra.mxu0 %v2061
      %v2089 = vpop.f32.mrf.mxu0
      %v2090 = vadd.f32 0.0, %v2089
      %2091 = vdwg.mxu0
      %2092 = vrot.lane.b32.xlu0 %v800, 48
      %v2093 = vpop.permute.xlu0 %2092
      %2094 = vrot.lane.b32.xlu0 %v802, 48
      %v2095 = vpop.permute.xlu0 %2094
      %2096 = vrot.lane.b32.xlu0 %v804, 48
      %v2097 = vpop.permute.xlu0 %2096
      %v2101 = vsel %vm1324, %v1655, 0
      %v2104 = vsel %vm1324, %v1670, 0
      %v2107 = vsel %vm1324, %v1685, 0
      %v2109 = vsel %vm2063, %v2097, 0
      %2111 = vmatpush.msra.mxu0 0.0
      %2112 = vmatpush.msra.mxu0 0.0
      %2113 = vmatpush.msra.mxu0 0.0
      %2114 = vmatpush.msra.mxu0 0.0
      %2115 = vmatpush.msra.mxu0 0.0
      %2116 = vmatpush.msra.mxu0 0.0
      %2117 = vmatpush.msra.mxu0 0.0
      %2118 = vmatpush.msra.mxu0 0.0
      %2119 = vmatpush.msra.mxu0 0.0
      %2120 = vmatpush.msra.mxu0 0.0
      %2121 = vmatpush.msra.mxu0 0.0
      %2122 = vmatpush.msra.mxu0 0.0
      %2123 = vmatpush.msra.mxu0 0.0
      %2124 = vmatpush.msra.mxu0 %v2109
      %2125 = vmatpush.msra.mxu0 %v2095
      %2126 = vmatpush.msra.mxu0 %v2093
      %2127 = vmatmul.f32.gmra.mxu0 %v2101
      %v2128 = vpop.f32.mrf.mxu0
      %v2129 = vadd.f32 0.0, %v2128
      %2130 = vmatmul.f32.gmra.mxu0 %v2104
      %v2131 = vpop.f32.mrf.mxu0
      %v2132 = vadd.f32 0.0, %v2131
      %2133 = vmatmul.f32.gmra.mxu0 %v2107
      %v2134 = vpop.f32.mrf.mxu0
      %v2135 = vadd.f32 0.0, %v2134
      %2136 = vdwg.mxu0
      %2137 = vrot.lane.b32.xlu0 %v806, 48
      %v2138 = vpop.permute.xlu0 %2137
      %2139 = vrot.lane.b32.xlu0 %v808, 48
      %v2140 = vpop.permute.xlu0 %2139
      %2141 = vrot.lane.b32.xlu0 %v810, 48
      %v2142 = vpop.permute.xlu0 %2141
      %v2146 = vsel %vm1324, %v1700, 0
      %v2149 = vsel %vm1324, %v1715, 0
      %v2152 = vsel %vm1324, %v1730, 0
      %v2154 = vsel %vm2063, %v2142, 0
      %2156 = vmatpush.msra.mxu0 0.0
      %2157 = vmatpush.msra.mxu0 0.0
      %2158 = vmatpush.msra.mxu0 0.0
      %2159 = vmatpush.msra.mxu0 0.0
      %2160 = vmatpush.msra.mxu0 0.0
      %2161 = vmatpush.msra.mxu0 0.0
      %2162 = vmatpush.msra.mxu0 0.0
      %2163 = vmatpush.msra.mxu0 0.0
      %2164 = vmatpush.msra.mxu0 0.0
      %2165 = vmatpush.msra.mxu0 0.0
      %2166 = vmatpush.msra.mxu0 0.0
      %2167 = vmatpush.msra.mxu0 0.0
      %2168 = vmatpush.msra.mxu0 0.0
      %2169 = vmatpush.msra.mxu0 %v2154
      %2170 = vmatpush.msra.mxu0 %v2140
      %2171 = vmatpush.msra.mxu0 %v2138
      %2172 = vmatmul.f32.gmra.mxu0 %v2146
      %v2173 = vpop.f32.mrf.mxu0
      %v2174 = vadd.f32 0.0, %v2173
      %2175 = vmatmul.f32.gmra.mxu0 %v2149
      %v2176 = vpop.f32.mrf.mxu0
      %v2177 = vadd.f32 0.0, %v2176
      %2178 = vmatmul.f32.gmra.mxu0 %v2152
      %v2179 = vpop.f32.mrf.mxu0
      %v2180 = vadd.f32 0.0, %v2179
      %2181 = vdwg.mxu0
      %2182 = vrot.lane.b32.xlu0 %v812, 48
      %v2183 = vpop.permute.xlu0 %2182
      %2184 = vrot.lane.b32.xlu0 %v814, 48
      %v2185 = vpop.permute.xlu0 %2184
      %2186 = vrot.lane.b32.xlu0 %v816, 48
      %v2187 = vpop.permute.xlu0 %2186
      %v2191 = vsel %vm1324, %v1745, 0
      %v2194 = vsel %vm1324, %v1760, 0
      %v2197 = vsel %vm1324, %v1775, 0
      %v2199 = vsel %vm2063, %v2187, 0
      %2201 = vmatpush.msra.mxu0 0.0
      %2202 = vmatpush.msra.mxu0 0.0
      %2203 = vmatpush.msra.mxu0 0.0
      %2204 = vmatpush.msra.mxu0 0.0
      %2205 = vmatpush.msra.mxu0 0.0
      %2206 = vmatpush.msra.mxu0 0.0
      %2207 = vmatpush.msra.mxu0 0.0
      %2208 = vmatpush.msra.mxu0 0.0
      %2209 = vmatpush.msra.mxu0 0.0
      %2210 = vmatpush.msra.mxu0 0.0
      %2211 = vmatpush.msra.mxu0 0.0
      %2212 = vmatpush.msra.mxu0 0.0
      %2213 = vmatpush.msra.mxu0 0.0
      %2214 = vmatpush.msra.mxu0 %v2199
      %2215 = vmatpush.msra.mxu0 %v2185
      %2216 = vmatpush.msra.mxu0 %v2183
      %2217 = vmatmul.f32.gmra.mxu0 %v2191
      %v2218 = vpop.f32.mrf.mxu0
      %v2219 = vadd.f32 0.0, %v2218
      %2220 = vmatmul.f32.gmra.mxu0 %v2194
      %v2221 = vpop.f32.mrf.mxu0
      %v2222 = vadd.f32 0.0, %v2221
      %2223 = vmatmul.f32.gmra.mxu0 %v2197
      %v2224 = vpop.f32.mrf.mxu0
      %v2225 = vadd.f32 0.0, %v2224
      %2226 = vdwg.mxu0
      %2227 = vrot.lane.b32.xlu0 %v818, 48
      %v2228 = vpop.permute.xlu0 %2227
      %2229 = vrot.lane.b32.xlu0 %v820, 48
      %v2230 = vpop.permute.xlu0 %2229
      %2231 = vrot.lane.b32.xlu0 %v822, 48
      %v2232 = vpop.permute.xlu0 %2231
      %v2236 = vsel %vm1324, %v1790, 0
      %v2239 = vsel %vm1324, %v1805, 0
      %v2242 = vsel %vm1324, %v1820, 0
      %v2244 = vsel %vm2063, %v2232, 0
      %2246 = vmatpush.msra.mxu0 0.0
      %2247 = vmatpush.msra.mxu0 0.0
      %2248 = vmatpush.msra.mxu0 0.0
      %2249 = vmatpush.msra.mxu0 0.0
      %2250 = vmatpush.msra.mxu0 0.0
      %2251 = vmatpush.msra.mxu0 0.0
      %2252 = vmatpush.msra.mxu0 0.0
      %2253 = vmatpush.msra.mxu0 0.0
      %2254 = vmatpush.msra.mxu0 0.0
      %2255 = vmatpush.msra.mxu0 0.0
      %2256 = vmatpush.msra.mxu0 0.0
      %2257 = vmatpush.msra.mxu0 0.0
      %2258 = vmatpush.msra.mxu0 0.0
      %2259 = vmatpush.msra.mxu0 %v2244
      %2260 = vmatpush.msra.mxu0 %v2230
      %2261 = vmatpush.msra.mxu0 %v2228
      %2262 = vmatmul.f32.gmra.mxu0 %v2236
      %v2263 = vpop.f32.mrf.mxu0
      %v2264 = vadd.f32 0.0, %v2263
      %2265 = vmatmul.f32.gmra.mxu0 %v2239
      %v2266 = vpop.f32.mrf.mxu0
      %v2267 = vadd.f32 0.0, %v2266
      %2268 = vmatmul.f32.gmra.mxu0 %v2242
      %v2269 = vpop.f32.mrf.mxu0
      %v2270 = vadd.f32 0.0, %v2269
      %2271 = vdwg.mxu0
      %2272 = vrot.lane.b32.xlu0 %v824, 48
      %v2273 = vpop.permute.xlu0 %2272
      %2274 = vrot.lane.b32.xlu0 %v826, 48
      %v2275 = vpop.permute.xlu0 %2274
      %2276 = vrot.lane.b32.xlu0 %v828, 48
      %v2277 = vpop.permute.xlu0 %2276
      %v2281 = vsel %vm1324, %v1835, 0
      %v2284 = vsel %vm1324, %v1850, 0
      %v2287 = vsel %vm1324, %v1865, 0
      %v2289 = vsel %vm2063, %v2277, 0
      %2291 = vmatpush.msra.mxu0 0.0
      %2292 = vmatpush.msra.mxu0 0.0
      %2293 = vmatpush.msra.mxu0 0.0
      %2294 = vmatpush.msra.mxu0 0.0
      %2295 = vmatpush.msra.mxu0 0.0
      %2296 = vmatpush.msra.mxu0 0.0
      %2297 = vmatpush.msra.mxu0 0.0
      %2298 = vmatpush.msra.mxu0 0.0
      %2299 = vmatpush.msra.mxu0 0.0
      %2300 = vmatpush.msra.mxu0 0.0
      %2301 = vmatpush.msra.mxu0 0.0
      %2302 = vmatpush.msra.mxu0 0.0
      %2303 = vmatpush.msra.mxu0 0.0
      %2304 = vmatpush.msra.mxu0 %v2289
      %2305 = vmatpush.msra.mxu0 %v2275
      %2306 = vmatpush.msra.mxu0 %v2273
      %2307 = vmatmul.f32.gmra.mxu0 %v2281
      %v2308 = vpop.f32.mrf.mxu0
      %v2309 = vadd.f32 0.0, %v2308
      %2310 = vmatmul.f32.gmra.mxu0 %v2284
      %v2311 = vpop.f32.mrf.mxu0
      %v2312 = vadd.f32 0.0, %v2311
      %2313 = vmatmul.f32.gmra.mxu0 %v2287
      %v2314 = vpop.f32.mrf.mxu0
      %v2315 = vadd.f32 0.0, %v2314
      %2316 = vdwg.mxu0
      %2317 = vrot.lane.b32.xlu0 %v830, 48
      %v2318 = vpop.permute.xlu0 %2317
      %2319 = vrot.lane.b32.xlu0 %v832, 48
      %v2320 = vpop.permute.xlu0 %2319
      %2321 = vrot.lane.b32.xlu0 %v834, 48
      %v2322 = vpop.permute.xlu0 %2321
      %v2326 = vsel %vm1324, %v1880, 0
      %v2329 = vsel %vm1324, %v1895, 0
      %v2332 = vsel %vm1324, %v1910, 0
      %v2334 = vsel %vm2063, %v2322, 0
      %2336 = vmatpush.msra.mxu0 0.0
      %2337 = vmatpush.msra.mxu0 0.0
      %2338 = vmatpush.msra.mxu0 0.0
      %2339 = vmatpush.msra.mxu0 0.0
      %2340 = vmatpush.msra.mxu0 0.0
      %2341 = vmatpush.msra.mxu0 0.0
      %2342 = vmatpush.msra.mxu0 0.0
      %2343 = vmatpush.msra.mxu0 0.0
      %2344 = vmatpush.msra.mxu0 0.0
      %2345 = vmatpush.msra.mxu0 0.0
      %2346 = vmatpush.msra.mxu0 0.0
      %2347 = vmatpush.msra.mxu0 0.0
      %2348 = vmatpush.msra.mxu0 0.0
      %2349 = vmatpush.msra.mxu0 %v2334
      %2350 = vmatpush.msra.mxu0 %v2320
      %2351 = vmatpush.msra.mxu0 %v2318
      %2352 = vmatmul.f32.gmra.mxu0 %v2326
      %v2353 = vpop.f32.mrf.mxu0
      %v2354 = vadd.f32 0.0, %v2353
      %2355 = vmatmul.f32.gmra.mxu0 %v2329
      %v2356 = vpop.f32.mrf.mxu0
      %v2357 = vadd.f32 0.0, %v2356
      %2358 = vmatmul.f32.gmra.mxu0 %v2332
      %v2359 = vpop.f32.mrf.mxu0
      %v2360 = vadd.f32 0.0, %v2359
      %2361 = vdwg.mxu0
      %2362 = vrot.lane.b32.xlu0 %v836, 48
      %v2363 = vpop.permute.xlu0 %2362
      %2364 = vrot.lane.b32.xlu0 %v838, 48
      %v2365 = vpop.permute.xlu0 %2364
      %2366 = vrot.lane.b32.xlu0 %v840, 48
      %v2367 = vpop.permute.xlu0 %2366
      %v2371 = vsel %vm1324, %v1925, 0
      %v2374 = vsel %vm1324, %v1940, 0
      %v2377 = vsel %vm1324, %v1955, 0
      %v2379 = vsel %vm2063, %v2367, 0
      %2381 = vmatpush.msra.mxu0 0.0
      %2382 = vmatpush.msra.mxu0 0.0
      %2383 = vmatpush.msra.mxu0 0.0
      %2384 = vmatpush.msra.mxu0 0.0
      %2385 = vmatpush.msra.mxu0 0.0
      %2386 = vmatpush.msra.mxu0 0.0
      %2387 = vmatpush.msra.mxu0 0.0
      %2388 = vmatpush.msra.mxu0 0.0
      %2389 = vmatpush.msra.mxu0 0.0
      %2390 = vmatpush.msra.mxu0 0.0
      %2391 = vmatpush.msra.mxu0 0.0
      %2392 = vmatpush.msra.mxu0 0.0
      %2393 = vmatpush.msra.mxu0 0.0
      %2394 = vmatpush.msra.mxu0 %v2379
      %2395 = vmatpush.msra.mxu0 %v2365
      %2396 = vmatpush.msra.mxu0 %v2363
      %2397 = vmatmul.f32.gmra.mxu0 %v2371
      %v2398 = vpop.f32.mrf.mxu0
      %v2399 = vadd.f32 0.0, %v2398
      %2400 = vmatmul.f32.gmra.mxu0 %v2374
      %v2401 = vpop.f32.mrf.mxu0
      %v2402 = vadd.f32 0.0, %v2401
      %2403 = vmatmul.f32.gmra.mxu0 %v2377
      %v2404 = vpop.f32.mrf.mxu0
      %v2405 = vadd.f32 0.0, %v2404
      %2406 = vdwg.mxu0
      %2407 = vrot.lane.b32.xlu0 %v842, 48
      %v2408 = vpop.permute.xlu0 %2407
      %2409 = vrot.lane.b32.xlu0 %v844, 48
      %v2410 = vpop.permute.xlu0 %2409
      %2411 = vrot.lane.b32.xlu0 %v846, 48
      %v2412 = vpop.permute.xlu0 %2411
      %v2416 = vsel %vm1324, %v1970, 0
      %v2419 = vsel %vm1324, %v1985, 0
      %v2422 = vsel %vm1324, %v2000, 0
      %v2424 = vsel %vm2063, %v2412, 0
      %2426 = vmatpush.msra.mxu0 0.0
      %2427 = vmatpush.msra.mxu0 0.0
      %2428 = vmatpush.msra.mxu0 0.0
      %2429 = vmatpush.msra.mxu0 0.0
      %2430 = vmatpush.msra.mxu0 0.0
      %2431 = vmatpush.msra.mxu0 0.0
      %2432 = vmatpush.msra.mxu0 0.0
      %2433 = vmatpush.msra.mxu0 0.0
      %2434 = vmatpush.msra.mxu0 0.0
      %2435 = vmatpush.msra.mxu0 0.0
      %2436 = vmatpush.msra.mxu0 0.0
      %2437 = vmatpush.msra.mxu0 0.0
      %2438 = vmatpush.msra.mxu0 0.0
      %2439 = vmatpush.msra.mxu0 %v2424
      %2440 = vmatpush.msra.mxu0 %v2410
      %2441 = vmatpush.msra.mxu0 %v2408
      %2442 = vmatmul.f32.gmra.mxu0 %v2416
      %v2443 = vpop.f32.mrf.mxu0
      %v2444 = vadd.f32 0.0, %v2443
      %2445 = vmatmul.f32.gmra.mxu0 %v2419
      %v2446 = vpop.f32.mrf.mxu0
      %v2447 = vadd.f32 0.0, %v2446
      %2448 = vmatmul.f32.gmra.mxu0 %v2422
      %v2449 = vpop.f32.mrf.mxu0
      %v2450 = vadd.f32 0.0, %v2449
      %2451 = vdwg.mxu0
      %2452 = vrot.lane.b32.xlu0 %v848, 48
      %v2453 = vpop.permute.xlu0 %2452
      %2454 = vrot.lane.b32.xlu0 %v850, 48
      %v2455 = vpop.permute.xlu0 %2454
      %2456 = vrot.lane.b32.xlu0 %v852, 48
      %v2457 = vpop.permute.xlu0 %2456
      %v2461 = vsel %vm1324, %v2015, 0
      %v2464 = vsel %vm1324, %v2030, 0
      %v2467 = vsel %vm1324, %v2045, 0
      %v2469 = vsel %vm2063, %v2457, 0
      %2471 = vmatpush.msra.mxu0 0.0
      %2472 = vmatpush.msra.mxu0 0.0
      %2473 = vmatpush.msra.mxu0 0.0
      %2474 = vmatpush.msra.mxu0 0.0
      %2475 = vmatpush.msra.mxu0 0.0
      %2476 = vmatpush.msra.mxu0 0.0
      %2477 = vmatpush.msra.mxu0 0.0
      %2478 = vmatpush.msra.mxu0 0.0
      %2479 = vmatpush.msra.mxu0 0.0
      %2480 = vmatpush.msra.mxu0 0.0
      %2481 = vmatpush.msra.mxu0 0.0
      %2482 = vmatpush.msra.mxu0 0.0
      %2483 = vmatpush.msra.mxu0 0.0
      %2484 = vmatpush.msra.mxu0 %v2469
      %2485 = vmatpush.msra.mxu0 %v2455
      %2486 = vmatpush.msra.mxu0 %v2453
      %2487 = vmatmul.f32.gmra.mxu0 %v2461
      %v2488 = vpop.f32.mrf.mxu0
      %v2489 = vadd.f32 0.0, %v2488
      %2490 = vmatmul.f32.gmra.mxu0 %v2464
      %v2491 = vpop.f32.mrf.mxu0
      %v2492 = vadd.f32 0.0, %v2491
      %2493 = vmatmul.f32.gmra.mxu0 %v2467
      %v2494 = vpop.f32.mrf.mxu0
      %v2495 = vadd.f32 0.0, %v2494
      %2496 = vdwg.mxu0
      %2500 = vrot.lane.b32.xlu0 %v2129, 4
      %v2501 = vpop.permute.xlu0 %2500
      %2502 = vrot.lane.b32.xlu0 %v2132, 4
      %v2503 = vpop.permute.xlu0 %2502
      %2504 = vrot.lane.b32.xlu0 %v2135, 4
      %v2505 = vpop.permute.xlu0 %2504
      %2512 = vrot.lane.b32.xlu0 %v2174, 8
      %v2513 = vpop.permute.xlu0 %2512
      %2514 = vrot.lane.b32.xlu0 %v2177, 8
      %v2515 = vpop.permute.xlu0 %2514
      %2516 = vrot.lane.b32.xlu0 %v2180, 8
      %v2517 = vpop.permute.xlu0 %2516
      %2524 = vrot.lane.b32.xlu0 %v2219, 12
      %v2525 = vpop.permute.xlu0 %2524
      %2526 = vrot.lane.b32.xlu0 %v2222, 12
      %v2527 = vpop.permute.xlu0 %2526
      %2528 = vrot.lane.b32.xlu0 %v2225, 12
      %v2529 = vpop.permute.xlu0 %2528
      %2536 = vrot.lane.b32.xlu0 %v2264, 16
      %v2537 = vpop.permute.xlu0 %2536
      %2538 = vrot.lane.b32.xlu0 %v2267, 16
      %v2539 = vpop.permute.xlu0 %2538
      %2540 = vrot.lane.b32.xlu0 %v2270, 16
      %v2541 = vpop.permute.xlu0 %2540
      %2548 = vrot.lane.b32.xlu0 %v2309, 20
      %v2549 = vpop.permute.xlu0 %2548
      %2550 = vrot.lane.b32.xlu0 %v2312, 20
      %v2551 = vpop.permute.xlu0 %2550
      %2552 = vrot.lane.b32.xlu0 %v2315, 20
      %v2553 = vpop.permute.xlu0 %2552
      %2560 = vrot.lane.b32.xlu0 %v2354, 24
      %v2561 = vpop.permute.xlu0 %2560
      %2562 = vrot.lane.b32.xlu0 %v2357, 24
      %v2563 = vpop.permute.xlu0 %2562
      %2564 = vrot.lane.b32.xlu0 %v2360, 24
      %v2565 = vpop.permute.xlu0 %2564
      %2572 = vrot.lane.b32.xlu0 %v2399, 28
      %v2573 = vpop.permute.xlu0 %2572
      %2574 = vrot.lane.b32.xlu0 %v2402, 28
      %v2575 = vpop.permute.xlu0 %2574
      %2576 = vrot.lane.b32.xlu0 %v2405, 28
      %v2577 = vpop.permute.xlu0 %2576
      %2584 = vrot.lane.b32.xlu0 %v2444, 32
      %v2585 = vpop.permute.xlu0 %2584
      %2586 = vrot.lane.b32.xlu0 %v2447, 32
      %v2587 = vpop.permute.xlu0 %2586
      %2588 = vrot.lane.b32.xlu0 %v2450, 32
      %v2589 = vpop.permute.xlu0 %2588
      %2596 = vrot.lane.b32.xlu0 %v2489, 36
      %v2597 = vpop.permute.xlu0 %2596
      %2598 = vrot.lane.b32.xlu0 %v2492, 36
      %v2599 = vpop.permute.xlu0 %2598
      %2600 = vrot.lane.b32.xlu0 %v2495, 36
      %v2601 = vpop.permute.xlu0 %2600
      %v2605 = vsel %vm859, %v2084, %v2501
      %v2606 = vsel %vm859, %v2087, %v2503
      %v2607 = vsel %vm859, %v2090, %v2505
      %vm2608 = vcmask 64512
      %v2609 = vsel %vm2608, %v2605, %v2513
      %v2610 = vsel %vm2608, %v2606, %v2515
      %v2611 = vsel %vm2608, %v2607, %v2517
      %vm2612 = vcmask 97280
      %v2613 = vsel %vm2612, %v2609, %v2525
      %v2614 = vsel %vm2612, %v2610, %v2527
      %v2615 = vsel %vm2612, %v2611, %v2529
      %vm2616 = vcmask 130048
      %v2617 = vsel %vm2616, %v2613, %v2537
      %v2618 = vsel %vm2616, %v2614, %v2539
      %v2619 = vsel %vm2616, %v2615, %v2541
      %vm2620 = vcmask 162816
      %v2621 = vsel %vm2620, %v2617, %v2549
      %v2622 = vsel %vm2620, %v2618, %v2551
      %v2623 = vsel %vm2620, %v2619, %v2553
      %vm2624 = vcmask 195584
      %v2625 = vsel %vm2624, %v2621, %v2561
      %v2626 = vsel %vm2624, %v2622, %v2563
      %v2627 = vsel %vm2624, %v2623, %v2565
      %vm2628 = vcmask 228352
      %v2629 = vsel %vm2628, %v2625, %v2573
      %v2630 = vsel %vm2628, %v2626, %v2575
      %v2631 = vsel %vm2628, %v2627, %v2577
      %vm2632 = vcmask 261120
      %v2633 = vsel %vm2632, %v2629, %v2585
      %v2634 = vsel %vm2632, %v2630, %v2587
      %v2635 = vsel %vm2632, %v2631, %v2589
      %vm2636 = vcmask 293888
      %v2637 = vsel %vm2636, %v2633, %v2597
      %v2638 = vsel %vm2636, %v2634, %v2599
      %v2639 = vsel %vm2636, %v2635, %v2601
      %v2640 = vld [vmem:[%s616] sm:$0xff]
      %v2641 = vld [vmem:[%s616 + $0x8] sm:$0xff]
      %v2642 = vld [vmem:[%s616 + $0x10] sm:$0xff]
      %v2643 = vld [vmem:[%s616 + $0x18] sm:$0xff]
      %v2644 = vld [vmem:[%s616 + $0x20] sm:$0xff]
      %v2645 = vld [vmem:[%s619] sm:$0x1]
      %v2647 = vperm.slane %v2645, 0
      %v2650 = vsel %vm665, %v2637, 0
      %v2653 = vsel %vm665, %v2638, 0
      %v2656 = vsel %vm665, %v2639, 0
      %2658 = vmatpush.msra.mxu0 0.0
      %2659 = vmatpush.msra.mxu0 0.0
      %2660 = vmatpush.msra.mxu0 0.0
      %2661 = vmatpush.msra.mxu0 0.0
      %2662 = vmatpush.msra.mxu0 0.0
      %2663 = vmatpush.msra.mxu0 0.0
      %2664 = vmatpush.msra.mxu0 0.0
      %2665 = vmatpush.msra.mxu0 0.0
      %2666 = vmatpush.msra.mxu0 0.0
      %2667 = vmatpush.msra.mxu0 0.0
      %2668 = vmatpush.msra.mxu0 0.0
      %2669 = vmatpush.msra.mxu0 %v2644
      %2670 = vmatpush.msra.mxu0 %v2643
      %2671 = vmatpush.msra.mxu0 %v2642
      %2672 = vmatpush.msra.mxu0 %v2641
      %2673 = vmatpush.msra.mxu0 %v2640
      %2674 = vmatmul.f32.gmra.mxu0 %v2650
      %v2675 = vpop.f32.mrf.mxu0
      %v2676 = vadd.f32 %v2647, %v2675
      %2677 = vmatmul.f32.gmra.mxu0 %v2653
      %v2678 = vpop.f32.mrf.mxu0
      %v2679 = vadd.f32 %v2647, %v2678
      %2680 = vmatmul.f32.gmra.mxu0 %v2656
      %v2681 = vpop.f32.mrf.mxu0
      %v2682 = vadd.f32 %v2647, %v2681
      %2683 = vdwg.mxu0
      %v2684 = vadd.f32 %v660, %v2676
      %v2685 = vadd.f32 %v661, %v2679
      %v2686 = vadd.f32 %v662, %v2682
      %v2687 = vld [vmem:[%s622] sm:$0x1]
      %v2688 = vld [vmem:[%s625] sm:$0x1]
      %v2689 = vsel %vm665, %v2684, 0.0
      %2690 = vadd.xlane.f32.xlu0 %v2689
      %v2691 = vpop.xlane.xlu0 %2690
      %v2692 = vsel %vm665, %v2685, 0.0
      %2693 = vadd.xlane.f32.xlu0 %v2692
      %v2694 = vpop.xlane.xlu0 %2693
      %v2695 = vsel %vm672, %v2686, 0.0
      %2696 = vadd.xlane.f32.xlu0 %v2695
      %v2697 = vpop.xlane.xlu0 %2696
      %v2698 = vmul.f32 %v2691, %v682
      %v2699 = vmul.f32 %v2694, %v682
      %v2700 = vmul.f32 %v2697, %v682
      %v2701 = vsub.f32 %v2684, %v2698
      %v2702 = vsub.f32 %v2685, %v2699
      %v2703 = vsub.f32 %v2686, %v2700
      %v2704 = vmul.f32 %v2701, %v2701
      %v2705 = vmul.f32 %v2702, %v2702
      %v2706 = vmul.f32 %v2703, %v2703
      %v2707 = vsel %vm665, %v2704, 0.0
      %2708 = vadd.xlane.f32.xlu0 %v2707
      %v2709 = vpop.xlane.xlu0 %2708
      %v2710 = vsel %vm665, %v2705, 0.0
      %2711 = vadd.xlane.f32.xlu0 %v2710
      %v2712 = vpop.xlane.xlu0 %2711
      %v2713 = vsel %vm672, %v2706, 0.0
      %2714 = vadd.xlane.f32.xlu0 %v2713
      %v2715 = vpop.xlane.xlu0 %2714
      %v2716 = vmul.f32 %v2709, %v682
      %v2717 = vmul.f32 %v2712, %v682
      %v2718 = vmul.f32 %v2715, %v682
      %v2719 = vadd.f32 %v2716, 1e-05
      %v2720 = vadd.f32 %v2717, 1e-05
      %v2721 = vadd.f32 %v2718, 1e-05
      %v2722 = vrsqrt.pop %v2719
      %v2723 = vmul.f32 %v2722, %v2719
      %v2724 = vmul.f32 %v2723, %v2722
      %v2725 = vmul.f32 0.5, %v2724
      %v2726 = vsub.f32 1.5, %v2725
      %v2727 = vmul.f32 %v2722, %v2726
      %vm2728 = vweird.f32 %v2719
      %vm2729 = vweird.f32 %v2722
      %vm2730 = vmor %vm2728, %vm2729
      %v2731 = vsel %vm2730, %v2722, %v2727
      %v2732 = vrsqrt.pop %v2720
      %v2733 = vmul.f32 %v2732, %v2720
      %v2734 = vmul.f32 %v2733, %v2732
      %v2735 = vmul.f32 0.5, %v2734
      %v2736 = vsub.f32 1.5, %v2735
      %v2737 = vmul.f32 %v2732, %v2736
      %vm2738 = vweird.f32 %v2720
      %vm2739 = vweird.f32 %v2732
      %vm2740 = vmor %vm2738, %vm2739
      %v2741 = vsel %vm2740, %v2732, %v2737
      %v2742 = vrsqrt.pop %v2721
      %v2743 = vmul.f32 %v2742, %v2721
      %v2744 = vmul.f32 %v2743, %v2742
      %v2745 = vmul.f32 0.5, %v2744
      %v2746 = vsub.f32 1.5, %v2745
      %v2747 = vmul.f32 %v2742, %v2746
      %vm2748 = vweird.f32 %v2721
      %vm2749 = vweird.f32 %v2742
      %vm2750 = vmor %vm2748, %vm2749
      %v2751 = vsel %vm2750, %v2742, %v2747
      %v2752 = vmul.f32 %v2701, %v2731
      %v2753 = vmul.f32 %v2702, %v2741
      %v2754 = vmul.f32 %v2703, %v2751
      %v2756 = vperm.slane %v2687, 0
      %v2758 = vmul.f32 %v2752, %v2756
      %v2759 = vmul.f32 %v2753, %v2756
      %v2760 = vmul.f32 %v2754, %v2756
      %v2762 = vperm.slane %v2688, 0
      %v2764 = vadd.f32 %v2758, %v2762
      %v2765 = vadd.f32 %v2759, %v2762
      %v2766 = vadd.f32 %v2760, %v2762
      %v2767 = vld [vmem:[%s630] sm:$0xff]
      %v2768 = vld [vmem:[%s630 + $0x8] sm:$0xff]
      %v2769 = vld [vmem:[%s630 + $0x10] sm:$0xff]
      %v2770 = vld [vmem:[%s630 + $0x18] sm:$0xff]
      %v2771 = vld [vmem:[%s630 + $0x20] sm:$0xff]
      %v2772 = vld [vmem:[%s630 + $0x28] sm:$0xff]
      %v2773 = vld [vmem:[%s630 + $0x30] sm:$0xff]
      %v2774 = vld [vmem:[%s630 + $0x38] sm:$0xff]
      %v2775 = vld [vmem:[%s630 + $0x40] sm:$0xff]
      %v2776 = vld [vmem:[%s630 + $0x48] sm:$0xff]
      %v2777 = vld [vmem:[%s634] sm:$0x3]
      %v2779 = vperm.slane %v2777, 0
      %v2780 = vperm.slane %v2777, 1
      %v2784 = vsel %vm665, %v2764, 0
      %v2787 = vsel %vm665, %v2765, 0
      %v2790 = vsel %vm665, %v2766, 0
      %2792 = vmatpush.msra.mxu0 0.0
      %2793 = vmatpush.msra.mxu0 0.0
      %2794 = vmatpush.msra.mxu0 0.0
      %2795 = vmatpush.msra.mxu0 0.0
      %2796 = vmatpush.msra.mxu0 0.0
      %2797 = vmatpush.msra.mxu0 0.0
      %2798 = vmatpush.msra.mxu0 0.0
      %2799 = vmatpush.msra.mxu0 0.0
      %2800 = vmatpush.msra.mxu0 0.0
      %2801 = vmatpush.msra.mxu0 0.0
      %2802 = vmatpush.msra.mxu0 0.0
      %2803 = vmatpush.msra.mxu0 %v2775
      %2804 = vmatpush.msra.mxu0 %v2773
      %2805 = vmatpush.msra.mxu0 %v2771
      %2806 = vmatpush.msra.mxu0 %v2769
      %2807 = vmatpush.msra.mxu0 %v2767
      %2808 = vmatmul.f32.gmra.mxu0 %v2784
      %v2809 = vpop.f32.mrf.mxu0
      %v2810 = vadd.f32 %v2779, %v2809
      %2811 = vmatmul.f32.gmra.mxu0 %v2787
      %v2812 = vpop.f32.mrf.mxu0
      %v2813 = vadd.f32 %v2779, %v2812
      %2814 = vmatmul.f32.gmra.mxu0 %v2790
      %v2815 = vpop.f32.mrf.mxu0
      %v2816 = vadd.f32 %v2779, %v2815
      %2817 = vdwg.mxu0
      %2818 = vmatpush.msra.mxu0 0.0
      %2819 = vmatpush.msra.mxu0 0.0
      %2820 = vmatpush.msra.mxu0 0.0
      %2821 = vmatpush.msra.mxu0 0.0
      %2822 = vmatpush.msra.mxu0 0.0
      %2823 = vmatpush.msra.mxu0 0.0
      %2824 = vmatpush.msra.mxu0 0.0
      %2825 = vmatpush.msra.mxu0 0.0
      %2826 = vmatpush.msra.mxu0 0.0
      %2827 = vmatpush.msra.mxu0 0.0
      %2828 = vmatpush.msra.mxu0 0.0
      %2829 = vmatpush.msra.mxu0 %v2776
      %2830 = vmatpush.msra.mxu0 %v2774
      %2831 = vmatpush.msra.mxu0 %v2772
      %2832 = vmatpush.msra.mxu0 %v2770
      %2833 = vmatpush.msra.mxu0 %v2768
      %2834 = vmatmul.f32.gmra.mxu0 %v2784
      %v2835 = vpop.f32.mrf.mxu0
      %v2836 = vadd.f32 %v2780, %v2835
      %2837 = vmatmul.f32.gmra.mxu0 %v2787
      %v2838 = vpop.f32.mrf.mxu0
      %v2839 = vadd.f32 %v2780, %v2838
      %2840 = vmatmul.f32.gmra.mxu0 %v2790
      %v2841 = vpop.f32.mrf.mxu0
      %v2842 = vadd.f32 %v2780, %v2841
      %2843 = vdwg.mxu0
      %v2844 = vmul.f32 %v2810, 0.5
      %v2845 = vmul.f32 %v2836, 0.5
      %v2846 = vmul.f32 %v2813, 0.5
      %v2847 = vmul.f32 %v2839, 0.5
      %v2848 = vmul.f32 %v2816, 0.5
      %v2849 = vmul.f32 %v2842, 0.5
      %v2850 = vmul.f32 %v2810, 0.70710677
      %v2851 = vmul.f32 %v2836, 0.70710677
      %v2852 = vmul.f32 %v2813, 0.70710677
      %v2853 = vmul.f32 %v2839, 0.70710677
      %v2854 = vmul.f32 %v2816, 0.70710677
      %v2855 = vmul.f32 %v2842, 0.70710677
      %v2856 = vmul.f32 %v2850, %v2850
      %v2857 = vmin.f32 16.0, %v2856
      %v2858 = vmul.f32 %v2857, 2.1237322e-06
      %v2859 = vadd.f32 %v2858, 0.00028619796
      %v2860 = vmul.f32 %v2857, %v2859
      %v2861 = vadd.f32 %v2860, 0.0036580483
      %v2862 = vmul.f32 %v2857, %v2861
      %v2863 = vadd.f32 %v2862, 0.05243302
      %v2864 = vmul.f32 %v2857, %v2863
      %v2865 = vadd.f32 %v2864, 0.18741608
      %v2866 = vmul.f32 %v2857, %v2865
      %v2867 = vadd.f32 %v2866, 1.1283791
      %v2868 = vmul.f32 %v2850, %v2867
      %v2869 = vmul.f32 %v2857, 3.8918573e-05
      %v2870 = vadd.f32 %v2869, 0.001143296
      %v2871 = vmul.f32 %v2857, %v2870
      %v2872 = vadd.f32 %v2871, 0.014752088
      %v2873 = vmul.f32 %v2857, %v2872
      %v2874 = vadd.f32 %v2873, 0.112945676
      %v2875 = vmul.f32 %v2857, %v2874
      %v2876 = vadd.f32 %v2875, 0.4994258
      %v2877 = vmul.f32 %v2857, %v2876
      %v2878 = vadd.f32 %v2877, 1.0
      %v2879 = vrcp.pop %v2878
      %v2880 = vmul.f32 %v2878, %v2879
      %v2881 = vsub.f32 1.0, %v2880
      %v2882 = vmul.f32 %v2879, %v2881
      %v2883 = vadd.f32 %v2879, %v2882
      %vm2884 = vweird.f32 %v2878
      %vm2885 = vweird.f32 %v2879
      %vm2886 = vmor %vm2884, %vm2885
      %v2887 = vsel %vm2886, %v2879, %v2883
      %v2888 = vand.u32 2147483647, %v2878
      %vm2889 = vcmp.eq.f32.partialorder %v2888, 8.507059e+37
      %v2890 = vand.u32 %v2878, 2147483648
      %v2891 = vor.u32 1.1754944e-38, %v2890
      %v2892 = vsel %vm2889, %v2891, %v2887
      %v2893 = vmul.f32 %v2868, %v2892
      %v2894 = vmin.f32 %v2893, 1.0
      %v2895 = vmax.f32 %v2894, -1.0
      %v2896 = vmul.f32 %v2851, %v2851
      %v2897 = vmin.f32 16.0, %v2896
      %v2898 = vmul.f32 %v2897, 2.1237322e-06
      %v2899 = vadd.f32 %v2898, 0.00028619796
      %v2900 = vmul.f32 %v2897, %v2899
      %v2901 = vadd.f32 %v2900, 0.0036580483
      %v2902 = vmul.f32 %v2897, %v2901
      %v2903 = vadd.f32 %v2902, 0.05243302
      %v2904 = vmul.f32 %v2897, %v2903
      %v2905 = vadd.f32 %v2904, 0.18741608
      %v2906 = vmul.f32 %v2897, %v2905
      %v2907 = vadd.f32 %v2906, 1.1283791
      %v2908 = vmul.f32 %v2851, %v2907
      %v2909 = vmul.f32 %v2897, 3.8918573e-05
      %v2910 = vadd.f32 %v2909, 0.001143296
      %v2911 = vmul.f32 %v2897, %v2910
      %v2912 = vadd.f32 %v2911, 0.014752088
      %v2913 = vmul.f32 %v2897, %v2912
      %v2914 = vadd.f32 %v2913, 0.112945676
      %v2915 = vmul.f32 %v2897, %v2914
      %v2916 = vadd.f32 %v2915, 0.4994258
      %v2917 = vmul.f32 %v2897, %v2916
      %v2918 = vadd.f32 %v2917, 1.0
      %v2919 = vrcp.pop %v2918
      %v2920 = vmul.f32 %v2918, %v2919
      %v2921 = vsub.f32 1.0, %v2920
      %v2922 = vmul.f32 %v2919, %v2921
      %v2923 = vadd.f32 %v2919, %v2922
      %vm2924 = vweird.f32 %v2918
      %vm2925 = vweird.f32 %v2919
      %vm2926 = vmor %vm2924, %vm2925
      %v2927 = vsel %vm2926, %v2919, %v2923
      %v2928 = vand.u32 2147483647, %v2918
      %vm2929 = vcmp.eq.f32.partialorder %v2928, 8.507059e+37
      %v2930 = vand.u32 %v2918, 2147483648
      %v2931 = vor.u32 1.1754944e-38, %v2930
      %v2932 = vsel %vm2929, %v2931, %v2927
      %v2933 = vmul.f32 %v2908, %v2932
      %v2934 = vmin.f32 %v2933, 1.0
      %v2935 = vmax.f32 %v2934, -1.0
      %v2936 = vmul.f32 %v2852, %v2852
      %v2937 = vmin.f32 16.0, %v2936
      %v2938 = vmul.f32 %v2937, 2.1237322e-06
      %v2939 = vadd.f32 %v2938, 0.00028619796
      %v2940 = vmul.f32 %v2937, %v2939
      %v2941 = vadd.f32 %v2940, 0.0036580483
      %v2942 = vmul.f32 %v2937, %v2941
      %v2943 = vadd.f32 %v2942, 0.05243302
      %v2944 = vmul.f32 %v2937, %v2943
      %v2945 = vadd.f32 %v2944, 0.18741608
      %v2946 = vmul.f32 %v2937, %v2945
      %v2947 = vadd.f32 %v2946, 1.1283791
      %v2948 = vmul.f32 %v2852, %v2947
      %v2949 = vmul.f32 %v2937, 3.8918573e-05
      %v2950 = vadd.f32 %v2949, 0.001143296
      %v2951 = vmul.f32 %v2937, %v2950
      %v2952 = vadd.f32 %v2951, 0.014752088
      %v2953 = vmul.f32 %v2937, %v2952
      %v2954 = vadd.f32 %v2953, 0.112945676
      %v2955 = vmul.f32 %v2937, %v2954
      %v2956 = vadd.f32 %v2955, 0.4994258
      %v2957 = vmul.f32 %v2937, %v2956
      %v2958 = vadd.f32 %v2957, 1.0
      %v2959 = vrcp.pop %v2958
      %v2960 = vmul.f32 %v2958, %v2959
      %v2961 = vsub.f32 1.0, %v2960
      %v2962 = vmul.f32 %v2959, %v2961
      %v2963 = vadd.f32 %v2959, %v2962
      %vm2964 = vweird.f32 %v2958
      %vm2965 = vweird.f32 %v2959
      %vm2966 = vmor %vm2964, %vm2965
      %v2967 = vsel %vm2966, %v2959, %v2963
      %v2968 = vand.u32 2147483647, %v2958
      %vm2969 = vcmp.eq.f32.partialorder %v2968, 8.507059e+37
      %v2970 = vand.u32 %v2958, 2147483648
      %v2971 = vor.u32 1.1754944e-38, %v2970
      %v2972 = vsel %vm2969, %v2971, %v2967
      %v2973 = vmul.f32 %v2948, %v2972
      %v2974 = vmin.f32 %v2973, 1.0
      %v2975 = vmax.f32 %v2974, -1.0
      %v2976 = vmul.f32 %v2853, %v2853
      %v2977 = vmin.f32 16.0, %v2976
      %v2978 = vmul.f32 %v2977, 2.1237322e-06
      %v2979 = vadd.f32 %v2978, 0.00028619796
      %v2980 = vmul.f32 %v2977, %v2979
      %v2981 = vadd.f32 %v2980, 0.0036580483
      %v2982 = vmul.f32 %v2977, %v2981
      %v2983 = vadd.f32 %v2982, 0.05243302
      %v2984 = vmul.f32 %v2977, %v2983
      %v2985 = vadd.f32 %v2984, 0.18741608
      %v2986 = vmul.f32 %v2977, %v2985
      %v2987 = vadd.f32 %v2986, 1.1283791
      %v2988 = vmul.f32 %v2853, %v2987
      %v2989 = vmul.f32 %v2977, 3.8918573e-05
      %v2990 = vadd.f32 %v2989, 0.001143296
      %v2991 = vmul.f32 %v2977, %v2990
      %v2992 = vadd.f32 %v2991, 0.014752088
      %v2993 = vmul.f32 %v2977, %v2992
      %v2994 = vadd.f32 %v2993, 0.112945676
      %v2995 = vmul.f32 %v2977, %v2994
      %v2996 = vadd.f32 %v2995, 0.4994258
      %v2997 = vmul.f32 %v2977, %v2996
      %v2998 = vadd.f32 %v2997, 1.0
      %v2999 = vrcp.pop %v2998
      %v3000 = vmul.f32 %v2998, %v2999
      %v3001 = vsub.f32 1.0, %v3000
      %v3002 = vmul.f32 %v2999, %v3001
      %v3003 = vadd.f32 %v2999, %v3002
      %vm3004 = vweird.f32 %v2998
      %vm3005 = vweird.f32 %v2999
      %vm3006 = vmor %vm3004, %vm3005
      %v3007 = vsel %vm3006, %v2999, %v3003
      %v3008 = vand.u32 2147483647, %v2998
      %vm3009 = vcmp.eq.f32.partialorder %v3008, 8.507059e+37
      %v3010 = vand.u32 %v2998, 2147483648
      %v3011 = vor.u32 1.1754944e-38, %v3010
      %v3012 = vsel %vm3009, %v3011, %v3007
      %v3013 = vmul.f32 %v2988, %v3012
      %v3014 = vmin.f32 %v3013, 1.0
      %v3015 = vmax.f32 %v3014, -1.0
      %v3016 = vmul.f32 %v2854, %v2854
      %v3017 = vmin.f32 16.0, %v3016
      %v3018 = vmul.f32 %v3017, 2.1237322e-06
      %v3019 = vadd.f32 %v3018, 0.00028619796
      %v3020 = vmul.f32 %v3017, %v3019
      %v3021 = vadd.f32 %v3020, 0.0036580483
      %v3022 = vmul.f32 %v3017, %v3021
      %v3023 = vadd.f32 %v3022, 0.05243302
      %v3024 = vmul.f32 %v3017, %v3023
      %v3025 = vadd.f32 %v3024, 0.18741608
      %v3026 = vmul.f32 %v3017, %v3025
      %v3027 = vadd.f32 %v3026, 1.1283791
      %v3028 = vmul.f32 %v2854, %v3027
      %v3029 = vmul.f32 %v3017, 3.8918573e-05
      %v3030 = vadd.f32 %v3029, 0.001143296
      %v3031 = vmul.f32 %v3017, %v3030
      %v3032 = vadd.f32 %v3031, 0.014752088
      %v3033 = vmul.f32 %v3017, %v3032
      %v3034 = vadd.f32 %v3033, 0.112945676
      %v3035 = vmul.f32 %v3017, %v3034
      %v3036 = vadd.f32 %v3035, 0.4994258
      %v3037 = vmul.f32 %v3017, %v3036
      %v3038 = vadd.f32 %v3037, 1.0
      %v3039 = vrcp.pop %v3038
      %v3040 = vmul.f32 %v3038, %v3039
      %v3041 = vsub.f32 1.0, %v3040
      %v3042 = vmul.f32 %v3039, %v3041
      %v3043 = vadd.f32 %v3039, %v3042
      %vm3044 = vweird.f32 %v3038
      %vm3045 = vweird.f32 %v3039
      %vm3046 = vmor %vm3044, %vm3045
      %v3047 = vsel %vm3046, %v3039, %v3043
      %v3048 = vand.u32 2147483647, %v3038
      %vm3049 = vcmp.eq.f32.partialorder %v3048, 8.507059e+37
      %v3050 = vand.u32 %v3038, 2147483648
      %v3051 = vor.u32 1.1754944e-38, %v3050
      %v3052 = vsel %vm3049, %v3051, %v3047
      %v3053 = vmul.f32 %v3028, %v3052
      %v3054 = vmin.f32 %v3053, 1.0
      %v3055 = vmax.f32 %v3054, -1.0
      %v3056 = vmul.f32 %v2855, %v2855
      %v3057 = vmin.f32 16.0, %v3056
      %v3058 = vmul.f32 %v3057, 2.1237322e-06
      %v3059 = vadd.f32 %v3058, 0.00028619796
      %v3060 = vmul.f32 %v3057, %v3059
      %v3061 = vadd.f32 %v3060, 0.0036580483
      %v3062 = vmul.f32 %v3057, %v3061
      %v3063 = vadd.f32 %v3062, 0.05243302
      %v3064 = vmul.f32 %v3057, %v3063
      %v3065 = vadd.f32 %v3064, 0.18741608
      %v3066 = vmul.f32 %v3057, %v3065
      %v3067 = vadd.f32 %v3066, 1.1283791
      %v3068 = vmul.f32 %v2855, %v3067
      %v3069 = vmul.f32 %v3057, 3.8918573e-05
      %v3070 = vadd.f32 %v3069, 0.001143296
      %v3071 = vmul.f32 %v3057, %v3070
      %v3072 = vadd.f32 %v3071, 0.014752088
      %v3073 = vmul.f32 %v3057, %v3072
      %v3074 = vadd.f32 %v3073, 0.112945676
      %v3075 = vmul.f32 %v3057, %v3074
      %v3076 = vadd.f32 %v3075, 0.4994258
      %v3077 = vmul.f32 %v3057, %v3076
      %v3078 = vadd.f32 %v3077, 1.0
      %v3079 = vrcp.pop %v3078
      %v3080 = vmul.f32 %v3078, %v3079
      %v3081 = vsub.f32 1.0, %v3080
      %v3082 = vmul.f32 %v3079, %v3081
      %v3083 = vadd.f32 %v3079, %v3082
      %vm3084 = vweird.f32 %v3078
      %vm3085 = vweird.f32 %v3079
      %vm3086 = vmor %vm3084, %vm3085
      %v3087 = vsel %vm3086, %v3079, %v3083
      %v3088 = vand.u32 2147483647, %v3078
      %vm3089 = vcmp.eq.f32.partialorder %v3088, 8.507059e+37
      %v3090 = vand.u32 %v3078, 2147483648
      %v3091 = vor.u32 1.1754944e-38, %v3090
      %v3092 = vsel %vm3089, %v3091, %v3087
      %v3093 = vmul.f32 %v3068, %v3092
      %v3094 = vmin.f32 %v3093, 1.0
      %v3095 = vmax.f32 %v3094, -1.0
      %v3096 = vadd.f32 %v2895, 1.0
      %v3097 = vadd.f32 %v2935, 1.0
      %v3098 = vadd.f32 %v2975, 1.0
      %v3099 = vadd.f32 %v3015, 1.0
      %v3100 = vadd.f32 %v3055, 1.0
      %v3101 = vadd.f32 %v3095, 1.0
      %v3102 = vmul.f32 %v2844, %v3096
      %v3103 = vmul.f32 %v2845, %v3097
      %v3104 = vmul.f32 %v2846, %v3098
      %v3105 = vmul.f32 %v2847, %v3099
      %v3106 = vmul.f32 %v2848, %v3100
      %v3107 = vmul.f32 %v2849, %v3101
      %v3108 = vld [vmem:[%s639] sm:$0xff]
      %v3109 = vld [vmem:[%s639 + $0x8] sm:$0xff]
      %v3110 = vld [vmem:[%s639 + $0x10] sm:$0xff]
      %v3111 = vld [vmem:[%s639 + $0x18] sm:$0xff]
      %v3112 = vld [vmem:[%s639 + $0x20] sm:$0xff]
      %v3113 = vld [vmem:[%s639 + $0x28] sm:$0xff]
      %v3114 = vld [vmem:[%s639 + $0x30] sm:$0xff]
      %v3115 = vld [vmem:[%s639 + $0x38] sm:$0xff]
      %v3116 = vld [vmem:[%s639 + $0x40] sm:$0xff]
      %v3117 = vld [vmem:[%s639 + $0x48] sm:$0xff]
      %v3118 = vld [vmem:[%s639 + $0x50] sm:$0xff]
      %v3119 = vld [vmem:[%s639 + $0x58] sm:$0xff]
      %v3120 = vld [vmem:[%s639 + $0x60] sm:$0xff]
      %v3121 = vld [vmem:[%s639 + $0x68] sm:$0xff]
      %v3122 = vld [vmem:[%s639 + $0x70] sm:$0xff]
      %v3123 = vld [vmem:[%s639 + $0x78] sm:$0xff]
      %v3124 = vld [vmem:[%s639 + $0x80] sm:$0xff]
      %v3125 = vld [vmem:[%s639 + $0x88] sm:$0xff]
      %v3126 = vld [vmem:[%s639 + $0x90] sm:$0xff]
      %v3127 = vld [vmem:[%s639 + $0x98] sm:$0xff]
      %v3128 = vld [vmem:[%s642] sm:$0x1]
      %v3130 = vperm.slane %v3128, 0
      %v3133 = vsel %vm2632, %v3103, 0
      %v3136 = vsel %vm2632, %v3105, 0
      %v3139 = vsel %vm2632, %v3107, 0
      %3141 = vmatpush.msra.mxu0 %v3123
      %3142 = vmatpush.msra.mxu0 %v3122
      %3143 = vmatpush.msra.mxu0 %v3121
      %3144 = vmatpush.msra.mxu0 %v3120
      %3145 = vmatpush.msra.mxu0 %v3119
      %3146 = vmatpush.msra.mxu0 %v3118
      %3147 = vmatpush.msra.mxu0 %v3117
      %3148 = vmatpush.msra.mxu0 %v3116
      %3149 = vmatpush.msra.mxu0 %v3115
      %3150 = vmatpush.msra.mxu0 %v3114
      %3151 = vmatpush.msra.mxu0 %v3113
      %3152 = vmatpush.msra.mxu0 %v3112
      %3153 = vmatpush.msra.mxu0 %v3111
      %3154 = vmatpush.msra.mxu0 %v3110
      %3155 = vmatpush.msra.mxu0 %v3109
      %3156 = vmatpush.msra.mxu0 %v3108
      %3157 = vmatmul.f32.gmra.mxu0 %v3102
      %v3158 = vpop.f32.mrf.mxu0
      %v3159 = vadd.f32 %v3130, %v3158
      %3160 = vmatmul.f32.gmra.mxu0 %v3104
      %v3161 = vpop.f32.mrf.mxu0
      %v3162 = vadd.f32 %v3130, %v3161
      %3163 = vmatmul.f32.gmra.mxu0 %v3106
      %v3164 = vpop.f32.mrf.mxu0
      %v3165 = vadd.f32 %v3130, %v3164
      %3166 = vdwg.mxu0
      %3167 = vmatpush.msra.mxu0 0.0
      %3168 = vmatpush.msra.mxu0 0.0
      %3169 = vmatpush.msra.mxu0 0.0
      %3170 = vmatpush.msra.mxu0 0.0
      %3171 = vmatpush.msra.mxu0 0.0
      %3172 = vmatpush.msra.mxu0 0.0
      %3173 = vmatpush.msra.mxu0 0.0
      %3174 = vmatpush.msra.mxu0 0.0
      %3175 = vmatpush.msra.mxu0 0.0
      %3176 = vmatpush.msra.mxu0 0.0
      %3177 = vmatpush.msra.mxu0 0.0
      %3178 = vmatpush.msra.mxu0 0.0
      %3179 = vmatpush.msra.mxu0 %v3127
      %3180 = vmatpush.msra.mxu0 %v3126
      %3181 = vmatpush.msra.mxu0 %v3125
      %3182 = vmatpush.msra.mxu0 %v3124
      %3183 = vmatmul.f32.gmra.mxu0 %v3133
      %v3184 = vpop.f32.mrf.mxu0
      %v3185 = vadd.f32 %v3159, %v3184
      %3186 = vmatmul.f32.gmra.mxu0 %v3136
      %v3187 = vpop.f32.mrf.mxu0
      %v3188 = vadd.f32 %v3162, %v3187
      %3189 = vmatmul.f32.gmra.mxu0 %v3139
      %v3190 = vpop.f32.mrf.mxu0
      %v3191 = vadd.f32 %v3165, %v3190
      %3192 = vdwg.mxu0
      %v3193 = vadd.f32 %v2684, %v3185
      %v3194 = vadd.f32 %v2685, %v3188
      %v3195 = vadd.f32 %v2686, %v3191
      %3196 = vst.msk [vmem:[%s647] sm:$0xff] %vm665, %v3193
      %3197 = vst.msk [vmem:[%s647 + $0x8] sm:$0xff] %vm665, %v3194
      %3198 = vst.msk [vmem:[%s647 + $0x10] sm:$0x3f] %vm672, %v3195
      %p3199 = scmp.lt.s32.totalorder %s28, 1
      %s3200 = scalar_select %p3199, %s28, 1
      %s3201 = smul.addr %s3200, 3
      %s3202 = smul.addr %s3201, 8
      %s3203 = scalar_lea.vmem %s13, %s3202
      // Predicated region
      $region77: #{conformer_forward.4} parent=71 // pred_check
        %p3204 = pneg %p392
      $region78: #{conformer_forward.4} parent=71 // pred_check_branch
        %3206 = sbr.rel (%p3204) target = $region80
      $region79: #{conformer_forward.4} parent=71 // pred_region
        _
      $region80: #{conformer_forward.4} parent=71 // pred_fallthru
        _
    $region72: #{conformer_forward.4} parent=5 // pred_fallthru
      _
    %p3207 = scmp.le.s32.totalorder 2, %s19
    // Predicated region
    $region81: #{conformer_forward.4} parent=5 // pred_check
      %p3208 = pneg %p3207
    $region82: #{conformer_forward.4} parent=5 // pred_check_branch
      %3210 = sbr.rel (%p3208) target = $region84
    $region83: #{conformer_forward.4} parent=5 // pred_region
      %s3211 = ssub.s32 %s19, 2
      // Predicated region
      $region85: #{conformer_forward.4} parent=83 // pred_check
        %p3212 = pneg %p398
      $region86: #{conformer_forward.4} parent=83 // pred_check_branch
        %3214 = sbr.rel (%p3212) target = $region88
      $region87: #{conformer_forward.4} parent=83 // pred_region
        %p3215 = scmp.lt.s32.totalorder %s30, 1
        %s3216 = scalar_select %p3215, %s30, 1
        %s3217 = smul.addr %s3216, 3
        %s3218 = smul.addr %s3217, 8
        %s3219 = scalar_lea.vmem %s13, %s3218
      $region88: #{conformer_forward.4} parent=83 // pred_fallthru
        _
    $region84: #{conformer_forward.4} parent=5 // pred_fallthru
      _
  $region6: #{conformer_forward.4} parent=0 // loop_footer
    %s23 = sadd.s32 1, %s19
  $region7: #{conformer_forward.4} parent=0 // loop_footer_branch
    %18 = sbr.rel target = $region3
  $region8: #{conformer_forward.4} parent=0 // loop_exit
    _

</llo_original>
